<compile_context>
chip_gen: v5e
topology: v5e:2x2
jax: 0.10.0
libtpu: 0.0.40
codegen_flags: <defaults>
</compile_context>

<pallas_src>
import jax
import jax.numpy as jnp
from jax.experimental import pallas as pl
from jax.experimental.pallas import tpu as pltpu


def _rotation_rems(C):
    """Distinct lane remainders (dx * C) % 128 used by the 9-wide depthwise conv."""
    return sorted({(dx * C) % 128 for dx in range(9)})


# --------------------------------------------------------------------------- #
# Pallas kernel: whole PRM forward for ONE batch element per grid step.
# --------------------------------------------------------------------------- #
def prm_kernel(x_ref, w1b_ref, b1t_ref, w21e_ref, b21_ref, w22_ref, b22_ref,
               tile_ref, w31bd_ref, b31t_ref, wdwt_ref, bdwt_ref,
               out_ref, pad_s):
    _, H, WC = out_ref.shape                      # lane-dense width WC = W*C
    C = w22_ref.shape[0]
    HP8, PADWC = pad_s.shape[1], pad_s.shape[2]   # H + 8, (W + 8) * C
    rems = _rotation_rems(C)
    rem_idx = {r: i for i, r in enumerate(rems)}

    # ---- conv_bn_relu_1: 3x3 conv (input zero-padded by 1), folded BN, ReLU.
    # One banded matmul per dy row window: big-K MXU dots, stays lane-dense.
    acc = jnp.dot(x_ref[0, 0:H, :], w1b_ref[0],
                  preferred_element_type=jnp.float32)
    for dy in (1, 2):
        acc = acc + jnp.dot(x_ref[0, dy:dy + H, :], w1b_ref[dy],
                            preferred_element_type=jnp.float32)
    out1 = jnp.maximum(acc + b1t_ref[...], 0.0)                   # (H, WC)

    # ---- branch 2: global avg pool -> 1x1 -> 1x1 -> sigmoid -> tile over W.
    # The pooling matrix (and 1/(H*W)) is folded into w21e; tile_ref broadcasts
    # the (1, C) gate back to the lane-dense (1, W*C) layout.
    rowsum = jnp.sum(out1, axis=0, keepdims=True)                 # (1, WC)
    z = jnp.maximum(jnp.dot(rowsum, w21e_ref[...],
                            preferred_element_type=jnp.float32) + b21_ref[...], 0.0)
    z = jnp.maximum(jnp.dot(z, w22_ref[...],
                            preferred_element_type=jnp.float32) + b22_ref[...], 0.0)
    out2t = jnp.dot(jax.nn.sigmoid(z), tile_ref[...],
                    preferred_element_type=jnp.float32)           # (1, WC)

    # ---- branch 3a: 1x1 conv as a block-diagonal (WC, WC) matmul.
    # bf16 operands, f32 accumulation (error << validation tolerance).
    out31 = jnp.maximum(
        jnp.dot(out1.astype(w31bd_ref.dtype), w31bd_ref[...],
                preferred_element_type=jnp.float32) + b31t_ref[...], 0.0)

    # ---- branch 3b: 9x9 depthwise conv, padding 4.
    # pad_s[0] = out31 zero-padded by 4 rows / 4*C lanes on each side.
    # pad_s[i>0] = the same buffer pre-shifted left by rems[i] lanes (built with
    # one unaligned load + aligned-start store each), so EVERY tap slice in the
    # 81-tap loop below is a lane-tile-aligned VMEM load (sublane offsets are
    # free on loads).  Scratch persists across grid steps and the grid axis may
    # be split across TensorCores, so copy 0 is re-zeroed every step (18
    # lane-dense vreg stores -- negligible) rather than program_id-guarded.
    pad_s[0] = jnp.zeros((HP8, PADWC), jnp.float32)
    pad_s[0, 4:4 + H, 4 * C:4 * C + WC] = out31
    for i, rem in enumerate(rems):
        if rem == 0:
            continue
        pad_s[i, :, 0:PADWC - rem] = pad_s[0, :, rem:PADWC]

    acc3 = jnp.zeros((H, WC), jnp.float32)
    for dy in range(9):
        for dx in range(9):
            rem = (dx * C) % 128
            lane0 = dx * C - rem                  # multiple of 128 -> aligned
            slab = pad_s[rem_idx[rem], dy:dy + H, lane0:lane0 + WC]
            acc3 = acc3 + slab * wdwt_ref[dy, dx]                 # (H,WC)*(1,WC)
    out3 = jax.nn.sigmoid(jnp.maximum(acc3 + bdwt_ref[...], 0.0))

    # ---- combine: out = out_1 * (1 + out_2 * out_3); lane-dense, unmasked store.
    out_ref[0] = out1 * (1.0 + out2t * out3)


# --------------------------------------------------------------------------- #
# Wrapper: NCHW in / NCHW out; all weight re-layouts are static prep work.
# --------------------------------------------------------------------------- #
@jax.jit
def prm_forward(x_nchw, params):
    N, C, H, W = x_nchw.shape
    (w1, b1, w21, b21, w22, b22, w31, b31, wdw, bdw) = params

    WC = W * C
    rems = _rotation_rems(C)

    # --- input: NCHW -> zero-padded, lane-dense (N, H+2, (W+2)*C) ---
    x = jnp.transpose(x_nchw, (0, 2, 3, 1)).astype(jnp.float32)
    x = jnp.pad(x, ((0, 0), (1, 1), (1, 1), (0, 0)))
    x = x.reshape(N, H + 2, (W + 2) * C)

    # --- static weight layout prep (banded / block-diagonal / lane-tiled) ---
    f32 = jnp.float32
    eye_c = jnp.eye(C, dtype=f32)
    # 3x3 conv as 3 banded matrices: w1b[dy][(w+dx)*C + ci, w*C + co] = w1[dy,dx,ci,co]
    w1b = jnp.stack([
        sum(jnp.kron(jnp.eye(W + 2, W, k=-dx, dtype=f32), w1[dy, dx])
            for dx in range(3))
        for dy in range(3)])                                      # (3, (W+2)C, WC)
    b1t = jnp.tile(b1.reshape(1, C), (1, W))                      # (1, WC)
    gather = jnp.kron(jnp.ones((W, 1), f32), eye_c)               # (WC, C): sum over w
    w21e = (gather @ w21) / float(H * W)                          # GAP folded into w21
    b21r = b21.reshape(1, C)
    b22r = b22.reshape(1, C)
    tile_c = jnp.kron(jnp.ones((1, W), f32), eye_c)               # (C, WC): tile over w
    w31bd = jnp.kron(jnp.eye(W, dtype=f32), w31).astype(jnp.bfloat16)   # (WC, WC)
    b31t = jnp.tile(b31.reshape(1, C), (1, W))                    # (1, WC)
    wdwt = jnp.tile(wdw.reshape(9, 9, 1, C), (1, 1, 1, W))        # (9, 9, 1, WC)
    bdwt = jnp.tile(bdw.reshape(1, C), (1, W))                    # (1, WC)

    weights = (w1b, b1t, w21e, b21r, w22, b22r, tile_c, w31bd, b31t, wdwt, bdwt)

    def wspec(a):
        return pl.BlockSpec(a.shape, lambda n, nd=a.ndim: (0,) * nd)

    flops = N * (3 * 2 * H * (W + 2) * C * WC        # banded 3x3 conv
                 + 2 * H * WC * WC                   # block-diagonal 1x1 conv
                 + 2 * 81 * H * WC                   # depthwise MACs
                 + 2 * WC * C + 2 * C * C + 2 * C * WC   # branch-2 dots
                 + 8 * H * WC)                       # elementwise
    transc = N * (H * WC + C)                        # sigmoids
    bytes_accessed = 4 * (x.size + N * H * WC) + sum(
        int(a.size) * a.dtype.itemsize for a in weights)

    out = pl.pallas_call(
        prm_kernel,
        out_shape=jax.ShapeDtypeStruct((N, H, WC), jnp.float32),
        grid=(N,),
        in_specs=[pl.BlockSpec((1, H + 2, (W + 2) * C), lambda n: (n, 0, 0))]
                 + [wspec(a) for a in weights],
        out_specs=pl.BlockSpec((1, H, WC), lambda n: (n, 0, 0)),
        scratch_shapes=[
            pltpu.VMEM((len(rems), H + 8, (W + 8) * C), jnp.float32),
        ],
        compiler_params=pltpu.CompilerParams(
            dimension_semantics=("parallel",)),
        cost_estimate=pl.CostEstimate(flops=flops, transcendentals=transc,
                                      bytes_accessed=bytes_accessed),
    )(x, *weights)

    out = out.reshape(N, H, W, C)
    return jnp.transpose(out, (0, 3, 1, 2))           # back to NCHW


# --------------------------------------------------------------------------- #
# Deterministic parameter init (eval-mode BN folded into conv weight/bias)
# --------------------------------------------------------------------------- #
def fold_bn(w, b, gamma, beta, mean, var, eps=1e-5):
    # w: (..., C_out); BN scales the output channel (last axis of w).  b: (C,)
    scale = gamma / jnp.sqrt(var + eps)
    return w * scale, (b - mean) * scale + beta


def init_params(key, C):
    keys = jax.random.split(key, 15)

    def bn_params(k):
        k1, k2, k3, k4 = jax.random.split(k, 4)
        gamma = jax.random.uniform(k1, (C,), minval=0.5, maxval=1.5)
        beta = 0.1 * jax.random.normal(k2, (C,))
        mean = 0.1 * jax.random.normal(k3, (C,))
        var = jax.random.uniform(k4, (C,), minval=0.5, maxval=1.5)
        return gamma, beta, mean, var

    # conv_bn_relu_1: PyTorch weight [C,C,3,3] -> HWIO [3,3,C_in,C_out]
    w1 = 0.1 * jax.random.normal(keys[0], (3, 3, C, C), dtype=jnp.float32)
    b1 = 0.1 * jax.random.normal(keys[1], (C,), dtype=jnp.float32)
    w1, b1 = fold_bn(w1, b1, *bn_params(keys[2]))

    # 1x1 convs: PyTorch [C,C,1,1] -> [C_in, C_out]
    w21 = 0.1 * jax.random.normal(keys[3], (C, C), dtype=jnp.float32)
    b21 = 0.1 * jax.random.normal(keys[4], (C,), dtype=jnp.float32)
    w21, b21 = fold_bn(w21, b21, *bn_params(keys[5]))

    w22 = 0.1 * jax.random.normal(keys[6], (C, C), dtype=jnp.float32)
    b22 = 0.1 * jax.random.normal(keys[7], (C,), dtype=jnp.float32)
    w22, b22 = fold_bn(w22, b22, *bn_params(keys[8]))

    w31 = 0.1 * jax.random.normal(keys[9], (C, C), dtype=jnp.float32)
    b31 = 0.1 * jax.random.normal(keys[10], (C,), dtype=jnp.float32)
    w31, b31 = fold_bn(w31, b31, *bn_params(keys[11]))

    # depthwise 9x9: PyTorch [C,1,9,9] -> [9,9,C]
    wdw = 0.1 * jax.random.normal(keys[12], (9, 9, C), dtype=jnp.float32)
    bdw = 0.1 * jax.random.normal(keys[13], (C,), dtype=jnp.float32)
    wdw, bdw = fold_bn(wdw, bdw, *bn_params(keys[14]))

    return (w1, b1, w21, b21, w22, b22, w31, b31, wdw, bdw)


# --------------------------------------------------------------------------- #
# Pure-JAX reference (XLA convs) for numeric validation
# --------------------------------------------------------------------------- #
def prm_reference(x_nchw, params):
    w1, b1, w21, b21, w22, b22, w31, b31, wdw, bdw = params
    x = jnp.transpose(x_nchw, (0, 2, 3, 1)).astype(jnp.float32)
    C = x.shape[-1]
    with jax.default_matmul_precision("float32"):
        dn1 = jax.lax.conv_dimension_numbers(x.shape, w1.shape,
                                             ('NHWC', 'HWIO', 'NHWC'))
        out1 = jax.lax.conv_general_dilated(x, w1, (1, 1), ((1, 1), (1, 1)),
                                            dimension_numbers=dn1)
        out1 = jnp.maximum(out1 + b1.reshape(1, 1, 1, -1), 0.0)

        pooled = jnp.mean(out1, axis=(1, 2))                       # (N, C)
        z = jnp.maximum(pooled @ w21 + b21, 0.0)
        z = jnp.maximum(z @ w22 + b22, 0.0)
        out2 = jax.nn.sigmoid(z)[:, None, None, :]

        out31 = jnp.maximum(jnp.einsum('nhwc,cd->nhwd', out1, w31)
                            + b31.reshape(1, 1, 1, -1), 0.0)
        wdw4 = wdw.reshape(9, 9, 1, C)
        dn2 = jax.lax.conv_dimension_numbers(out31.shape, wdw4.shape,
                                             ('NHWC', 'HWIO', 'NHWC'))
        out32 = jax.lax.conv_general_dilated(out31, wdw4, (1, 1), ((4, 4), (4, 4)),
                                             dimension_numbers=dn2,
                                             feature_group_count=C)
        out3 = jax.nn.sigmoid(jnp.maximum(out32 + bdw.reshape(1, 1, 1, -1), 0.0))

        out = out1 * (1.0 + out2 * out3)
    return jnp.transpose(out, (0, 3, 1, 2))


if __name__ == "__main__":
    key = jax.random.PRNGKey(0)
    kx, kp = jax.random.split(key)

    N, C, H, W = 2, 32, 16, 16          # PRM(output_chl_num=32), NCHW input
    x = jax.random.normal(kx, (N, C, H, W), dtype=jnp.float32)
    params = init_params(kp, C)

    out = prm_forward(x, params)
    out = jax.block_until_ready(out)
    assert out.shape == (N, C, H, W)

    ref = prm_reference(x, params)
    max_err = float(jnp.max(jnp.abs(out - ref)))
    if not (max_err < 2e-2):
        raise AssertionError(f"Pallas/reference mismatch, max abs err = {max_err}")

    print("KERNEL_OK")
</pallas_src>

<mosaic_0001>
module attributes {stable_mosaic.version = 11 : i64} {
  func.func @prm_kernel(%arg0: i32, %arg1: memref<1x18x576xf32, #tpu.memory_space<vmem>>, %arg2: memref<3x576x512xf32, #tpu.memory_space<vmem>>, %arg3: memref<1x512xf32, #tpu.memory_space<vmem>>, %arg4: memref<512x32xf32, #tpu.memory_space<vmem>>, %arg5: memref<1x32xf32, #tpu.memory_space<vmem>>, %arg6: memref<32x32xf32, #tpu.memory_space<vmem>>, %arg7: memref<1x32xf32, #tpu.memory_space<vmem>>, %arg8: memref<32x512xf32, #tpu.memory_space<vmem>>, %arg9: memref<512x512xbf16, #tpu.memory_space<vmem>>, %arg10: memref<1x512xf32, #tpu.memory_space<vmem>>, %arg11: memref<9x9x1x512xf32, #tpu.memory_space<vmem>>, %arg12: memref<1x512xf32, #tpu.memory_space<vmem>>, %arg13: memref<1x16x512xf32, #tpu.memory_space<vmem>>, %arg14: memref<4x24x768xf32, #tpu.memory_space<vmem>>) attributes {dimension_semantics = [#tpu.dimension_semantics<parallel>], iteration_bounds = array<i64: 2>, scalar_prefetch = 0 : i64, scratch_operands = 1 : i64, tpu.core_type = #tpu.core_type<tc>, window_params = [{transform_indices = @transform_0, window_bounds = array<i64: 1, 18, 576>}, {pipeline_mode = #tpu.pipeline_mode<synchronous>, transform_indices = @transform_1, window_bounds = array<i64: 3, 576, 512>}, {pipeline_mode = #tpu.pipeline_mode<synchronous>, transform_indices = @transform_2, window_bounds = array<i64: 1, 512>}, {pipeline_mode = #tpu.pipeline_mode<synchronous>, transform_indices = @transform_3, window_bounds = array<i64: 512, 32>}, {pipeline_mode = #tpu.pipeline_mode<synchronous>, transform_indices = @transform_4, window_bounds = array<i64: 1, 32>}, {pipeline_mode = #tpu.pipeline_mode<synchronous>, transform_indices = @transform_5, window_bounds = array<i64: 32, 32>}, {pipeline_mode = #tpu.pipeline_mode<synchronous>, transform_indices = @transform_6, window_bounds = array<i64: 1, 32>}, {pipeline_mode = #tpu.pipeline_mode<synchronous>, transform_indices = @transform_7, window_bounds = array<i64: 32, 512>}, {pipeline_mode = #tpu.pipeline_mode<synchronous>, transform_indices = @transform_8, window_bounds = array<i64: 512, 512>}, {pipeline_mode = #tpu.pipeline_mode<synchronous>, transform_indices = @transform_9, window_bounds = array<i64: 1, 512>}, {pipeline_mode = #tpu.pipeline_mode<synchronous>, transform_indices = @transform_10, window_bounds = array<i64: 9, 9, 1, 512>}, {pipeline_mode = #tpu.pipeline_mode<synchronous>, transform_indices = @transform_11, window_bounds = array<i64: 1, 512>}, {transform_indices = @transform_12, window_bounds = array<i64: 1, 16, 512>}]} {
    %c0 = arith.constant 0 : index
    %c0_0 = arith.constant 0 : index
    %c0_1 = arith.constant 0 : index
    %0 = vector.load %arg1[%c0, %c0_0, %c0_1] : memref<1x18x576xf32, #tpu.memory_space<vmem>>, vector<1x16x576xf32>
    %1 = vector.shape_cast %0 : vector<1x16x576xf32> to vector<16x576xf32>
    %c0_2 = arith.constant 0 : index
    %c0_3 = arith.constant 0 : index
    %c0_4 = arith.constant 0 : index
    %2 = vector.load %arg2[%c0_2, %c0_3, %c0_4] : memref<3x576x512xf32, #tpu.memory_space<vmem>>, vector<1x576x512xf32>
    %3 = vector.shape_cast %2 : vector<1x576x512xf32> to vector<576x512xf32>
    %cst = arith.constant dense<0.000000e+00> : vector<16x512xf32>
    %4 = tpu.matmul %1, %3, %cst {dimension_numbers = #tpu.dot_dimension_numbers<[1], [0], [0], [1], [0, 0, 1, 1], [], []>} : vector<16x576xf32>, vector<576x512xf32>, vector<16x512xf32> -> vector<16x512xf32>
    %c0_5 = arith.constant 0 : index
    %c1 = arith.constant 1 : index
    %c0_6 = arith.constant 0 : index
    %5 = vector.load %arg1[%c0_5, %c1, %c0_6] : memref<1x18x576xf32, #tpu.memory_space<vmem>>, vector<1x16x576xf32>
    %6 = vector.shape_cast %5 : vector<1x16x576xf32> to vector<16x576xf32>
    %c1_7 = arith.constant 1 : index
    %c0_8 = arith.constant 0 : index
    %c0_9 = arith.constant 0 : index
    %7 = vector.load %arg2[%c1_7, %c0_8, %c0_9] : memref<3x576x512xf32, #tpu.memory_space<vmem>>, vector<1x576x512xf32>
    %8 = vector.shape_cast %7 : vector<1x576x512xf32> to vector<576x512xf32>
    %cst_10 = arith.constant dense<0.000000e+00> : vector<16x512xf32>
    %9 = tpu.matmul %6, %8, %cst_10 {dimension_numbers = #tpu.dot_dimension_numbers<[1], [0], [0], [1], [0, 0, 1, 1], [], []>} : vector<16x576xf32>, vector<576x512xf32>, vector<16x512xf32> -> vector<16x512xf32>
    %10 = arith.addf %4, %9 : vector<16x512xf32>
    %c0_11 = arith.constant 0 : index
    %c2 = arith.constant 2 : index
    %c0_12 = arith.constant 0 : index
    %11 = vector.load %arg1[%c0_11, %c2, %c0_12] : memref<1x18x576xf32, #tpu.memory_space<vmem>>, vector<1x16x576xf32>
    %12 = vector.shape_cast %11 : vector<1x16x576xf32> to vector<16x576xf32>
    %c2_13 = arith.constant 2 : index
    %c0_14 = arith.constant 0 : index
    %c0_15 = arith.constant 0 : index
    %13 = vector.load %arg2[%c2_13, %c0_14, %c0_15] : memref<3x576x512xf32, #tpu.memory_space<vmem>>, vector<1x576x512xf32>
    %14 = vector.shape_cast %13 : vector<1x576x512xf32> to vector<576x512xf32>
    %cst_16 = arith.constant dense<0.000000e+00> : vector<16x512xf32>
    %15 = tpu.matmul %12, %14, %cst_16 {dimension_numbers = #tpu.dot_dimension_numbers<[1], [0], [0], [1], [0, 0, 1, 1], [], []>} : vector<16x576xf32>, vector<576x512xf32>, vector<16x512xf32> -> vector<16x512xf32>
    %16 = arith.addf %10, %15 : vector<16x512xf32>
    %c0_17 = arith.constant 0 : index
    %c0_18 = arith.constant 0 : index
    %17 = vector.load %arg3[%c0_17, %c0_18] : memref<1x512xf32, #tpu.memory_space<vmem>>, vector<1x512xf32>
    %18 = vector.broadcast %17 : vector<1x512xf32> to vector<16x512xf32>
    %19 = arith.addf %16, %18 : vector<16x512xf32>
    %cst_19 = arith.constant 0.000000e+00 : f32
    %20 = vector.broadcast %cst_19 : f32 to vector<16x512xf32>
    %21 = arith.maximumf %19, %20 : vector<16x512xf32>
    %cst_20 = arith.constant dense<0.000000e+00> : vector<512xf32>
    %22 = vector.multi_reduction <add>, %21, %cst_20 [0] : vector<16x512xf32> to vector<512xf32>
    %23 = vector.shape_cast %22 : vector<512xf32> to vector<1x512xf32>
    %c0_21 = arith.constant 0 : index
    %c0_22 = arith.constant 0 : index
    %24 = vector.load %arg4[%c0_21, %c0_22] : memref<512x32xf32, #tpu.memory_space<vmem>>, vector<512x32xf32>
    %cst_23 = arith.constant dense<0.000000e+00> : vector<1x32xf32>
    %25 = tpu.matmul %23, %24, %cst_23 {dimension_numbers = #tpu.dot_dimension_numbers<[1], [0], [0], [1], [0, 0, 1, 1], [], []>} : vector<1x512xf32>, vector<512x32xf32>, vector<1x32xf32> -> vector<1x32xf32>
    %c0_24 = arith.constant 0 : index
    %c0_25 = arith.constant 0 : index
    %26 = vector.load %arg5[%c0_24, %c0_25] : memref<1x32xf32, #tpu.memory_space<vmem>>, vector<1x32xf32>
    %27 = arith.addf %25, %26 : vector<1x32xf32>
    %cst_26 = arith.constant 0.000000e+00 : f32
    %28 = vector.broadcast %cst_26 : f32 to vector<1x32xf32>
    %29 = arith.maximumf %27, %28 : vector<1x32xf32>
    %c0_27 = arith.constant 0 : index
    %c0_28 = arith.constant 0 : index
    %30 = vector.load %arg6[%c0_27, %c0_28] : memref<32x32xf32, #tpu.memory_space<vmem>>, vector<32x32xf32>
    %cst_29 = arith.constant dense<0.000000e+00> : vector<1x32xf32>
    %31 = tpu.matmul %29, %30, %cst_29 {dimension_numbers = #tpu.dot_dimension_numbers<[1], [0], [0], [1], [0, 0, 1, 1], [], []>} : vector<1x32xf32>, vector<32x32xf32>, vector<1x32xf32> -> vector<1x32xf32>
    %c0_30 = arith.constant 0 : index
    %c0_31 = arith.constant 0 : index
    %32 = vector.load %arg7[%c0_30, %c0_31] : memref<1x32xf32, #tpu.memory_space<vmem>>, vector<1x32xf32>
    %33 = arith.addf %31, %32 : vector<1x32xf32>
    %cst_32 = arith.constant 0.000000e+00 : f32
    %34 = vector.broadcast %cst_32 : f32 to vector<1x32xf32>
    %35 = arith.maximumf %33, %34 : vector<1x32xf32>
    %36 = arith.negf %35 : vector<1x32xf32>
    %37 = math.exp %36 : vector<1x32xf32>
    %cst_33 = arith.constant 1.000000e+00 : f32
    %38 = vector.broadcast %cst_33 : f32 to vector<1x32xf32>
    %39 = arith.addf %38, %37 : vector<1x32xf32>
    %40 = arith.divf %38, %39 : vector<1x32xf32>
    %c0_34 = arith.constant 0 : index
    %c0_35 = arith.constant 0 : index
    %41 = vector.load %arg8[%c0_34, %c0_35] : memref<32x512xf32, #tpu.memory_space<vmem>>, vector<32x512xf32>
    %cst_36 = arith.constant dense<0.000000e+00> : vector<1x512xf32>
    %42 = tpu.matmul %40, %41, %cst_36 {dimension_numbers = #tpu.dot_dimension_numbers<[1], [0], [0], [1], [0, 0, 1, 1], [], []>} : vector<1x32xf32>, vector<32x512xf32>, vector<1x512xf32> -> vector<1x512xf32>
    %43 = arith.truncf %21 : vector<16x512xf32> to vector<16x512xbf16>
    %c0_37 = arith.constant 0 : index
    %c0_38 = arith.constant 0 : index
    %44 = vector.load %arg9[%c0_37, %c0_38] : memref<512x512xbf16, #tpu.memory_space<vmem>>, vector<512x512xbf16>
    %cst_39 = arith.constant dense<0.000000e+00> : vector<16x512xf32>
    %45 = tpu.matmul %43, %44, %cst_39 {dimension_numbers = #tpu.dot_dimension_numbers<[1], [0], [0], [1], [0, 0, 1, 1], [], []>} : vector<16x512xbf16>, vector<512x512xbf16>, vector<16x512xf32> -> vector<16x512xf32>
    %c0_40 = arith.constant 0 : index
    %c0_41 = arith.constant 0 : index
    %46 = vector.load %arg10[%c0_40, %c0_41] : memref<1x512xf32, #tpu.memory_space<vmem>>, vector<1x512xf32>
    %47 = vector.broadcast %46 : vector<1x512xf32> to vector<16x512xf32>
    %48 = arith.addf %45, %47 : vector<16x512xf32>
    %cst_42 = arith.constant 0.000000e+00 : f32
    %49 = vector.broadcast %cst_42 : f32 to vector<16x512xf32>
    %50 = arith.maximumf %48, %49 : vector<16x512xf32>
    %cst_43 = arith.constant 0.000000e+00 : f32
    %51 = vector.broadcast %cst_43 : f32 to vector<24x768xf32>
    %c0_44 = arith.constant 0 : index
    %c0_45 = arith.constant 0 : index
    %c0_46 = arith.constant 0 : index
    %52 = vector.load %arg14[%c0_44, %c0_45, %c0_46] : memref<4x24x768xf32, #tpu.memory_space<vmem>>, vector<1x24x768xf32>
    %53 = vector.shape_cast %52 : vector<1x24x768xf32> to vector<24x768xf32>
    %54 = vector.shape_cast %51 : vector<24x768xf32> to vector<1x24x768xf32>
    tpu.vector_store %arg14[%c0_44, %c0_45, %c0_46], %54 {strides = array<i32>} : memref<4x24x768xf32, #tpu.memory_space<vmem>>, vector<1x24x768xf32>,
    %c0_47 = arith.constant 0 : index
    %c4 = arith.constant 4 : index
    %c128 = arith.constant 128 : index
    %55 = vector.load %arg14[%c0_47, %c4, %c128] : memref<4x24x768xf32, #tpu.memory_space<vmem>>, vector<1x16x512xf32>
    %56 = vector.shape_cast %55 : vector<1x16x512xf32> to vector<16x512xf32>
    %57 = vector.shape_cast %50 : vector<16x512xf32> to vector<1x16x512xf32>
    tpu.vector_store %arg14[%c0_47, %c4, %c128], %57 {strides = array<i32>} : memref<4x24x768xf32, #tpu.memory_space<vmem>>, vector<1x16x512xf32>,
    %c0_48 = arith.constant 0 : index
    %c0_49 = arith.constant 0 : index
    %c32 = arith.constant 32 : index
    %58 = vector.load %arg14[%c0_48, %c0_49, %c32] : memref<4x24x768xf32, #tpu.memory_space<vmem>>, vector<1x24x736xf32>
    %59 = vector.shape_cast %58 : vector<1x24x736xf32> to vector<24x736xf32>
    %c1_50 = arith.constant 1 : index
    %c0_51 = arith.constant 0 : index
    %c0_52 = arith.constant 0 : index
    %60 = vector.load %arg14[%c1_50, %c0_51, %c0_52] : memref<4x24x768xf32, #tpu.memory_space<vmem>>, vector<1x24x736xf32>
    %61 = vector.shape_cast %60 : vector<1x24x736xf32> to vector<24x736xf32>
    %62 = vector.shape_cast %59 : vector<24x736xf32> to vector<1x24x736xf32>
    tpu.vector_store %arg14[%c1_50, %c0_51, %c0_52], %62 {strides = array<i32>} : memref<4x24x768xf32, #tpu.memory_space<vmem>>, vector<1x24x736xf32>,
    %c0_53 = arith.constant 0 : index
    %c0_54 = arith.constant 0 : index
    %c64 = arith.constant 64 : index
    %63 = vector.load %arg14[%c0_53, %c0_54, %c64] : memref<4x24x768xf32, #tpu.memory_space<vmem>>, vector<1x24x704xf32>
    %64 = vector.shape_cast %63 : vector<1x24x704xf32> to vector<24x704xf32>
    %c2_55 = arith.constant 2 : index
    %c0_56 = arith.constant 0 : index
    %c0_57 = arith.constant 0 : index
    %65 = vector.load %arg14[%c2_55, %c0_56, %c0_57] : memref<4x24x768xf32, #tpu.memory_space<vmem>>, vector<1x24x704xf32>
    %66 = vector.shape_cast %65 : vector<1x24x704xf32> to vector<24x704xf32>
    %67 = vector.shape_cast %64 : vector<24x704xf32> to vector<1x24x704xf32>
    tpu.vector_store %arg14[%c2_55, %c0_56, %c0_57], %67 {strides = array<i32>} : memref<4x24x768xf32, #tpu.memory_space<vmem>>, vector<1x24x704xf32>,
    %c0_58 = arith.constant 0 : index
    %c0_59 = arith.constant 0 : index
    %c96 = arith.constant 96 : index
    %68 = vector.load %arg14[%c0_58, %c0_59, %c96] : memref<4x24x768xf32, #tpu.memory_space<vmem>>, vector<1x24x672xf32>
    %69 = vector.shape_cast %68 : vector<1x24x672xf32> to vector<24x672xf32>
    %c3 = arith.constant 3 : index
    %c0_60 = arith.constant 0 : index
    %c0_61 = arith.constant 0 : index
    %70 = vector.load %arg14[%c3, %c0_60, %c0_61] : memref<4x24x768xf32, #tpu.memory_space<vmem>>, vector<1x24x672xf32>
    %71 = vector.shape_cast %70 : vector<1x24x672xf32> to vector<24x672xf32>
    %72 = vector.shape_cast %69 : vector<24x672xf32> to vector<1x24x672xf32>
    tpu.vector_store %arg14[%c3, %c0_60, %c0_61], %72 {strides = array<i32>} : memref<4x24x768xf32, #tpu.memory_space<vmem>>, vector<1x24x672xf32>,
    %cst_62 = arith.constant 0.000000e+00 : f32
    %73 = vector.broadcast %cst_62 : f32 to vector<16x512xf32>
    %c0_63 = arith.constant 0 : index
    %c0_64 = arith.constant 0 : index
    %c0_65 = arith.constant 0 : index
    %74 = vector.load %arg14[%c0_63, %c0_64, %c0_65] : memref<4x24x768xf32, #tpu.memory_space<vmem>>, vector<1x16x512xf32>
    %75 = vector.shape_cast %74 : vector<1x16x512xf32> to vector<16x512xf32>
    %c0_66 = arith.constant 0 : index
    %c0_67 = arith.constant 0 : index
    %c0_68 = arith.constant 0 : index
    %c0_69 = arith.constant 0 : index
    %76 = vector.load %arg11[%c0_66, %c0_67, %c0_68, %c0_69] : memref<9x9x1x512xf32, #tpu.memory_space<vmem>>, vector<1x1x1x512xf32>
    %77 = vector.shape_cast %76 : vector<1x1x1x512xf32> to vector<1x512xf32>
    %78 = vector.broadcast %77 : vector<1x512xf32> to vector<16x512xf32>
    %79 = arith.mulf %75, %78 : vector<16x512xf32>
    %80 = arith.addf %73, %79 : vector<16x512xf32>
    %c1_70 = arith.constant 1 : index
    %c0_71 = arith.constant 0 : index
    %c0_72 = arith.constant 0 : index
    %81 = vector.load %arg14[%c1_70, %c0_71, %c0_72] : memref<4x24x768xf32, #tpu.memory_space<vmem>>, vector<1x16x512xf32>
    %82 = vector.shape_cast %81 : vector<1x16x512xf32> to vector<16x512xf32>
    %c0_73 = arith.constant 0 : index
    %c1_74 = arith.constant 1 : index
    %c0_75 = arith.constant 0 : index
    %c0_76 = arith.constant 0 : index
    %83 = vector.load %arg11[%c0_73, %c1_74, %c0_75, %c0_76] : memref<9x9x1x512xf32, #tpu.memory_space<vmem>>, vector<1x1x1x512xf32>
    %84 = vector.shape_cast %83 : vector<1x1x1x512xf32> to vector<1x512xf32>
    %85 = vector.broadcast %84 : vector<1x512xf32> to vector<16x512xf32>
    %86 = arith.mulf %82, %85 : vector<16x512xf32>
    %87 = arith.addf %80, %86 : vector<16x512xf32>
    %c2_77 = arith.constant 2 : index
    %c0_78 = arith.constant 0 : index
    %c0_79 = arith.constant 0 : index
    %88 = vector.load %arg14[%c2_77, %c0_78, %c0_79] : memref<4x24x768xf32, #tpu.memory_space<vmem>>, vector<1x16x512xf32>
    %89 = vector.shape_cast %88 : vector<1x16x512xf32> to vector<16x512xf32>
    %c0_80 = arith.constant 0 : index
    %c2_81 = arith.constant 2 : index
    %c0_82 = arith.constant 0 : index
    %c0_83 = arith.constant 0 : index
    %90 = vector.load %arg11[%c0_80, %c2_81, %c0_82, %c0_83] : memref<9x9x1x512xf32, #tpu.memory_space<vmem>>, vector<1x1x1x512xf32>
    %91 = vector.shape_cast %90 : vector<1x1x1x512xf32> to vector<1x512xf32>
    %92 = vector.broadcast %91 : vector<1x512xf32> to vector<16x512xf32>
    %93 = arith.mulf %89, %92 : vector<16x512xf32>
    %94 = arith.addf %87, %93 : vector<16x512xf32>
    %c3_84 = arith.constant 3 : index
    %c0_85 = arith.constant 0 : index
    %c0_86 = arith.constant 0 : index
    %95 = vector.load %arg14[%c3_84, %c0_85, %c0_86] : memref<4x24x768xf32, #tpu.memory_space<vmem>>, vector<1x16x512xf32>
    %96 = vector.shape_cast %95 : vector<1x16x512xf32> to vector<16x512xf32>
    %c0_87 = arith.constant 0 : index
    %c3_88 = arith.constant 3 : index
    %c0_89 = arith.constant 0 : index
    %c0_90 = arith.constant 0 : index
    %97 = vector.load %arg11[%c0_87, %c3_88, %c0_89, %c0_90] : memref<9x9x1x512xf32, #tpu.memory_space<vmem>>, vector<1x1x1x512xf32>
    %98 = vector.shape_cast %97 : vector<1x1x1x512xf32> to vector<1x512xf32>
    %99 = vector.broadcast %98 : vector<1x512xf32> to vector<16x512xf32>
    %100 = arith.mulf %96, %99 : vector<16x512xf32>
    %101 = arith.addf %94, %100 : vector<16x512xf32>
    %c0_91 = arith.constant 0 : index
    %c0_92 = arith.constant 0 : index
    %c128_93 = arith.constant 128 : index
    %102 = vector.load %arg14[%c0_91, %c0_92, %c128_93] : memref<4x24x768xf32, #tpu.memory_space<vmem>>, vector<1x16x512xf32>
    %103 = vector.shape_cast %102 : vector<1x16x512xf32> to vector<16x512xf32>
    %c0_94 = arith.constant 0 : index
    %c4_95 = arith.constant 4 : index
    %c0_96 = arith.constant 0 : index
    %c0_97 = arith.constant 0 : index
    %104 = vector.load %arg11[%c0_94, %c4_95, %c0_96, %c0_97] : memref<9x9x1x512xf32, #tpu.memory_space<vmem>>, vector<1x1x1x512xf32>
    %105 = vector.shape_cast %104 : vector<1x1x1x512xf32> to vector<1x512xf32>
    %106 = vector.broadcast %105 : vector<1x512xf32> to vector<16x512xf32>
    %107 = arith.mulf %103, %106 : vector<16x512xf32>
    %108 = arith.addf %101, %107 : vector<16x512xf32>
    %c1_98 = arith.constant 1 : index
    %c0_99 = arith.constant 0 : index
    %c128_100 = arith.constant 128 : index
    %109 = vector.load %arg14[%c1_98, %c0_99, %c128_100] : memref<4x24x768xf32, #tpu.memory_space<vmem>>, vector<1x16x512xf32>
    %110 = vector.shape_cast %109 : vector<1x16x512xf32> to vector<16x512xf32>
    %c0_101 = arith.constant 0 : index
    %c5 = arith.constant 5 : index
    %c0_102 = arith.constant 0 : index
    %c0_103 = arith.constant 0 : index
    %111 = vector.load %arg11[%c0_101, %c5, %c0_102, %c0_103] : memref<9x9x1x512xf32, #tpu.memory_space<vmem>>, vector<1x1x1x512xf32>
    %112 = vector.shape_cast %111 : vector<1x1x1x512xf32> to vector<1x512xf32>
    %113 = vector.broadcast %112 : vector<1x512xf32> to vector<16x512xf32>
    %114 = arith.mulf %110, %113 : vector<16x512xf32>
    %115 = arith.addf %108, %114 : vector<16x512xf32>
    %c2_104 = arith.constant 2 : index
    %c0_105 = arith.constant 0 : index
    %c128_106 = arith.constant 128 : index
    %116 = vector.load %arg14[%c2_104, %c0_105, %c128_106] : memref<4x24x768xf32, #tpu.memory_space<vmem>>, vector<1x16x512xf32>
    %117 = vector.shape_cast %116 : vector<1x16x512xf32> to vector<16x512xf32>
    %c0_107 = arith.constant 0 : index
    %c6 = arith.constant 6 : index
    %c0_108 = arith.constant 0 : index
    %c0_109 = arith.constant 0 : index
    %118 = vector.load %arg11[%c0_107, %c6, %c0_108, %c0_109] : memref<9x9x1x512xf32, #tpu.memory_space<vmem>>, vector<1x1x1x512xf32>
    %119 = vector.shape_cast %118 : vector<1x1x1x512xf32> to vector<1x512xf32>
    %120 = vector.broadcast %119 : vector<1x512xf32> to vector<16x512xf32>
    %121 = arith.mulf %117, %120 : vector<16x512xf32>
    %122 = arith.addf %115, %121 : vector<16x512xf32>
    %c3_110 = arith.constant 3 : index
    %c0_111 = arith.constant 0 : index
    %c128_112 = arith.constant 128 : index
    %123 = vector.load %arg14[%c3_110, %c0_111, %c128_112] : memref<4x24x768xf32, #tpu.memory_space<vmem>>, vector<1x16x512xf32>
    %124 = vector.shape_cast %123 : vector<1x16x512xf32> to vector<16x512xf32>
    %c0_113 = arith.constant 0 : index
    %c7 = arith.constant 7 : index
    %c0_114 = arith.constant 0 : index
    %c0_115 = arith.constant 0 : index
    %125 = vector.load %arg11[%c0_113, %c7, %c0_114, %c0_115] : memref<9x9x1x512xf32, #tpu.memory_space<vmem>>, vector<1x1x1x512xf32>
    %126 = vector.shape_cast %125 : vector<1x1x1x512xf32> to vector<1x512xf32>
    %127 = vector.broadcast %126 : vector<1x512xf32> to vector<16x512xf32>
    %128 = arith.mulf %124, %127 : vector<16x512xf32>
    %129 = arith.addf %122, %128 : vector<16x512xf32>
    %c0_116 = arith.constant 0 : index
    %c0_117 = arith.constant 0 : index
    %c256 = arith.constant 256 : index
    %130 = vector.load %arg14[%c0_116, %c0_117, %c256] : memref<4x24x768xf32, #tpu.memory_space<vmem>>, vector<1x16x512xf32>
    %131 = vector.shape_cast %130 : vector<1x16x512xf32> to vector<16x512xf32>
    %c0_118 = arith.constant 0 : index
    %c8 = arith.constant 8 : index
    %c0_119 = arith.constant 0 : index
    %c0_120 = arith.constant 0 : index
    %132 = vector.load %arg11[%c0_118, %c8, %c0_119, %c0_120] : memref<9x9x1x512xf32, #tpu.memory_space<vmem>>, vector<1x1x1x512xf32>
    %133 = vector.shape_cast %132 : vector<1x1x1x512xf32> to vector<1x512xf32>
    %134 = vector.broadcast %133 : vector<1x512xf32> to vector<16x512xf32>
    %135 = arith.mulf %131, %134 : vector<16x512xf32>
    %136 = arith.addf %129, %135 : vector<16x512xf32>
    %c0_121 = arith.constant 0 : index
    %c1_122 = arith.constant 1 : index
    %c0_123 = arith.constant 0 : index
    %137 = vector.load %arg14[%c0_121, %c1_122, %c0_123] : memref<4x24x768xf32, #tpu.memory_space<vmem>>, vector<1x16x512xf32>
    %138 = vector.shape_cast %137 : vector<1x16x512xf32> to vector<16x512xf32>
    %c1_124 = arith.constant 1 : index
    %c0_125 = arith.constant 0 : index
    %c0_126 = arith.constant 0 : index
    %c0_127 = arith.constant 0 : index
    %139 = vector.load %arg11[%c1_124, %c0_125, %c0_126, %c0_127] : memref<9x9x1x512xf32, #tpu.memory_space<vmem>>, vector<1x1x1x512xf32>
    %140 = vector.shape_cast %139 : vector<1x1x1x512xf32> to vector<1x512xf32>
    %141 = vector.broadcast %140 : vector<1x512xf32> to vector<16x512xf32>
    %142 = arith.mulf %138, %141 : vector<16x512xf32>
    %143 = arith.addf %136, %142 : vector<16x512xf32>
    %c1_128 = arith.constant 1 : index
    %c1_129 = arith.constant 1 : index
    %c0_130 = arith.constant 0 : index
    %144 = vector.load %arg14[%c1_128, %c1_129, %c0_130] : memref<4x24x768xf32, #tpu.memory_space<vmem>>, vector<1x16x512xf32>
    %145 = vector.shape_cast %144 : vector<1x16x512xf32> to vector<16x512xf32>
    %c1_131 = arith.constant 1 : index
    %c1_132 = arith.constant 1 : index
    %c0_133 = arith.constant 0 : index
    %c0_134 = arith.constant 0 : index
    %146 = vector.load %arg11[%c1_131, %c1_132, %c0_133, %c0_134] : memref<9x9x1x512xf32, #tpu.memory_space<vmem>>, vector<1x1x1x512xf32>
    %147 = vector.shape_cast %146 : vector<1x1x1x512xf32> to vector<1x512xf32>
    %148 = vector.broadcast %147 : vector<1x512xf32> to vector<16x512xf32>
    %149 = arith.mulf %145, %148 : vector<16x512xf32>
    %150 = arith.addf %143, %149 : vector<16x512xf32>
    %c2_135 = arith.constant 2 : index
    %c1_136 = arith.constant 1 : index
    %c0_137 = arith.constant 0 : index
    %151 = vector.load %arg14[%c2_135, %c1_136, %c0_137] : memref<4x24x768xf32, #tpu.memory_space<vmem>>, vector<1x16x512xf32>
    %152 = vector.shape_cast %151 : vector<1x16x512xf32> to vector<16x512xf32>
    %c1_138 = arith.constant 1 : index
    %c2_139 = arith.constant 2 : index
    %c0_140 = arith.constant 0 : index
    %c0_141 = arith.constant 0 : index
    %153 = vector.load %arg11[%c1_138, %c2_139, %c0_140, %c0_141] : memref<9x9x1x512xf32, #tpu.memory_space<vmem>>, vector<1x1x1x512xf32>
    %154 = vector.shape_cast %153 : vector<1x1x1x512xf32> to vector<1x512xf32>
    %155 = vector.broadcast %154 : vector<1x512xf32> to vector<16x512xf32>
    %156 = arith.mulf %152, %155 : vector<16x512xf32>
    %157 = arith.addf %150, %156 : vector<16x512xf32>
    %c3_142 = arith.constant 3 : index
    %c1_143 = arith.constant 1 : index
    %c0_144 = arith.constant 0 : index
    %158 = vector.load %arg14[%c3_142, %c1_143, %c0_144] : memref<4x24x768xf32, #tpu.memory_space<vmem>>, vector<1x16x512xf32>
    %159 = vector.shape_cast %158 : vector<1x16x512xf32> to vector<16x512xf32>
    %c1_145 = arith.constant 1 : index
    %c3_146 = arith.constant 3 : index
    %c0_147 = arith.constant 0 : index
    %c0_148 = arith.constant 0 : index
    %160 = vector.load %arg11[%c1_145, %c3_146, %c0_147, %c0_148] : memref<9x9x1x512xf32, #tpu.memory_space<vmem>>, vector<1x1x1x512xf32>
    %161 = vector.shape_cast %160 : vector<1x1x1x512xf32> to vector<1x512xf32>
    %162 = vector.broadcast %161 : vector<1x512xf32> to vector<16x512xf32>
    %163 = arith.mulf %159, %162 : vector<16x512xf32>
    %164 = arith.addf %157, %163 : vector<16x512xf32>
    %c0_149 = arith.constant 0 : index
    %c1_150 = arith.constant 1 : index
    %c128_151 = arith.constant 128 : index
    %165 = vector.load %arg14[%c0_149, %c1_150, %c128_151] : memref<4x24x768xf32, #tpu.memory_space<vmem>>, vector<1x16x512xf32>
    %166 = vector.shape_cast %165 : vector<1x16x512xf32> to vector<16x512xf32>
    %c1_152 = arith.constant 1 : index
    %c4_153 = arith.constant 4 : index
    %c0_154 = arith.constant 0 : index
    %c0_155 = arith.constant 0 : index
    %167 = vector.load %arg11[%c1_152, %c4_153, %c0_154, %c0_155] : memref<9x9x1x512xf32, #tpu.memory_space<vmem>>, vector<1x1x1x512xf32>
    %168 = vector.shape_cast %167 : vector<1x1x1x512xf32> to vector<1x512xf32>
    %169 = vector.broadcast %168 : vector<1x512xf32> to vector<16x512xf32>
    %170 = arith.mulf %166, %169 : vector<16x512xf32>
    %171 = arith.addf %164, %170 : vector<16x512xf32>
    %c1_156 = arith.constant 1 : index
    %c1_157 = arith.constant 1 : index
    %c128_158 = arith.constant 128 : index
    %172 = vector.load %arg14[%c1_156, %c1_157, %c128_158] : memref<4x24x768xf32, #tpu.memory_space<vmem>>, vector<1x16x512xf32>
    %173 = vector.shape_cast %172 : vector<1x16x512xf32> to vector<16x512xf32>
    %c1_159 = arith.constant 1 : index
    %c5_160 = arith.constant 5 : index
    %c0_161 = arith.constant 0 : index
    %c0_162 = arith.constant 0 : index
    %174 = vector.load %arg11[%c1_159, %c5_160, %c0_161, %c0_162] : memref<9x9x1x512xf32, #tpu.memory_space<vmem>>, vector<1x1x1x512xf32>
    %175 = vector.shape_cast %174 : vector<1x1x1x512xf32> to vector<1x512xf32>
    %176 = vector.broadcast %175 : vector<1x512xf32> to vector<16x512xf32>
    %177 = arith.mulf %173, %176 : vector<16x512xf32>
    %178 = arith.addf %171, %177 : vector<16x512xf32>
    %c2_163 = arith.constant 2 : index
    %c1_164 = arith.constant 1 : index
    %c128_165 = arith.constant 128 : index
    %179 = vector.load %arg14[%c2_163, %c1_164, %c128_165] : memref<4x24x768xf32, #tpu.memory_space<vmem>>, vector<1x16x512xf32>
    %180 = vector.shape_cast %179 : vector<1x16x512xf32> to vector<16x512xf32>
    %c1_166 = arith.constant 1 : index
    %c6_167 = arith.constant 6 : index
    %c0_168 = arith.constant 0 : index
    %c0_169 = arith.constant 0 : index
    %181 = vector.load %arg11[%c1_166, %c6_167, %c0_168, %c0_169] : memref<9x9x1x512xf32, #tpu.memory_space<vmem>>, vector<1x1x1x512xf32>
    %182 = vector.shape_cast %181 : vector<1x1x1x512xf32> to vector<1x512xf32>
    %183 = vector.broadcast %182 : vector<1x512xf32> to vector<16x512xf32>
    %184 = arith.mulf %180, %183 : vector<16x512xf32>
    %185 = arith.addf %178, %184 : vector<16x512xf32>
    %c3_170 = arith.constant 3 : index
    %c1_171 = arith.constant 1 : index
    %c128_172 = arith.constant 128 : index
    %186 = vector.load %arg14[%c3_170, %c1_171, %c128_172] : memref<4x24x768xf32, #tpu.memory_space<vmem>>, vector<1x16x512xf32>
    %187 = vector.shape_cast %186 : vector<1x16x512xf32> to vector<16x512xf32>
    %c1_173 = arith.constant 1 : index
    %c7_174 = arith.constant 7 : index
    %c0_175 = arith.constant 0 : index
    %c0_176 = arith.constant 0 : index
    %188 = vector.load %arg11[%c1_173, %c7_174, %c0_175, %c0_176] : memref<9x9x1x512xf32, #tpu.memory_space<vmem>>, vector<1x1x1x512xf32>
    %189 = vector.shape_cast %188 : vector<1x1x1x512xf32> to vector<1x512xf32>
    %190 = vector.broadcast %189 : vector<1x512xf32> to vector<16x512xf32>
    %191 = arith.mulf %187, %190 : vector<16x512xf32>
    %192 = arith.addf %185, %191 : vector<16x512xf32>
    %c0_177 = arith.constant 0 : index
    %c1_178 = arith.constant 1 : index
    %c256_179 = arith.constant 256 : index
    %193 = vector.load %arg14[%c0_177, %c1_178, %c256_179] : memref<4x24x768xf32, #tpu.memory_space<vmem>>, vector<1x16x512xf32>
    %194 = vector.shape_cast %193 : vector<1x16x512xf32> to vector<16x512xf32>
    %c1_180 = arith.constant 1 : index
    %c8_181 = arith.constant 8 : index
    %c0_182 = arith.constant 0 : index
    %c0_183 = arith.constant 0 : index
    %195 = vector.load %arg11[%c1_180, %c8_181, %c0_182, %c0_183] : memref<9x9x1x512xf32, #tpu.memory_space<vmem>>, vector<1x1x1x512xf32>
    %196 = vector.shape_cast %195 : vector<1x1x1x512xf32> to vector<1x512xf32>
    %197 = vector.broadcast %196 : vector<1x512xf32> to vector<16x512xf32>
    %198 = arith.mulf %194, %197 : vector<16x512xf32>
    %199 = arith.addf %192, %198 : vector<16x512xf32>
    %c0_184 = arith.constant 0 : index
    %c2_185 = arith.constant 2 : index
    %c0_186 = arith.constant 0 : index
    %200 = vector.load %arg14[%c0_184, %c2_185, %c0_186] : memref<4x24x768xf32, #tpu.memory_space<vmem>>, vector<1x16x512xf32>
    %201 = vector.shape_cast %200 : vector<1x16x512xf32> to vector<16x512xf32>
    %c2_187 = arith.constant 2 : index
    %c0_188 = arith.constant 0 : index
    %c0_189 = arith.constant 0 : index
    %c0_190 = arith.constant 0 : index
    %202 = vector.load %arg11[%c2_187, %c0_188, %c0_189, %c0_190] : memref<9x9x1x512xf32, #tpu.memory_space<vmem>>, vector<1x1x1x512xf32>
    %203 = vector.shape_cast %202 : vector<1x1x1x512xf32> to vector<1x512xf32>
    %204 = vector.broadcast %203 : vector<1x512xf32> to vector<16x512xf32>
    %205 = arith.mulf %201, %204 : vector<16x512xf32>
    %206 = arith.addf %199, %205 : vector<16x512xf32>
    %c1_191 = arith.constant 1 : index
    %c2_192 = arith.constant 2 : index
    %c0_193 = arith.constant 0 : index
    %207 = vector.load %arg14[%c1_191, %c2_192, %c0_193] : memref<4x24x768xf32, #tpu.memory_space<vmem>>, vector<1x16x512xf32>
    %208 = vector.shape_cast %207 : vector<1x16x512xf32> to vector<16x512xf32>
    %c2_194 = arith.constant 2 : index
    %c1_195 = arith.constant 1 : index
    %c0_196 = arith.constant 0 : index
    %c0_197 = arith.constant 0 : index
    %209 = vector.load %arg11[%c2_194, %c1_195, %c0_196, %c0_197] : memref<9x9x1x512xf32, #tpu.memory_space<vmem>>, vector<1x1x1x512xf32>
    %210 = vector.shape_cast %209 : vector<1x1x1x512xf32> to vector<1x512xf32>
    %211 = vector.broadcast %210 : vector<1x512xf32> to vector<16x512xf32>
    %212 = arith.mulf %208, %211 : vector<16x512xf32>
    %213 = arith.addf %206, %212 : vector<16x512xf32>
    %c2_198 = arith.constant 2 : index
    %c2_199 = arith.constant 2 : index
    %c0_200 = arith.constant 0 : index
    %214 = vector.load %arg14[%c2_198, %c2_199, %c0_200] : memref<4x24x768xf32, #tpu.memory_space<vmem>>, vector<1x16x512xf32>
    %215 = vector.shape_cast %214 : vector<1x16x512xf32> to vector<16x512xf32>
    %c2_201 = arith.constant 2 : index
    %c2_202 = arith.constant 2 : index
    %c0_203 = arith.constant 0 : index
    %c0_204 = arith.constant 0 : index
    %216 = vector.load %arg11[%c2_201, %c2_202, %c0_203, %c0_204] : memref<9x9x1x512xf32, #tpu.memory_space<vmem>>, vector<1x1x1x512xf32>
    %217 = vector.shape_cast %216 : vector<1x1x1x512xf32> to vector<1x512xf32>
    %218 = vector.broadcast %217 : vector<1x512xf32> to vector<16x512xf32>
    %219 = arith.mulf %215, %218 : vector<16x512xf32>
    %220 = arith.addf %213, %219 : vector<16x512xf32>
    %c3_205 = arith.constant 3 : index
    %c2_206 = arith.constant 2 : index
    %c0_207 = arith.constant 0 : index
    %221 = vector.load %arg14[%c3_205, %c2_206, %c0_207] : memref<4x24x768xf32, #tpu.memory_space<vmem>>, vector<1x16x512xf32>
    %222 = vector.shape_cast %221 : vector<1x16x512xf32> to vector<16x512xf32>
    %c2_208 = arith.constant 2 : index
    %c3_209 = arith.constant 3 : index
    %c0_210 = arith.constant 0 : index
    %c0_211 = arith.constant 0 : index
    %223 = vector.load %arg11[%c2_208, %c3_209, %c0_210, %c0_211] : memref<9x9x1x512xf32, #tpu.memory_space<vmem>>, vector<1x1x1x512xf32>
    %224 = vector.shape_cast %223 : vector<1x1x1x512xf32> to vector<1x512xf32>
    %225 = vector.broadcast %224 : vector<1x512xf32> to vector<16x512xf32>
    %226 = arith.mulf %222, %225 : vector<16x512xf32>
    %227 = arith.addf %220, %226 : vector<16x512xf32>
    %c0_212 = arith.constant 0 : index
    %c2_213 = arith.constant 2 : index
    %c128_214 = arith.constant 128 : index
    %228 = vector.load %arg14[%c0_212, %c2_213, %c128_214] : memref<4x24x768xf32, #tpu.memory_space<vmem>>, vector<1x16x512xf32>
    %229 = vector.shape_cast %228 : vector<1x16x512xf32> to vector<16x512xf32>
    %c2_215 = arith.constant 2 : index
    %c4_216 = arith.constant 4 : index
    %c0_217 = arith.constant 0 : index
    %c0_218 = arith.constant 0 : index
    %230 = vector.load %arg11[%c2_215, %c4_216, %c0_217, %c0_218] : memref<9x9x1x512xf32, #tpu.memory_space<vmem>>, vector<1x1x1x512xf32>
    %231 = vector.shape_cast %230 : vector<1x1x1x512xf32> to vector<1x512xf32>
    %232 = vector.broadcast %231 : vector<1x512xf32> to vector<16x512xf32>
    %233 = arith.mulf %229, %232 : vector<16x512xf32>
    %234 = arith.addf %227, %233 : vector<16x512xf32>
    %c1_219 = arith.constant 1 : index
    %c2_220 = arith.constant 2 : index
    %c128_221 = arith.constant 128 : index
    %235 = vector.load %arg14[%c1_219, %c2_220, %c128_221] : memref<4x24x768xf32, #tpu.memory_space<vmem>>, vector<1x16x512xf32>
    %236 = vector.shape_cast %235 : vector<1x16x512xf32> to vector<16x512xf32>
    %c2_222 = arith.constant 2 : index
    %c5_223 = arith.constant 5 : index
    %c0_224 = arith.constant 0 : index
    %c0_225 = arith.constant 0 : index
    %237 = vector.load %arg11[%c2_222, %c5_223, %c0_224, %c0_225] : memref<9x9x1x512xf32, #tpu.memory_space<vmem>>, vector<1x1x1x512xf32>
    %238 = vector.shape_cast %237 : vector<1x1x1x512xf32> to vector<1x512xf32>
    %239 = vector.broadcast %238 : vector<1x512xf32> to vector<16x512xf32>
    %240 = arith.mulf %236, %239 : vector<16x512xf32>
    %241 = arith.addf %234, %240 : vector<16x512xf32>
    %c2_226 = arith.constant 2 : index
    %c2_227 = arith.constant 2 : index
    %c128_228 = arith.constant 128 : index
    %242 = vector.load %arg14[%c2_226, %c2_227, %c128_228] : memref<4x24x768xf32, #tpu.memory_space<vmem>>, vector<1x16x512xf32>
    %243 = vector.shape_cast %242 : vector<1x16x512xf32> to vector<16x512xf32>
    %c2_229 = arith.constant 2 : index
    %c6_230 = arith.constant 6 : index
    %c0_231 = arith.constant 0 : index
    %c0_232 = arith.constant 0 : index
    %244 = vector.load %arg11[%c2_229, %c6_230, %c0_231, %c0_232] : memref<9x9x1x512xf32, #tpu.memory_space<vmem>>, vector<1x1x1x512xf32>
    %245 = vector.shape_cast %244 : vector<1x1x1x512xf32> to vector<1x512xf32>
    %246 = vector.broadcast %245 : vector<1x512xf32> to vector<16x512xf32>
    %247 = arith.mulf %243, %246 : vector<16x512xf32>
    %248 = arith.addf %241, %247 : vector<16x512xf32>
    %c3_233 = arith.constant 3 : index
    %c2_234 = arith.constant 2 : index
    %c128_235 = arith.constant 128 : index
    %249 = vector.load %arg14[%c3_233, %c2_234, %c128_235] : memref<4x24x768xf32, #tpu.memory_space<vmem>>, vector<1x16x512xf32>
    %250 = vector.shape_cast %249 : vector<1x16x512xf32> to vector<16x512xf32>
    %c2_236 = arith.constant 2 : index
    %c7_237 = arith.constant 7 : index
    %c0_238 = arith.constant 0 : index
    %c0_239 = arith.constant 0 : index
    %251 = vector.load %arg11[%c2_236, %c7_237, %c0_238, %c0_239] : memref<9x9x1x512xf32, #tpu.memory_space<vmem>>, vector<1x1x1x512xf32>
    %252 = vector.shape_cast %251 : vector<1x1x1x512xf32> to vector<1x512xf32>
    %253 = vector.broadcast %252 : vector<1x512xf32> to vector<16x512xf32>
    %254 = arith.mulf %250, %253 : vector<16x512xf32>
    %255 = arith.addf %248, %254 : vector<16x512xf32>
    %c0_240 = arith.constant 0 : index
    %c2_241 = arith.constant 2 : index
    %c256_242 = arith.constant 256 : index
    %256 = vector.load %arg14[%c0_240, %c2_241, %c256_242] : memref<4x24x768xf32, #tpu.memory_space<vmem>>, vector<1x16x512xf32>
    %257 = vector.shape_cast %256 : vector<1x16x512xf32> to vector<16x512xf32>
    %c2_243 = arith.constant 2 : index
    %c8_244 = arith.constant 8 : index
    %c0_245 = arith.constant 0 : index
    %c0_246 = arith.constant 0 : index
    %258 = vector.load %arg11[%c2_243, %c8_244, %c0_245, %c0_246] : memref<9x9x1x512xf32, #tpu.memory_space<vmem>>, vector<1x1x1x512xf32>
    %259 = vector.shape_cast %258 : vector<1x1x1x512xf32> to vector<1x512xf32>
    %260 = vector.broadcast %259 : vector<1x512xf32> to vector<16x512xf32>
    %261 = arith.mulf %257, %260 : vector<16x512xf32>
    %262 = arith.addf %255, %261 : vector<16x512xf32>
    %c0_247 = arith.constant 0 : index
    %c3_248 = arith.constant 3 : index
    %c0_249 = arith.constant 0 : index
    %263 = vector.load %arg14[%c0_247, %c3_248, %c0_249] : memref<4x24x768xf32, #tpu.memory_space<vmem>>, vector<1x16x512xf32>
    %264 = vector.shape_cast %263 : vector<1x16x512xf32> to vector<16x512xf32>
    %c3_250 = arith.constant 3 : index
    %c0_251 = arith.constant 0 : index
    %c0_252 = arith.constant 0 : index
    %c0_253 = arith.constant 0 : index
    %265 = vector.load %arg11[%c3_250, %c0_251, %c0_252, %c0_253] : memref<9x9x1x512xf32, #tpu.memory_space<vmem>>, vector<1x1x1x512xf32>
    %266 = vector.shape_cast %265 : vector<1x1x1x512xf32> to vector<1x512xf32>
    %267 = vector.broadcast %266 : vector<1x512xf32> to vector<16x512xf32>
    %268 = arith.mulf %264, %267 : vector<16x512xf32>
    %269 = arith.addf %262, %268 : vector<16x512xf32>
    %c1_254 = arith.constant 1 : index
    %c3_255 = arith.constant 3 : index
    %c0_256 = arith.constant 0 : index
    %270 = vector.load %arg14[%c1_254, %c3_255, %c0_256] : memref<4x24x768xf32, #tpu.memory_space<vmem>>, vector<1x16x512xf32>
    %271 = vector.shape_cast %270 : vector<1x16x512xf32> to vector<16x512xf32>
    %c3_257 = arith.constant 3 : index
    %c1_258 = arith.constant 1 : index
    %c0_259 = arith.constant 0 : index
    %c0_260 = arith.constant 0 : index
    %272 = vector.load %arg11[%c3_257, %c1_258, %c0_259, %c0_260] : memref<9x9x1x512xf32, #tpu.memory_space<vmem>>, vector<1x1x1x512xf32>
    %273 = vector.shape_cast %272 : vector<1x1x1x512xf32> to vector<1x512xf32>
    %274 = vector.broadcast %273 : vector<1x512xf32> to vector<16x512xf32>
    %275 = arith.mulf %271, %274 : vector<16x512xf32>
    %276 = arith.addf %269, %275 : vector<16x512xf32>
    %c2_261 = arith.constant 2 : index
    %c3_262 = arith.constant 3 : index
    %c0_263 = arith.constant 0 : index
    %277 = vector.load %arg14[%c2_261, %c3_262, %c0_263] : memref<4x24x768xf32, #tpu.memory_space<vmem>>, vector<1x16x512xf32>
    %278 = vector.shape_cast %277 : vector<1x16x512xf32> to vector<16x512xf32>
    %c3_264 = arith.constant 3 : index
    %c2_265 = arith.constant 2 : index
    %c0_266 = arith.constant 0 : index
    %c0_267 = arith.constant 0 : index
    %279 = vector.load %arg11[%c3_264, %c2_265, %c0_266, %c0_267] : memref<9x9x1x512xf32, #tpu.memory_space<vmem>>, vector<1x1x1x512xf32>
    %280 = vector.shape_cast %279 : vector<1x1x1x512xf32> to vector<1x512xf32>
    %281 = vector.broadcast %280 : vector<1x512xf32> to vector<16x512xf32>
    %282 = arith.mulf %278, %281 : vector<16x512xf32>
    %283 = arith.addf %276, %282 : vector<16x512xf32>
    %c3_268 = arith.constant 3 : index
    %c3_269 = arith.constant 3 : index
    %c0_270 = arith.constant 0 : index
    %284 = vector.load %arg14[%c3_268, %c3_269, %c0_270] : memref<4x24x768xf32, #tpu.memory_space<vmem>>, vector<1x16x512xf32>
    %285 = vector.shape_cast %284 : vector<1x16x512xf32> to vector<16x512xf32>
    %c3_271 = arith.constant 3 : index
    %c3_272 = arith.constant 3 : index
    %c0_273 = arith.constant 0 : index
    %c0_274 = arith.constant 0 : index
    %286 = vector.load %arg11[%c3_271, %c3_272, %c0_273, %c0_274] : memref<9x9x1x512xf32, #tpu.memory_space<vmem>>, vector<1x1x1x512xf32>
    %287 = vector.shape_cast %286 : vector<1x1x1x512xf32> to vector<1x512xf32>
    %288 = vector.broadcast %287 : vector<1x512xf32> to vector<16x512xf32>
    %289 = arith.mulf %285, %288 : vector<16x512xf32>
    %290 = arith.addf %283, %289 : vector<16x512xf32>
    %c0_275 = arith.constant 0 : index
    %c3_276 = arith.constant 3 : index
    %c128_277 = arith.constant 128 : index
    %291 = vector.load %arg14[%c0_275, %c3_276, %c128_277] : memref<4x24x768xf32, #tpu.memory_space<vmem>>, vector<1x16x512xf32>
    %292 = vector.shape_cast %291 : vector<1x16x512xf32> to vector<16x512xf32>
    %c3_278 = arith.constant 3 : index
    %c4_279 = arith.constant 4 : index
    %c0_280 = arith.constant 0 : index
    %c0_281 = arith.constant 0 : index
    %293 = vector.load %arg11[%c3_278, %c4_279, %c0_280, %c0_281] : memref<9x9x1x512xf32, #tpu.memory_space<vmem>>, vector<1x1x1x512xf32>
    %294 = vector.shape_cast %293 : vector<1x1x1x512xf32> to vector<1x512xf32>
    %295 = vector.broadcast %294 : vector<1x512xf32> to vector<16x512xf32>
    %296 = arith.mulf %292, %295 : vector<16x512xf32>
    %297 = arith.addf %290, %296 : vector<16x512xf32>
    %c1_282 = arith.constant 1 : index
    %c3_283 = arith.constant 3 : index
    %c128_284 = arith.constant 128 : index
    %298 = vector.load %arg14[%c1_282, %c3_283, %c128_284] : memref<4x24x768xf32, #tpu.memory_space<vmem>>, vector<1x16x512xf32>
    %299 = vector.shape_cast %298 : vector<1x16x512xf32> to vector<16x512xf32>
    %c3_285 = arith.constant 3 : index
    %c5_286 = arith.constant 5 : index
    %c0_287 = arith.constant 0 : index
    %c0_288 = arith.constant 0 : index
    %300 = vector.load %arg11[%c3_285, %c5_286, %c0_287, %c0_288] : memref<9x9x1x512xf32, #tpu.memory_space<vmem>>, vector<1x1x1x512xf32>
    %301 = vector.shape_cast %300 : vector<1x1x1x512xf32> to vector<1x512xf32>
    %302 = vector.broadcast %301 : vector<1x512xf32> to vector<16x512xf32>
    %303 = arith.mulf %299, %302 : vector<16x512xf32>
    %304 = arith.addf %297, %303 : vector<16x512xf32>
    %c2_289 = arith.constant 2 : index
    %c3_290 = arith.constant 3 : index
    %c128_291 = arith.constant 128 : index
    %305 = vector.load %arg14[%c2_289, %c3_290, %c128_291] : memref<4x24x768xf32, #tpu.memory_space<vmem>>, vector<1x16x512xf32>
    %306 = vector.shape_cast %305 : vector<1x16x512xf32> to vector<16x512xf32>
    %c3_292 = arith.constant 3 : index
    %c6_293 = arith.constant 6 : index
    %c0_294 = arith.constant 0 : index
    %c0_295 = arith.constant 0 : index
    %307 = vector.load %arg11[%c3_292, %c6_293, %c0_294, %c0_295] : memref<9x9x1x512xf32, #tpu.memory_space<vmem>>, vector<1x1x1x512xf32>
    %308 = vector.shape_cast %307 : vector<1x1x1x512xf32> to vector<1x512xf32>
    %309 = vector.broadcast %308 : vector<1x512xf32> to vector<16x512xf32>
    %310 = arith.mulf %306, %309 : vector<16x512xf32>
    %311 = arith.addf %304, %310 : vector<16x512xf32>
    %c3_296 = arith.constant 3 : index
    %c3_297 = arith.constant 3 : index
    %c128_298 = arith.constant 128 : index
    %312 = vector.load %arg14[%c3_296, %c3_297, %c128_298] : memref<4x24x768xf32, #tpu.memory_space<vmem>>, vector<1x16x512xf32>
    %313 = vector.shape_cast %312 : vector<1x16x512xf32> to vector<16x512xf32>
    %c3_299 = arith.constant 3 : index
    %c7_300 = arith.constant 7 : index
    %c0_301 = arith.constant 0 : index
    %c0_302 = arith.constant 0 : index
    %314 = vector.load %arg11[%c3_299, %c7_300, %c0_301, %c0_302] : memref<9x9x1x512xf32, #tpu.memory_space<vmem>>, vector<1x1x1x512xf32>
    %315 = vector.shape_cast %314 : vector<1x1x1x512xf32> to vector<1x512xf32>
    %316 = vector.broadcast %315 : vector<1x512xf32> to vector<16x512xf32>
    %317 = arith.mulf %313, %316 : vector<16x512xf32>
    %318 = arith.addf %311, %317 : vector<16x512xf32>
    %c0_303 = arith.constant 0 : index
    %c3_304 = arith.constant 3 : index
    %c256_305 = arith.constant 256 : index
    %319 = vector.load %arg14[%c0_303, %c3_304, %c256_305] : memref<4x24x768xf32, #tpu.memory_space<vmem>>, vector<1x16x512xf32>
    %320 = vector.shape_cast %319 : vector<1x16x512xf32> to vector<16x512xf32>
    %c3_306 = arith.constant 3 : index
    %c8_307 = arith.constant 8 : index
    %c0_308 = arith.constant 0 : index
    %c0_309 = arith.constant 0 : index
    %321 = vector.load %arg11[%c3_306, %c8_307, %c0_308, %c0_309] : memref<9x9x1x512xf32, #tpu.memory_space<vmem>>, vector<1x1x1x512xf32>
    %322 = vector.shape_cast %321 : vector<1x1x1x512xf32> to vector<1x512xf32>
    %323 = vector.broadcast %322 : vector<1x512xf32> to vector<16x512xf32>
    %324 = arith.mulf %320, %323 : vector<16x512xf32>
    %325 = arith.addf %318, %324 : vector<16x512xf32>
    %c0_310 = arith.constant 0 : index
    %c4_311 = arith.constant 4 : index
    %c0_312 = arith.constant 0 : index
    %326 = vector.load %arg14[%c0_310, %c4_311, %c0_312] : memref<4x24x768xf32, #tpu.memory_space<vmem>>, vector<1x16x512xf32>
    %327 = vector.shape_cast %326 : vector<1x16x512xf32> to vector<16x512xf32>
    %c4_313 = arith.constant 4 : index
    %c0_314 = arith.constant 0 : index
    %c0_315 = arith.constant 0 : index
    %c0_316 = arith.constant 0 : index
    %328 = vector.load %arg11[%c4_313, %c0_314, %c0_315, %c0_316] : memref<9x9x1x512xf32, #tpu.memory_space<vmem>>, vector<1x1x1x512xf32>
    %329 = vector.shape_cast %328 : vector<1x1x1x512xf32> to vector<1x512xf32>
    %330 = vector.broadcast %329 : vector<1x512xf32> to vector<16x512xf32>
    %331 = arith.mulf %327, %330 : vector<16x512xf32>
    %332 = arith.addf %325, %331 : vector<16x512xf32>
    %c1_317 = arith.constant 1 : index
    %c4_318 = arith.constant 4 : index
    %c0_319 = arith.constant 0 : index
    %333 = vector.load %arg14[%c1_317, %c4_318, %c0_319] : memref<4x24x768xf32, #tpu.memory_space<vmem>>, vector<1x16x512xf32>
    %334 = vector.shape_cast %333 : vector<1x16x512xf32> to vector<16x512xf32>
    %c4_320 = arith.constant 4 : index
    %c1_321 = arith.constant 1 : index
    %c0_322 = arith.constant 0 : index
    %c0_323 = arith.constant 0 : index
    %335 = vector.load %arg11[%c4_320, %c1_321, %c0_322, %c0_323] : memref<9x9x1x512xf32, #tpu.memory_space<vmem>>, vector<1x1x1x512xf32>
    %336 = vector.shape_cast %335 : vector<1x1x1x512xf32> to vector<1x512xf32>
    %337 = vector.broadcast %336 : vector<1x512xf32> to vector<16x512xf32>
    %338 = arith.mulf %334, %337 : vector<16x512xf32>
    %339 = arith.addf %332, %338 : vector<16x512xf32>
    %c2_324 = arith.constant 2 : index
    %c4_325 = arith.constant 4 : index
    %c0_326 = arith.constant 0 : index
    %340 = vector.load %arg14[%c2_324, %c4_325, %c0_326] : memref<4x24x768xf32, #tpu.memory_space<vmem>>, vector<1x16x512xf32>
    %341 = vector.shape_cast %340 : vector<1x16x512xf32> to vector<16x512xf32>
    %c4_327 = arith.constant 4 : index
    %c2_328 = arith.constant 2 : index
    %c0_329 = arith.constant 0 : index
    %c0_330 = arith.constant 0 : index
    %342 = vector.load %arg11[%c4_327, %c2_328, %c0_329, %c0_330] : memref<9x9x1x512xf32, #tpu.memory_space<vmem>>, vector<1x1x1x512xf32>
    %343 = vector.shape_cast %342 : vector<1x1x1x512xf32> to vector<1x512xf32>
    %344 = vector.broadcast %343 : vector<1x512xf32> to vector<16x512xf32>
    %345 = arith.mulf %341, %344 : vector<16x512xf32>
    %346 = arith.addf %339, %345 : vector<16x512xf32>
    %c3_331 = arith.constant 3 : index
    %c4_332 = arith.constant 4 : index
    %c0_333 = arith.constant 0 : index
    %347 = vector.load %arg14[%c3_331, %c4_332, %c0_333] : memref<4x24x768xf32, #tpu.memory_space<vmem>>, vector<1x16x512xf32>
    %348 = vector.shape_cast %347 : vector<1x16x512xf32> to vector<16x512xf32>
    %c4_334 = arith.constant 4 : index
    %c3_335 = arith.constant 3 : index
    %c0_336 = arith.constant 0 : index
    %c0_337 = arith.constant 0 : index
    %349 = vector.load %arg11[%c4_334, %c3_335, %c0_336, %c0_337] : memref<9x9x1x512xf32, #tpu.memory_space<vmem>>, vector<1x1x1x512xf32>
    %350 = vector.shape_cast %349 : vector<1x1x1x512xf32> to vector<1x512xf32>
    %351 = vector.broadcast %350 : vector<1x512xf32> to vector<16x512xf32>
    %352 = arith.mulf %348, %351 : vector<16x512xf32>
    %353 = arith.addf %346, %352 : vector<16x512xf32>
    %c0_338 = arith.constant 0 : index
    %c4_339 = arith.constant 4 : index
    %c128_340 = arith.constant 128 : index
    %354 = vector.load %arg14[%c0_338, %c4_339, %c128_340] : memref<4x24x768xf32, #tpu.memory_space<vmem>>, vector<1x16x512xf32>
    %355 = vector.shape_cast %354 : vector<1x16x512xf32> to vector<16x512xf32>
    %c4_341 = arith.constant 4 : index
    %c4_342 = arith.constant 4 : index
    %c0_343 = arith.constant 0 : index
    %c0_344 = arith.constant 0 : index
    %356 = vector.load %arg11[%c4_341, %c4_342, %c0_343, %c0_344] : memref<9x9x1x512xf32, #tpu.memory_space<vmem>>, vector<1x1x1x512xf32>
    %357 = vector.shape_cast %356 : vector<1x1x1x512xf32> to vector<1x512xf32>
    %358 = vector.broadcast %357 : vector<1x512xf32> to vector<16x512xf32>
    %359 = arith.mulf %355, %358 : vector<16x512xf32>
    %360 = arith.addf %353, %359 : vector<16x512xf32>
    %c1_345 = arith.constant 1 : index
    %c4_346 = arith.constant 4 : index
    %c128_347 = arith.constant 128 : index
    %361 = vector.load %arg14[%c1_345, %c4_346, %c128_347] : memref<4x24x768xf32, #tpu.memory_space<vmem>>, vector<1x16x512xf32>
    %362 = vector.shape_cast %361 : vector<1x16x512xf32> to vector<16x512xf32>
    %c4_348 = arith.constant 4 : index
    %c5_349 = arith.constant 5 : index
    %c0_350 = arith.constant 0 : index
    %c0_351 = arith.constant 0 : index
    %363 = vector.load %arg11[%c4_348, %c5_349, %c0_350, %c0_351] : memref<9x9x1x512xf32, #tpu.memory_space<vmem>>, vector<1x1x1x512xf32>
    %364 = vector.shape_cast %363 : vector<1x1x1x512xf32> to vector<1x512xf32>
    %365 = vector.broadcast %364 : vector<1x512xf32> to vector<16x512xf32>
    %366 = arith.mulf %362, %365 : vector<16x512xf32>
    %367 = arith.addf %360, %366 : vector<16x512xf32>
    %c2_352 = arith.constant 2 : index
    %c4_353 = arith.constant 4 : index
    %c128_354 = arith.constant 128 : index
    %368 = vector.load %arg14[%c2_352, %c4_353, %c128_354] : memref<4x24x768xf32, #tpu.memory_space<vmem>>, vector<1x16x512xf32>
    %369 = vector.shape_cast %368 : vector<1x16x512xf32> to vector<16x512xf32>
    %c4_355 = arith.constant 4 : index
    %c6_356 = arith.constant 6 : index
    %c0_357 = arith.constant 0 : index
    %c0_358 = arith.constant 0 : index
    %370 = vector.load %arg11[%c4_355, %c6_356, %c0_357, %c0_358] : memref<9x9x1x512xf32, #tpu.memory_space<vmem>>, vector<1x1x1x512xf32>
    %371 = vector.shape_cast %370 : vector<1x1x1x512xf32> to vector<1x512xf32>
    %372 = vector.broadcast %371 : vector<1x512xf32> to vector<16x512xf32>
    %373 = arith.mulf %369, %372 : vector<16x512xf32>
    %374 = arith.addf %367, %373 : vector<16x512xf32>
    %c3_359 = arith.constant 3 : index
    %c4_360 = arith.constant 4 : index
    %c128_361 = arith.constant 128 : index
    %375 = vector.load %arg14[%c3_359, %c4_360, %c128_361] : memref<4x24x768xf32, #tpu.memory_space<vmem>>, vector<1x16x512xf32>
    %376 = vector.shape_cast %375 : vector<1x16x512xf32> to vector<16x512xf32>
    %c4_362 = arith.constant 4 : index
    %c7_363 = arith.constant 7 : index
    %c0_364 = arith.constant 0 : index
    %c0_365 = arith.constant 0 : index
    %377 = vector.load %arg11[%c4_362, %c7_363, %c0_364, %c0_365] : memref<9x9x1x512xf32, #tpu.memory_space<vmem>>, vector<1x1x1x512xf32>
    %378 = vector.shape_cast %377 : vector<1x1x1x512xf32> to vector<1x512xf32>
    %379 = vector.broadcast %378 : vector<1x512xf32> to vector<16x512xf32>
    %380 = arith.mulf %376, %379 : vector<16x512xf32>
    %381 = arith.addf %374, %380 : vector<16x512xf32>
    %c0_366 = arith.constant 0 : index
    %c4_367 = arith.constant 4 : index
    %c256_368 = arith.constant 256 : index
    %382 = vector.load %arg14[%c0_366, %c4_367, %c256_368] : memref<4x24x768xf32, #tpu.memory_space<vmem>>, vector<1x16x512xf32>
    %383 = vector.shape_cast %382 : vector<1x16x512xf32> to vector<16x512xf32>
    %c4_369 = arith.constant 4 : index
    %c8_370 = arith.constant 8 : index
    %c0_371 = arith.constant 0 : index
    %c0_372 = arith.constant 0 : index
    %384 = vector.load %arg11[%c4_369, %c8_370, %c0_371, %c0_372] : memref<9x9x1x512xf32, #tpu.memory_space<vmem>>, vector<1x1x1x512xf32>
    %385 = vector.shape_cast %384 : vector<1x1x1x512xf32> to vector<1x512xf32>
    %386 = vector.broadcast %385 : vector<1x512xf32> to vector<16x512xf32>
    %387 = arith.mulf %383, %386 : vector<16x512xf32>
    %388 = arith.addf %381, %387 : vector<16x512xf32>
    %c0_373 = arith.constant 0 : index
    %c5_374 = arith.constant 5 : index
    %c0_375 = arith.constant 0 : index
    %389 = vector.load %arg14[%c0_373, %c5_374, %c0_375] : memref<4x24x768xf32, #tpu.memory_space<vmem>>, vector<1x16x512xf32>
    %390 = vector.shape_cast %389 : vector<1x16x512xf32> to vector<16x512xf32>
    %c5_376 = arith.constant 5 : index
    %c0_377 = arith.constant 0 : index
    %c0_378 = arith.constant 0 : index
    %c0_379 = arith.constant 0 : index
    %391 = vector.load %arg11[%c5_376, %c0_377, %c0_378, %c0_379] : memref<9x9x1x512xf32, #tpu.memory_space<vmem>>, vector<1x1x1x512xf32>
    %392 = vector.shape_cast %391 : vector<1x1x1x512xf32> to vector<1x512xf32>
    %393 = vector.broadcast %392 : vector<1x512xf32> to vector<16x512xf32>
    %394 = arith.mulf %390, %393 : vector<16x512xf32>
    %395 = arith.addf %388, %394 : vector<16x512xf32>
    %c1_380 = arith.constant 1 : index
    %c5_381 = arith.constant 5 : index
    %c0_382 = arith.constant 0 : index
    %396 = vector.load %arg14[%c1_380, %c5_381, %c0_382] : memref<4x24x768xf32, #tpu.memory_space<vmem>>, vector<1x16x512xf32>
    %397 = vector.shape_cast %396 : vector<1x16x512xf32> to vector<16x512xf32>
    %c5_383 = arith.constant 5 : index
    %c1_384 = arith.constant 1 : index
    %c0_385 = arith.constant 0 : index
    %c0_386 = arith.constant 0 : index
    %398 = vector.load %arg11[%c5_383, %c1_384, %c0_385, %c0_386] : memref<9x9x1x512xf32, #tpu.memory_space<vmem>>, vector<1x1x1x512xf32>
    %399 = vector.shape_cast %398 : vector<1x1x1x512xf32> to vector<1x512xf32>
    %400 = vector.broadcast %399 : vector<1x512xf32> to vector<16x512xf32>
    %401 = arith.mulf %397, %400 : vector<16x512xf32>
    %402 = arith.addf %395, %401 : vector<16x512xf32>
    %c2_387 = arith.constant 2 : index
    %c5_388 = arith.constant 5 : index
    %c0_389 = arith.constant 0 : index
    %403 = vector.load %arg14[%c2_387, %c5_388, %c0_389] : memref<4x24x768xf32, #tpu.memory_space<vmem>>, vector<1x16x512xf32>
    %404 = vector.shape_cast %403 : vector<1x16x512xf32> to vector<16x512xf32>
    %c5_390 = arith.constant 5 : index
    %c2_391 = arith.constant 2 : index
    %c0_392 = arith.constant 0 : index
    %c0_393 = arith.constant 0 : index
    %405 = vector.load %arg11[%c5_390, %c2_391, %c0_392, %c0_393] : memref<9x9x1x512xf32, #tpu.memory_space<vmem>>, vector<1x1x1x512xf32>
    %406 = vector.shape_cast %405 : vector<1x1x1x512xf32> to vector<1x512xf32>
    %407 = vector.broadcast %406 : vector<1x512xf32> to vector<16x512xf32>
    %408 = arith.mulf %404, %407 : vector<16x512xf32>
    %409 = arith.addf %402, %408 : vector<16x512xf32>
    %c3_394 = arith.constant 3 : index
    %c5_395 = arith.constant 5 : index
    %c0_396 = arith.constant 0 : index
    %410 = vector.load %arg14[%c3_394, %c5_395, %c0_396] : memref<4x24x768xf32, #tpu.memory_space<vmem>>, vector<1x16x512xf32>
    %411 = vector.shape_cast %410 : vector<1x16x512xf32> to vector<16x512xf32>
    %c5_397 = arith.constant 5 : index
    %c3_398 = arith.constant 3 : index
    %c0_399 = arith.constant 0 : index
    %c0_400 = arith.constant 0 : index
    %412 = vector.load %arg11[%c5_397, %c3_398, %c0_399, %c0_400] : memref<9x9x1x512xf32, #tpu.memory_space<vmem>>, vector<1x1x1x512xf32>
    %413 = vector.shape_cast %412 : vector<1x1x1x512xf32> to vector<1x512xf32>
    %414 = vector.broadcast %413 : vector<1x512xf32> to vector<16x512xf32>
    %415 = arith.mulf %411, %414 : vector<16x512xf32>
    %416 = arith.addf %409, %415 : vector<16x512xf32>
    %c0_401 = arith.constant 0 : index
    %c5_402 = arith.constant 5 : index
    %c128_403 = arith.constant 128 : index
    %417 = vector.load %arg14[%c0_401, %c5_402, %c128_403] : memref<4x24x768xf32, #tpu.memory_space<vmem>>, vector<1x16x512xf32>
    %418 = vector.shape_cast %417 : vector<1x16x512xf32> to vector<16x512xf32>
    %c5_404 = arith.constant 5 : index
    %c4_405 = arith.constant 4 : index
    %c0_406 = arith.constant 0 : index
    %c0_407 = arith.constant 0 : index
    %419 = vector.load %arg11[%c5_404, %c4_405, %c0_406, %c0_407] : memref<9x9x1x512xf32, #tpu.memory_space<vmem>>, vector<1x1x1x512xf32>
    %420 = vector.shape_cast %419 : vector<1x1x1x512xf32> to vector<1x512xf32>
    %421 = vector.broadcast %420 : vector<1x512xf32> to vector<16x512xf32>
    %422 = arith.mulf %418, %421 : vector<16x512xf32>
    %423 = arith.addf %416, %422 : vector<16x512xf32>
    %c1_408 = arith.constant 1 : index
    %c5_409 = arith.constant 5 : index
    %c128_410 = arith.constant 128 : index
    %424 = vector.load %arg14[%c1_408, %c5_409, %c128_410] : memref<4x24x768xf32, #tpu.memory_space<vmem>>, vector<1x16x512xf32>
    %425 = vector.shape_cast %424 : vector<1x16x512xf32> to vector<16x512xf32>
    %c5_411 = arith.constant 5 : index
    %c5_412 = arith.constant 5 : index
    %c0_413 = arith.constant 0 : index
    %c0_414 = arith.constant 0 : index
    %426 = vector.load %arg11[%c5_411, %c5_412, %c0_413, %c0_414] : memref<9x9x1x512xf32, #tpu.memory_space<vmem>>, vector<1x1x1x512xf32>
    %427 = vector.shape_cast %426 : vector<1x1x1x512xf32> to vector<1x512xf32>
    %428 = vector.broadcast %427 : vector<1x512xf32> to vector<16x512xf32>
    %429 = arith.mulf %425, %428 : vector<16x512xf32>
    %430 = arith.addf %423, %429 : vector<16x512xf32>
    %c2_415 = arith.constant 2 : index
    %c5_416 = arith.constant 5 : index
    %c128_417 = arith.constant 128 : index
    %431 = vector.load %arg14[%c2_415, %c5_416, %c128_417] : memref<4x24x768xf32, #tpu.memory_space<vmem>>, vector<1x16x512xf32>
    %432 = vector.shape_cast %431 : vector<1x16x512xf32> to vector<16x512xf32>
    %c5_418 = arith.constant 5 : index
    %c6_419 = arith.constant 6 : index
    %c0_420 = arith.constant 0 : index
    %c0_421 = arith.constant 0 : index
    %433 = vector.load %arg11[%c5_418, %c6_419, %c0_420, %c0_421] : memref<9x9x1x512xf32, #tpu.memory_space<vmem>>, vector<1x1x1x512xf32>
    %434 = vector.shape_cast %433 : vector<1x1x1x512xf32> to vector<1x512xf32>
    %435 = vector.broadcast %434 : vector<1x512xf32> to vector<16x512xf32>
    %436 = arith.mulf %432, %435 : vector<16x512xf32>
    %437 = arith.addf %430, %436 : vector<16x512xf32>
    %c3_422 = arith.constant 3 : index
    %c5_423 = arith.constant 5 : index
    %c128_424 = arith.constant 128 : index
    %438 = vector.load %arg14[%c3_422, %c5_423, %c128_424] : memref<4x24x768xf32, #tpu.memory_space<vmem>>, vector<1x16x512xf32>
    %439 = vector.shape_cast %438 : vector<1x16x512xf32> to vector<16x512xf32>
    %c5_425 = arith.constant 5 : index
    %c7_426 = arith.constant 7 : index
    %c0_427 = arith.constant 0 : index
    %c0_428 = arith.constant 0 : index
    %440 = vector.load %arg11[%c5_425, %c7_426, %c0_427, %c0_428] : memref<9x9x1x512xf32, #tpu.memory_space<vmem>>, vector<1x1x1x512xf32>
    %441 = vector.shape_cast %440 : vector<1x1x1x512xf32> to vector<1x512xf32>
    %442 = vector.broadcast %441 : vector<1x512xf32> to vector<16x512xf32>
    %443 = arith.mulf %439, %442 : vector<16x512xf32>
    %444 = arith.addf %437, %443 : vector<16x512xf32>
    %c0_429 = arith.constant 0 : index
    %c5_430 = arith.constant 5 : index
    %c256_431 = arith.constant 256 : index
    %445 = vector.load %arg14[%c0_429, %c5_430, %c256_431] : memref<4x24x768xf32, #tpu.memory_space<vmem>>, vector<1x16x512xf32>
    %446 = vector.shape_cast %445 : vector<1x16x512xf32> to vector<16x512xf32>
    %c5_432 = arith.constant 5 : index
    %c8_433 = arith.constant 8 : index
    %c0_434 = arith.constant 0 : index
    %c0_435 = arith.constant 0 : index
    %447 = vector.load %arg11[%c5_432, %c8_433, %c0_434, %c0_435] : memref<9x9x1x512xf32, #tpu.memory_space<vmem>>, vector<1x1x1x512xf32>
    %448 = vector.shape_cast %447 : vector<1x1x1x512xf32> to vector<1x512xf32>
    %449 = vector.broadcast %448 : vector<1x512xf32> to vector<16x512xf32>
    %450 = arith.mulf %446, %449 : vector<16x512xf32>
    %451 = arith.addf %444, %450 : vector<16x512xf32>
    %c0_436 = arith.constant 0 : index
    %c6_437 = arith.constant 6 : index
    %c0_438 = arith.constant 0 : index
    %452 = vector.load %arg14[%c0_436, %c6_437, %c0_438] : memref<4x24x768xf32, #tpu.memory_space<vmem>>, vector<1x16x512xf32>
    %453 = vector.shape_cast %452 : vector<1x16x512xf32> to vector<16x512xf32>
    %c6_439 = arith.constant 6 : index
    %c0_440 = arith.constant 0 : index
    %c0_441 = arith.constant 0 : index
    %c0_442 = arith.constant 0 : index
    %454 = vector.load %arg11[%c6_439, %c0_440, %c0_441, %c0_442] : memref<9x9x1x512xf32, #tpu.memory_space<vmem>>, vector<1x1x1x512xf32>
    %455 = vector.shape_cast %454 : vector<1x1x1x512xf32> to vector<1x512xf32>
    %456 = vector.broadcast %455 : vector<1x512xf32> to vector<16x512xf32>
    %457 = arith.mulf %453, %456 : vector<16x512xf32>
    %458 = arith.addf %451, %457 : vector<16x512xf32>
    %c1_443 = arith.constant 1 : index
    %c6_444 = arith.constant 6 : index
    %c0_445 = arith.constant 0 : index
    %459 = vector.load %arg14[%c1_443, %c6_444, %c0_445] : memref<4x24x768xf32, #tpu.memory_space<vmem>>, vector<1x16x512xf32>
    %460 = vector.shape_cast %459 : vector<1x16x512xf32> to vector<16x512xf32>
    %c6_446 = arith.constant 6 : index
    %c1_447 = arith.constant 1 : index
    %c0_448 = arith.constant 0 : index
    %c0_449 = arith.constant 0 : index
    %461 = vector.load %arg11[%c6_446, %c1_447, %c0_448, %c0_449] : memref<9x9x1x512xf32, #tpu.memory_space<vmem>>, vector<1x1x1x512xf32>
    %462 = vector.shape_cast %461 : vector<1x1x1x512xf32> to vector<1x512xf32>
    %463 = vector.broadcast %462 : vector<1x512xf32> to vector<16x512xf32>
    %464 = arith.mulf %460, %463 : vector<16x512xf32>
    %465 = arith.addf %458, %464 : vector<16x512xf32>
    %c2_450 = arith.constant 2 : index
    %c6_451 = arith.constant 6 : index
    %c0_452 = arith.constant 0 : index
    %466 = vector.load %arg14[%c2_450, %c6_451, %c0_452] : memref<4x24x768xf32, #tpu.memory_space<vmem>>, vector<1x16x512xf32>
    %467 = vector.shape_cast %466 : vector<1x16x512xf32> to vector<16x512xf32>
    %c6_453 = arith.constant 6 : index
    %c2_454 = arith.constant 2 : index
    %c0_455 = arith.constant 0 : index
    %c0_456 = arith.constant 0 : index
    %468 = vector.load %arg11[%c6_453, %c2_454, %c0_455, %c0_456] : memref<9x9x1x512xf32, #tpu.memory_space<vmem>>, vector<1x1x1x512xf32>
    %469 = vector.shape_cast %468 : vector<1x1x1x512xf32> to vector<1x512xf32>
    %470 = vector.broadcast %469 : vector<1x512xf32> to vector<16x512xf32>
    %471 = arith.mulf %467, %470 : vector<16x512xf32>
    %472 = arith.addf %465, %471 : vector<16x512xf32>
    %c3_457 = arith.constant 3 : index
    %c6_458 = arith.constant 6 : index
    %c0_459 = arith.constant 0 : index
    %473 = vector.load %arg14[%c3_457, %c6_458, %c0_459] : memref<4x24x768xf32, #tpu.memory_space<vmem>>, vector<1x16x512xf32>
    %474 = vector.shape_cast %473 : vector<1x16x512xf32> to vector<16x512xf32>
    %c6_460 = arith.constant 6 : index
    %c3_461 = arith.constant 3 : index
    %c0_462 = arith.constant 0 : index
    %c0_463 = arith.constant 0 : index
    %475 = vector.load %arg11[%c6_460, %c3_461, %c0_462, %c0_463] : memref<9x9x1x512xf32, #tpu.memory_space<vmem>>, vector<1x1x1x512xf32>
    %476 = vector.shape_cast %475 : vector<1x1x1x512xf32> to vector<1x512xf32>
    %477 = vector.broadcast %476 : vector<1x512xf32> to vector<16x512xf32>
    %478 = arith.mulf %474, %477 : vector<16x512xf32>
    %479 = arith.addf %472, %478 : vector<16x512xf32>
    %c0_464 = arith.constant 0 : index
    %c6_465 = arith.constant 6 : index
    %c128_466 = arith.constant 128 : index
    %480 = vector.load %arg14[%c0_464, %c6_465, %c128_466] : memref<4x24x768xf32, #tpu.memory_space<vmem>>, vector<1x16x512xf32>
    %481 = vector.shape_cast %480 : vector<1x16x512xf32> to vector<16x512xf32>
    %c6_467 = arith.constant 6 : index
    %c4_468 = arith.constant 4 : index
    %c0_469 = arith.constant 0 : index
    %c0_470 = arith.constant 0 : index
    %482 = vector.load %arg11[%c6_467, %c4_468, %c0_469, %c0_470] : memref<9x9x1x512xf32, #tpu.memory_space<vmem>>, vector<1x1x1x512xf32>
    %483 = vector.shape_cast %482 : vector<1x1x1x512xf32> to vector<1x512xf32>
    %484 = vector.broadcast %483 : vector<1x512xf32> to vector<16x512xf32>
    %485 = arith.mulf %481, %484 : vector<16x512xf32>
    %486 = arith.addf %479, %485 : vector<16x512xf32>
    %c1_471 = arith.constant 1 : index
    %c6_472 = arith.constant 6 : index
    %c128_473 = arith.constant 128 : index
    %487 = vector.load %arg14[%c1_471, %c6_472, %c128_473] : memref<4x24x768xf32, #tpu.memory_space<vmem>>, vector<1x16x512xf32>
    %488 = vector.shape_cast %487 : vector<1x16x512xf32> to vector<16x512xf32>
    %c6_474 = arith.constant 6 : index
    %c5_475 = arith.constant 5 : index
    %c0_476 = arith.constant 0 : index
    %c0_477 = arith.constant 0 : index
    %489 = vector.load %arg11[%c6_474, %c5_475, %c0_476, %c0_477] : memref<9x9x1x512xf32, #tpu.memory_space<vmem>>, vector<1x1x1x512xf32>
    %490 = vector.shape_cast %489 : vector<1x1x1x512xf32> to vector<1x512xf32>
    %491 = vector.broadcast %490 : vector<1x512xf32> to vector<16x512xf32>
    %492 = arith.mulf %488, %491 : vector<16x512xf32>
    %493 = arith.addf %486, %492 : vector<16x512xf32>
    %c2_478 = arith.constant 2 : index
    %c6_479 = arith.constant 6 : index
    %c128_480 = arith.constant 128 : index
    %494 = vector.load %arg14[%c2_478, %c6_479, %c128_480] : memref<4x24x768xf32, #tpu.memory_space<vmem>>, vector<1x16x512xf32>
    %495 = vector.shape_cast %494 : vector<1x16x512xf32> to vector<16x512xf32>
    %c6_481 = arith.constant 6 : index
    %c6_482 = arith.constant 6 : index
    %c0_483 = arith.constant 0 : index
    %c0_484 = arith.constant 0 : index
    %496 = vector.load %arg11[%c6_481, %c6_482, %c0_483, %c0_484] : memref<9x9x1x512xf32, #tpu.memory_space<vmem>>, vector<1x1x1x512xf32>
    %497 = vector.shape_cast %496 : vector<1x1x1x512xf32> to vector<1x512xf32>
    %498 = vector.broadcast %497 : vector<1x512xf32> to vector<16x512xf32>
    %499 = arith.mulf %495, %498 : vector<16x512xf32>
    %500 = arith.addf %493, %499 : vector<16x512xf32>
    %c3_485 = arith.constant 3 : index
    %c6_486 = arith.constant 6 : index
    %c128_487 = arith.constant 128 : index
    %501 = vector.load %arg14[%c3_485, %c6_486, %c128_487] : memref<4x24x768xf32, #tpu.memory_space<vmem>>, vector<1x16x512xf32>
    %502 = vector.shape_cast %501 : vector<1x16x512xf32> to vector<16x512xf32>
    %c6_488 = arith.constant 6 : index
    %c7_489 = arith.constant 7 : index
    %c0_490 = arith.constant 0 : index
    %c0_491 = arith.constant 0 : index
    %503 = vector.load %arg11[%c6_488, %c7_489, %c0_490, %c0_491] : memref<9x9x1x512xf32, #tpu.memory_space<vmem>>, vector<1x1x1x512xf32>
    %504 = vector.shape_cast %503 : vector<1x1x1x512xf32> to vector<1x512xf32>
    %505 = vector.broadcast %504 : vector<1x512xf32> to vector<16x512xf32>
    %506 = arith.mulf %502, %505 : vector<16x512xf32>
    %507 = arith.addf %500, %506 : vector<16x512xf32>
    %c0_492 = arith.constant 0 : index
    %c6_493 = arith.constant 6 : index
    %c256_494 = arith.constant 256 : index
    %508 = vector.load %arg14[%c0_492, %c6_493, %c256_494] : memref<4x24x768xf32, #tpu.memory_space<vmem>>, vector<1x16x512xf32>
    %509 = vector.shape_cast %508 : vector<1x16x512xf32> to vector<16x512xf32>
    %c6_495 = arith.constant 6 : index
    %c8_496 = arith.constant 8 : index
    %c0_497 = arith.constant 0 : index
    %c0_498 = arith.constant 0 : index
    %510 = vector.load %arg11[%c6_495, %c8_496, %c0_497, %c0_498] : memref<9x9x1x512xf32, #tpu.memory_space<vmem>>, vector<1x1x1x512xf32>
    %511 = vector.shape_cast %510 : vector<1x1x1x512xf32> to vector<1x512xf32>
    %512 = vector.broadcast %511 : vector<1x512xf32> to vector<16x512xf32>
    %513 = arith.mulf %509, %512 : vector<16x512xf32>
    %514 = arith.addf %507, %513 : vector<16x512xf32>
    %c0_499 = arith.constant 0 : index
    %c7_500 = arith.constant 7 : index
    %c0_501 = arith.constant 0 : index
    %515 = vector.load %arg14[%c0_499, %c7_500, %c0_501] : memref<4x24x768xf32, #tpu.memory_space<vmem>>, vector<1x16x512xf32>
    %516 = vector.shape_cast %515 : vector<1x16x512xf32> to vector<16x512xf32>
    %c7_502 = arith.constant 7 : index
    %c0_503 = arith.constant 0 : index
    %c0_504 = arith.constant 0 : index
    %c0_505 = arith.constant 0 : index
    %517 = vector.load %arg11[%c7_502, %c0_503, %c0_504, %c0_505] : memref<9x9x1x512xf32, #tpu.memory_space<vmem>>, vector<1x1x1x512xf32>
    %518 = vector.shape_cast %517 : vector<1x1x1x512xf32> to vector<1x512xf32>
    %519 = vector.broadcast %518 : vector<1x512xf32> to vector<16x512xf32>
    %520 = arith.mulf %516, %519 : vector<16x512xf32>
    %521 = arith.addf %514, %520 : vector<16x512xf32>
    %c1_506 = arith.constant 1 : index
    %c7_507 = arith.constant 7 : index
    %c0_508 = arith.constant 0 : index
    %522 = vector.load %arg14[%c1_506, %c7_507, %c0_508] : memref<4x24x768xf32, #tpu.memory_space<vmem>>, vector<1x16x512xf32>
    %523 = vector.shape_cast %522 : vector<1x16x512xf32> to vector<16x512xf32>
    %c7_509 = arith.constant 7 : index
    %c1_510 = arith.constant 1 : index
    %c0_511 = arith.constant 0 : index
    %c0_512 = arith.constant 0 : index
    %524 = vector.load %arg11[%c7_509, %c1_510, %c0_511, %c0_512] : memref<9x9x1x512xf32, #tpu.memory_space<vmem>>, vector<1x1x1x512xf32>
    %525 = vector.shape_cast %524 : vector<1x1x1x512xf32> to vector<1x512xf32>
    %526 = vector.broadcast %525 : vector<1x512xf32> to vector<16x512xf32>
    %527 = arith.mulf %523, %526 : vector<16x512xf32>
    %528 = arith.addf %521, %527 : vector<16x512xf32>
    %c2_513 = arith.constant 2 : index
    %c7_514 = arith.constant 7 : index
    %c0_515 = arith.constant 0 : index
    %529 = vector.load %arg14[%c2_513, %c7_514, %c0_515] : memref<4x24x768xf32, #tpu.memory_space<vmem>>, vector<1x16x512xf32>
    %530 = vector.shape_cast %529 : vector<1x16x512xf32> to vector<16x512xf32>
    %c7_516 = arith.constant 7 : index
    %c2_517 = arith.constant 2 : index
    %c0_518 = arith.constant 0 : index
    %c0_519 = arith.constant 0 : index
    %531 = vector.load %arg11[%c7_516, %c2_517, %c0_518, %c0_519] : memref<9x9x1x512xf32, #tpu.memory_space<vmem>>, vector<1x1x1x512xf32>
    %532 = vector.shape_cast %531 : vector<1x1x1x512xf32> to vector<1x512xf32>
    %533 = vector.broadcast %532 : vector<1x512xf32> to vector<16x512xf32>
    %534 = arith.mulf %530, %533 : vector<16x512xf32>
    %535 = arith.addf %528, %534 : vector<16x512xf32>
    %c3_520 = arith.constant 3 : index
    %c7_521 = arith.constant 7 : index
    %c0_522 = arith.constant 0 : index
    %536 = vector.load %arg14[%c3_520, %c7_521, %c0_522] : memref<4x24x768xf32, #tpu.memory_space<vmem>>, vector<1x16x512xf32>
    %537 = vector.shape_cast %536 : vector<1x16x512xf32> to vector<16x512xf32>
    %c7_523 = arith.constant 7 : index
    %c3_524 = arith.constant 3 : index
    %c0_525 = arith.constant 0 : index
    %c0_526 = arith.constant 0 : index
    %538 = vector.load %arg11[%c7_523, %c3_524, %c0_525, %c0_526] : memref<9x9x1x512xf32, #tpu.memory_space<vmem>>, vector<1x1x1x512xf32>
    %539 = vector.shape_cast %538 : vector<1x1x1x512xf32> to vector<1x512xf32>
    %540 = vector.broadcast %539 : vector<1x512xf32> to vector<16x512xf32>
    %541 = arith.mulf %537, %540 : vector<16x512xf32>
    %542 = arith.addf %535, %541 : vector<16x512xf32>
    %c0_527 = arith.constant 0 : index
    %c7_528 = arith.constant 7 : index
    %c128_529 = arith.constant 128 : index
    %543 = vector.load %arg14[%c0_527, %c7_528, %c128_529] : memref<4x24x768xf32, #tpu.memory_space<vmem>>, vector<1x16x512xf32>
    %544 = vector.shape_cast %543 : vector<1x16x512xf32> to vector<16x512xf32>
    %c7_530 = arith.constant 7 : index
    %c4_531 = arith.constant 4 : index
    %c0_532 = arith.constant 0 : index
    %c0_533 = arith.constant 0 : index
    %545 = vector.load %arg11[%c7_530, %c4_531, %c0_532, %c0_533] : memref<9x9x1x512xf32, #tpu.memory_space<vmem>>, vector<1x1x1x512xf32>
    %546 = vector.shape_cast %545 : vector<1x1x1x512xf32> to vector<1x512xf32>
    %547 = vector.broadcast %546 : vector<1x512xf32> to vector<16x512xf32>
    %548 = arith.mulf %544, %547 : vector<16x512xf32>
    %549 = arith.addf %542, %548 : vector<16x512xf32>
    %c1_534 = arith.constant 1 : index
    %c7_535 = arith.constant 7 : index
    %c128_536 = arith.constant 128 : index
    %550 = vector.load %arg14[%c1_534, %c7_535, %c128_536] : memref<4x24x768xf32, #tpu.memory_space<vmem>>, vector<1x16x512xf32>
    %551 = vector.shape_cast %550 : vector<1x16x512xf32> to vector<16x512xf32>
    %c7_537 = arith.constant 7 : index
    %c5_538 = arith.constant 5 : index
    %c0_539 = arith.constant 0 : index
    %c0_540 = arith.constant 0 : index
    %552 = vector.load %arg11[%c7_537, %c5_538, %c0_539, %c0_540] : memref<9x9x1x512xf32, #tpu.memory_space<vmem>>, vector<1x1x1x512xf32>
    %553 = vector.shape_cast %552 : vector<1x1x1x512xf32> to vector<1x512xf32>
    %554 = vector.broadcast %553 : vector<1x512xf32> to vector<16x512xf32>
    %555 = arith.mulf %551, %554 : vector<16x512xf32>
    %556 = arith.addf %549, %555 : vector<16x512xf32>
    %c2_541 = arith.constant 2 : index
    %c7_542 = arith.constant 7 : index
    %c128_543 = arith.constant 128 : index
    %557 = vector.load %arg14[%c2_541, %c7_542, %c128_543] : memref<4x24x768xf32, #tpu.memory_space<vmem>>, vector<1x16x512xf32>
    %558 = vector.shape_cast %557 : vector<1x16x512xf32> to vector<16x512xf32>
    %c7_544 = arith.constant 7 : index
    %c6_545 = arith.constant 6 : index
    %c0_546 = arith.constant 0 : index
    %c0_547 = arith.constant 0 : index
    %559 = vector.load %arg11[%c7_544, %c6_545, %c0_546, %c0_547] : memref<9x9x1x512xf32, #tpu.memory_space<vmem>>, vector<1x1x1x512xf32>
    %560 = vector.shape_cast %559 : vector<1x1x1x512xf32> to vector<1x512xf32>
    %561 = vector.broadcast %560 : vector<1x512xf32> to vector<16x512xf32>
    %562 = arith.mulf %558, %561 : vector<16x512xf32>
    %563 = arith.addf %556, %562 : vector<16x512xf32>
    %c3_548 = arith.constant 3 : index
    %c7_549 = arith.constant 7 : index
    %c128_550 = arith.constant 128 : index
    %564 = vector.load %arg14[%c3_548, %c7_549, %c128_550] : memref<4x24x768xf32, #tpu.memory_space<vmem>>, vector<1x16x512xf32>
    %565 = vector.shape_cast %564 : vector<1x16x512xf32> to vector<16x512xf32>
    %c7_551 = arith.constant 7 : index
    %c7_552 = arith.constant 7 : index
    %c0_553 = arith.constant 0 : index
    %c0_554 = arith.constant 0 : index
    %566 = vector.load %arg11[%c7_551, %c7_552, %c0_553, %c0_554] : memref<9x9x1x512xf32, #tpu.memory_space<vmem>>, vector<1x1x1x512xf32>
    %567 = vector.shape_cast %566 : vector<1x1x1x512xf32> to vector<1x512xf32>
    %568 = vector.broadcast %567 : vector<1x512xf32> to vector<16x512xf32>
    %569 = arith.mulf %565, %568 : vector<16x512xf32>
    %570 = arith.addf %563, %569 : vector<16x512xf32>
    %c0_555 = arith.constant 0 : index
    %c7_556 = arith.constant 7 : index
    %c256_557 = arith.constant 256 : index
    %571 = vector.load %arg14[%c0_555, %c7_556, %c256_557] : memref<4x24x768xf32, #tpu.memory_space<vmem>>, vector<1x16x512xf32>
    %572 = vector.shape_cast %571 : vector<1x16x512xf32> to vector<16x512xf32>
    %c7_558 = arith.constant 7 : index
    %c8_559 = arith.constant 8 : index
    %c0_560 = arith.constant 0 : index
    %c0_561 = arith.constant 0 : index
    %573 = vector.load %arg11[%c7_558, %c8_559, %c0_560, %c0_561] : memref<9x9x1x512xf32, #tpu.memory_space<vmem>>, vector<1x1x1x512xf32>
    %574 = vector.shape_cast %573 : vector<1x1x1x512xf32> to vector<1x512xf32>
    %575 = vector.broadcast %574 : vector<1x512xf32> to vector<16x512xf32>
    %576 = arith.mulf %572, %575 : vector<16x512xf32>
    %577 = arith.addf %570, %576 : vector<16x512xf32>
    %c0_562 = arith.constant 0 : index
    %c8_563 = arith.constant 8 : index
    %c0_564 = arith.constant 0 : index
    %578 = vector.load %arg14[%c0_562, %c8_563, %c0_564] : memref<4x24x768xf32, #tpu.memory_space<vmem>>, vector<1x16x512xf32>
    %579 = vector.shape_cast %578 : vector<1x16x512xf32> to vector<16x512xf32>
    %c8_565 = arith.constant 8 : index
    %c0_566 = arith.constant 0 : index
    %c0_567 = arith.constant 0 : index
    %c0_568 = arith.constant 0 : index
    %580 = vector.load %arg11[%c8_565, %c0_566, %c0_567, %c0_568] : memref<9x9x1x512xf32, #tpu.memory_space<vmem>>, vector<1x1x1x512xf32>
    %581 = vector.shape_cast %580 : vector<1x1x1x512xf32> to vector<1x512xf32>
    %582 = vector.broadcast %581 : vector<1x512xf32> to vector<16x512xf32>
    %583 = arith.mulf %579, %582 : vector<16x512xf32>
    %584 = arith.addf %577, %583 : vector<16x512xf32>
    %c1_569 = arith.constant 1 : index
    %c8_570 = arith.constant 8 : index
    %c0_571 = arith.constant 0 : index
    %585 = vector.load %arg14[%c1_569, %c8_570, %c0_571] : memref<4x24x768xf32, #tpu.memory_space<vmem>>, vector<1x16x512xf32>
    %586 = vector.shape_cast %585 : vector<1x16x512xf32> to vector<16x512xf32>
    %c8_572 = arith.constant 8 : index
    %c1_573 = arith.constant 1 : index
    %c0_574 = arith.constant 0 : index
    %c0_575 = arith.constant 0 : index
    %587 = vector.load %arg11[%c8_572, %c1_573, %c0_574, %c0_575] : memref<9x9x1x512xf32, #tpu.memory_space<vmem>>, vector<1x1x1x512xf32>
    %588 = vector.shape_cast %587 : vector<1x1x1x512xf32> to vector<1x512xf32>
    %589 = vector.broadcast %588 : vector<1x512xf32> to vector<16x512xf32>
    %590 = arith.mulf %586, %589 : vector<16x512xf32>
    %591 = arith.addf %584, %590 : vector<16x512xf32>
    %c2_576 = arith.constant 2 : index
    %c8_577 = arith.constant 8 : index
    %c0_578 = arith.constant 0 : index
    %592 = vector.load %arg14[%c2_576, %c8_577, %c0_578] : memref<4x24x768xf32, #tpu.memory_space<vmem>>, vector<1x16x512xf32>
    %593 = vector.shape_cast %592 : vector<1x16x512xf32> to vector<16x512xf32>
    %c8_579 = arith.constant 8 : index
    %c2_580 = arith.constant 2 : index
    %c0_581 = arith.constant 0 : index
    %c0_582 = arith.constant 0 : index
    %594 = vector.load %arg11[%c8_579, %c2_580, %c0_581, %c0_582] : memref<9x9x1x512xf32, #tpu.memory_space<vmem>>, vector<1x1x1x512xf32>
    %595 = vector.shape_cast %594 : vector<1x1x1x512xf32> to vector<1x512xf32>
    %596 = vector.broadcast %595 : vector<1x512xf32> to vector<16x512xf32>
    %597 = arith.mulf %593, %596 : vector<16x512xf32>
    %598 = arith.addf %591, %597 : vector<16x512xf32>
    %c3_583 = arith.constant 3 : index
    %c8_584 = arith.constant 8 : index
    %c0_585 = arith.constant 0 : index
    %599 = vector.load %arg14[%c3_583, %c8_584, %c0_585] : memref<4x24x768xf32, #tpu.memory_space<vmem>>, vector<1x16x512xf32>
    %600 = vector.shape_cast %599 : vector<1x16x512xf32> to vector<16x512xf32>
    %c8_586 = arith.constant 8 : index
    %c3_587 = arith.constant 3 : index
    %c0_588 = arith.constant 0 : index
    %c0_589 = arith.constant 0 : index
    %601 = vector.load %arg11[%c8_586, %c3_587, %c0_588, %c0_589] : memref<9x9x1x512xf32, #tpu.memory_space<vmem>>, vector<1x1x1x512xf32>
    %602 = vector.shape_cast %601 : vector<1x1x1x512xf32> to vector<1x512xf32>
    %603 = vector.broadcast %602 : vector<1x512xf32> to vector<16x512xf32>
    %604 = arith.mulf %600, %603 : vector<16x512xf32>
    %605 = arith.addf %598, %604 : vector<16x512xf32>
    %c0_590 = arith.constant 0 : index
    %c8_591 = arith.constant 8 : index
    %c128_592 = arith.constant 128 : index
    %606 = vector.load %arg14[%c0_590, %c8_591, %c128_592] : memref<4x24x768xf32, #tpu.memory_space<vmem>>, vector<1x16x512xf32>
    %607 = vector.shape_cast %606 : vector<1x16x512xf32> to vector<16x512xf32>
    %c8_593 = arith.constant 8 : index
    %c4_594 = arith.constant 4 : index
    %c0_595 = arith.constant 0 : index
    %c0_596 = arith.constant 0 : index
    %608 = vector.load %arg11[%c8_593, %c4_594, %c0_595, %c0_596] : memref<9x9x1x512xf32, #tpu.memory_space<vmem>>, vector<1x1x1x512xf32>
    %609 = vector.shape_cast %608 : vector<1x1x1x512xf32> to vector<1x512xf32>
    %610 = vector.broadcast %609 : vector<1x512xf32> to vector<16x512xf32>
    %611 = arith.mulf %607, %610 : vector<16x512xf32>
    %612 = arith.addf %605, %611 : vector<16x512xf32>
    %c1_597 = arith.constant 1 : index
    %c8_598 = arith.constant 8 : index
    %c128_599 = arith.constant 128 : index
    %613 = vector.load %arg14[%c1_597, %c8_598, %c128_599] : memref<4x24x768xf32, #tpu.memory_space<vmem>>, vector<1x16x512xf32>
    %614 = vector.shape_cast %613 : vector<1x16x512xf32> to vector<16x512xf32>
    %c8_600 = arith.constant 8 : index
    %c5_601 = arith.constant 5 : index
    %c0_602 = arith.constant 0 : index
    %c0_603 = arith.constant 0 : index
    %615 = vector.load %arg11[%c8_600, %c5_601, %c0_602, %c0_603] : memref<9x9x1x512xf32, #tpu.memory_space<vmem>>, vector<1x1x1x512xf32>
    %616 = vector.shape_cast %615 : vector<1x1x1x512xf32> to vector<1x512xf32>
    %617 = vector.broadcast %616 : vector<1x512xf32> to vector<16x512xf32>
    %618 = arith.mulf %614, %617 : vector<16x512xf32>
    %619 = arith.addf %612, %618 : vector<16x512xf32>
    %c2_604 = arith.constant 2 : index
    %c8_605 = arith.constant 8 : index
    %c128_606 = arith.constant 128 : index
    %620 = vector.load %arg14[%c2_604, %c8_605, %c128_606] : memref<4x24x768xf32, #tpu.memory_space<vmem>>, vector<1x16x512xf32>
    %621 = vector.shape_cast %620 : vector<1x16x512xf32> to vector<16x512xf32>
    %c8_607 = arith.constant 8 : index
    %c6_608 = arith.constant 6 : index
    %c0_609 = arith.constant 0 : index
    %c0_610 = arith.constant 0 : index
    %622 = vector.load %arg11[%c8_607, %c6_608, %c0_609, %c0_610] : memref<9x9x1x512xf32, #tpu.memory_space<vmem>>, vector<1x1x1x512xf32>
    %623 = vector.shape_cast %622 : vector<1x1x1x512xf32> to vector<1x512xf32>
    %624 = vector.broadcast %623 : vector<1x512xf32> to vector<16x512xf32>
    %625 = arith.mulf %621, %624 : vector<16x512xf32>
    %626 = arith.addf %619, %625 : vector<16x512xf32>
    %c3_611 = arith.constant 3 : index
    %c8_612 = arith.constant 8 : index
    %c128_613 = arith.constant 128 : index
    %627 = vector.load %arg14[%c3_611, %c8_612, %c128_613] : memref<4x24x768xf32, #tpu.memory_space<vmem>>, vector<1x16x512xf32>
    %628 = vector.shape_cast %627 : vector<1x16x512xf32> to vector<16x512xf32>
    %c8_614 = arith.constant 8 : index
    %c7_615 = arith.constant 7 : index
    %c0_616 = arith.constant 0 : index
    %c0_617 = arith.constant 0 : index
    %629 = vector.load %arg11[%c8_614, %c7_615, %c0_616, %c0_617] : memref<9x9x1x512xf32, #tpu.memory_space<vmem>>, vector<1x1x1x512xf32>
    %630 = vector.shape_cast %629 : vector<1x1x1x512xf32> to vector<1x512xf32>
    %631 = vector.broadcast %630 : vector<1x512xf32> to vector<16x512xf32>
    %632 = arith.mulf %628, %631 : vector<16x512xf32>
    %633 = arith.addf %626, %632 : vector<16x512xf32>
    %c0_618 = arith.constant 0 : index
    %c8_619 = arith.constant 8 : index
    %c256_620 = arith.constant 256 : index
    %634 = vector.load %arg14[%c0_618, %c8_619, %c256_620] : memref<4x24x768xf32, #tpu.memory_space<vmem>>, vector<1x16x512xf32>
    %635 = vector.shape_cast %634 : vector<1x16x512xf32> to vector<16x512xf32>
    %c8_621 = arith.constant 8 : index
    %c8_622 = arith.constant 8 : index
    %c0_623 = arith.constant 0 : index
    %c0_624 = arith.constant 0 : index
    %636 = vector.load %arg11[%c8_621, %c8_622, %c0_623, %c0_624] : memref<9x9x1x512xf32, #tpu.memory_space<vmem>>, vector<1x1x1x512xf32>
    %637 = vector.shape_cast %636 : vector<1x1x1x512xf32> to vector<1x512xf32>
    %638 = vector.broadcast %637 : vector<1x512xf32> to vector<16x512xf32>
    %639 = arith.mulf %635, %638 : vector<16x512xf32>
    %640 = arith.addf %633, %639 : vector<16x512xf32>
    %c0_625 = arith.constant 0 : index
    %c0_626 = arith.constant 0 : index
    %641 = vector.load %arg12[%c0_625, %c0_626] : memref<1x512xf32, #tpu.memory_space<vmem>>, vector<1x512xf32>
    %642 = vector.broadcast %641 : vector<1x512xf32> to vector<16x512xf32>
    %643 = arith.addf %640, %642 : vector<16x512xf32>
    %cst_627 = arith.constant 0.000000e+00 : f32
    %644 = vector.broadcast %cst_627 : f32 to vector<16x512xf32>
    %645 = arith.maximumf %643, %644 : vector<16x512xf32>
    %646 = arith.negf %645 : vector<16x512xf32>
    %647 = math.exp %646 : vector<16x512xf32>
    %cst_628 = arith.constant 1.000000e+00 : f32
    %648 = vector.broadcast %cst_628 : f32 to vector<16x512xf32>
    %649 = arith.addf %648, %647 : vector<16x512xf32>
    %650 = arith.divf %648, %649 : vector<16x512xf32>
    %651 = vector.broadcast %42 : vector<1x512xf32> to vector<16x512xf32>
    %652 = arith.mulf %651, %650 : vector<16x512xf32>
    %cst_629 = arith.constant 1.000000e+00 : f32
    %653 = vector.broadcast %cst_629 : f32 to vector<16x512xf32>
    %654 = arith.addf %653, %652 : vector<16x512xf32>
    %655 = arith.mulf %21, %654 : vector<16x512xf32>
    %c0_630 = arith.constant 0 : index
    %c0_631 = arith.constant 0 : index
    %c0_632 = arith.constant 0 : index
    %656 = vector.load %arg13[%c0_630, %c0_631, %c0_632] : memref<1x16x512xf32, #tpu.memory_space<vmem>>, vector<1x16x512xf32>
    %657 = vector.shape_cast %656 : vector<1x16x512xf32> to vector<16x512xf32>
    %658 = vector.shape_cast %655 : vector<16x512xf32> to vector<1x16x512xf32>
    tpu.vector_store %arg13[%c0_630, %c0_631, %c0_632], %658 {strides = array<i32>} : memref<1x16x512xf32, #tpu.memory_space<vmem>>, vector<1x16x512xf32>,
    return
  }
  func.func @transform_0(%arg0: i32) -> (i32, i32, i32) {
    %c0_i32 = arith.constant 0 : i32
    %c0_i32_0 = arith.constant 0 : i32
    %c0_i32_1 = arith.constant 0 : i32
    return %arg0, %c0_i32, %c0_i32_0 : i32, i32, i32
  }
  func.func @transform_1(%arg0: i32) -> (i32, i32, i32) {
    %c0_i32 = arith.constant 0 : i32
    %c0_i32_0 = arith.constant 0 : i32
    %c0_i32_1 = arith.constant 0 : i32
    %c0_i32_2 = arith.constant 0 : i32
    return %c0_i32, %c0_i32_0, %c0_i32_1 : i32, i32, i32
  }
  func.func @transform_2(%arg0: i32) -> (i32, i32) {
    %c0_i32 = arith.constant 0 : i32
    %c0_i32_0 = arith.constant 0 : i32
    %c0_i32_1 = arith.constant 0 : i32
    return %c0_i32, %c0_i32_0 : i32, i32
  }
  func.func @transform_3(%arg0: i32) -> (i32, i32) {
    %c0_i32 = arith.constant 0 : i32
    %c0_i32_0 = arith.constant 0 : i32
    %c0_i32_1 = arith.constant 0 : i32
    return %c0_i32, %c0_i32_0 : i32, i32
  }
  func.func @transform_4(%arg0: i32) -> (i32, i32) {
    %c0_i32 = arith.constant 0 : i32
    %c0_i32_0 = arith.constant 0 : i32
    %c0_i32_1 = arith.constant 0 : i32
    return %c0_i32, %c0_i32_0 : i32, i32
  }
  func.func @transform_5(%arg0: i32) -> (i32, i32) {
    %c0_i32 = arith.constant 0 : i32
    %c0_i32_0 = arith.constant 0 : i32
    %c0_i32_1 = arith.constant 0 : i32
    return %c0_i32, %c0_i32_0 : i32, i32
  }
  func.func @transform_6(%arg0: i32) -> (i32, i32) {
    %c0_i32 = arith.constant 0 : i32
    %c0_i32_0 = arith.constant 0 : i32
    %c0_i32_1 = arith.constant 0 : i32
    return %c0_i32, %c0_i32_0 : i32, i32
  }
  func.func @transform_7(%arg0: i32) -> (i32, i32) {
    %c0_i32 = arith.constant 0 : i32
    %c0_i32_0 = arith.constant 0 : i32
    %c0_i32_1 = arith.constant 0 : i32
    return %c0_i32, %c0_i32_0 : i32, i32
  }
  func.func @transform_8(%arg0: i32) -> (i32, i32) {
    %c0_i32 = arith.constant 0 : i32
    %c0_i32_0 = arith.constant 0 : i32
    %c0_i32_1 = arith.constant 0 : i32
    return %c0_i32, %c0_i32_0 : i32, i32
  }
  func.func @transform_9(%arg0: i32) -> (i32, i32) {
    %c0_i32 = arith.constant 0 : i32
    %c0_i32_0 = arith.constant 0 : i32
    %c0_i32_1 = arith.constant 0 : i32
    return %c0_i32, %c0_i32_0 : i32, i32
  }
  func.func @transform_10(%arg0: i32) -> (i32, i32, i32, i32) {
    %c0_i32 = arith.constant 0 : i32
    %c0_i32_0 = arith.constant 0 : i32
    %c0_i32_1 = arith.constant 0 : i32
    %c0_i32_2 = arith.constant 0 : i32
    %c0_i32_3 = arith.constant 0 : i32
    return %c0_i32, %c0_i32_0, %c0_i32_1, %c0_i32_2 : i32, i32, i32, i32
  }
  func.func @transform_11(%arg0: i32) -> (i32, i32) {
    %c0_i32 = arith.constant 0 : i32
    %c0_i32_0 = arith.constant 0 : i32
    %c0_i32_1 = arith.constant 0 : i32
    return %c0_i32, %c0_i32_0 : i32, i32
  }
  func.func @transform_12(%arg0: i32) -> (i32, i32, i32) {
    %c0_i32 = arith.constant 0 : i32
    %c0_i32_0 = arith.constant 0 : i32
    %c0_i32_1 = arith.constant 0 : i32
    return %arg0, %c0_i32, %c0_i32_0 : i32, i32, i32
  }
}

</mosaic_0001>

<llo_original>
// kernel: prm_forward.1
$region0: #{prm_forward.1}
  #allocation0 [shape = 'u32[]', space=smem, size = 0x4, offset = 0x4, fixed_abs, tag = 'smem constant byte address 0x4 - core index']
  #allocation1 [shape = 'u32[72,128]{1,0:T(1,128)}', space=vmem, size = 0x9000, scoped, tag = 'internal scratch']
  #allocation2 [shape = 'f32[4,24,768]{2,1,0:T(8,128)}', space=vmem, size = 0x48000, scoped, tag = 'scratch operand']
  %s0 = inlined_call_operand.vmem [shape: f32[2,18,576], index: 0, kind: input, shape index: {}]
  %s1 = inlined_call_operand.vmem [shape: f32[3,576,512], index: 1, kind: input, shape index: {}]
  %s2 = inlined_call_operand.vmem [shape: f32[1,512], index: 2, kind: input, shape index: {}]
  %s3 = inlined_call_operand.vmem [shape: f32[512,32], index: 3, kind: input, shape index: {}]
  %s4 = inlined_call_operand.vmem [shape: f32[1,32], index: 4, kind: input, shape index: {}]
  %s5 = inlined_call_operand.vmem [shape: f32[32,32], index: 5, kind: input, shape index: {}]
  %s6 = inlined_call_operand.vmem [shape: f32[1,32], index: 6, kind: input, shape index: {}]
  %s7 = inlined_call_operand.vmem [shape: f32[32,512], index: 7, kind: input, shape index: {}]
  %s8 = inlined_call_operand.vmem [shape: bf16[512,512], index: 8, kind: input, shape index: {}]
  %s9 = inlined_call_operand.vmem [shape: f32[1,512], index: 9, kind: input, shape index: {}]
  %s10 = inlined_call_operand.vmem [shape: f32[9,9,1,512], index: 10, kind: input, shape index: {}]
  %s11 = inlined_call_operand.vmem [shape: f32[1,512], index: 11, kind: input, shape index: {}]
  %s12 = inlined_call_operand.vmem [shape: f32[2,16,512], index: 12, kind: output, shape index: {}]
  %s13 = sld [smem:[#allocation0]]
  $region81: #{prm_forward.1} parent=0
    _
  %s15 = ssub.s32 1, %s13
  %s16 = scalar_select 0, %s15, %s13
  loop: start=0, step=1, limit=4
  $region2: #{prm_forward.1} parent=0 // loop_pre_header
    _
  $region3: #{prm_forward.1} parent=0 // loop_header
    %s18 = sphi 0, %s22
    %p19 = scmp.ge.s32.totalorder %s18, 4
    %s28 = sphi 0, %s30
    %s31 = sphi 0, %s28
    %s32 = sphi 0, %s31
    %s48 = sphi 0, %s32
    %s52 = sphi 0, %s52
    %s54 = sphi 0, %s52
    %s55 = sphi 0, %s54
    %s69 = sphi 0, %s55
    %s73 = sphi 0, %s73
    %s75 = sphi 0, %s73
    %s76 = sphi 0, %s75
    %s90 = sphi 0, %s76
    %s94 = sphi 0, %s94
    %s96 = sphi 0, %s94
    %s97 = sphi 0, %s96
    %s111 = sphi 0, %s97
    %s115 = sphi 0, %s115
    %s117 = sphi 0, %s115
    %s118 = sphi 0, %s117
    %s132 = sphi 0, %s118
    %s136 = sphi 0, %s136
    %s138 = sphi 0, %s136
    %s139 = sphi 0, %s138
    %s153 = sphi 0, %s139
    %s157 = sphi 0, %s157
    %s159 = sphi 0, %s157
    %s160 = sphi 0, %s159
    %s174 = sphi 0, %s160
    %s178 = sphi 0, %s178
    %s180 = sphi 0, %s178
    %s181 = sphi 0, %s180
    %s195 = sphi 0, %s181
    %s199 = sphi 0, %s199
    %s201 = sphi 0, %s199
    %s202 = sphi 0, %s201
    %s216 = sphi 0, %s202
    %s220 = sphi 0, %s220
    %s222 = sphi 0, %s220
    %s223 = sphi 0, %s222
    %s237 = sphi 0, %s223
    %s241 = sphi 0, %s241
    %s243 = sphi 0, %s241
    %s244 = sphi 0, %s243
    %s258 = sphi 0, %s244
    %s262 = sphi 0, %s262
    %s264 = sphi 0, %s262
    %s265 = sphi 0, %s264
    %s279 = sphi 0, %s265
    %s285 = sphi 0, %s287
    %s288 = sphi 0, %s285
    %s289 = sphi 0, %s288
    %s305 = sphi 0, %s289
  $region4: #{prm_forward.1} parent=0 // loop_header_branch
    %21 = sbr.rel (%p19) target = $region8
  $region5: #{prm_forward.1} parent=0 // loop_body
    %s23 = ssub.s32 %s18, 1
    %s24 = ssub.s32 %s18, 2
    %s25 = sadd.s32 %s18, 1
    %s26 = ssub.s32 %s18, %s25
    %p27 = scmp.eq.s32.totalorder %s26, 0
    %s29 = sadd.s32 %s28, 1
    %s30 = scalar_select %p27, %s28, %s29
    %p33 = pneg %p27
    %p34 = scmp.eq.s32.totalorder %s18, 1
    %p35 = por %p33, %p34
    %p36 = scmp.ne.s32.totalorder %s28, %s31
    %p37 = scmp.eq.s32.totalorder %s18, 0
    %p38 = por %p36, %p37
    %p39 = scmp.ne.s32.totalorder %s28, %s31
    %p40 = scmp.eq.s32.totalorder %s23, 1
    %p41 = por %p39, %p40
    %p42 = scmp.ne.s32.totalorder %s31, %s32
    %p43 = scmp.eq.s32.totalorder %s23, 0
    %p44 = por %p42, %p43
    %p45 = scmp.ne.s32.totalorder %s31, %s32
    %p46 = scmp.eq.s32.totalorder %s24, 1
    %p47 = por %p45, %p46
    %p49 = scmp.ne.s32.totalorder %s32, %s48
    %p50 = scmp.eq.s32.totalorder %s24, 0
    %p51 = por %p49, %p50
    %s53 = sadd.s32 %s52, 1
    %p56 = scmp.eq.s32.totalorder %s18, 1
    %p57 = scmp.ne.s32.totalorder %s52, %s54
    %p58 = scmp.eq.s32.totalorder %s18, 0
    %p59 = por %p57, %p58
    %p60 = scmp.ne.s32.totalorder %s52, %s54
    %p61 = scmp.eq.s32.totalorder %s23, 1
    %p62 = por %p60, %p61
    %p63 = scmp.ne.s32.totalorder %s54, %s55
    %p64 = scmp.eq.s32.totalorder %s23, 0
    %p65 = por %p63, %p64
    %p66 = scmp.ne.s32.totalorder %s54, %s55
    %p67 = scmp.eq.s32.totalorder %s24, 1
    %p68 = por %p66, %p67
    %p70 = scmp.ne.s32.totalorder %s55, %s69
    %p71 = scmp.eq.s32.totalorder %s24, 0
    %p72 = por %p70, %p71
    %s74 = sadd.s32 %s73, 1
    %p77 = scmp.eq.s32.totalorder %s18, 1
    %p78 = scmp.ne.s32.totalorder %s73, %s75
    %p79 = scmp.eq.s32.totalorder %s18, 0
    %p80 = por %p78, %p79
    %p81 = scmp.ne.s32.totalorder %s73, %s75
    %p82 = scmp.eq.s32.totalorder %s23, 1
    %p83 = por %p81, %p82
    %p84 = scmp.ne.s32.totalorder %s75, %s76
    %p85 = scmp.eq.s32.totalorder %s23, 0
    %p86 = por %p84, %p85
    %p87 = scmp.ne.s32.totalorder %s75, %s76
    %p88 = scmp.eq.s32.totalorder %s24, 1
    %p89 = por %p87, %p88
    %p91 = scmp.ne.s32.totalorder %s76, %s90
    %p92 = scmp.eq.s32.totalorder %s24, 0
    %p93 = por %p91, %p92
    %s95 = sadd.s32 %s94, 1
    %p98 = scmp.eq.s32.totalorder %s18, 1
    %p99 = scmp.ne.s32.totalorder %s94, %s96
    %p100 = scmp.eq.s32.totalorder %s18, 0
    %p101 = por %p99, %p100
    %p102 = scmp.ne.s32.totalorder %s94, %s96
    %p103 = scmp.eq.s32.totalorder %s23, 1
    %p104 = por %p102, %p103
    %p105 = scmp.ne.s32.totalorder %s96, %s97
    %p106 = scmp.eq.s32.totalorder %s23, 0
    %p107 = por %p105, %p106
    %p108 = scmp.ne.s32.totalorder %s96, %s97
    %p109 = scmp.eq.s32.totalorder %s24, 1
    %p110 = por %p108, %p109
    %p112 = scmp.ne.s32.totalorder %s97, %s111
    %p113 = scmp.eq.s32.totalorder %s24, 0
    %p114 = por %p112, %p113
    %s116 = sadd.s32 %s115, 1
    %p119 = scmp.eq.s32.totalorder %s18, 1
    %p120 = scmp.ne.s32.totalorder %s115, %s117
    %p121 = scmp.eq.s32.totalorder %s18, 0
    %p122 = por %p120, %p121
    %p123 = scmp.ne.s32.totalorder %s115, %s117
    %p124 = scmp.eq.s32.totalorder %s23, 1
    %p125 = por %p123, %p124
    %p126 = scmp.ne.s32.totalorder %s117, %s118
    %p127 = scmp.eq.s32.totalorder %s23, 0
    %p128 = por %p126, %p127
    %p129 = scmp.ne.s32.totalorder %s117, %s118
    %p130 = scmp.eq.s32.totalorder %s24, 1
    %p131 = por %p129, %p130
    %p133 = scmp.ne.s32.totalorder %s118, %s132
    %p134 = scmp.eq.s32.totalorder %s24, 0
    %p135 = por %p133, %p134
    %s137 = sadd.s32 %s136, 1
    %p140 = scmp.eq.s32.totalorder %s18, 1
    %p141 = scmp.ne.s32.totalorder %s136, %s138
    %p142 = scmp.eq.s32.totalorder %s18, 0
    %p143 = por %p141, %p142
    %p144 = scmp.ne.s32.totalorder %s136, %s138
    %p145 = scmp.eq.s32.totalorder %s23, 1
    %p146 = por %p144, %p145
    %p147 = scmp.ne.s32.totalorder %s138, %s139
    %p148 = scmp.eq.s32.totalorder %s23, 0
    %p149 = por %p147, %p148
    %p150 = scmp.ne.s32.totalorder %s138, %s139
    %p151 = scmp.eq.s32.totalorder %s24, 1
    %p152 = por %p150, %p151
    %p154 = scmp.ne.s32.totalorder %s139, %s153
    %p155 = scmp.eq.s32.totalorder %s24, 0
    %p156 = por %p154, %p155
    %s158 = sadd.s32 %s157, 1
    %p161 = scmp.eq.s32.totalorder %s18, 1
    %p162 = scmp.ne.s32.totalorder %s157, %s159
    %p163 = scmp.eq.s32.totalorder %s18, 0
    %p164 = por %p162, %p163
    %p165 = scmp.ne.s32.totalorder %s157, %s159
    %p166 = scmp.eq.s32.totalorder %s23, 1
    %p167 = por %p165, %p166
    %p168 = scmp.ne.s32.totalorder %s159, %s160
    %p169 = scmp.eq.s32.totalorder %s23, 0
    %p170 = por %p168, %p169
    %p171 = scmp.ne.s32.totalorder %s159, %s160
    %p172 = scmp.eq.s32.totalorder %s24, 1
    %p173 = por %p171, %p172
    %p175 = scmp.ne.s32.totalorder %s160, %s174
    %p176 = scmp.eq.s32.totalorder %s24, 0
    %p177 = por %p175, %p176
    %s179 = sadd.s32 %s178, 1
    %p182 = scmp.eq.s32.totalorder %s18, 1
    %p183 = scmp.ne.s32.totalorder %s178, %s180
    %p184 = scmp.eq.s32.totalorder %s18, 0
    %p185 = por %p183, %p184
    %p186 = scmp.ne.s32.totalorder %s178, %s180
    %p187 = scmp.eq.s32.totalorder %s23, 1
    %p188 = por %p186, %p187
    %p189 = scmp.ne.s32.totalorder %s180, %s181
    %p190 = scmp.eq.s32.totalorder %s23, 0
    %p191 = por %p189, %p190
    %p192 = scmp.ne.s32.totalorder %s180, %s181
    %p193 = scmp.eq.s32.totalorder %s24, 1
    %p194 = por %p192, %p193
    %p196 = scmp.ne.s32.totalorder %s181, %s195
    %p197 = scmp.eq.s32.totalorder %s24, 0
    %p198 = por %p196, %p197
    %s200 = sadd.s32 %s199, 1
    %p203 = scmp.eq.s32.totalorder %s18, 1
    %p204 = scmp.ne.s32.totalorder %s199, %s201
    %p205 = scmp.eq.s32.totalorder %s18, 0
    %p206 = por %p204, %p205
    %p207 = scmp.ne.s32.totalorder %s199, %s201
    %p208 = scmp.eq.s32.totalorder %s23, 1
    %p209 = por %p207, %p208
    %p210 = scmp.ne.s32.totalorder %s201, %s202
    %p211 = scmp.eq.s32.totalorder %s23, 0
    %p212 = por %p210, %p211
    %p213 = scmp.ne.s32.totalorder %s201, %s202
    %p214 = scmp.eq.s32.totalorder %s24, 1
    %p215 = por %p213, %p214
    %p217 = scmp.ne.s32.totalorder %s202, %s216
    %p218 = scmp.eq.s32.totalorder %s24, 0
    %p219 = por %p217, %p218
    %s221 = sadd.s32 %s220, 1
    %p224 = scmp.eq.s32.totalorder %s18, 1
    %p225 = scmp.ne.s32.totalorder %s220, %s222
    %p226 = scmp.eq.s32.totalorder %s18, 0
    %p227 = por %p225, %p226
    %p228 = scmp.ne.s32.totalorder %s220, %s222
    %p229 = scmp.eq.s32.totalorder %s23, 1
    %p230 = por %p228, %p229
    %p231 = scmp.ne.s32.totalorder %s222, %s223
    %p232 = scmp.eq.s32.totalorder %s23, 0
    %p233 = por %p231, %p232
    %p234 = scmp.ne.s32.totalorder %s222, %s223
    %p235 = scmp.eq.s32.totalorder %s24, 1
    %p236 = por %p234, %p235
    %p238 = scmp.ne.s32.totalorder %s223, %s237
    %p239 = scmp.eq.s32.totalorder %s24, 0
    %p240 = por %p238, %p239
    %s242 = sadd.s32 %s241, 1
    %p245 = scmp.eq.s32.totalorder %s18, 1
    %p246 = scmp.ne.s32.totalorder %s241, %s243
    %p247 = scmp.eq.s32.totalorder %s18, 0
    %p248 = por %p246, %p247
    %p249 = scmp.ne.s32.totalorder %s241, %s243
    %p250 = scmp.eq.s32.totalorder %s23, 1
    %p251 = por %p249, %p250
    %p252 = scmp.ne.s32.totalorder %s243, %s244
    %p253 = scmp.eq.s32.totalorder %s23, 0
    %p254 = por %p252, %p253
    %p255 = scmp.ne.s32.totalorder %s243, %s244
    %p256 = scmp.eq.s32.totalorder %s24, 1
    %p257 = por %p255, %p256
    %p259 = scmp.ne.s32.totalorder %s244, %s258
    %p260 = scmp.eq.s32.totalorder %s24, 0
    %p261 = por %p259, %p260
    %s263 = sadd.s32 %s262, 1
    %p266 = scmp.eq.s32.totalorder %s18, 1
    %p267 = scmp.ne.s32.totalorder %s262, %s264
    %p268 = scmp.eq.s32.totalorder %s18, 0
    %p269 = por %p267, %p268
    %p270 = scmp.ne.s32.totalorder %s262, %s264
    %p271 = scmp.eq.s32.totalorder %s23, 1
    %p272 = por %p270, %p271
    %p273 = scmp.ne.s32.totalorder %s264, %s265
    %p274 = scmp.eq.s32.totalorder %s23, 0
    %p275 = por %p273, %p274
    %p276 = scmp.ne.s32.totalorder %s264, %s265
    %p277 = scmp.eq.s32.totalorder %s24, 1
    %p278 = por %p276, %p277
    %p280 = scmp.ne.s32.totalorder %s265, %s279
    %p281 = scmp.eq.s32.totalorder %s24, 0
    %p282 = por %p280, %p281
    %s283 = ssub.s32 %s18, %s25
    %p284 = scmp.eq.s32.totalorder %s283, 0
    %s286 = sadd.s32 %s285, 1
    %s287 = scalar_select %p284, %s285, %s286
    %p290 = pneg %p284
    %p291 = scmp.eq.s32.totalorder %s18, 1
    %p292 = por %p290, %p291
    %p293 = scmp.ne.s32.totalorder %s285, %s288
    %p294 = scmp.eq.s32.totalorder %s18, 0
    %p295 = por %p293, %p294
    %p296 = scmp.ne.s32.totalorder %s285, %s288
    %p297 = scmp.eq.s32.totalorder %s23, 1
    %p298 = por %p296, %p297
    %p299 = scmp.ne.s32.totalorder %s288, %s289
    %p300 = scmp.eq.s32.totalorder %s23, 0
    %p301 = por %p299, %p300
    %p302 = scmp.ne.s32.totalorder %s288, %s289
    %p303 = scmp.eq.s32.totalorder %s24, 1
    %p304 = por %p302, %p303
    %p306 = scmp.ne.s32.totalorder %s289, %s305
    %p307 = scmp.eq.s32.totalorder %s24, 0
    %p308 = por %p306, %p307
    %p309 = scmp.le.s32.totalorder 1, %s18
    %p310 = scmp.lt.s32.totalorder %s18, 3
    %p311 = pnand %p309, %p310
    %p312 = pneg %p311
    // Predicated region
    $region9: #{prm_forward.1} parent=5 // pred_check
      _
    $region10: #{prm_forward.1} parent=5 // pred_check_branch
      %314 = sbr.rel (%p311) target = $region12
    $region11: #{prm_forward.1} parent=5 // pred_region
      %s315 = ssub.s32 %s18, 1
      // Predicated region
      $region13: #{prm_forward.1} parent=11 // pred_check
        %p316 = pneg %p65
      $region14: #{prm_forward.1} parent=11 // pred_check_branch
        %318 = sbr.rel (%p316) target = $region16
      $region15: #{prm_forward.1} parent=11 // pred_region
        _
      $region16: #{prm_forward.1} parent=11 // pred_fallthru
        _
      // Predicated region
      $region17: #{prm_forward.1} parent=11 // pred_check
        %p319 = pneg %p86
      $region18: #{prm_forward.1} parent=11 // pred_check_branch
        %321 = sbr.rel (%p319) target = $region20
      $region19: #{prm_forward.1} parent=11 // pred_region
        _
      $region20: #{prm_forward.1} parent=11 // pred_fallthru
        _
      // Predicated region
      $region21: #{prm_forward.1} parent=11 // pred_check
        %p322 = pneg %p107
      $region22: #{prm_forward.1} parent=11 // pred_check_branch
        %324 = sbr.rel (%p322) target = $region24
      $region23: #{prm_forward.1} parent=11 // pred_region
        _
      $region24: #{prm_forward.1} parent=11 // pred_fallthru
        _
      // Predicated region
      $region25: #{prm_forward.1} parent=11 // pred_check
        %p325 = pneg %p128
      $region26: #{prm_forward.1} parent=11 // pred_check_branch
        %327 = sbr.rel (%p325) target = $region28
      $region27: #{prm_forward.1} parent=11 // pred_region
        _
      $region28: #{prm_forward.1} parent=11 // pred_fallthru
        _
      // Predicated region
      $region29: #{prm_forward.1} parent=11 // pred_check
        %p328 = pneg %p149
      $region30: #{prm_forward.1} parent=11 // pred_check_branch
        %330 = sbr.rel (%p328) target = $region32
      $region31: #{prm_forward.1} parent=11 // pred_region
        _
      $region32: #{prm_forward.1} parent=11 // pred_fallthru
        _
      // Predicated region
      $region33: #{prm_forward.1} parent=11 // pred_check
        %p331 = pneg %p170
      $region34: #{prm_forward.1} parent=11 // pred_check_branch
        %333 = sbr.rel (%p331) target = $region36
      $region35: #{prm_forward.1} parent=11 // pred_region
        _
      $region36: #{prm_forward.1} parent=11 // pred_fallthru
        _
      // Predicated region
      $region37: #{prm_forward.1} parent=11 // pred_check
        %p334 = pneg %p191
      $region38: #{prm_forward.1} parent=11 // pred_check_branch
        %336 = sbr.rel (%p334) target = $region40
      $region39: #{prm_forward.1} parent=11 // pred_region
        _
      $region40: #{prm_forward.1} parent=11 // pred_fallthru
        _
      // Predicated region
      $region41: #{prm_forward.1} parent=11 // pred_check
        %p337 = pneg %p212
      $region42: #{prm_forward.1} parent=11 // pred_check_branch
        %339 = sbr.rel (%p337) target = $region44
      $region43: #{prm_forward.1} parent=11 // pred_region
        _
      $region44: #{prm_forward.1} parent=11 // pred_fallthru
        _
      // Predicated region
      $region45: #{prm_forward.1} parent=11 // pred_check
        %p340 = pneg %p233
      $region46: #{prm_forward.1} parent=11 // pred_check_branch
        %342 = sbr.rel (%p340) target = $region48
      $region47: #{prm_forward.1} parent=11 // pred_region
        _
      $region48: #{prm_forward.1} parent=11 // pred_fallthru
        _
      // Predicated region
      $region49: #{prm_forward.1} parent=11 // pred_check
        %p343 = pneg %p254
      $region50: #{prm_forward.1} parent=11 // pred_check_branch
        %345 = sbr.rel (%p343) target = $region52
      $region51: #{prm_forward.1} parent=11 // pred_region
        _
      $region52: #{prm_forward.1} parent=11 // pred_fallthru
        _
      // Predicated region
      $region53: #{prm_forward.1} parent=11 // pred_check
        %p346 = pneg %p275
      $region54: #{prm_forward.1} parent=11 // pred_check_branch
        %348 = sbr.rel (%p346) target = $region56
      $region55: #{prm_forward.1} parent=11 // pred_region
        _
      $region56: #{prm_forward.1} parent=11 // pred_fallthru
        _
    $region12: #{prm_forward.1} parent=5 // pred_fallthru
      _
    %p349 = scmp.lt.s32.totalorder %s18, 2
    // Predicated region
    $region57: #{prm_forward.1} parent=5 // pred_check
      %p350 = pneg %p349
    $region58: #{prm_forward.1} parent=5 // pred_check_branch
      %352 = sbr.rel (%p350) target = $region60
    $region59: #{prm_forward.1} parent=5 // pred_region
      // Predicated region
      $region61: #{prm_forward.1} parent=59 // pred_check
        %p353 = pneg %p38
      $region62: #{prm_forward.1} parent=59 // pred_check_branch
        %355 = sbr.rel (%p353) target = $region64
      $region63: #{prm_forward.1} parent=59 // pred_region
        %p356 = scmp.lt.s32.totalorder %s18, 1
        %s357 = scalar_select %p356, %s18, 1
        %s358 = smul.addr %s357, 15
        %s359 = smul.addr %s358, 8
        %s360 = scalar_lea.vmem %s0, %s359
      $region64: #{prm_forward.1} parent=59 // pred_fallthru
        _
    $region60: #{prm_forward.1} parent=5 // pred_fallthru
      _
    %p361 = scmp.le.s32.totalorder 1, %s18
    %p362 = scmp.lt.s32.totalorder %s18, 3
    %p363 = pnand %p361, %p362
    %p364 = pneg %p363
    // Predicated region
    $region65: #{prm_forward.1} parent=5 // pred_check
      _
    $region66: #{prm_forward.1} parent=5 // pred_check_branch
      %366 = sbr.rel (%p363) target = $region68
    $region67: #{prm_forward.1} parent=5 // pred_region
      %s367 = ssub.s32 %s18, 1
      %p368 = scmp.lt.s32.totalorder %s23, 1
      %s369 = scalar_select %p368, %s23, 1
      %s370 = smul.addr %s369, 15
      %s371 = smul.addr %s370, 8
      %s372 = scalar_lea.vmem %s0, %s371
      %p373 = pneg %p44
      %p374 = pneg %p41
      %p375 = pneg %p65
      %p376 = pneg %p62
      %p377 = pneg %p86
      %p378 = pneg %p83
      %p379 = pneg %p107
      %p380 = pneg %p104
      %p381 = pneg %p128
      %p382 = pneg %p125
      %p383 = pneg %p149
      %p384 = pneg %p146
      %p385 = pneg %p170
      %p386 = pneg %p167
      %p387 = pneg %p191
      %p388 = pneg %p188
      %p389 = pneg %p212
      %p390 = pneg %p209
      %p391 = pneg %p233
      %p392 = pneg %p230
      %p393 = pneg %p254
      %p394 = pneg %p251
      %p395 = pneg %p275
      %p396 = pneg %p272
      %p397 = pneg %p301
      %p398 = pneg %p298
      %p399 = scmp.lt.s32.totalorder %s23, 1
      %s400 = scalar_select %p399, %s23, 1
      %s401 = smul.addr %s400, 8
      %s402 = smul.addr %s401, 8
      %s403 = scalar_lea.vmem %s12, %s402
      %p404 = scmp.lt.s32.totalorder %s23, 1
      %s405 = scalar_select %p404, %s23, 1
      %s406 = smul.addr %s405, 15
      %s407 = smul.addr %s406, 8
      %s408 = scalar_lea.vmem %s0, %s407
      %p409 = scmp.lt.s32.totalorder %s23, 1
      %s410 = scalar_select %p409, %s23, 1
      %s411 = smul.addr %s410, 8
      %s412 = smul.addr %s411, 8
      %s413 = scalar_lea.vmem %s12, %s412
      %v414 = vld [vmem:[%s408] sm:$0xff]
      %v415 = vld [vmem:[%s408 + $0x8] sm:$0xff]
      %v416 = vld [vmem:[%s408 + $0x10] sm:$0xff]
      %v417 = vld [vmem:[%s408 + $0x18] sm:$0xff]
      %v418 = vld [vmem:[%s408 + $0x20] sm:$0xff]
      %v419 = vld [vmem:[%s408 + $0x28] sm:$0xff]
      %v420 = vld [vmem:[%s408 + $0x30] sm:$0xff]
      %v421 = vld [vmem:[%s408 + $0x38] sm:$0xff]
      %v422 = vld [vmem:[%s408 + $0x40] sm:$0xff]
      %v423 = vld [vmem:[%s408 + $0x48] sm:$0xff]
      %v424 = vld [vmem:[%s1] sm:$0xff]
      %v425 = vld [vmem:[%s1 + $0x8] sm:$0xff]
      %v426 = vld [vmem:[%s1 + $0x10] sm:$0xff]
      %v427 = vld [vmem:[%s1 + $0x18] sm:$0xff]
      %v428 = vld [vmem:[%s1 + $0x20] sm:$0xff]
      %v429 = vld [vmem:[%s1 + $0x28] sm:$0xff]
      %v430 = vld [vmem:[%s1 + $0x30] sm:$0xff]
      %v431 = vld [vmem:[%s1 + $0x38] sm:$0xff]
      %v432 = vld [vmem:[%s1 + $0x40] sm:$0xff]
      %v433 = vld [vmem:[%s1 + $0x48] sm:$0xff]
      %v434 = vld [vmem:[%s1 + $0x50] sm:$0xff]
      %v435 = vld [vmem:[%s1 + $0x58] sm:$0xff]
      %v436 = vld [vmem:[%s1 + $0x60] sm:$0xff]
      %v437 = vld [vmem:[%s1 + $0x68] sm:$0xff]
      %v438 = vld [vmem:[%s1 + $0x70] sm:$0xff]
      %v439 = vld [vmem:[%s1 + $0x78] sm:$0xff]
      %v440 = vld [vmem:[%s1 + $0x80] sm:$0xff]
      %v441 = vld [vmem:[%s1 + $0x88] sm:$0xff]
      %v442 = vld [vmem:[%s1 + $0x90] sm:$0xff]
      %v443 = vld [vmem:[%s1 + $0x98] sm:$0xff]
      %v444 = vld [vmem:[%s1 + $0xa0] sm:$0xff]
      %v445 = vld [vmem:[%s1 + $0xa8] sm:$0xff]
      %v446 = vld [vmem:[%s1 + $0xb0] sm:$0xff]
      %v447 = vld [vmem:[%s1 + $0xb8] sm:$0xff]
      %v448 = vld [vmem:[%s1 + $0xc0] sm:$0xff]
      %v449 = vld [vmem:[%s1 + $0xc8] sm:$0xff]
      %v450 = vld [vmem:[%s1 + $0xd0] sm:$0xff]
      %v451 = vld [vmem:[%s1 + $0xd8] sm:$0xff]
      %v452 = vld [vmem:[%s1 + $0xe0] sm:$0xff]
      %v453 = vld [vmem:[%s1 + $0xe8] sm:$0xff]
      %v454 = vld [vmem:[%s1 + $0xf0] sm:$0xff]
      %v455 = vld [vmem:[%s1 + $0xf8] sm:$0xff]
      %v456 = vld [vmem:[%s1 + $0x100] sm:$0xff]
      %v457 = vld [vmem:[%s1 + $0x108] sm:$0xff]
      %v458 = vld [vmem:[%s1 + $0x110] sm:$0xff]
      %v459 = vld [vmem:[%s1 + $0x118] sm:$0xff]
      %v460 = vld [vmem:[%s1 + $0x120] sm:$0xff]
      %v461 = vld [vmem:[%s1 + $0x128] sm:$0xff]
      %v462 = vld [vmem:[%s1 + $0x130] sm:$0xff]
      %v463 = vld [vmem:[%s1 + $0x138] sm:$0xff]
      %v464 = vld [vmem:[%s1 + $0x140] sm:$0xff]
      %v465 = vld [vmem:[%s1 + $0x148] sm:$0xff]
      %v466 = vld [vmem:[%s1 + $0x150] sm:$0xff]
      %v467 = vld [vmem:[%s1 + $0x158] sm:$0xff]
      %v468 = vld [vmem:[%s1 + $0x160] sm:$0xff]
      %v469 = vld [vmem:[%s1 + $0x168] sm:$0xff]
      %v470 = vld [vmem:[%s1 + $0x170] sm:$0xff]
      %v471 = vld [vmem:[%s1 + $0x178] sm:$0xff]
      %v472 = vld [vmem:[%s1 + $0x180] sm:$0xff]
      %v473 = vld [vmem:[%s1 + $0x188] sm:$0xff]
      %v474 = vld [vmem:[%s1 + $0x190] sm:$0xff]
      %v475 = vld [vmem:[%s1 + $0x198] sm:$0xff]
      %v476 = vld [vmem:[%s1 + $0x1a0] sm:$0xff]
      %v477 = vld [vmem:[%s1 + $0x1a8] sm:$0xff]
      %v478 = vld [vmem:[%s1 + $0x1b0] sm:$0xff]
      %v479 = vld [vmem:[%s1 + $0x1b8] sm:$0xff]
      %v480 = vld [vmem:[%s1 + $0x1c0] sm:$0xff]
      %v481 = vld [vmem:[%s1 + $0x1c8] sm:$0xff]
      %v482 = vld [vmem:[%s1 + $0x1d0] sm:$0xff]
      %v483 = vld [vmem:[%s1 + $0x1d8] sm:$0xff]
      %v484 = vld [vmem:[%s1 + $0x1e0] sm:$0xff]
      %v485 = vld [vmem:[%s1 + $0x1e8] sm:$0xff]
      %v486 = vld [vmem:[%s1 + $0x1f0] sm:$0xff]
      %v487 = vld [vmem:[%s1 + $0x1f8] sm:$0xff]
      %v488 = vld [vmem:[%s1 + $0x200] sm:$0xff]
      %v489 = vld [vmem:[%s1 + $0x208] sm:$0xff]
      %v490 = vld [vmem:[%s1 + $0x210] sm:$0xff]
      %v491 = vld [vmem:[%s1 + $0x218] sm:$0xff]
      %v492 = vld [vmem:[%s1 + $0x220] sm:$0xff]
      %v493 = vld [vmem:[%s1 + $0x228] sm:$0xff]
      %v494 = vld [vmem:[%s1 + $0x230] sm:$0xff]
      %v495 = vld [vmem:[%s1 + $0x238] sm:$0xff]
      %v496 = vld [vmem:[%s1 + $0x240] sm:$0xff]
      %v497 = vld [vmem:[%s1 + $0x248] sm:$0xff]
      %v498 = vld [vmem:[%s1 + $0x250] sm:$0xff]
      %v499 = vld [vmem:[%s1 + $0x258] sm:$0xff]
      %v500 = vld [vmem:[%s1 + $0x260] sm:$0xff]
      %v501 = vld [vmem:[%s1 + $0x268] sm:$0xff]
      %v502 = vld [vmem:[%s1 + $0x270] sm:$0xff]
      %v503 = vld [vmem:[%s1 + $0x278] sm:$0xff]
      %v504 = vld [vmem:[%s1 + $0x280] sm:$0xff]
      %v505 = vld [vmem:[%s1 + $0x288] sm:$0xff]
      %v506 = vld [vmem:[%s1 + $0x290] sm:$0xff]
      %v507 = vld [vmem:[%s1 + $0x298] sm:$0xff]
      %v508 = vld [vmem:[%s1 + $0x2a0] sm:$0xff]
      %v509 = vld [vmem:[%s1 + $0x2a8] sm:$0xff]
      %v510 = vld [vmem:[%s1 + $0x2b0] sm:$0xff]
      %v511 = vld [vmem:[%s1 + $0x2b8] sm:$0xff]
      %v512 = vld [vmem:[%s1 + $0x2c0] sm:$0xff]
      %v513 = vld [vmem:[%s1 + $0x2c8] sm:$0xff]
      %v514 = vld [vmem:[%s1 + $0x2d0] sm:$0xff]
      %v515 = vld [vmem:[%s1 + $0x2d8] sm:$0xff]
      %v516 = vld [vmem:[%s1 + $0x2e0] sm:$0xff]
      %v517 = vld [vmem:[%s1 + $0x2e8] sm:$0xff]
      %v518 = vld [vmem:[%s1 + $0x2f0] sm:$0xff]
      %v519 = vld [vmem:[%s1 + $0x2f8] sm:$0xff]
      %v520 = vld [vmem:[%s1 + $0x300] sm:$0xff]
      %v521 = vld [vmem:[%s1 + $0x308] sm:$0xff]
      %v522 = vld [vmem:[%s1 + $0x310] sm:$0xff]
      %v523 = vld [vmem:[%s1 + $0x318] sm:$0xff]
      %v524 = vld [vmem:[%s1 + $0x320] sm:$0xff]
      %v525 = vld [vmem:[%s1 + $0x328] sm:$0xff]
      %v526 = vld [vmem:[%s1 + $0x330] sm:$0xff]
      %v527 = vld [vmem:[%s1 + $0x338] sm:$0xff]
      %v528 = vld [vmem:[%s1 + $0x340] sm:$0xff]
      %v529 = vld [vmem:[%s1 + $0x348] sm:$0xff]
      %v530 = vld [vmem:[%s1 + $0x350] sm:$0xff]
      %v531 = vld [vmem:[%s1 + $0x358] sm:$0xff]
      %v532 = vld [vmem:[%s1 + $0x360] sm:$0xff]
      %v533 = vld [vmem:[%s1 + $0x368] sm:$0xff]
      %v534 = vld [vmem:[%s1 + $0x370] sm:$0xff]
      %v535 = vld [vmem:[%s1 + $0x378] sm:$0xff]
      %v536 = vld [vmem:[%s1 + $0x380] sm:$0xff]
      %v537 = vld [vmem:[%s1 + $0x388] sm:$0xff]
      %v538 = vld [vmem:[%s1 + $0x390] sm:$0xff]
      %v539 = vld [vmem:[%s1 + $0x398] sm:$0xff]
      %v540 = vld [vmem:[%s1 + $0x3a0] sm:$0xff]
      %v541 = vld [vmem:[%s1 + $0x3a8] sm:$0xff]
      %v542 = vld [vmem:[%s1 + $0x3b0] sm:$0xff]
      %v543 = vld [vmem:[%s1 + $0x3b8] sm:$0xff]
      %v544 = vld [vmem:[%s1 + $0x3c0] sm:$0xff]
      %v545 = vld [vmem:[%s1 + $0x3c8] sm:$0xff]
      %v546 = vld [vmem:[%s1 + $0x3d0] sm:$0xff]
      %v547 = vld [vmem:[%s1 + $0x3d8] sm:$0xff]
      %v548 = vld [vmem:[%s1 + $0x3e0] sm:$0xff]
      %v549 = vld [vmem:[%s1 + $0x3e8] sm:$0xff]
      %v550 = vld [vmem:[%s1 + $0x3f0] sm:$0xff]
      %v551 = vld [vmem:[%s1 + $0x3f8] sm:$0xff]
      %v552 = vld [vmem:[%s1 + $0x400] sm:$0xff]
      %v553 = vld [vmem:[%s1 + $0x408] sm:$0xff]
      %v554 = vld [vmem:[%s1 + $0x410] sm:$0xff]
      %v555 = vld [vmem:[%s1 + $0x418] sm:$0xff]
      %v556 = vld [vmem:[%s1 + $0x420] sm:$0xff]
      %v557 = vld [vmem:[%s1 + $0x428] sm:$0xff]
      %v558 = vld [vmem:[%s1 + $0x430] sm:$0xff]
      %v559 = vld [vmem:[%s1 + $0x438] sm:$0xff]
      %v560 = vld [vmem:[%s1 + $0x440] sm:$0xff]
      %v561 = vld [vmem:[%s1 + $0x448] sm:$0xff]
      %v562 = vld [vmem:[%s1 + $0x450] sm:$0xff]
      %v563 = vld [vmem:[%s1 + $0x458] sm:$0xff]
      %v564 = vld [vmem:[%s1 + $0x460] sm:$0xff]
      %v565 = vld [vmem:[%s1 + $0x468] sm:$0xff]
      %v566 = vld [vmem:[%s1 + $0x470] sm:$0xff]
      %v567 = vld [vmem:[%s1 + $0x478] sm:$0xff]
      %v568 = vld [vmem:[%s1 + $0x480] sm:$0xff]
      %v569 = vld [vmem:[%s1 + $0x488] sm:$0xff]
      %v570 = vld [vmem:[%s1 + $0x490] sm:$0xff]
      %v571 = vld [vmem:[%s1 + $0x498] sm:$0xff]
      %v572 = vld [vmem:[%s1 + $0x4a0] sm:$0xff]
      %v573 = vld [vmem:[%s1 + $0x4a8] sm:$0xff]
      %v574 = vld [vmem:[%s1 + $0x4b0] sm:$0xff]
      %v575 = vld [vmem:[%s1 + $0x4b8] sm:$0xff]
      %v576 = vld [vmem:[%s1 + $0x4c0] sm:$0xff]
      %v577 = vld [vmem:[%s1 + $0x4c8] sm:$0xff]
      %v578 = vld [vmem:[%s1 + $0x4d0] sm:$0xff]
      %v579 = vld [vmem:[%s1 + $0x4d8] sm:$0xff]
      %v580 = vld [vmem:[%s1 + $0x4e0] sm:$0xff]
      %v581 = vld [vmem:[%s1 + $0x4e8] sm:$0xff]
      %v582 = vld [vmem:[%s1 + $0x4f0] sm:$0xff]
      %v583 = vld [vmem:[%s1 + $0x4f8] sm:$0xff]
      %v584 = vld [vmem:[%s1 + $0x500] sm:$0xff]
      %v585 = vld [vmem:[%s1 + $0x508] sm:$0xff]
      %v586 = vld [vmem:[%s1 + $0x510] sm:$0xff]
      %v587 = vld [vmem:[%s1 + $0x518] sm:$0xff]
      %v588 = vld [vmem:[%s1 + $0x520] sm:$0xff]
      %v589 = vld [vmem:[%s1 + $0x528] sm:$0xff]
      %v590 = vld [vmem:[%s1 + $0x530] sm:$0xff]
      %v591 = vld [vmem:[%s1 + $0x538] sm:$0xff]
      %v592 = vld [vmem:[%s1 + $0x540] sm:$0xff]
      %v593 = vld [vmem:[%s1 + $0x548] sm:$0xff]
      %v594 = vld [vmem:[%s1 + $0x550] sm:$0xff]
      %v595 = vld [vmem:[%s1 + $0x558] sm:$0xff]
      %v596 = vld [vmem:[%s1 + $0x560] sm:$0xff]
      %v597 = vld [vmem:[%s1 + $0x568] sm:$0xff]
      %v598 = vld [vmem:[%s1 + $0x570] sm:$0xff]
      %v599 = vld [vmem:[%s1 + $0x578] sm:$0xff]
      %v600 = vld [vmem:[%s1 + $0x580] sm:$0xff]
      %v601 = vld [vmem:[%s1 + $0x588] sm:$0xff]
      %v602 = vld [vmem:[%s1 + $0x590] sm:$0xff]
      %v603 = vld [vmem:[%s1 + $0x598] sm:$0xff]
      %v604 = vld [vmem:[%s1 + $0x5a0] sm:$0xff]
      %v605 = vld [vmem:[%s1 + $0x5a8] sm:$0xff]
      %v606 = vld [vmem:[%s1 + $0x5b0] sm:$0xff]
      %v607 = vld [vmem:[%s1 + $0x5b8] sm:$0xff]
      %v608 = vld [vmem:[%s1 + $0x5c0] sm:$0xff]
      %v609 = vld [vmem:[%s1 + $0x5c8] sm:$0xff]
      %v610 = vld [vmem:[%s1 + $0x5d0] sm:$0xff]
      %v611 = vld [vmem:[%s1 + $0x5d8] sm:$0xff]
      %v612 = vld [vmem:[%s1 + $0x5e0] sm:$0xff]
      %v613 = vld [vmem:[%s1 + $0x5e8] sm:$0xff]
      %v614 = vld [vmem:[%s1 + $0x5f0] sm:$0xff]
      %v615 = vld [vmem:[%s1 + $0x5f8] sm:$0xff]
      %v616 = vld [vmem:[%s1 + $0x600] sm:$0xff]
      %v617 = vld [vmem:[%s1 + $0x608] sm:$0xff]
      %v618 = vld [vmem:[%s1 + $0x610] sm:$0xff]
      %v619 = vld [vmem:[%s1 + $0x618] sm:$0xff]
      %v620 = vld [vmem:[%s1 + $0x620] sm:$0xff]
      %v621 = vld [vmem:[%s1 + $0x628] sm:$0xff]
      %v622 = vld [vmem:[%s1 + $0x630] sm:$0xff]
      %v623 = vld [vmem:[%s1 + $0x638] sm:$0xff]
      %v624 = vld [vmem:[%s1 + $0x640] sm:$0xff]
      %v625 = vld [vmem:[%s1 + $0x648] sm:$0xff]
      %v626 = vld [vmem:[%s1 + $0x650] sm:$0xff]
      %v627 = vld [vmem:[%s1 + $0x658] sm:$0xff]
      %v628 = vld [vmem:[%s1 + $0x660] sm:$0xff]
      %v629 = vld [vmem:[%s1 + $0x668] sm:$0xff]
      %v630 = vld [vmem:[%s1 + $0x670] sm:$0xff]
      %v631 = vld [vmem:[%s1 + $0x678] sm:$0xff]
      %v632 = vld [vmem:[%s1 + $0x680] sm:$0xff]
      %v633 = vld [vmem:[%s1 + $0x688] sm:$0xff]
      %v634 = vld [vmem:[%s1 + $0x690] sm:$0xff]
      %v635 = vld [vmem:[%s1 + $0x698] sm:$0xff]
      %v636 = vld [vmem:[%s1 + $0x6a0] sm:$0xff]
      %v637 = vld [vmem:[%s1 + $0x6a8] sm:$0xff]
      %v638 = vld [vmem:[%s1 + $0x6b0] sm:$0xff]
      %v639 = vld [vmem:[%s1 + $0x6b8] sm:$0xff]
      %v640 = vld [vmem:[%s1 + $0x6c0] sm:$0xff]
      %v641 = vld [vmem:[%s1 + $0x6c8] sm:$0xff]
      %v642 = vld [vmem:[%s1 + $0x6d0] sm:$0xff]
      %v643 = vld [vmem:[%s1 + $0x6d8] sm:$0xff]
      %v644 = vld [vmem:[%s1 + $0x6e0] sm:$0xff]
      %v645 = vld [vmem:[%s1 + $0x6e8] sm:$0xff]
      %v646 = vld [vmem:[%s1 + $0x6f0] sm:$0xff]
      %v647 = vld [vmem:[%s1 + $0x6f8] sm:$0xff]
      %v648 = vld [vmem:[%s1 + $0x700] sm:$0xff]
      %v649 = vld [vmem:[%s1 + $0x708] sm:$0xff]
      %v650 = vld [vmem:[%s1 + $0x710] sm:$0xff]
      %v651 = vld [vmem:[%s1 + $0x718] sm:$0xff]
      %v652 = vld [vmem:[%s1 + $0x720] sm:$0xff]
      %v653 = vld [vmem:[%s1 + $0x728] sm:$0xff]
      %v654 = vld [vmem:[%s1 + $0x730] sm:$0xff]
      %v655 = vld [vmem:[%s1 + $0x738] sm:$0xff]
      %v656 = vld [vmem:[%s1 + $0x740] sm:$0xff]
      %v657 = vld [vmem:[%s1 + $0x748] sm:$0xff]
      %v658 = vld [vmem:[%s1 + $0x750] sm:$0xff]
      %v659 = vld [vmem:[%s1 + $0x758] sm:$0xff]
      %v660 = vld [vmem:[%s1 + $0x760] sm:$0xff]
      %v661 = vld [vmem:[%s1 + $0x768] sm:$0xff]
      %v662 = vld [vmem:[%s1 + $0x770] sm:$0xff]
      %v663 = vld [vmem:[%s1 + $0x778] sm:$0xff]
      %v664 = vld [vmem:[%s1 + $0x780] sm:$0xff]
      %v665 = vld [vmem:[%s1 + $0x788] sm:$0xff]
      %v666 = vld [vmem:[%s1 + $0x790] sm:$0xff]
      %v667 = vld [vmem:[%s1 + $0x798] sm:$0xff]
      %v668 = vld [vmem:[%s1 + $0x7a0] sm:$0xff]
      %v669 = vld [vmem:[%s1 + $0x7a8] sm:$0xff]
      %v670 = vld [vmem:[%s1 + $0x7b0] sm:$0xff]
      %v671 = vld [vmem:[%s1 + $0x7b8] sm:$0xff]
      %v672 = vld [vmem:[%s1 + $0x7c0] sm:$0xff]
      %v673 = vld [vmem:[%s1 + $0x7c8] sm:$0xff]
      %v674 = vld [vmem:[%s1 + $0x7d0] sm:$0xff]
      %v675 = vld [vmem:[%s1 + $0x7d8] sm:$0xff]
      %v676 = vld [vmem:[%s1 + $0x7e0] sm:$0xff]
      %v677 = vld [vmem:[%s1 + $0x7e8] sm:$0xff]
      %v678 = vld [vmem:[%s1 + $0x7f0] sm:$0xff]
      %v679 = vld [vmem:[%s1 + $0x7f8] sm:$0xff]
      %v680 = vld [vmem:[%s1 + $0x800] sm:$0xff]
      %v681 = vld [vmem:[%s1 + $0x808] sm:$0xff]
      %v682 = vld [vmem:[%s1 + $0x810] sm:$0xff]
      %v683 = vld [vmem:[%s1 + $0x818] sm:$0xff]
      %v684 = vld [vmem:[%s1 + $0x820] sm:$0xff]
      %v685 = vld [vmem:[%s1 + $0x828] sm:$0xff]
      %v686 = vld [vmem:[%s1 + $0x830] sm:$0xff]
      %v687 = vld [vmem:[%s1 + $0x838] sm:$0xff]
      %v688 = vld [vmem:[%s1 + $0x840] sm:$0xff]
      %v689 = vld [vmem:[%s1 + $0x848] sm:$0xff]
      %v690 = vld [vmem:[%s1 + $0x850] sm:$0xff]
      %v691 = vld [vmem:[%s1 + $0x858] sm:$0xff]
      %v692 = vld [vmem:[%s1 + $0x860] sm:$0xff]
      %v693 = vld [vmem:[%s1 + $0x868] sm:$0xff]
      %v694 = vld [vmem:[%s1 + $0x870] sm:$0xff]
      %v695 = vld [vmem:[%s1 + $0x878] sm:$0xff]
      %v696 = vld [vmem:[%s1 + $0x880] sm:$0xff]
      %v697 = vld [vmem:[%s1 + $0x888] sm:$0xff]
      %v698 = vld [vmem:[%s1 + $0x890] sm:$0xff]
      %v699 = vld [vmem:[%s1 + $0x898] sm:$0xff]
      %v700 = vld [vmem:[%s1 + $0x8a0] sm:$0xff]
      %v701 = vld [vmem:[%s1 + $0x8a8] sm:$0xff]
      %v702 = vld [vmem:[%s1 + $0x8b0] sm:$0xff]
      %v703 = vld [vmem:[%s1 + $0x8b8] sm:$0xff]
      %v704 = vld [vmem:[%s1 + $0x8c0] sm:$0xff]
      %v705 = vld [vmem:[%s1 + $0x8c8] sm:$0xff]
      %v706 = vld [vmem:[%s1 + $0x8d0] sm:$0xff]
      %v707 = vld [vmem:[%s1 + $0x8d8] sm:$0xff]
      %v708 = vld [vmem:[%s1 + $0x8e0] sm:$0xff]
      %v709 = vld [vmem:[%s1 + $0x8e8] sm:$0xff]
      %v710 = vld [vmem:[%s1 + $0x8f0] sm:$0xff]
      %v711 = vld [vmem:[%s1 + $0x8f8] sm:$0xff]
      %v712 = vld [vmem:[%s408] sm:$0xfe]
      %v713 = vld [vmem:[%s408 + $0x8] sm:$0xfe]
      %v714 = vld [vmem:[%s408 + $0x10] sm:$0xfe]
      %v715 = vld [vmem:[%s408 + $0x18] sm:$0xfe]
      %v716 = vld [vmem:[%s408 + $0x20] sm:$0xfe]
      %v717 = vld [vmem:[%s408 + $0x50] sm:$0x1]
      %v718 = vld [vmem:[%s408 + $0x58] sm:$0x1]
      %v719 = vld [vmem:[%s408 + $0x60] sm:$0x1]
      %v720 = vld [vmem:[%s408 + $0x68] sm:$0x1]
      %v721 = vld [vmem:[%s408 + $0x70] sm:$0x1]
      %s722 = scalar_lea.vmem %s1, 2304
      %v723 = vld [vmem:[%s722] sm:$0xff]
      %v724 = vld [vmem:[%s722 + $0x8] sm:$0xff]
      %v725 = vld [vmem:[%s722 + $0x10] sm:$0xff]
      %v726 = vld [vmem:[%s722 + $0x18] sm:$0xff]
      %v727 = vld [vmem:[%s722 + $0x20] sm:$0xff]
      %v728 = vld [vmem:[%s722 + $0x28] sm:$0xff]
      %v729 = vld [vmem:[%s722 + $0x30] sm:$0xff]
      %v730 = vld [vmem:[%s722 + $0x38] sm:$0xff]
      %v731 = vld [vmem:[%s722 + $0x40] sm:$0xff]
      %v732 = vld [vmem:[%s722 + $0x48] sm:$0xff]
      %v733 = vld [vmem:[%s722 + $0x50] sm:$0xff]
      %v734 = vld [vmem:[%s722 + $0x58] sm:$0xff]
      %v735 = vld [vmem:[%s722 + $0x60] sm:$0xff]
      %v736 = vld [vmem:[%s722 + $0x68] sm:$0xff]
      %v737 = vld [vmem:[%s722 + $0x70] sm:$0xff]
      %v738 = vld [vmem:[%s722 + $0x78] sm:$0xff]
      %v739 = vld [vmem:[%s722 + $0x80] sm:$0xff]
      %v740 = vld [vmem:[%s722 + $0x88] sm:$0xff]
      %v741 = vld [vmem:[%s722 + $0x90] sm:$0xff]
      %v742 = vld [vmem:[%s722 + $0x98] sm:$0xff]
      %v743 = vld [vmem:[%s722 + $0xa0] sm:$0xff]
      %v744 = vld [vmem:[%s722 + $0xa8] sm:$0xff]
      %v745 = vld [vmem:[%s722 + $0xb0] sm:$0xff]
      %v746 = vld [vmem:[%s722 + $0xb8] sm:$0xff]
      %v747 = vld [vmem:[%s722 + $0xc0] sm:$0xff]
      %v748 = vld [vmem:[%s722 + $0xc8] sm:$0xff]
      %v749 = vld [vmem:[%s722 + $0xd0] sm:$0xff]
      %v750 = vld [vmem:[%s722 + $0xd8] sm:$0xff]
      %v751 = vld [vmem:[%s722 + $0xe0] sm:$0xff]
      %v752 = vld [vmem:[%s722 + $0xe8] sm:$0xff]
      %v753 = vld [vmem:[%s722 + $0xf0] sm:$0xff]
      %v754 = vld [vmem:[%s722 + $0xf8] sm:$0xff]
      %v755 = vld [vmem:[%s722 + $0x100] sm:$0xff]
      %v756 = vld [vmem:[%s722 + $0x108] sm:$0xff]
      %v757 = vld [vmem:[%s722 + $0x110] sm:$0xff]
      %v758 = vld [vmem:[%s722 + $0x118] sm:$0xff]
      %v759 = vld [vmem:[%s722 + $0x120] sm:$0xff]
      %v760 = vld [vmem:[%s722 + $0x128] sm:$0xff]
      %v761 = vld [vmem:[%s722 + $0x130] sm:$0xff]
      %v762 = vld [vmem:[%s722 + $0x138] sm:$0xff]
      %v763 = vld [vmem:[%s722 + $0x140] sm:$0xff]
      %v764 = vld [vmem:[%s722 + $0x148] sm:$0xff]
      %v765 = vld [vmem:[%s722 + $0x150] sm:$0xff]
      %v766 = vld [vmem:[%s722 + $0x158] sm:$0xff]
      %v767 = vld [vmem:[%s722 + $0x160] sm:$0xff]
      %v768 = vld [vmem:[%s722 + $0x168] sm:$0xff]
      %v769 = vld [vmem:[%s722 + $0x170] sm:$0xff]
      %v770 = vld [vmem:[%s722 + $0x178] sm:$0xff]
      %v771 = vld [vmem:[%s722 + $0x180] sm:$0xff]
      %v772 = vld [vmem:[%s722 + $0x188] sm:$0xff]
      %v773 = vld [vmem:[%s722 + $0x190] sm:$0xff]
      %v774 = vld [vmem:[%s722 + $0x198] sm:$0xff]
      %v775 = vld [vmem:[%s722 + $0x1a0] sm:$0xff]
      %v776 = vld [vmem:[%s722 + $0x1a8] sm:$0xff]
      %v777 = vld [vmem:[%s722 + $0x1b0] sm:$0xff]
      %v778 = vld [vmem:[%s722 + $0x1b8] sm:$0xff]
      %v779 = vld [vmem:[%s722 + $0x1c0] sm:$0xff]
      %v780 = vld [vmem:[%s722 + $0x1c8] sm:$0xff]
      %v781 = vld [vmem:[%s722 + $0x1d0] sm:$0xff]
      %v782 = vld [vmem:[%s722 + $0x1d8] sm:$0xff]
      %v783 = vld [vmem:[%s722 + $0x1e0] sm:$0xff]
      %v784 = vld [vmem:[%s722 + $0x1e8] sm:$0xff]
      %v785 = vld [vmem:[%s722 + $0x1f0] sm:$0xff]
      %v786 = vld [vmem:[%s722 + $0x1f8] sm:$0xff]
      %v787 = vld [vmem:[%s722 + $0x200] sm:$0xff]
      %v788 = vld [vmem:[%s722 + $0x208] sm:$0xff]
      %v789 = vld [vmem:[%s722 + $0x210] sm:$0xff]
      %v790 = vld [vmem:[%s722 + $0x218] sm:$0xff]
      %v791 = vld [vmem:[%s722 + $0x220] sm:$0xff]
      %v792 = vld [vmem:[%s722 + $0x228] sm:$0xff]
      %v793 = vld [vmem:[%s722 + $0x230] sm:$0xff]
      %v794 = vld [vmem:[%s722 + $0x238] sm:$0xff]
      %v795 = vld [vmem:[%s722 + $0x240] sm:$0xff]
      %v796 = vld [vmem:[%s722 + $0x248] sm:$0xff]
      %v797 = vld [vmem:[%s722 + $0x250] sm:$0xff]
      %v798 = vld [vmem:[%s722 + $0x258] sm:$0xff]
      %v799 = vld [vmem:[%s722 + $0x260] sm:$0xff]
      %v800 = vld [vmem:[%s722 + $0x268] sm:$0xff]
      %v801 = vld [vmem:[%s722 + $0x270] sm:$0xff]
      %v802 = vld [vmem:[%s722 + $0x278] sm:$0xff]
      %v803 = vld [vmem:[%s722 + $0x280] sm:$0xff]
      %v804 = vld [vmem:[%s722 + $0x288] sm:$0xff]
      %v805 = vld [vmem:[%s722 + $0x290] sm:$0xff]
      %v806 = vld [vmem:[%s722 + $0x298] sm:$0xff]
      %v807 = vld [vmem:[%s722 + $0x2a0] sm:$0xff]
      %v808 = vld [vmem:[%s722 + $0x2a8] sm:$0xff]
      %v809 = vld [vmem:[%s722 + $0x2b0] sm:$0xff]
      %v810 = vld [vmem:[%s722 + $0x2b8] sm:$0xff]
      %v811 = vld [vmem:[%s722 + $0x2c0] sm:$0xff]
      %v812 = vld [vmem:[%s722 + $0x2c8] sm:$0xff]
      %v813 = vld [vmem:[%s722 + $0x2d0] sm:$0xff]
      %v814 = vld [vmem:[%s722 + $0x2d8] sm:$0xff]
      %v815 = vld [vmem:[%s722 + $0x2e0] sm:$0xff]
      %v816 = vld [vmem:[%s722 + $0x2e8] sm:$0xff]
      %v817 = vld [vmem:[%s722 + $0x2f0] sm:$0xff]
      %v818 = vld [vmem:[%s722 + $0x2f8] sm:$0xff]
      %v819 = vld [vmem:[%s722 + $0x300] sm:$0xff]
      %v820 = vld [vmem:[%s722 + $0x308] sm:$0xff]
      %v821 = vld [vmem:[%s722 + $0x310] sm:$0xff]
      %v822 = vld [vmem:[%s722 + $0x318] sm:$0xff]
      %v823 = vld [vmem:[%s722 + $0x320] sm:$0xff]
      %v824 = vld [vmem:[%s722 + $0x328] sm:$0xff]
      %v825 = vld [vmem:[%s722 + $0x330] sm:$0xff]
      %v826 = vld [vmem:[%s722 + $0x338] sm:$0xff]
      %v827 = vld [vmem:[%s722 + $0x340] sm:$0xff]
      %v828 = vld [vmem:[%s722 + $0x348] sm:$0xff]
      %v829 = vld [vmem:[%s722 + $0x350] sm:$0xff]
      %v830 = vld [vmem:[%s722 + $0x358] sm:$0xff]
      %v831 = vld [vmem:[%s722 + $0x360] sm:$0xff]
      %v832 = vld [vmem:[%s722 + $0x368] sm:$0xff]
      %v833 = vld [vmem:[%s722 + $0x370] sm:$0xff]
      %v834 = vld [vmem:[%s722 + $0x378] sm:$0xff]
      %v835 = vld [vmem:[%s722 + $0x380] sm:$0xff]
      %v836 = vld [vmem:[%s722 + $0x388] sm:$0xff]
      %v837 = vld [vmem:[%s722 + $0x390] sm:$0xff]
      %v838 = vld [vmem:[%s722 + $0x398] sm:$0xff]
      %v839 = vld [vmem:[%s722 + $0x3a0] sm:$0xff]
      %v840 = vld [vmem:[%s722 + $0x3a8] sm:$0xff]
      %v841 = vld [vmem:[%s722 + $0x3b0] sm:$0xff]
      %v842 = vld [vmem:[%s722 + $0x3b8] sm:$0xff]
      %v843 = vld [vmem:[%s722 + $0x3c0] sm:$0xff]
      %v844 = vld [vmem:[%s722 + $0x3c8] sm:$0xff]
      %v845 = vld [vmem:[%s722 + $0x3d0] sm:$0xff]
      %v846 = vld [vmem:[%s722 + $0x3d8] sm:$0xff]
      %v847 = vld [vmem:[%s722 + $0x3e0] sm:$0xff]
      %v848 = vld [vmem:[%s722 + $0x3e8] sm:$0xff]
      %v849 = vld [vmem:[%s722 + $0x3f0] sm:$0xff]
      %v850 = vld [vmem:[%s722 + $0x3f8] sm:$0xff]
      %v851 = vld [vmem:[%s722 + $0x400] sm:$0xff]
      %v852 = vld [vmem:[%s722 + $0x408] sm:$0xff]
      %v853 = vld [vmem:[%s722 + $0x410] sm:$0xff]
      %v854 = vld [vmem:[%s722 + $0x418] sm:$0xff]
      %v855 = vld [vmem:[%s722 + $0x420] sm:$0xff]
      %v856 = vld [vmem:[%s722 + $0x428] sm:$0xff]
      %v857 = vld [vmem:[%s722 + $0x430] sm:$0xff]
      %v858 = vld [vmem:[%s722 + $0x438] sm:$0xff]
      %v859 = vld [vmem:[%s722 + $0x440] sm:$0xff]
      %v860 = vld [vmem:[%s722 + $0x448] sm:$0xff]
      %v861 = vld [vmem:[%s722 + $0x450] sm:$0xff]
      %v862 = vld [vmem:[%s722 + $0x458] sm:$0xff]
      %v863 = vld [vmem:[%s722 + $0x460] sm:$0xff]
      %v864 = vld [vmem:[%s722 + $0x468] sm:$0xff]
      %v865 = vld [vmem:[%s722 + $0x470] sm:$0xff]
      %v866 = vld [vmem:[%s722 + $0x478] sm:$0xff]
      %v867 = vld [vmem:[%s722 + $0x480] sm:$0xff]
      %v868 = vld [vmem:[%s722 + $0x488] sm:$0xff]
      %v869 = vld [vmem:[%s722 + $0x490] sm:$0xff]
      %v870 = vld [vmem:[%s722 + $0x498] sm:$0xff]
      %v871 = vld [vmem:[%s722 + $0x4a0] sm:$0xff]
      %v872 = vld [vmem:[%s722 + $0x4a8] sm:$0xff]
      %v873 = vld [vmem:[%s722 + $0x4b0] sm:$0xff]
      %v874 = vld [vmem:[%s722 + $0x4b8] sm:$0xff]
      %v875 = vld [vmem:[%s722 + $0x4c0] sm:$0xff]
      %v876 = vld [vmem:[%s722 + $0x4c8] sm:$0xff]
      %v877 = vld [vmem:[%s722 + $0x4d0] sm:$0xff]
      %v878 = vld [vmem:[%s722 + $0x4d8] sm:$0xff]
      %v879 = vld [vmem:[%s722 + $0x4e0] sm:$0xff]
      %v880 = vld [vmem:[%s722 + $0x4e8] sm:$0xff]
      %v881 = vld [vmem:[%s722 + $0x4f0] sm:$0xff]
      %v882 = vld [vmem:[%s722 + $0x4f8] sm:$0xff]
      %v883 = vld [vmem:[%s722 + $0x500] sm:$0xff]
      %v884 = vld [vmem:[%s722 + $0x508] sm:$0xff]
      %v885 = vld [vmem:[%s722 + $0x510] sm:$0xff]
      %v886 = vld [vmem:[%s722 + $0x518] sm:$0xff]
      %v887 = vld [vmem:[%s722 + $0x520] sm:$0xff]
      %v888 = vld [vmem:[%s722 + $0x528] sm:$0xff]
      %v889 = vld [vmem:[%s722 + $0x530] sm:$0xff]
      %v890 = vld [vmem:[%s722 + $0x538] sm:$0xff]
      %v891 = vld [vmem:[%s722 + $0x540] sm:$0xff]
      %v892 = vld [vmem:[%s722 + $0x548] sm:$0xff]
      %v893 = vld [vmem:[%s722 + $0x550] sm:$0xff]
      %v894 = vld [vmem:[%s722 + $0x558] sm:$0xff]
      %v895 = vld [vmem:[%s722 + $0x560] sm:$0xff]
      %v896 = vld [vmem:[%s722 + $0x568] sm:$0xff]
      %v897 = vld [vmem:[%s722 + $0x570] sm:$0xff]
      %v898 = vld [vmem:[%s722 + $0x578] sm:$0xff]
      %v899 = vld [vmem:[%s722 + $0x580] sm:$0xff]
      %v900 = vld [vmem:[%s722 + $0x588] sm:$0xff]
      %v901 = vld [vmem:[%s722 + $0x590] sm:$0xff]
      %v902 = vld [vmem:[%s722 + $0x598] sm:$0xff]
      %v903 = vld [vmem:[%s722 + $0x5a0] sm:$0xff]
      %v904 = vld [vmem:[%s722 + $0x5a8] sm:$0xff]
      %v905 = vld [vmem:[%s722 + $0x5b0] sm:$0xff]
      %v906 = vld [vmem:[%s722 + $0x5b8] sm:$0xff]
      %v907 = vld [vmem:[%s722 + $0x5c0] sm:$0xff]
      %v908 = vld [vmem:[%s722 + $0x5c8] sm:$0xff]
      %v909 = vld [vmem:[%s722 + $0x5d0] sm:$0xff]
      %v910 = vld [vmem:[%s722 + $0x5d8] sm:$0xff]
      %v911 = vld [vmem:[%s722 + $0x5e0] sm:$0xff]
      %v912 = vld [vmem:[%s722 + $0x5e8] sm:$0xff]
      %v913 = vld [vmem:[%s722 + $0x5f0] sm:$0xff]
      %v914 = vld [vmem:[%s722 + $0x5f8] sm:$0xff]
      %v915 = vld [vmem:[%s722 + $0x600] sm:$0xff]
      %v916 = vld [vmem:[%s722 + $0x608] sm:$0xff]
      %v917 = vld [vmem:[%s722 + $0x610] sm:$0xff]
      %v918 = vld [vmem:[%s722 + $0x618] sm:$0xff]
      %v919 = vld [vmem:[%s722 + $0x620] sm:$0xff]
      %v920 = vld [vmem:[%s722 + $0x628] sm:$0xff]
      %v921 = vld [vmem:[%s722 + $0x630] sm:$0xff]
      %v922 = vld [vmem:[%s722 + $0x638] sm:$0xff]
      %v923 = vld [vmem:[%s722 + $0x640] sm:$0xff]
      %v924 = vld [vmem:[%s722 + $0x648] sm:$0xff]
      %v925 = vld [vmem:[%s722 + $0x650] sm:$0xff]
      %v926 = vld [vmem:[%s722 + $0x658] sm:$0xff]
      %v927 = vld [vmem:[%s722 + $0x660] sm:$0xff]
      %v928 = vld [vmem:[%s722 + $0x668] sm:$0xff]
      %v929 = vld [vmem:[%s722 + $0x670] sm:$0xff]
      %v930 = vld [vmem:[%s722 + $0x678] sm:$0xff]
      %v931 = vld [vmem:[%s722 + $0x680] sm:$0xff]
      %v932 = vld [vmem:[%s722 + $0x688] sm:$0xff]
      %v933 = vld [vmem:[%s722 + $0x690] sm:$0xff]
      %v934 = vld [vmem:[%s722 + $0x698] sm:$0xff]
      %v935 = vld [vmem:[%s722 + $0x6a0] sm:$0xff]
      %v936 = vld [vmem:[%s722 + $0x6a8] sm:$0xff]
      %v937 = vld [vmem:[%s722 + $0x6b0] sm:$0xff]
      %v938 = vld [vmem:[%s722 + $0x6b8] sm:$0xff]
      %v939 = vld [vmem:[%s722 + $0x6c0] sm:$0xff]
      %v940 = vld [vmem:[%s722 + $0x6c8] sm:$0xff]
      %v941 = vld [vmem:[%s722 + $0x6d0] sm:$0xff]
      %v942 = vld [vmem:[%s722 + $0x6d8] sm:$0xff]
      %v943 = vld [vmem:[%s722 + $0x6e0] sm:$0xff]
      %v944 = vld [vmem:[%s722 + $0x6e8] sm:$0xff]
      %v945 = vld [vmem:[%s722 + $0x6f0] sm:$0xff]
      %v946 = vld [vmem:[%s722 + $0x6f8] sm:$0xff]
      %v947 = vld [vmem:[%s722 + $0x700] sm:$0xff]
      %v948 = vld [vmem:[%s722 + $0x708] sm:$0xff]
      %v949 = vld [vmem:[%s722 + $0x710] sm:$0xff]
      %v950 = vld [vmem:[%s722 + $0x718] sm:$0xff]
      %v951 = vld [vmem:[%s722 + $0x720] sm:$0xff]
      %v952 = vld [vmem:[%s722 + $0x728] sm:$0xff]
      %v953 = vld [vmem:[%s722 + $0x730] sm:$0xff]
      %v954 = vld [vmem:[%s722 + $0x738] sm:$0xff]
      %v955 = vld [vmem:[%s722 + $0x740] sm:$0xff]
      %v956 = vld [vmem:[%s722 + $0x748] sm:$0xff]
      %v957 = vld [vmem:[%s722 + $0x750] sm:$0xff]
      %v958 = vld [vmem:[%s722 + $0x758] sm:$0xff]
      %v959 = vld [vmem:[%s722 + $0x760] sm:$0xff]
      %v960 = vld [vmem:[%s722 + $0x768] sm:$0xff]
      %v961 = vld [vmem:[%s722 + $0x770] sm:$0xff]
      %v962 = vld [vmem:[%s722 + $0x778] sm:$0xff]
      %v963 = vld [vmem:[%s722 + $0x780] sm:$0xff]
      %v964 = vld [vmem:[%s722 + $0x788] sm:$0xff]
      %v965 = vld [vmem:[%s722 + $0x790] sm:$0xff]
      %v966 = vld [vmem:[%s722 + $0x798] sm:$0xff]
      %v967 = vld [vmem:[%s722 + $0x7a0] sm:$0xff]
      %v968 = vld [vmem:[%s722 + $0x7a8] sm:$0xff]
      %v969 = vld [vmem:[%s722 + $0x7b0] sm:$0xff]
      %v970 = vld [vmem:[%s722 + $0x7b8] sm:$0xff]
      %v971 = vld [vmem:[%s722 + $0x7c0] sm:$0xff]
      %v972 = vld [vmem:[%s722 + $0x7c8] sm:$0xff]
      %v973 = vld [vmem:[%s722 + $0x7d0] sm:$0xff]
      %v974 = vld [vmem:[%s722 + $0x7d8] sm:$0xff]
      %v975 = vld [vmem:[%s722 + $0x7e0] sm:$0xff]
      %v976 = vld [vmem:[%s722 + $0x7e8] sm:$0xff]
      %v977 = vld [vmem:[%s722 + $0x7f0] sm:$0xff]
      %v978 = vld [vmem:[%s722 + $0x7f8] sm:$0xff]
      %v979 = vld [vmem:[%s722 + $0x800] sm:$0xff]
      %v980 = vld [vmem:[%s722 + $0x808] sm:$0xff]
      %v981 = vld [vmem:[%s722 + $0x810] sm:$0xff]
      %v982 = vld [vmem:[%s722 + $0x818] sm:$0xff]
      %v983 = vld [vmem:[%s722 + $0x820] sm:$0xff]
      %v984 = vld [vmem:[%s722 + $0x828] sm:$0xff]
      %v985 = vld [vmem:[%s722 + $0x830] sm:$0xff]
      %v986 = vld [vmem:[%s722 + $0x838] sm:$0xff]
      %v987 = vld [vmem:[%s722 + $0x840] sm:$0xff]
      %v988 = vld [vmem:[%s722 + $0x848] sm:$0xff]
      %v989 = vld [vmem:[%s722 + $0x850] sm:$0xff]
      %v990 = vld [vmem:[%s722 + $0x858] sm:$0xff]
      %v991 = vld [vmem:[%s722 + $0x860] sm:$0xff]
      %v992 = vld [vmem:[%s722 + $0x868] sm:$0xff]
      %v993 = vld [vmem:[%s722 + $0x870] sm:$0xff]
      %v994 = vld [vmem:[%s722 + $0x878] sm:$0xff]
      %v995 = vld [vmem:[%s722 + $0x880] sm:$0xff]
      %v996 = vld [vmem:[%s722 + $0x888] sm:$0xff]
      %v997 = vld [vmem:[%s722 + $0x890] sm:$0xff]
      %v998 = vld [vmem:[%s722 + $0x898] sm:$0xff]
      %v999 = vld [vmem:[%s722 + $0x8a0] sm:$0xff]
      %v1000 = vld [vmem:[%s722 + $0x8a8] sm:$0xff]
      %v1001 = vld [vmem:[%s722 + $0x8b0] sm:$0xff]
      %v1002 = vld [vmem:[%s722 + $0x8b8] sm:$0xff]
      %v1003 = vld [vmem:[%s722 + $0x8c0] sm:$0xff]
      %v1004 = vld [vmem:[%s722 + $0x8c8] sm:$0xff]
      %v1005 = vld [vmem:[%s722 + $0x8d0] sm:$0xff]
      %v1006 = vld [vmem:[%s722 + $0x8d8] sm:$0xff]
      %v1007 = vld [vmem:[%s722 + $0x8e0] sm:$0xff]
      %v1008 = vld [vmem:[%s722 + $0x8e8] sm:$0xff]
      %v1009 = vld [vmem:[%s722 + $0x8f0] sm:$0xff]
      %v1010 = vld [vmem:[%s722 + $0x8f8] sm:$0xff]
      %vm1026 = vcmask 1046528
      %v1027 = vrot.slane %v712, 1
      %v1028 = vrot.slane %v419, 1
      %v1029 = vsel %vm1026, %v1027, %v1028
      %v1030 = vrot.slane %v713, 1
      %v1031 = vrot.slane %v420, 1
      %v1032 = vsel %vm1026, %v1030, %v1031
      %v1033 = vrot.slane %v714, 1
      %v1034 = vrot.slane %v421, 1
      %v1035 = vsel %vm1026, %v1033, %v1034
      %v1036 = vrot.slane %v715, 1
      %v1037 = vrot.slane %v422, 1
      %v1038 = vsel %vm1026, %v1036, %v1037
      %v1039 = vrot.slane %v716, 1
      %v1040 = vrot.slane %v423, 1
      %v1041 = vsel %vm1026, %v1039, %v1040
      %v1042 = vrot.slane %v717, 1
      %v1043 = vsel %vm1026, %v1028, %v1042
      %v1044 = vrot.slane %v718, 1
      %v1045 = vsel %vm1026, %v1031, %v1044
      %v1046 = vrot.slane %v719, 1
      %v1047 = vsel %vm1026, %v1034, %v1046
      %v1048 = vrot.slane %v720, 1
      %v1049 = vsel %vm1026, %v1037, %v1048
      %v1050 = vrot.slane %v721, 1
      %v1051 = vsel %vm1026, %v1040, %v1050
      %vm1060 = vcmask 523264
      %v1061 = vsel %vm1060, %v1041, 0
      %v1063 = vsel %vm1060, %v1051, 0
      %1065 = vmatpush.msra.mxu0 %v783
      %1066 = vmatpush.msra.mxu0 %v779
      %1067 = vmatpush.msra.mxu0 %v775
      %1068 = vmatpush.msra.mxu0 %v771
      %1069 = vmatpush.msra.mxu0 %v767
      %1070 = vmatpush.msra.mxu0 %v763
      %1071 = vmatpush.msra.mxu0 %v759
      %1072 = vmatpush.msra.mxu0 %v755
      %1073 = vmatpush.msra.mxu0 %v751
      %1074 = vmatpush.msra.mxu0 %v747
      %1075 = vmatpush.msra.mxu0 %v743
      %1076 = vmatpush.msra.mxu0 %v739
      %1077 = vmatpush.msra.mxu0 %v735
      %1078 = vmatpush.msra.mxu0 %v731
      %1079 = vmatpush.msra.mxu0 %v727
      %1080 = vmatpush.msra.mxu0 %v723
      %1081 = vmatmul.f32.gmra.mxu0 %v1029
      %v1082 = vpop.f32.mrf.mxu0
      %v1083 = vadd.f32 0.0, %v1082
      %1084 = vmatmul.f32.gmra.mxu0 %v1043
      %v1085 = vpop.f32.mrf.mxu0
      %v1086 = vadd.f32 0.0, %v1085
      %1087 = vdwg.mxu0
      %1088 = vmatpush.msra.mxu0 %v847
      %1089 = vmatpush.msra.mxu0 %v843
      %1090 = vmatpush.msra.mxu0 %v839
      %1091 = vmatpush.msra.mxu0 %v835
      %1092 = vmatpush.msra.mxu0 %v831
      %1093 = vmatpush.msra.mxu0 %v827
      %1094 = vmatpush.msra.mxu0 %v823
      %1095 = vmatpush.msra.mxu0 %v819
      %1096 = vmatpush.msra.mxu0 %v815
      %1097 = vmatpush.msra.mxu0 %v811
      %1098 = vmatpush.msra.mxu0 %v807
      %1099 = vmatpush.msra.mxu0 %v803
      %1100 = vmatpush.msra.mxu0 %v799
      %1101 = vmatpush.msra.mxu0 %v795
      %1102 = vmatpush.msra.mxu0 %v791
      %1103 = vmatpush.msra.mxu0 %v787
      %1104 = vmatmul.f32.gmra.mxu0 %v1032
      %v1105 = vpop.f32.mrf.mxu0
      %v1106 = vadd.f32 %v1083, %v1105
      %1107 = vmatmul.f32.gmra.mxu0 %v1045
      %v1108 = vpop.f32.mrf.mxu0
      %v1109 = vadd.f32 %v1086, %v1108
      %1110 = vdwg.mxu0
      %1111 = vmatpush.msra.mxu0 %v911
      %1112 = vmatpush.msra.mxu0 %v907
      %1113 = vmatpush.msra.mxu0 %v903
      %1114 = vmatpush.msra.mxu0 %v899
      %1115 = vmatpush.msra.mxu0 %v895
      %1116 = vmatpush.msra.mxu0 %v891
      %1117 = vmatpush.msra.mxu0 %v887
      %1118 = vmatpush.msra.mxu0 %v883
      %1119 = vmatpush.msra.mxu0 %v879
      %1120 = vmatpush.msra.mxu0 %v875
      %1121 = vmatpush.msra.mxu0 %v871
      %1122 = vmatpush.msra.mxu0 %v867
      %1123 = vmatpush.msra.mxu0 %v863
      %1124 = vmatpush.msra.mxu0 %v859
      %1125 = vmatpush.msra.mxu0 %v855
      %1126 = vmatpush.msra.mxu0 %v851
      %1127 = vmatmul.f32.gmra.mxu0 %v1035
      %v1128 = vpop.f32.mrf.mxu0
      %v1129 = vadd.f32 %v1106, %v1128
      %1130 = vmatmul.f32.gmra.mxu0 %v1047
      %v1131 = vpop.f32.mrf.mxu0
      %v1132 = vadd.f32 %v1109, %v1131
      %1133 = vdwg.mxu0
      %1134 = vmatpush.msra.mxu0 %v975
      %1135 = vmatpush.msra.mxu0 %v971
      %1136 = vmatpush.msra.mxu0 %v967
      %1137 = vmatpush.msra.mxu0 %v963
      %1138 = vmatpush.msra.mxu0 %v959
      %1139 = vmatpush.msra.mxu0 %v955
      %1140 = vmatpush.msra.mxu0 %v951
      %1141 = vmatpush.msra.mxu0 %v947
      %1142 = vmatpush.msra.mxu0 %v943
      %1143 = vmatpush.msra.mxu0 %v939
      %1144 = vmatpush.msra.mxu0 %v935
      %1145 = vmatpush.msra.mxu0 %v931
      %1146 = vmatpush.msra.mxu0 %v927
      %1147 = vmatpush.msra.mxu0 %v923
      %1148 = vmatpush.msra.mxu0 %v919
      %1149 = vmatpush.msra.mxu0 %v915
      %1150 = vmatmul.f32.gmra.mxu0 %v1038
      %v1151 = vpop.f32.mrf.mxu0
      %v1152 = vadd.f32 %v1129, %v1151
      %1153 = vmatmul.f32.gmra.mxu0 %v1049
      %v1154 = vpop.f32.mrf.mxu0
      %v1155 = vadd.f32 %v1132, %v1154
      %1156 = vdwg.mxu0
      %1157 = vmatpush.msra.mxu0 0.0
      %1158 = vmatpush.msra.mxu0 0.0
      %1159 = vmatpush.msra.mxu0 0.0
      %1160 = vmatpush.msra.mxu0 0.0
      %1161 = vmatpush.msra.mxu0 0.0
      %1162 = vmatpush.msra.mxu0 0.0
      %1163 = vmatpush.msra.mxu0 0.0
      %1164 = vmatpush.msra.mxu0 0.0
      %1165 = vmatpush.msra.mxu0 %v1007
      %1166 = vmatpush.msra.mxu0 %v1003
      %1167 = vmatpush.msra.mxu0 %v999
      %1168 = vmatpush.msra.mxu0 %v995
      %1169 = vmatpush.msra.mxu0 %v991
      %1170 = vmatpush.msra.mxu0 %v987
      %1171 = vmatpush.msra.mxu0 %v983
      %1172 = vmatpush.msra.mxu0 %v979
      %1173 = vmatmul.f32.gmra.mxu0 %v1061
      %v1174 = vpop.f32.mrf.mxu0
      %v1175 = vadd.f32 %v1152, %v1174
      %1176 = vmatmul.f32.gmra.mxu0 %v1063
      %v1177 = vpop.f32.mrf.mxu0
      %v1178 = vadd.f32 %v1155, %v1177
      %1179 = vdwg.mxu0
      %1180 = vmatpush.msra.mxu0 %v784
      %1181 = vmatpush.msra.mxu0 %v780
      %1182 = vmatpush.msra.mxu0 %v776
      %1183 = vmatpush.msra.mxu0 %v772
      %1184 = vmatpush.msra.mxu0 %v768
      %1185 = vmatpush.msra.mxu0 %v764
      %1186 = vmatpush.msra.mxu0 %v760
      %1187 = vmatpush.msra.mxu0 %v756
      %1188 = vmatpush.msra.mxu0 %v752
      %1189 = vmatpush.msra.mxu0 %v748
      %1190 = vmatpush.msra.mxu0 %v744
      %1191 = vmatpush.msra.mxu0 %v740
      %1192 = vmatpush.msra.mxu0 %v736
      %1193 = vmatpush.msra.mxu0 %v732
      %1194 = vmatpush.msra.mxu0 %v728
      %1195 = vmatpush.msra.mxu0 %v724
      %1196 = vmatmul.f32.gmra.mxu0 %v1029
      %v1197 = vpop.f32.mrf.mxu0
      %v1198 = vadd.f32 0.0, %v1197
      %1199 = vmatmul.f32.gmra.mxu0 %v1043
      %v1200 = vpop.f32.mrf.mxu0
      %v1201 = vadd.f32 0.0, %v1200
      %1202 = vdwg.mxu0
      %1203 = vmatpush.msra.mxu0 %v848
      %1204 = vmatpush.msra.mxu0 %v844
      %1205 = vmatpush.msra.mxu0 %v840
      %1206 = vmatpush.msra.mxu0 %v836
      %1207 = vmatpush.msra.mxu0 %v832
      %1208 = vmatpush.msra.mxu0 %v828
      %1209 = vmatpush.msra.mxu0 %v824
      %1210 = vmatpush.msra.mxu0 %v820
      %1211 = vmatpush.msra.mxu0 %v816
      %1212 = vmatpush.msra.mxu0 %v812
      %1213 = vmatpush.msra.mxu0 %v808
      %1214 = vmatpush.msra.mxu0 %v804
      %1215 = vmatpush.msra.mxu0 %v800
      %1216 = vmatpush.msra.mxu0 %v796
      %1217 = vmatpush.msra.mxu0 %v792
      %1218 = vmatpush.msra.mxu0 %v788
      %1219 = vmatmul.f32.gmra.mxu0 %v1032
      %v1220 = vpop.f32.mrf.mxu0
      %v1221 = vadd.f32 %v1198, %v1220
      %1222 = vmatmul.f32.gmra.mxu0 %v1045
      %v1223 = vpop.f32.mrf.mxu0
      %v1224 = vadd.f32 %v1201, %v1223
      %1225 = vdwg.mxu0
      %1226 = vmatpush.msra.mxu0 %v912
      %1227 = vmatpush.msra.mxu0 %v908
      %1228 = vmatpush.msra.mxu0 %v904
      %1229 = vmatpush.msra.mxu0 %v900
      %1230 = vmatpush.msra.mxu0 %v896
      %1231 = vmatpush.msra.mxu0 %v892
      %1232 = vmatpush.msra.mxu0 %v888
      %1233 = vmatpush.msra.mxu0 %v884
      %1234 = vmatpush.msra.mxu0 %v880
      %1235 = vmatpush.msra.mxu0 %v876
      %1236 = vmatpush.msra.mxu0 %v872
      %1237 = vmatpush.msra.mxu0 %v868
      %1238 = vmatpush.msra.mxu0 %v864
      %1239 = vmatpush.msra.mxu0 %v860
      %1240 = vmatpush.msra.mxu0 %v856
      %1241 = vmatpush.msra.mxu0 %v852
      %1242 = vmatmul.f32.gmra.mxu0 %v1035
      %v1243 = vpop.f32.mrf.mxu0
      %v1244 = vadd.f32 %v1221, %v1243
      %1245 = vmatmul.f32.gmra.mxu0 %v1047
      %v1246 = vpop.f32.mrf.mxu0
      %v1247 = vadd.f32 %v1224, %v1246
      %1248 = vdwg.mxu0
      %1249 = vmatpush.msra.mxu0 %v976
      %1250 = vmatpush.msra.mxu0 %v972
      %1251 = vmatpush.msra.mxu0 %v968
      %1252 = vmatpush.msra.mxu0 %v964
      %1253 = vmatpush.msra.mxu0 %v960
      %1254 = vmatpush.msra.mxu0 %v956
      %1255 = vmatpush.msra.mxu0 %v952
      %1256 = vmatpush.msra.mxu0 %v948
      %1257 = vmatpush.msra.mxu0 %v944
      %1258 = vmatpush.msra.mxu0 %v940
      %1259 = vmatpush.msra.mxu0 %v936
      %1260 = vmatpush.msra.mxu0 %v932
      %1261 = vmatpush.msra.mxu0 %v928
      %1262 = vmatpush.msra.mxu0 %v924
      %1263 = vmatpush.msra.mxu0 %v920
      %1264 = vmatpush.msra.mxu0 %v916
      %1265 = vmatmul.f32.gmra.mxu0 %v1038
      %v1266 = vpop.f32.mrf.mxu0
      %v1267 = vadd.f32 %v1244, %v1266
      %1268 = vmatmul.f32.gmra.mxu0 %v1049
      %v1269 = vpop.f32.mrf.mxu0
      %v1270 = vadd.f32 %v1247, %v1269
      %1271 = vdwg.mxu0
      %1272 = vmatpush.msra.mxu0 0.0
      %1273 = vmatpush.msra.mxu0 0.0
      %1274 = vmatpush.msra.mxu0 0.0
      %1275 = vmatpush.msra.mxu0 0.0
      %1276 = vmatpush.msra.mxu0 0.0
      %1277 = vmatpush.msra.mxu0 0.0
      %1278 = vmatpush.msra.mxu0 0.0
      %1279 = vmatpush.msra.mxu0 0.0
      %1280 = vmatpush.msra.mxu0 %v1008
      %1281 = vmatpush.msra.mxu0 %v1004
      %1282 = vmatpush.msra.mxu0 %v1000
      %1283 = vmatpush.msra.mxu0 %v996
      %1284 = vmatpush.msra.mxu0 %v992
      %1285 = vmatpush.msra.mxu0 %v988
      %1286 = vmatpush.msra.mxu0 %v984
      %1287 = vmatpush.msra.mxu0 %v980
      %1288 = vmatmul.f32.gmra.mxu0 %v1061
      %v1289 = vpop.f32.mrf.mxu0
      %v1290 = vadd.f32 %v1267, %v1289
      %1291 = vmatmul.f32.gmra.mxu0 %v1063
      %v1292 = vpop.f32.mrf.mxu0
      %v1293 = vadd.f32 %v1270, %v1292
      %1294 = vdwg.mxu0
      %1295 = vmatpush.msra.mxu0 %v785
      %1296 = vmatpush.msra.mxu0 %v781
      %1297 = vmatpush.msra.mxu0 %v777
      %1298 = vmatpush.msra.mxu0 %v773
      %1299 = vmatpush.msra.mxu0 %v769
      %1300 = vmatpush.msra.mxu0 %v765
      %1301 = vmatpush.msra.mxu0 %v761
      %1302 = vmatpush.msra.mxu0 %v757
      %1303 = vmatpush.msra.mxu0 %v753
      %1304 = vmatpush.msra.mxu0 %v749
      %1305 = vmatpush.msra.mxu0 %v745
      %1306 = vmatpush.msra.mxu0 %v741
      %1307 = vmatpush.msra.mxu0 %v737
      %1308 = vmatpush.msra.mxu0 %v733
      %1309 = vmatpush.msra.mxu0 %v729
      %1310 = vmatpush.msra.mxu0 %v725
      %1311 = vmatmul.f32.gmra.mxu0 %v1029
      %v1312 = vpop.f32.mrf.mxu0
      %v1313 = vadd.f32 0.0, %v1312
      %1314 = vmatmul.f32.gmra.mxu0 %v1043
      %v1315 = vpop.f32.mrf.mxu0
      %v1316 = vadd.f32 0.0, %v1315
      %1317 = vdwg.mxu0
      %1318 = vmatpush.msra.mxu0 %v849
      %1319 = vmatpush.msra.mxu0 %v845
      %1320 = vmatpush.msra.mxu0 %v841
      %1321 = vmatpush.msra.mxu0 %v837
      %1322 = vmatpush.msra.mxu0 %v833
      %1323 = vmatpush.msra.mxu0 %v829
      %1324 = vmatpush.msra.mxu0 %v825
      %1325 = vmatpush.msra.mxu0 %v821
      %1326 = vmatpush.msra.mxu0 %v817
      %1327 = vmatpush.msra.mxu0 %v813
      %1328 = vmatpush.msra.mxu0 %v809
      %1329 = vmatpush.msra.mxu0 %v805
      %1330 = vmatpush.msra.mxu0 %v801
      %1331 = vmatpush.msra.mxu0 %v797
      %1332 = vmatpush.msra.mxu0 %v793
      %1333 = vmatpush.msra.mxu0 %v789
      %1334 = vmatmul.f32.gmra.mxu0 %v1032
      %v1335 = vpop.f32.mrf.mxu0
      %v1336 = vadd.f32 %v1313, %v1335
      %1337 = vmatmul.f32.gmra.mxu0 %v1045
      %v1338 = vpop.f32.mrf.mxu0
      %v1339 = vadd.f32 %v1316, %v1338
      %1340 = vdwg.mxu0
      %1341 = vmatpush.msra.mxu0 %v913
      %1342 = vmatpush.msra.mxu0 %v909
      %1343 = vmatpush.msra.mxu0 %v905
      %1344 = vmatpush.msra.mxu0 %v901
      %1345 = vmatpush.msra.mxu0 %v897
      %1346 = vmatpush.msra.mxu0 %v893
      %1347 = vmatpush.msra.mxu0 %v889
      %1348 = vmatpush.msra.mxu0 %v885
      %1349 = vmatpush.msra.mxu0 %v881
      %1350 = vmatpush.msra.mxu0 %v877
      %1351 = vmatpush.msra.mxu0 %v873
      %1352 = vmatpush.msra.mxu0 %v869
      %1353 = vmatpush.msra.mxu0 %v865
      %1354 = vmatpush.msra.mxu0 %v861
      %1355 = vmatpush.msra.mxu0 %v857
      %1356 = vmatpush.msra.mxu0 %v853
      %1357 = vmatmul.f32.gmra.mxu0 %v1035
      %v1358 = vpop.f32.mrf.mxu0
      %v1359 = vadd.f32 %v1336, %v1358
      %1360 = vmatmul.f32.gmra.mxu0 %v1047
      %v1361 = vpop.f32.mrf.mxu0
      %v1362 = vadd.f32 %v1339, %v1361
      %1363 = vdwg.mxu0
      %1364 = vmatpush.msra.mxu0 %v977
      %1365 = vmatpush.msra.mxu0 %v973
      %1366 = vmatpush.msra.mxu0 %v969
      %1367 = vmatpush.msra.mxu0 %v965
      %1368 = vmatpush.msra.mxu0 %v961
      %1369 = vmatpush.msra.mxu0 %v957
      %1370 = vmatpush.msra.mxu0 %v953
      %1371 = vmatpush.msra.mxu0 %v949
      %1372 = vmatpush.msra.mxu0 %v945
      %1373 = vmatpush.msra.mxu0 %v941
      %1374 = vmatpush.msra.mxu0 %v937
      %1375 = vmatpush.msra.mxu0 %v933
      %1376 = vmatpush.msra.mxu0 %v929
      %1377 = vmatpush.msra.mxu0 %v925
      %1378 = vmatpush.msra.mxu0 %v921
      %1379 = vmatpush.msra.mxu0 %v917
      %1380 = vmatmul.f32.gmra.mxu0 %v1038
      %v1381 = vpop.f32.mrf.mxu0
      %v1382 = vadd.f32 %v1359, %v1381
      %1383 = vmatmul.f32.gmra.mxu0 %v1049
      %v1384 = vpop.f32.mrf.mxu0
      %v1385 = vadd.f32 %v1362, %v1384
      %1386 = vdwg.mxu0
      %1387 = vmatpush.msra.mxu0 0.0
      %1388 = vmatpush.msra.mxu0 0.0
      %1389 = vmatpush.msra.mxu0 0.0
      %1390 = vmatpush.msra.mxu0 0.0
      %1391 = vmatpush.msra.mxu0 0.0
      %1392 = vmatpush.msra.mxu0 0.0
      %1393 = vmatpush.msra.mxu0 0.0
      %1394 = vmatpush.msra.mxu0 0.0
      %1395 = vmatpush.msra.mxu0 %v1009
      %1396 = vmatpush.msra.mxu0 %v1005
      %1397 = vmatpush.msra.mxu0 %v1001
      %1398 = vmatpush.msra.mxu0 %v997
      %1399 = vmatpush.msra.mxu0 %v993
      %1400 = vmatpush.msra.mxu0 %v989
      %1401 = vmatpush.msra.mxu0 %v985
      %1402 = vmatpush.msra.mxu0 %v981
      %1403 = vmatmul.f32.gmra.mxu0 %v1061
      %v1404 = vpop.f32.mrf.mxu0
      %v1405 = vadd.f32 %v1382, %v1404
      %1406 = vmatmul.f32.gmra.mxu0 %v1063
      %v1407 = vpop.f32.mrf.mxu0
      %v1408 = vadd.f32 %v1385, %v1407
      %1409 = vdwg.mxu0
      %1410 = vmatpush.msra.mxu0 %v786
      %1411 = vmatpush.msra.mxu0 %v782
      %1412 = vmatpush.msra.mxu0 %v778
      %1413 = vmatpush.msra.mxu0 %v774
      %1414 = vmatpush.msra.mxu0 %v770
      %1415 = vmatpush.msra.mxu0 %v766
      %1416 = vmatpush.msra.mxu0 %v762
      %1417 = vmatpush.msra.mxu0 %v758
      %1418 = vmatpush.msra.mxu0 %v754
      %1419 = vmatpush.msra.mxu0 %v750
      %1420 = vmatpush.msra.mxu0 %v746
      %1421 = vmatpush.msra.mxu0 %v742
      %1422 = vmatpush.msra.mxu0 %v738
      %1423 = vmatpush.msra.mxu0 %v734
      %1424 = vmatpush.msra.mxu0 %v730
      %1425 = vmatpush.msra.mxu0 %v726
      %1426 = vmatmul.f32.gmra.mxu0 %v1029
      %v1427 = vpop.f32.mrf.mxu0
      %v1428 = vadd.f32 0.0, %v1427
      %1429 = vmatmul.f32.gmra.mxu0 %v1043
      %v1430 = vpop.f32.mrf.mxu0
      %v1431 = vadd.f32 0.0, %v1430
      %1432 = vdwg.mxu0
      %1433 = vmatpush.msra.mxu0 %v850
      %1434 = vmatpush.msra.mxu0 %v846
      %1435 = vmatpush.msra.mxu0 %v842
      %1436 = vmatpush.msra.mxu0 %v838
      %1437 = vmatpush.msra.mxu0 %v834
      %1438 = vmatpush.msra.mxu0 %v830
      %1439 = vmatpush.msra.mxu0 %v826
      %1440 = vmatpush.msra.mxu0 %v822
      %1441 = vmatpush.msra.mxu0 %v818
      %1442 = vmatpush.msra.mxu0 %v814
      %1443 = vmatpush.msra.mxu0 %v810
      %1444 = vmatpush.msra.mxu0 %v806
      %1445 = vmatpush.msra.mxu0 %v802
      %1446 = vmatpush.msra.mxu0 %v798
      %1447 = vmatpush.msra.mxu0 %v794
      %1448 = vmatpush.msra.mxu0 %v790
      %1449 = vmatmul.f32.gmra.mxu0 %v1032
      %v1450 = vpop.f32.mrf.mxu0
      %v1451 = vadd.f32 %v1428, %v1450
      %1452 = vmatmul.f32.gmra.mxu0 %v1045
      %v1453 = vpop.f32.mrf.mxu0
      %v1454 = vadd.f32 %v1431, %v1453
      %1455 = vdwg.mxu0
      %1456 = vmatpush.msra.mxu0 %v914
      %1457 = vmatpush.msra.mxu0 %v910
      %1458 = vmatpush.msra.mxu0 %v906
      %1459 = vmatpush.msra.mxu0 %v902
      %1460 = vmatpush.msra.mxu0 %v898
      %1461 = vmatpush.msra.mxu0 %v894
      %1462 = vmatpush.msra.mxu0 %v890
      %1463 = vmatpush.msra.mxu0 %v886
      %1464 = vmatpush.msra.mxu0 %v882
      %1465 = vmatpush.msra.mxu0 %v878
      %1466 = vmatpush.msra.mxu0 %v874
      %1467 = vmatpush.msra.mxu0 %v870
      %1468 = vmatpush.msra.mxu0 %v866
      %1469 = vmatpush.msra.mxu0 %v862
      %1470 = vmatpush.msra.mxu0 %v858
      %1471 = vmatpush.msra.mxu0 %v854
      %1472 = vmatmul.f32.gmra.mxu0 %v1035
      %v1473 = vpop.f32.mrf.mxu0
      %v1474 = vadd.f32 %v1451, %v1473
      %1475 = vmatmul.f32.gmra.mxu0 %v1047
      %v1476 = vpop.f32.mrf.mxu0
      %v1477 = vadd.f32 %v1454, %v1476
      %1478 = vdwg.mxu0
      %1479 = vmatpush.msra.mxu0 %v978
      %1480 = vmatpush.msra.mxu0 %v974
      %1481 = vmatpush.msra.mxu0 %v970
      %1482 = vmatpush.msra.mxu0 %v966
      %1483 = vmatpush.msra.mxu0 %v962
      %1484 = vmatpush.msra.mxu0 %v958
      %1485 = vmatpush.msra.mxu0 %v954
      %1486 = vmatpush.msra.mxu0 %v950
      %1487 = vmatpush.msra.mxu0 %v946
      %1488 = vmatpush.msra.mxu0 %v942
      %1489 = vmatpush.msra.mxu0 %v938
      %1490 = vmatpush.msra.mxu0 %v934
      %1491 = vmatpush.msra.mxu0 %v930
      %1492 = vmatpush.msra.mxu0 %v926
      %1493 = vmatpush.msra.mxu0 %v922
      %1494 = vmatpush.msra.mxu0 %v918
      %1495 = vmatmul.f32.gmra.mxu0 %v1038
      %v1496 = vpop.f32.mrf.mxu0
      %v1497 = vadd.f32 %v1474, %v1496
      %1498 = vmatmul.f32.gmra.mxu0 %v1049
      %v1499 = vpop.f32.mrf.mxu0
      %v1500 = vadd.f32 %v1477, %v1499
      %1501 = vdwg.mxu0
      %1502 = vmatpush.msra.mxu0 0.0
      %1503 = vmatpush.msra.mxu0 0.0
      %1504 = vmatpush.msra.mxu0 0.0
      %1505 = vmatpush.msra.mxu0 0.0
      %1506 = vmatpush.msra.mxu0 0.0
      %1507 = vmatpush.msra.mxu0 0.0
      %1508 = vmatpush.msra.mxu0 0.0
      %1509 = vmatpush.msra.mxu0 0.0
      %1510 = vmatpush.msra.mxu0 %v1010
      %1511 = vmatpush.msra.mxu0 %v1006
      %1512 = vmatpush.msra.mxu0 %v1002
      %1513 = vmatpush.msra.mxu0 %v998
      %1514 = vmatpush.msra.mxu0 %v994
      %1515 = vmatpush.msra.mxu0 %v990
      %1516 = vmatpush.msra.mxu0 %v986
      %1517 = vmatpush.msra.mxu0 %v982
      %1518 = vmatmul.f32.gmra.mxu0 %v1061
      %v1519 = vpop.f32.mrf.mxu0
      %v1520 = vadd.f32 %v1497, %v1519
      %1521 = vmatmul.f32.gmra.mxu0 %v1063
      %v1522 = vpop.f32.mrf.mxu0
      %v1523 = vadd.f32 %v1500, %v1522
      %1524 = vdwg.mxu0
      %v1526 = vsel %vm1060, %v418, 0
      %v1528 = vsel %vm1060, %v423, 0
      %1530 = vmatpush.msra.mxu0 %v484
      %1531 = vmatpush.msra.mxu0 %v480
      %1532 = vmatpush.msra.mxu0 %v476
      %1533 = vmatpush.msra.mxu0 %v472
      %1534 = vmatpush.msra.mxu0 %v468
      %1535 = vmatpush.msra.mxu0 %v464
      %1536 = vmatpush.msra.mxu0 %v460
      %1537 = vmatpush.msra.mxu0 %v456
      %1538 = vmatpush.msra.mxu0 %v452
      %1539 = vmatpush.msra.mxu0 %v448
      %1540 = vmatpush.msra.mxu0 %v444
      %1541 = vmatpush.msra.mxu0 %v440
      %1542 = vmatpush.msra.mxu0 %v436
      %1543 = vmatpush.msra.mxu0 %v432
      %1544 = vmatpush.msra.mxu0 %v428
      %1545 = vmatpush.msra.mxu0 %v424
      %1546 = vmatmul.f32.gmra.mxu0 %v414
      %v1547 = vpop.f32.mrf.mxu0
      %v1548 = vadd.f32 %v1175, %v1547
      %1549 = vmatmul.f32.gmra.mxu0 %v419
      %v1550 = vpop.f32.mrf.mxu0
      %v1551 = vadd.f32 %v1178, %v1550
      %1552 = vdwg.mxu0
      %1553 = vmatpush.msra.mxu0 %v548
      %1554 = vmatpush.msra.mxu0 %v544
      %1555 = vmatpush.msra.mxu0 %v540
      %1556 = vmatpush.msra.mxu0 %v536
      %1557 = vmatpush.msra.mxu0 %v532
      %1558 = vmatpush.msra.mxu0 %v528
      %1559 = vmatpush.msra.mxu0 %v524
      %1560 = vmatpush.msra.mxu0 %v520
      %1561 = vmatpush.msra.mxu0 %v516
      %1562 = vmatpush.msra.mxu0 %v512
      %1563 = vmatpush.msra.mxu0 %v508
      %1564 = vmatpush.msra.mxu0 %v504
      %1565 = vmatpush.msra.mxu0 %v500
      %1566 = vmatpush.msra.mxu0 %v496
      %1567 = vmatpush.msra.mxu0 %v492
      %1568 = vmatpush.msra.mxu0 %v488
      %1569 = vmatmul.f32.gmra.mxu0 %v415
      %v1570 = vpop.f32.mrf.mxu0
      %v1571 = vadd.f32 %v1548, %v1570
      %1572 = vmatmul.f32.gmra.mxu0 %v420
      %v1573 = vpop.f32.mrf.mxu0
      %v1574 = vadd.f32 %v1551, %v1573
      %1575 = vdwg.mxu0
      %1576 = vmatpush.msra.mxu0 %v612
      %1577 = vmatpush.msra.mxu0 %v608
      %1578 = vmatpush.msra.mxu0 %v604
      %1579 = vmatpush.msra.mxu0 %v600
      %1580 = vmatpush.msra.mxu0 %v596
      %1581 = vmatpush.msra.mxu0 %v592
      %1582 = vmatpush.msra.mxu0 %v588
      %1583 = vmatpush.msra.mxu0 %v584
      %1584 = vmatpush.msra.mxu0 %v580
      %1585 = vmatpush.msra.mxu0 %v576
      %1586 = vmatpush.msra.mxu0 %v572
      %1587 = vmatpush.msra.mxu0 %v568
      %1588 = vmatpush.msra.mxu0 %v564
      %1589 = vmatpush.msra.mxu0 %v560
      %1590 = vmatpush.msra.mxu0 %v556
      %1591 = vmatpush.msra.mxu0 %v552
      %1592 = vmatmul.f32.gmra.mxu0 %v416
      %v1593 = vpop.f32.mrf.mxu0
      %v1594 = vadd.f32 %v1571, %v1593
      %1595 = vmatmul.f32.gmra.mxu0 %v421
      %v1596 = vpop.f32.mrf.mxu0
      %v1597 = vadd.f32 %v1574, %v1596
      %1598 = vdwg.mxu0
      %1599 = vmatpush.msra.mxu0 %v676
      %1600 = vmatpush.msra.mxu0 %v672
      %1601 = vmatpush.msra.mxu0 %v668
      %1602 = vmatpush.msra.mxu0 %v664
      %1603 = vmatpush.msra.mxu0 %v660
      %1604 = vmatpush.msra.mxu0 %v656
      %1605 = vmatpush.msra.mxu0 %v652
      %1606 = vmatpush.msra.mxu0 %v648
      %1607 = vmatpush.msra.mxu0 %v644
      %1608 = vmatpush.msra.mxu0 %v640
      %1609 = vmatpush.msra.mxu0 %v636
      %1610 = vmatpush.msra.mxu0 %v632
      %1611 = vmatpush.msra.mxu0 %v628
      %1612 = vmatpush.msra.mxu0 %v624
      %1613 = vmatpush.msra.mxu0 %v620
      %1614 = vmatpush.msra.mxu0 %v616
      %1615 = vmatmul.f32.gmra.mxu0 %v417
      %v1616 = vpop.f32.mrf.mxu0
      %v1617 = vadd.f32 %v1594, %v1616
      %1618 = vmatmul.f32.gmra.mxu0 %v422
      %v1619 = vpop.f32.mrf.mxu0
      %v1620 = vadd.f32 %v1597, %v1619
      %1621 = vdwg.mxu0
      %1622 = vmatpush.msra.mxu0 0.0
      %1623 = vmatpush.msra.mxu0 0.0
      %1624 = vmatpush.msra.mxu0 0.0
      %1625 = vmatpush.msra.mxu0 0.0
      %1626 = vmatpush.msra.mxu0 0.0
      %1627 = vmatpush.msra.mxu0 0.0
      %1628 = vmatpush.msra.mxu0 0.0
      %1629 = vmatpush.msra.mxu0 0.0
      %1630 = vmatpush.msra.mxu0 %v708
      %1631 = vmatpush.msra.mxu0 %v704
      %1632 = vmatpush.msra.mxu0 %v700
      %1633 = vmatpush.msra.mxu0 %v696
      %1634 = vmatpush.msra.mxu0 %v692
      %1635 = vmatpush.msra.mxu0 %v688
      %1636 = vmatpush.msra.mxu0 %v684
      %1637 = vmatpush.msra.mxu0 %v680
      %1638 = vmatmul.f32.gmra.mxu0 %v1526
      %v1639 = vpop.f32.mrf.mxu0
      %v1640 = vadd.f32 %v1617, %v1639
      %1641 = vmatmul.f32.gmra.mxu0 %v1528
      %v1642 = vpop.f32.mrf.mxu0
      %v1643 = vadd.f32 %v1620, %v1642
      %1644 = vdwg.mxu0
      %1645 = vmatpush.msra.mxu0 %v485
      %1646 = vmatpush.msra.mxu0 %v481
      %1647 = vmatpush.msra.mxu0 %v477
      %1648 = vmatpush.msra.mxu0 %v473
      %1649 = vmatpush.msra.mxu0 %v469
      %1650 = vmatpush.msra.mxu0 %v465
      %1651 = vmatpush.msra.mxu0 %v461
      %1652 = vmatpush.msra.mxu0 %v457
      %1653 = vmatpush.msra.mxu0 %v453
      %1654 = vmatpush.msra.mxu0 %v449
      %1655 = vmatpush.msra.mxu0 %v445
      %1656 = vmatpush.msra.mxu0 %v441
      %1657 = vmatpush.msra.mxu0 %v437
      %1658 = vmatpush.msra.mxu0 %v433
      %1659 = vmatpush.msra.mxu0 %v429
      %1660 = vmatpush.msra.mxu0 %v425
      %1661 = vmatmul.f32.gmra.mxu0 %v414
      %v1662 = vpop.f32.mrf.mxu0
      %v1663 = vadd.f32 %v1290, %v1662
      %1664 = vmatmul.f32.gmra.mxu0 %v419
      %v1665 = vpop.f32.mrf.mxu0
      %v1666 = vadd.f32 %v1293, %v1665
      %1667 = vdwg.mxu0
      %1668 = vmatpush.msra.mxu0 %v549
      %1669 = vmatpush.msra.mxu0 %v545
      %1670 = vmatpush.msra.mxu0 %v541
      %1671 = vmatpush.msra.mxu0 %v537
      %1672 = vmatpush.msra.mxu0 %v533
      %1673 = vmatpush.msra.mxu0 %v529
      %1674 = vmatpush.msra.mxu0 %v525
      %1675 = vmatpush.msra.mxu0 %v521
      %1676 = vmatpush.msra.mxu0 %v517
      %1677 = vmatpush.msra.mxu0 %v513
      %1678 = vmatpush.msra.mxu0 %v509
      %1679 = vmatpush.msra.mxu0 %v505
      %1680 = vmatpush.msra.mxu0 %v501
      %1681 = vmatpush.msra.mxu0 %v497
      %1682 = vmatpush.msra.mxu0 %v493
      %1683 = vmatpush.msra.mxu0 %v489
      %1684 = vmatmul.f32.gmra.mxu0 %v415
      %v1685 = vpop.f32.mrf.mxu0
      %v1686 = vadd.f32 %v1663, %v1685
      %1687 = vmatmul.f32.gmra.mxu0 %v420
      %v1688 = vpop.f32.mrf.mxu0
      %v1689 = vadd.f32 %v1666, %v1688
      %1690 = vdwg.mxu0
      %1691 = vmatpush.msra.mxu0 %v613
      %1692 = vmatpush.msra.mxu0 %v609
      %1693 = vmatpush.msra.mxu0 %v605
      %1694 = vmatpush.msra.mxu0 %v601
      %1695 = vmatpush.msra.mxu0 %v597
      %1696 = vmatpush.msra.mxu0 %v593
      %1697 = vmatpush.msra.mxu0 %v589
      %1698 = vmatpush.msra.mxu0 %v585
      %1699 = vmatpush.msra.mxu0 %v581
      %1700 = vmatpush.msra.mxu0 %v577
      %1701 = vmatpush.msra.mxu0 %v573
      %1702 = vmatpush.msra.mxu0 %v569
      %1703 = vmatpush.msra.mxu0 %v565
      %1704 = vmatpush.msra.mxu0 %v561
      %1705 = vmatpush.msra.mxu0 %v557
      %1706 = vmatpush.msra.mxu0 %v553
      %1707 = vmatmul.f32.gmra.mxu0 %v416
      %v1708 = vpop.f32.mrf.mxu0
      %v1709 = vadd.f32 %v1686, %v1708
      %1710 = vmatmul.f32.gmra.mxu0 %v421
      %v1711 = vpop.f32.mrf.mxu0
      %v1712 = vadd.f32 %v1689, %v1711
      %1713 = vdwg.mxu0
      %1714 = vmatpush.msra.mxu0 %v677
      %1715 = vmatpush.msra.mxu0 %v673
      %1716 = vmatpush.msra.mxu0 %v669
      %1717 = vmatpush.msra.mxu0 %v665
      %1718 = vmatpush.msra.mxu0 %v661
      %1719 = vmatpush.msra.mxu0 %v657
      %1720 = vmatpush.msra.mxu0 %v653
      %1721 = vmatpush.msra.mxu0 %v649
      %1722 = vmatpush.msra.mxu0 %v645
      %1723 = vmatpush.msra.mxu0 %v641
      %1724 = vmatpush.msra.mxu0 %v637
      %1725 = vmatpush.msra.mxu0 %v633
      %1726 = vmatpush.msra.mxu0 %v629
      %1727 = vmatpush.msra.mxu0 %v625
      %1728 = vmatpush.msra.mxu0 %v621
      %1729 = vmatpush.msra.mxu0 %v617
      %1730 = vmatmul.f32.gmra.mxu0 %v417
      %v1731 = vpop.f32.mrf.mxu0
      %v1732 = vadd.f32 %v1709, %v1731
      %1733 = vmatmul.f32.gmra.mxu0 %v422
      %v1734 = vpop.f32.mrf.mxu0
      %v1735 = vadd.f32 %v1712, %v1734
      %1736 = vdwg.mxu0
      %1737 = vmatpush.msra.mxu0 0.0
      %1738 = vmatpush.msra.mxu0 0.0
      %1739 = vmatpush.msra.mxu0 0.0
      %1740 = vmatpush.msra.mxu0 0.0
      %1741 = vmatpush.msra.mxu0 0.0
      %1742 = vmatpush.msra.mxu0 0.0
      %1743 = vmatpush.msra.mxu0 0.0
      %1744 = vmatpush.msra.mxu0 0.0
      %1745 = vmatpush.msra.mxu0 %v709
      %1746 = vmatpush.msra.mxu0 %v705
      %1747 = vmatpush.msra.mxu0 %v701
      %1748 = vmatpush.msra.mxu0 %v697
      %1749 = vmatpush.msra.mxu0 %v693
      %1750 = vmatpush.msra.mxu0 %v689
      %1751 = vmatpush.msra.mxu0 %v685
      %1752 = vmatpush.msra.mxu0 %v681
      %1753 = vmatmul.f32.gmra.mxu0 %v1526
      %v1754 = vpop.f32.mrf.mxu0
      %v1755 = vadd.f32 %v1732, %v1754
      %1756 = vmatmul.f32.gmra.mxu0 %v1528
      %v1757 = vpop.f32.mrf.mxu0
      %v1758 = vadd.f32 %v1735, %v1757
      %1759 = vdwg.mxu0
      %1760 = vmatpush.msra.mxu0 %v486
      %1761 = vmatpush.msra.mxu0 %v482
      %1762 = vmatpush.msra.mxu0 %v478
      %1763 = vmatpush.msra.mxu0 %v474
      %1764 = vmatpush.msra.mxu0 %v470
      %1765 = vmatpush.msra.mxu0 %v466
      %1766 = vmatpush.msra.mxu0 %v462
      %1767 = vmatpush.msra.mxu0 %v458
      %1768 = vmatpush.msra.mxu0 %v454
      %1769 = vmatpush.msra.mxu0 %v450
      %1770 = vmatpush.msra.mxu0 %v446
      %1771 = vmatpush.msra.mxu0 %v442
      %1772 = vmatpush.msra.mxu0 %v438
      %1773 = vmatpush.msra.mxu0 %v434
      %1774 = vmatpush.msra.mxu0 %v430
      %1775 = vmatpush.msra.mxu0 %v426
      %1776 = vmatmul.f32.gmra.mxu0 %v414
      %v1777 = vpop.f32.mrf.mxu0
      %v1778 = vadd.f32 %v1405, %v1777
      %1779 = vmatmul.f32.gmra.mxu0 %v419
      %v1780 = vpop.f32.mrf.mxu0
      %v1781 = vadd.f32 %v1408, %v1780
      %1782 = vdwg.mxu0
      %1783 = vmatpush.msra.mxu0 %v550
      %1784 = vmatpush.msra.mxu0 %v546
      %1785 = vmatpush.msra.mxu0 %v542
      %1786 = vmatpush.msra.mxu0 %v538
      %1787 = vmatpush.msra.mxu0 %v534
      %1788 = vmatpush.msra.mxu0 %v530
      %1789 = vmatpush.msra.mxu0 %v526
      %1790 = vmatpush.msra.mxu0 %v522
      %1791 = vmatpush.msra.mxu0 %v518
      %1792 = vmatpush.msra.mxu0 %v514
      %1793 = vmatpush.msra.mxu0 %v510
      %1794 = vmatpush.msra.mxu0 %v506
      %1795 = vmatpush.msra.mxu0 %v502
      %1796 = vmatpush.msra.mxu0 %v498
      %1797 = vmatpush.msra.mxu0 %v494
      %1798 = vmatpush.msra.mxu0 %v490
      %1799 = vmatmul.f32.gmra.mxu0 %v415
      %v1800 = vpop.f32.mrf.mxu0
      %v1801 = vadd.f32 %v1778, %v1800
      %1802 = vmatmul.f32.gmra.mxu0 %v420
      %v1803 = vpop.f32.mrf.mxu0
      %v1804 = vadd.f32 %v1781, %v1803
      %1805 = vdwg.mxu0
      %1806 = vmatpush.msra.mxu0 %v614
      %1807 = vmatpush.msra.mxu0 %v610
      %1808 = vmatpush.msra.mxu0 %v606
      %1809 = vmatpush.msra.mxu0 %v602
      %1810 = vmatpush.msra.mxu0 %v598
      %1811 = vmatpush.msra.mxu0 %v594
      %1812 = vmatpush.msra.mxu0 %v590
      %1813 = vmatpush.msra.mxu0 %v586
      %1814 = vmatpush.msra.mxu0 %v582
      %1815 = vmatpush.msra.mxu0 %v578
      %1816 = vmatpush.msra.mxu0 %v574
      %1817 = vmatpush.msra.mxu0 %v570
      %1818 = vmatpush.msra.mxu0 %v566
      %1819 = vmatpush.msra.mxu0 %v562
      %1820 = vmatpush.msra.mxu0 %v558
      %1821 = vmatpush.msra.mxu0 %v554
      %1822 = vmatmul.f32.gmra.mxu0 %v416
      %v1823 = vpop.f32.mrf.mxu0
      %v1824 = vadd.f32 %v1801, %v1823
      %1825 = vmatmul.f32.gmra.mxu0 %v421
      %v1826 = vpop.f32.mrf.mxu0
      %v1827 = vadd.f32 %v1804, %v1826
      %1828 = vdwg.mxu0
      %1829 = vmatpush.msra.mxu0 %v678
      %1830 = vmatpush.msra.mxu0 %v674
      %1831 = vmatpush.msra.mxu0 %v670
      %1832 = vmatpush.msra.mxu0 %v666
      %1833 = vmatpush.msra.mxu0 %v662
      %1834 = vmatpush.msra.mxu0 %v658
      %1835 = vmatpush.msra.mxu0 %v654
      %1836 = vmatpush.msra.mxu0 %v650
      %1837 = vmatpush.msra.mxu0 %v646
      %1838 = vmatpush.msra.mxu0 %v642
      %1839 = vmatpush.msra.mxu0 %v638
      %1840 = vmatpush.msra.mxu0 %v634
      %1841 = vmatpush.msra.mxu0 %v630
      %1842 = vmatpush.msra.mxu0 %v626
      %1843 = vmatpush.msra.mxu0 %v622
      %1844 = vmatpush.msra.mxu0 %v618
      %1845 = vmatmul.f32.gmra.mxu0 %v417
      %v1846 = vpop.f32.mrf.mxu0
      %v1847 = vadd.f32 %v1824, %v1846
      %1848 = vmatmul.f32.gmra.mxu0 %v422
      %v1849 = vpop.f32.mrf.mxu0
      %v1850 = vadd.f32 %v1827, %v1849
      %1851 = vdwg.mxu0
      %1852 = vmatpush.msra.mxu0 0.0
      %1853 = vmatpush.msra.mxu0 0.0
      %1854 = vmatpush.msra.mxu0 0.0
      %1855 = vmatpush.msra.mxu0 0.0
      %1856 = vmatpush.msra.mxu0 0.0
      %1857 = vmatpush.msra.mxu0 0.0
      %1858 = vmatpush.msra.mxu0 0.0
      %1859 = vmatpush.msra.mxu0 0.0
      %1860 = vmatpush.msra.mxu0 %v710
      %1861 = vmatpush.msra.mxu0 %v706
      %1862 = vmatpush.msra.mxu0 %v702
      %1863 = vmatpush.msra.mxu0 %v698
      %1864 = vmatpush.msra.mxu0 %v694
      %1865 = vmatpush.msra.mxu0 %v690
      %1866 = vmatpush.msra.mxu0 %v686
      %1867 = vmatpush.msra.mxu0 %v682
      %1868 = vmatmul.f32.gmra.mxu0 %v1526
      %v1869 = vpop.f32.mrf.mxu0
      %v1870 = vadd.f32 %v1847, %v1869
      %1871 = vmatmul.f32.gmra.mxu0 %v1528
      %v1872 = vpop.f32.mrf.mxu0
      %v1873 = vadd.f32 %v1850, %v1872
      %1874 = vdwg.mxu0
      %1875 = vmatpush.msra.mxu0 %v487
      %1876 = vmatpush.msra.mxu0 %v483
      %1877 = vmatpush.msra.mxu0 %v479
      %1878 = vmatpush.msra.mxu0 %v475
      %1879 = vmatpush.msra.mxu0 %v471
      %1880 = vmatpush.msra.mxu0 %v467
      %1881 = vmatpush.msra.mxu0 %v463
      %1882 = vmatpush.msra.mxu0 %v459
      %1883 = vmatpush.msra.mxu0 %v455
      %1884 = vmatpush.msra.mxu0 %v451
      %1885 = vmatpush.msra.mxu0 %v447
      %1886 = vmatpush.msra.mxu0 %v443
      %1887 = vmatpush.msra.mxu0 %v439
      %1888 = vmatpush.msra.mxu0 %v435
      %1889 = vmatpush.msra.mxu0 %v431
      %1890 = vmatpush.msra.mxu0 %v427
      %1891 = vmatmul.f32.gmra.mxu0 %v414
      %v1892 = vpop.f32.mrf.mxu0
      %v1893 = vadd.f32 %v1520, %v1892
      %1894 = vmatmul.f32.gmra.mxu0 %v419
      %v1895 = vpop.f32.mrf.mxu0
      %v1896 = vadd.f32 %v1523, %v1895
      %1897 = vdwg.mxu0
      %1898 = vmatpush.msra.mxu0 %v551
      %1899 = vmatpush.msra.mxu0 %v547
      %1900 = vmatpush.msra.mxu0 %v543
      %1901 = vmatpush.msra.mxu0 %v539
      %1902 = vmatpush.msra.mxu0 %v535
      %1903 = vmatpush.msra.mxu0 %v531
      %1904 = vmatpush.msra.mxu0 %v527
      %1905 = vmatpush.msra.mxu0 %v523
      %1906 = vmatpush.msra.mxu0 %v519
      %1907 = vmatpush.msra.mxu0 %v515
      %1908 = vmatpush.msra.mxu0 %v511
      %1909 = vmatpush.msra.mxu0 %v507
      %1910 = vmatpush.msra.mxu0 %v503
      %1911 = vmatpush.msra.mxu0 %v499
      %1912 = vmatpush.msra.mxu0 %v495
      %1913 = vmatpush.msra.mxu0 %v491
      %1914 = vmatmul.f32.gmra.mxu0 %v415
      %v1915 = vpop.f32.mrf.mxu0
      %v1916 = vadd.f32 %v1893, %v1915
      %1917 = vmatmul.f32.gmra.mxu0 %v420
      %v1918 = vpop.f32.mrf.mxu0
      %v1919 = vadd.f32 %v1896, %v1918
      %1920 = vdwg.mxu0
      %1921 = vmatpush.msra.mxu0 %v615
      %1922 = vmatpush.msra.mxu0 %v611
      %1923 = vmatpush.msra.mxu0 %v607
      %1924 = vmatpush.msra.mxu0 %v603
      %1925 = vmatpush.msra.mxu0 %v599
      %1926 = vmatpush.msra.mxu0 %v595
      %1927 = vmatpush.msra.mxu0 %v591
      %1928 = vmatpush.msra.mxu0 %v587
      %1929 = vmatpush.msra.mxu0 %v583
      %1930 = vmatpush.msra.mxu0 %v579
      %1931 = vmatpush.msra.mxu0 %v575
      %1932 = vmatpush.msra.mxu0 %v571
      %1933 = vmatpush.msra.mxu0 %v567
      %1934 = vmatpush.msra.mxu0 %v563
      %1935 = vmatpush.msra.mxu0 %v559
      %1936 = vmatpush.msra.mxu0 %v555
      %1937 = vmatmul.f32.gmra.mxu0 %v416
      %v1938 = vpop.f32.mrf.mxu0
      %v1939 = vadd.f32 %v1916, %v1938
      %1940 = vmatmul.f32.gmra.mxu0 %v421
      %v1941 = vpop.f32.mrf.mxu0
      %v1942 = vadd.f32 %v1919, %v1941
      %1943 = vdwg.mxu0
      %1944 = vmatpush.msra.mxu0 %v679
      %1945 = vmatpush.msra.mxu0 %v675
      %1946 = vmatpush.msra.mxu0 %v671
      %1947 = vmatpush.msra.mxu0 %v667
      %1948 = vmatpush.msra.mxu0 %v663
      %1949 = vmatpush.msra.mxu0 %v659
      %1950 = vmatpush.msra.mxu0 %v655
      %1951 = vmatpush.msra.mxu0 %v651
      %1952 = vmatpush.msra.mxu0 %v647
      %1953 = vmatpush.msra.mxu0 %v643
      %1954 = vmatpush.msra.mxu0 %v639
      %1955 = vmatpush.msra.mxu0 %v635
      %1956 = vmatpush.msra.mxu0 %v631
      %1957 = vmatpush.msra.mxu0 %v627
      %1958 = vmatpush.msra.mxu0 %v623
      %1959 = vmatpush.msra.mxu0 %v619
      %1960 = vmatmul.f32.gmra.mxu0 %v417
      %v1961 = vpop.f32.mrf.mxu0
      %v1962 = vadd.f32 %v1939, %v1961
      %1963 = vmatmul.f32.gmra.mxu0 %v422
      %v1964 = vpop.f32.mrf.mxu0
      %v1965 = vadd.f32 %v1942, %v1964
      %1966 = vdwg.mxu0
      %1967 = vmatpush.msra.mxu0 0.0
      %1968 = vmatpush.msra.mxu0 0.0
      %1969 = vmatpush.msra.mxu0 0.0
      %1970 = vmatpush.msra.mxu0 0.0
      %1971 = vmatpush.msra.mxu0 0.0
      %1972 = vmatpush.msra.mxu0 0.0
      %1973 = vmatpush.msra.mxu0 0.0
      %1974 = vmatpush.msra.mxu0 0.0
      %1975 = vmatpush.msra.mxu0 %v711
      %1976 = vmatpush.msra.mxu0 %v707
      %1977 = vmatpush.msra.mxu0 %v703
      %1978 = vmatpush.msra.mxu0 %v699
      %1979 = vmatpush.msra.mxu0 %v695
      %1980 = vmatpush.msra.mxu0 %v691
      %1981 = vmatpush.msra.mxu0 %v687
      %1982 = vmatpush.msra.mxu0 %v683
      %1983 = vmatmul.f32.gmra.mxu0 %v1526
      %v1984 = vpop.f32.mrf.mxu0
      %v1985 = vadd.f32 %v1962, %v1984
      %1986 = vmatmul.f32.gmra.mxu0 %v1528
      %v1987 = vpop.f32.mrf.mxu0
      %v1988 = vadd.f32 %v1965, %v1987
      %1989 = vdwg.mxu0
      %v1990 = vld [vmem:[%s408] sm:$0xfc]
      %v1991 = vld [vmem:[%s408 + $0x8] sm:$0xfc]
      %v1992 = vld [vmem:[%s408 + $0x10] sm:$0xfc]
      %v1993 = vld [vmem:[%s408 + $0x18] sm:$0xfc]
      %v1994 = vld [vmem:[%s408 + $0x20] sm:$0xfc]
      %v1995 = vld [vmem:[%s408 + $0x50] sm:$0x3]
      %v1996 = vld [vmem:[%s408 + $0x58] sm:$0x3]
      %v1997 = vld [vmem:[%s408 + $0x60] sm:$0x3]
      %v1998 = vld [vmem:[%s408 + $0x68] sm:$0x3]
      %v1999 = vld [vmem:[%s408 + $0x70] sm:$0x3]
      %s2000 = scalar_lea.vmem %s1, 4608
      %v2001 = vld [vmem:[%s2000] sm:$0xff]
      %v2002 = vld [vmem:[%s2000 + $0x8] sm:$0xff]
      %v2003 = vld [vmem:[%s2000 + $0x10] sm:$0xff]
      %v2004 = vld [vmem:[%s2000 + $0x18] sm:$0xff]
      %v2005 = vld [vmem:[%s2000 + $0x20] sm:$0xff]
      %v2006 = vld [vmem:[%s2000 + $0x28] sm:$0xff]
      %v2007 = vld [vmem:[%s2000 + $0x30] sm:$0xff]
      %v2008 = vld [vmem:[%s2000 + $0x38] sm:$0xff]
      %v2009 = vld [vmem:[%s2000 + $0x40] sm:$0xff]
      %v2010 = vld [vmem:[%s2000 + $0x48] sm:$0xff]
      %v2011 = vld [vmem:[%s2000 + $0x50] sm:$0xff]
      %v2012 = vld [vmem:[%s2000 + $0x58] sm:$0xff]
      %v2013 = vld [vmem:[%s2000 + $0x60] sm:$0xff]
      %v2014 = vld [vmem:[%s2000 + $0x68] sm:$0xff]
      %v2015 = vld [vmem:[%s2000 + $0x70] sm:$0xff]
      %v2016 = vld [vmem:[%s2000 + $0x78] sm:$0xff]
      %v2017 = vld [vmem:[%s2000 + $0x80] sm:$0xff]
      %v2018 = vld [vmem:[%s2000 + $0x88] sm:$0xff]
      %v2019 = vld [vmem:[%s2000 + $0x90] sm:$0xff]
      %v2020 = vld [vmem:[%s2000 + $0x98] sm:$0xff]
      %v2021 = vld [vmem:[%s2000 + $0xa0] sm:$0xff]
      %v2022 = vld [vmem:[%s2000 + $0xa8] sm:$0xff]
      %v2023 = vld [vmem:[%s2000 + $0xb0] sm:$0xff]
      %v2024 = vld [vmem:[%s2000 + $0xb8] sm:$0xff]
      %v2025 = vld [vmem:[%s2000 + $0xc0] sm:$0xff]
      %v2026 = vld [vmem:[%s2000 + $0xc8] sm:$0xff]
      %v2027 = vld [vmem:[%s2000 + $0xd0] sm:$0xff]
      %v2028 = vld [vmem:[%s2000 + $0xd8] sm:$0xff]
      %v2029 = vld [vmem:[%s2000 + $0xe0] sm:$0xff]
      %v2030 = vld [vmem:[%s2000 + $0xe8] sm:$0xff]
      %v2031 = vld [vmem:[%s2000 + $0xf0] sm:$0xff]
      %v2032 = vld [vmem:[%s2000 + $0xf8] sm:$0xff]
      %v2033 = vld [vmem:[%s2000 + $0x100] sm:$0xff]
      %v2034 = vld [vmem:[%s2000 + $0x108] sm:$0xff]
      %v2035 = vld [vmem:[%s2000 + $0x110] sm:$0xff]
      %v2036 = vld [vmem:[%s2000 + $0x118] sm:$0xff]
      %v2037 = vld [vmem:[%s2000 + $0x120] sm:$0xff]
      %v2038 = vld [vmem:[%s2000 + $0x128] sm:$0xff]
      %v2039 = vld [vmem:[%s2000 + $0x130] sm:$0xff]
      %v2040 = vld [vmem:[%s2000 + $0x138] sm:$0xff]
      %v2041 = vld [vmem:[%s2000 + $0x140] sm:$0xff]
      %v2042 = vld [vmem:[%s2000 + $0x148] sm:$0xff]
      %v2043 = vld [vmem:[%s2000 + $0x150] sm:$0xff]
      %v2044 = vld [vmem:[%s2000 + $0x158] sm:$0xff]
      %v2045 = vld [vmem:[%s2000 + $0x160] sm:$0xff]
      %v2046 = vld [vmem:[%s2000 + $0x168] sm:$0xff]
      %v2047 = vld [vmem:[%s2000 + $0x170] sm:$0xff]
      %v2048 = vld [vmem:[%s2000 + $0x178] sm:$0xff]
      %v2049 = vld [vmem:[%s2000 + $0x180] sm:$0xff]
      %v2050 = vld [vmem:[%s2000 + $0x188] sm:$0xff]
      %v2051 = vld [vmem:[%s2000 + $0x190] sm:$0xff]
      %v2052 = vld [vmem:[%s2000 + $0x198] sm:$0xff]
      %v2053 = vld [vmem:[%s2000 + $0x1a0] sm:$0xff]
      %v2054 = vld [vmem:[%s2000 + $0x1a8] sm:$0xff]
      %v2055 = vld [vmem:[%s2000 + $0x1b0] sm:$0xff]
      %v2056 = vld [vmem:[%s2000 + $0x1b8] sm:$0xff]
      %v2057 = vld [vmem:[%s2000 + $0x1c0] sm:$0xff]
      %v2058 = vld [vmem:[%s2000 + $0x1c8] sm:$0xff]
      %v2059 = vld [vmem:[%s2000 + $0x1d0] sm:$0xff]
      %v2060 = vld [vmem:[%s2000 + $0x1d8] sm:$0xff]
      %v2061 = vld [vmem:[%s2000 + $0x1e0] sm:$0xff]
      %v2062 = vld [vmem:[%s2000 + $0x1e8] sm:$0xff]
      %v2063 = vld [vmem:[%s2000 + $0x1f0] sm:$0xff]
      %v2064 = vld [vmem:[%s2000 + $0x1f8] sm:$0xff]
      %v2065 = vld [vmem:[%s2000 + $0x200] sm:$0xff]
      %v2066 = vld [vmem:[%s2000 + $0x208] sm:$0xff]
      %v2067 = vld [vmem:[%s2000 + $0x210] sm:$0xff]
      %v2068 = vld [vmem:[%s2000 + $0x218] sm:$0xff]
      %v2069 = vld [vmem:[%s2000 + $0x220] sm:$0xff]
      %v2070 = vld [vmem:[%s2000 + $0x228] sm:$0xff]
      %v2071 = vld [vmem:[%s2000 + $0x230] sm:$0xff]
      %v2072 = vld [vmem:[%s2000 + $0x238] sm:$0xff]
      %v2073 = vld [vmem:[%s2000 + $0x240] sm:$0xff]
      %v2074 = vld [vmem:[%s2000 + $0x248] sm:$0xff]
      %v2075 = vld [vmem:[%s2000 + $0x250] sm:$0xff]
      %v2076 = vld [vmem:[%s2000 + $0x258] sm:$0xff]
      %v2077 = vld [vmem:[%s2000 + $0x260] sm:$0xff]
      %v2078 = vld [vmem:[%s2000 + $0x268] sm:$0xff]
      %v2079 = vld [vmem:[%s2000 + $0x270] sm:$0xff]
      %v2080 = vld [vmem:[%s2000 + $0x278] sm:$0xff]
      %v2081 = vld [vmem:[%s2000 + $0x280] sm:$0xff]
      %v2082 = vld [vmem:[%s2000 + $0x288] sm:$0xff]
      %v2083 = vld [vmem:[%s2000 + $0x290] sm:$0xff]
      %v2084 = vld [vmem:[%s2000 + $0x298] sm:$0xff]
      %v2085 = vld [vmem:[%s2000 + $0x2a0] sm:$0xff]
      %v2086 = vld [vmem:[%s2000 + $0x2a8] sm:$0xff]
      %v2087 = vld [vmem:[%s2000 + $0x2b0] sm:$0xff]
      %v2088 = vld [vmem:[%s2000 + $0x2b8] sm:$0xff]
      %v2089 = vld [vmem:[%s2000 + $0x2c0] sm:$0xff]
      %v2090 = vld [vmem:[%s2000 + $0x2c8] sm:$0xff]
      %v2091 = vld [vmem:[%s2000 + $0x2d0] sm:$0xff]
      %v2092 = vld [vmem:[%s2000 + $0x2d8] sm:$0xff]
      %v2093 = vld [vmem:[%s2000 + $0x2e0] sm:$0xff]
      %v2094 = vld [vmem:[%s2000 + $0x2e8] sm:$0xff]
      %v2095 = vld [vmem:[%s2000 + $0x2f0] sm:$0xff]
      %v2096 = vld [vmem:[%s2000 + $0x2f8] sm:$0xff]
      %v2097 = vld [vmem:[%s2000 + $0x300] sm:$0xff]
      %v2098 = vld [vmem:[%s2000 + $0x308] sm:$0xff]
      %v2099 = vld [vmem:[%s2000 + $0x310] sm:$0xff]
      %v2100 = vld [vmem:[%s2000 + $0x318] sm:$0xff]
      %v2101 = vld [vmem:[%s2000 + $0x320] sm:$0xff]
      %v2102 = vld [vmem:[%s2000 + $0x328] sm:$0xff]
      %v2103 = vld [vmem:[%s2000 + $0x330] sm:$0xff]
      %v2104 = vld [vmem:[%s2000 + $0x338] sm:$0xff]
      %v2105 = vld [vmem:[%s2000 + $0x340] sm:$0xff]
      %v2106 = vld [vmem:[%s2000 + $0x348] sm:$0xff]
      %v2107 = vld [vmem:[%s2000 + $0x350] sm:$0xff]
      %v2108 = vld [vmem:[%s2000 + $0x358] sm:$0xff]
      %v2109 = vld [vmem:[%s2000 + $0x360] sm:$0xff]
      %v2110 = vld [vmem:[%s2000 + $0x368] sm:$0xff]
      %v2111 = vld [vmem:[%s2000 + $0x370] sm:$0xff]
      %v2112 = vld [vmem:[%s2000 + $0x378] sm:$0xff]
      %v2113 = vld [vmem:[%s2000 + $0x380] sm:$0xff]
      %v2114 = vld [vmem:[%s2000 + $0x388] sm:$0xff]
      %v2115 = vld [vmem:[%s2000 + $0x390] sm:$0xff]
      %v2116 = vld [vmem:[%s2000 + $0x398] sm:$0xff]
      %v2117 = vld [vmem:[%s2000 + $0x3a0] sm:$0xff]
      %v2118 = vld [vmem:[%s2000 + $0x3a8] sm:$0xff]
      %v2119 = vld [vmem:[%s2000 + $0x3b0] sm:$0xff]
      %v2120 = vld [vmem:[%s2000 + $0x3b8] sm:$0xff]
      %v2121 = vld [vmem:[%s2000 + $0x3c0] sm:$0xff]
      %v2122 = vld [vmem:[%s2000 + $0x3c8] sm:$0xff]
      %v2123 = vld [vmem:[%s2000 + $0x3d0] sm:$0xff]
      %v2124 = vld [vmem:[%s2000 + $0x3d8] sm:$0xff]
      %v2125 = vld [vmem:[%s2000 + $0x3e0] sm:$0xff]
      %v2126 = vld [vmem:[%s2000 + $0x3e8] sm:$0xff]
      %v2127 = vld [vmem:[%s2000 + $0x3f0] sm:$0xff]
      %v2128 = vld [vmem:[%s2000 + $0x3f8] sm:$0xff]
      %v2129 = vld [vmem:[%s2000 + $0x400] sm:$0xff]
      %v2130 = vld [vmem:[%s2000 + $0x408] sm:$0xff]
      %v2131 = vld [vmem:[%s2000 + $0x410] sm:$0xff]
      %v2132 = vld [vmem:[%s2000 + $0x418] sm:$0xff]
      %v2133 = vld [vmem:[%s2000 + $0x420] sm:$0xff]
      %v2134 = vld [vmem:[%s2000 + $0x428] sm:$0xff]
      %v2135 = vld [vmem:[%s2000 + $0x430] sm:$0xff]
      %v2136 = vld [vmem:[%s2000 + $0x438] sm:$0xff]
      %v2137 = vld [vmem:[%s2000 + $0x440] sm:$0xff]
      %v2138 = vld [vmem:[%s2000 + $0x448] sm:$0xff]
      %v2139 = vld [vmem:[%s2000 + $0x450] sm:$0xff]
      %v2140 = vld [vmem:[%s2000 + $0x458] sm:$0xff]
      %v2141 = vld [vmem:[%s2000 + $0x460] sm:$0xff]
      %v2142 = vld [vmem:[%s2000 + $0x468] sm:$0xff]
      %v2143 = vld [vmem:[%s2000 + $0x470] sm:$0xff]
      %v2144 = vld [vmem:[%s2000 + $0x478] sm:$0xff]
      %v2145 = vld [vmem:[%s2000 + $0x480] sm:$0xff]
      %v2146 = vld [vmem:[%s2000 + $0x488] sm:$0xff]
      %v2147 = vld [vmem:[%s2000 + $0x490] sm:$0xff]
      %v2148 = vld [vmem:[%s2000 + $0x498] sm:$0xff]
      %v2149 = vld [vmem:[%s2000 + $0x4a0] sm:$0xff]
      %v2150 = vld [vmem:[%s2000 + $0x4a8] sm:$0xff]
      %v2151 = vld [vmem:[%s2000 + $0x4b0] sm:$0xff]
      %v2152 = vld [vmem:[%s2000 + $0x4b8] sm:$0xff]
      %v2153 = vld [vmem:[%s2000 + $0x4c0] sm:$0xff]
      %v2154 = vld [vmem:[%s2000 + $0x4c8] sm:$0xff]
      %v2155 = vld [vmem:[%s2000 + $0x4d0] sm:$0xff]
      %v2156 = vld [vmem:[%s2000 + $0x4d8] sm:$0xff]
      %v2157 = vld [vmem:[%s2000 + $0x4e0] sm:$0xff]
      %v2158 = vld [vmem:[%s2000 + $0x4e8] sm:$0xff]
      %v2159 = vld [vmem:[%s2000 + $0x4f0] sm:$0xff]
      %v2160 = vld [vmem:[%s2000 + $0x4f8] sm:$0xff]
      %v2161 = vld [vmem:[%s2000 + $0x500] sm:$0xff]
      %v2162 = vld [vmem:[%s2000 + $0x508] sm:$0xff]
      %v2163 = vld [vmem:[%s2000 + $0x510] sm:$0xff]
      %v2164 = vld [vmem:[%s2000 + $0x518] sm:$0xff]
      %v2165 = vld [vmem:[%s2000 + $0x520] sm:$0xff]
      %v2166 = vld [vmem:[%s2000 + $0x528] sm:$0xff]
      %v2167 = vld [vmem:[%s2000 + $0x530] sm:$0xff]
      %v2168 = vld [vmem:[%s2000 + $0x538] sm:$0xff]
      %v2169 = vld [vmem:[%s2000 + $0x540] sm:$0xff]
      %v2170 = vld [vmem:[%s2000 + $0x548] sm:$0xff]
      %v2171 = vld [vmem:[%s2000 + $0x550] sm:$0xff]
      %v2172 = vld [vmem:[%s2000 + $0x558] sm:$0xff]
      %v2173 = vld [vmem:[%s2000 + $0x560] sm:$0xff]
      %v2174 = vld [vmem:[%s2000 + $0x568] sm:$0xff]
      %v2175 = vld [vmem:[%s2000 + $0x570] sm:$0xff]
      %v2176 = vld [vmem:[%s2000 + $0x578] sm:$0xff]
      %v2177 = vld [vmem:[%s2000 + $0x580] sm:$0xff]
      %v2178 = vld [vmem:[%s2000 + $0x588] sm:$0xff]
      %v2179 = vld [vmem:[%s2000 + $0x590] sm:$0xff]
      %v2180 = vld [vmem:[%s2000 + $0x598] sm:$0xff]
      %v2181 = vld [vmem:[%s2000 + $0x5a0] sm:$0xff]
      %v2182 = vld [vmem:[%s2000 + $0x5a8] sm:$0xff]
      %v2183 = vld [vmem:[%s2000 + $0x5b0] sm:$0xff]
      %v2184 = vld [vmem:[%s2000 + $0x5b8] sm:$0xff]
      %v2185 = vld [vmem:[%s2000 + $0x5c0] sm:$0xff]
      %v2186 = vld [vmem:[%s2000 + $0x5c8] sm:$0xff]
      %v2187 = vld [vmem:[%s2000 + $0x5d0] sm:$0xff]
      %v2188 = vld [vmem:[%s2000 + $0x5d8] sm:$0xff]
      %v2189 = vld [vmem:[%s2000 + $0x5e0] sm:$0xff]
      %v2190 = vld [vmem:[%s2000 + $0x5e8] sm:$0xff]
      %v2191 = vld [vmem:[%s2000 + $0x5f0] sm:$0xff]
      %v2192 = vld [vmem:[%s2000 + $0x5f8] sm:$0xff]
      %v2193 = vld [vmem:[%s2000 + $0x600] sm:$0xff]
      %v2194 = vld [vmem:[%s2000 + $0x608] sm:$0xff]
      %v2195 = vld [vmem:[%s2000 + $0x610] sm:$0xff]
      %v2196 = vld [vmem:[%s2000 + $0x618] sm:$0xff]
      %v2197 = vld [vmem:[%s2000 + $0x620] sm:$0xff]
      %v2198 = vld [vmem:[%s2000 + $0x628] sm:$0xff]
      %v2199 = vld [vmem:[%s2000 + $0x630] sm:$0xff]
      %v2200 = vld [vmem:[%s2000 + $0x638] sm:$0xff]
      %v2201 = vld [vmem:[%s2000 + $0x640] sm:$0xff]
      %v2202 = vld [vmem:[%s2000 + $0x648] sm:$0xff]
      %v2203 = vld [vmem:[%s2000 + $0x650] sm:$0xff]
      %v2204 = vld [vmem:[%s2000 + $0x658] sm:$0xff]
      %v2205 = vld [vmem:[%s2000 + $0x660] sm:$0xff]
      %v2206 = vld [vmem:[%s2000 + $0x668] sm:$0xff]
      %v2207 = vld [vmem:[%s2000 + $0x670] sm:$0xff]
      %v2208 = vld [vmem:[%s2000 + $0x678] sm:$0xff]
      %v2209 = vld [vmem:[%s2000 + $0x680] sm:$0xff]
      %v2210 = vld [vmem:[%s2000 + $0x688] sm:$0xff]
      %v2211 = vld [vmem:[%s2000 + $0x690] sm:$0xff]
      %v2212 = vld [vmem:[%s2000 + $0x698] sm:$0xff]
      %v2213 = vld [vmem:[%s2000 + $0x6a0] sm:$0xff]
      %v2214 = vld [vmem:[%s2000 + $0x6a8] sm:$0xff]
      %v2215 = vld [vmem:[%s2000 + $0x6b0] sm:$0xff]
      %v2216 = vld [vmem:[%s2000 + $0x6b8] sm:$0xff]
      %v2217 = vld [vmem:[%s2000 + $0x6c0] sm:$0xff]
      %v2218 = vld [vmem:[%s2000 + $0x6c8] sm:$0xff]
      %v2219 = vld [vmem:[%s2000 + $0x6d0] sm:$0xff]
      %v2220 = vld [vmem:[%s2000 + $0x6d8] sm:$0xff]
      %v2221 = vld [vmem:[%s2000 + $0x6e0] sm:$0xff]
      %v2222 = vld [vmem:[%s2000 + $0x6e8] sm:$0xff]
      %v2223 = vld [vmem:[%s2000 + $0x6f0] sm:$0xff]
      %v2224 = vld [vmem:[%s2000 + $0x6f8] sm:$0xff]
      %v2225 = vld [vmem:[%s2000 + $0x700] sm:$0xff]
      %v2226 = vld [vmem:[%s2000 + $0x708] sm:$0xff]
      %v2227 = vld [vmem:[%s2000 + $0x710] sm:$0xff]
      %v2228 = vld [vmem:[%s2000 + $0x718] sm:$0xff]
      %v2229 = vld [vmem:[%s2000 + $0x720] sm:$0xff]
      %v2230 = vld [vmem:[%s2000 + $0x728] sm:$0xff]
      %v2231 = vld [vmem:[%s2000 + $0x730] sm:$0xff]
      %v2232 = vld [vmem:[%s2000 + $0x738] sm:$0xff]
      %v2233 = vld [vmem:[%s2000 + $0x740] sm:$0xff]
      %v2234 = vld [vmem:[%s2000 + $0x748] sm:$0xff]
      %v2235 = vld [vmem:[%s2000 + $0x750] sm:$0xff]
      %v2236 = vld [vmem:[%s2000 + $0x758] sm:$0xff]
      %v2237 = vld [vmem:[%s2000 + $0x760] sm:$0xff]
      %v2238 = vld [vmem:[%s2000 + $0x768] sm:$0xff]
      %v2239 = vld [vmem:[%s2000 + $0x770] sm:$0xff]
      %v2240 = vld [vmem:[%s2000 + $0x778] sm:$0xff]
      %v2241 = vld [vmem:[%s2000 + $0x780] sm:$0xff]
      %v2242 = vld [vmem:[%s2000 + $0x788] sm:$0xff]
      %v2243 = vld [vmem:[%s2000 + $0x790] sm:$0xff]
      %v2244 = vld [vmem:[%s2000 + $0x798] sm:$0xff]
      %v2245 = vld [vmem:[%s2000 + $0x7a0] sm:$0xff]
      %v2246 = vld [vmem:[%s2000 + $0x7a8] sm:$0xff]
      %v2247 = vld [vmem:[%s2000 + $0x7b0] sm:$0xff]
      %v2248 = vld [vmem:[%s2000 + $0x7b8] sm:$0xff]
      %v2249 = vld [vmem:[%s2000 + $0x7c0] sm:$0xff]
      %v2250 = vld [vmem:[%s2000 + $0x7c8] sm:$0xff]
      %v2251 = vld [vmem:[%s2000 + $0x7d0] sm:$0xff]
      %v2252 = vld [vmem:[%s2000 + $0x7d8] sm:$0xff]
      %v2253 = vld [vmem:[%s2000 + $0x7e0] sm:$0xff]
      %v2254 = vld [vmem:[%s2000 + $0x7e8] sm:$0xff]
      %v2255 = vld [vmem:[%s2000 + $0x7f0] sm:$0xff]
      %v2256 = vld [vmem:[%s2000 + $0x7f8] sm:$0xff]
      %v2257 = vld [vmem:[%s2000 + $0x800] sm:$0xff]
      %v2258 = vld [vmem:[%s2000 + $0x808] sm:$0xff]
      %v2259 = vld [vmem:[%s2000 + $0x810] sm:$0xff]
      %v2260 = vld [vmem:[%s2000 + $0x818] sm:$0xff]
      %v2261 = vld [vmem:[%s2000 + $0x820] sm:$0xff]
      %v2262 = vld [vmem:[%s2000 + $0x828] sm:$0xff]
      %v2263 = vld [vmem:[%s2000 + $0x830] sm:$0xff]
      %v2264 = vld [vmem:[%s2000 + $0x838] sm:$0xff]
      %v2265 = vld [vmem:[%s2000 + $0x840] sm:$0xff]
      %v2266 = vld [vmem:[%s2000 + $0x848] sm:$0xff]
      %v2267 = vld [vmem:[%s2000 + $0x850] sm:$0xff]
      %v2268 = vld [vmem:[%s2000 + $0x858] sm:$0xff]
      %v2269 = vld [vmem:[%s2000 + $0x860] sm:$0xff]
      %v2270 = vld [vmem:[%s2000 + $0x868] sm:$0xff]
      %v2271 = vld [vmem:[%s2000 + $0x870] sm:$0xff]
      %v2272 = vld [vmem:[%s2000 + $0x878] sm:$0xff]
      %v2273 = vld [vmem:[%s2000 + $0x880] sm:$0xff]
      %v2274 = vld [vmem:[%s2000 + $0x888] sm:$0xff]
      %v2275 = vld [vmem:[%s2000 + $0x890] sm:$0xff]
      %v2276 = vld [vmem:[%s2000 + $0x898] sm:$0xff]
      %v2277 = vld [vmem:[%s2000 + $0x8a0] sm:$0xff]
      %v2278 = vld [vmem:[%s2000 + $0x8a8] sm:$0xff]
      %v2279 = vld [vmem:[%s2000 + $0x8b0] sm:$0xff]
      %v2280 = vld [vmem:[%s2000 + $0x8b8] sm:$0xff]
      %v2281 = vld [vmem:[%s2000 + $0x8c0] sm:$0xff]
      %v2282 = vld [vmem:[%s2000 + $0x8c8] sm:$0xff]
      %v2283 = vld [vmem:[%s2000 + $0x8d0] sm:$0xff]
      %v2284 = vld [vmem:[%s2000 + $0x8d8] sm:$0xff]
      %v2285 = vld [vmem:[%s2000 + $0x8e0] sm:$0xff]
      %v2286 = vld [vmem:[%s2000 + $0x8e8] sm:$0xff]
      %v2287 = vld [vmem:[%s2000 + $0x8f0] sm:$0xff]
      %v2288 = vld [vmem:[%s2000 + $0x8f8] sm:$0xff]
      %vm2299 = vcmask 1045504
      %v2300 = vrot.slane %v1990, 2
      %v2301 = vrot.slane %v419, 2
      %v2302 = vsel %vm2299, %v2300, %v2301
      %v2303 = vrot.slane %v1991, 2
      %v2304 = vrot.slane %v420, 2
      %v2305 = vsel %vm2299, %v2303, %v2304
      %v2306 = vrot.slane %v1992, 2
      %v2307 = vrot.slane %v421, 2
      %v2308 = vsel %vm2299, %v2306, %v2307
      %v2309 = vrot.slane %v1993, 2
      %v2310 = vrot.slane %v422, 2
      %v2311 = vsel %vm2299, %v2309, %v2310
      %v2312 = vrot.slane %v1994, 2
      %v2313 = vrot.slane %v423, 2
      %v2314 = vsel %vm2299, %v2312, %v2313
      %v2315 = vrot.slane %v1995, 2
      %v2316 = vsel %vm2299, %v2301, %v2315
      %v2317 = vrot.slane %v1996, 2
      %v2318 = vsel %vm2299, %v2304, %v2317
      %v2319 = vrot.slane %v1997, 2
      %v2320 = vsel %vm2299, %v2307, %v2319
      %v2321 = vrot.slane %v1998, 2
      %v2322 = vsel %vm2299, %v2310, %v2321
      %v2323 = vrot.slane %v1999, 2
      %v2324 = vsel %vm2299, %v2313, %v2323
      %v2333 = vsel %vm1060, %v2314, 0
      %v2335 = vsel %vm1060, %v2324, 0
      %2337 = vmatpush.msra.mxu0 %v2061
      %2338 = vmatpush.msra.mxu0 %v2057
      %2339 = vmatpush.msra.mxu0 %v2053
      %2340 = vmatpush.msra.mxu0 %v2049
      %2341 = vmatpush.msra.mxu0 %v2045
      %2342 = vmatpush.msra.mxu0 %v2041
      %2343 = vmatpush.msra.mxu0 %v2037
      %2344 = vmatpush.msra.mxu0 %v2033
      %2345 = vmatpush.msra.mxu0 %v2029
      %2346 = vmatpush.msra.mxu0 %v2025
      %2347 = vmatpush.msra.mxu0 %v2021
      %2348 = vmatpush.msra.mxu0 %v2017
      %2349 = vmatpush.msra.mxu0 %v2013
      %2350 = vmatpush.msra.mxu0 %v2009
      %2351 = vmatpush.msra.mxu0 %v2005
      %2352 = vmatpush.msra.mxu0 %v2001
      %2353 = vmatmul.f32.gmra.mxu0 %v2302
      %v2354 = vpop.f32.mrf.mxu0
      %v2355 = vadd.f32 0.0, %v2354
      %2356 = vmatmul.f32.gmra.mxu0 %v2316
      %v2357 = vpop.f32.mrf.mxu0
      %v2358 = vadd.f32 0.0, %v2357
      %2359 = vdwg.mxu0
      %2360 = vmatpush.msra.mxu0 %v2125
      %2361 = vmatpush.msra.mxu0 %v2121
      %2362 = vmatpush.msra.mxu0 %v2117
      %2363 = vmatpush.msra.mxu0 %v2113
      %2364 = vmatpush.msra.mxu0 %v2109
      %2365 = vmatpush.msra.mxu0 %v2105
      %2366 = vmatpush.msra.mxu0 %v2101
      %2367 = vmatpush.msra.mxu0 %v2097
      %2368 = vmatpush.msra.mxu0 %v2093
      %2369 = vmatpush.msra.mxu0 %v2089
      %2370 = vmatpush.msra.mxu0 %v2085
      %2371 = vmatpush.msra.mxu0 %v2081
      %2372 = vmatpush.msra.mxu0 %v2077
      %2373 = vmatpush.msra.mxu0 %v2073
      %2374 = vmatpush.msra.mxu0 %v2069
      %2375 = vmatpush.msra.mxu0 %v2065
      %2376 = vmatmul.f32.gmra.mxu0 %v2305
      %v2377 = vpop.f32.mrf.mxu0
      %v2378 = vadd.f32 %v2355, %v2377
      %2379 = vmatmul.f32.gmra.mxu0 %v2318
      %v2380 = vpop.f32.mrf.mxu0
      %v2381 = vadd.f32 %v2358, %v2380
      %2382 = vdwg.mxu0
      %2383 = vmatpush.msra.mxu0 %v2189
      %2384 = vmatpush.msra.mxu0 %v2185
      %2385 = vmatpush.msra.mxu0 %v2181
      %2386 = vmatpush.msra.mxu0 %v2177
      %2387 = vmatpush.msra.mxu0 %v2173
      %2388 = vmatpush.msra.mxu0 %v2169
      %2389 = vmatpush.msra.mxu0 %v2165
      %2390 = vmatpush.msra.mxu0 %v2161
      %2391 = vmatpush.msra.mxu0 %v2157
      %2392 = vmatpush.msra.mxu0 %v2153
      %2393 = vmatpush.msra.mxu0 %v2149
      %2394 = vmatpush.msra.mxu0 %v2145
      %2395 = vmatpush.msra.mxu0 %v2141
      %2396 = vmatpush.msra.mxu0 %v2137
      %2397 = vmatpush.msra.mxu0 %v2133
      %2398 = vmatpush.msra.mxu0 %v2129
      %2399 = vmatmul.f32.gmra.mxu0 %v2308
      %v2400 = vpop.f32.mrf.mxu0
      %v2401 = vadd.f32 %v2378, %v2400
      %2402 = vmatmul.f32.gmra.mxu0 %v2320
      %v2403 = vpop.f32.mrf.mxu0
      %v2404 = vadd.f32 %v2381, %v2403
      %2405 = vdwg.mxu0
      %2406 = vmatpush.msra.mxu0 %v2253
      %2407 = vmatpush.msra.mxu0 %v2249
      %2408 = vmatpush.msra.mxu0 %v2245
      %2409 = vmatpush.msra.mxu0 %v2241
      %2410 = vmatpush.msra.mxu0 %v2237
      %2411 = vmatpush.msra.mxu0 %v2233
      %2412 = vmatpush.msra.mxu0 %v2229
      %2413 = vmatpush.msra.mxu0 %v2225
      %2414 = vmatpush.msra.mxu0 %v2221
      %2415 = vmatpush.msra.mxu0 %v2217
      %2416 = vmatpush.msra.mxu0 %v2213
      %2417 = vmatpush.msra.mxu0 %v2209
      %2418 = vmatpush.msra.mxu0 %v2205
      %2419 = vmatpush.msra.mxu0 %v2201
      %2420 = vmatpush.msra.mxu0 %v2197
      %2421 = vmatpush.msra.mxu0 %v2193
      %2422 = vmatmul.f32.gmra.mxu0 %v2311
      %v2423 = vpop.f32.mrf.mxu0
      %v2424 = vadd.f32 %v2401, %v2423
      %2425 = vmatmul.f32.gmra.mxu0 %v2322
      %v2426 = vpop.f32.mrf.mxu0
      %v2427 = vadd.f32 %v2404, %v2426
      %2428 = vdwg.mxu0
      %2429 = vmatpush.msra.mxu0 0.0
      %2430 = vmatpush.msra.mxu0 0.0
      %2431 = vmatpush.msra.mxu0 0.0
      %2432 = vmatpush.msra.mxu0 0.0
      %2433 = vmatpush.msra.mxu0 0.0
      %2434 = vmatpush.msra.mxu0 0.0
      %2435 = vmatpush.msra.mxu0 0.0
      %2436 = vmatpush.msra.mxu0 0.0
      %2437 = vmatpush.msra.mxu0 %v2285
      %2438 = vmatpush.msra.mxu0 %v2281
      %2439 = vmatpush.msra.mxu0 %v2277
      %2440 = vmatpush.msra.mxu0 %v2273
      %2441 = vmatpush.msra.mxu0 %v2269
      %2442 = vmatpush.msra.mxu0 %v2265
      %2443 = vmatpush.msra.mxu0 %v2261
      %2444 = vmatpush.msra.mxu0 %v2257
      %2445 = vmatmul.f32.gmra.mxu0 %v2333
      %v2446 = vpop.f32.mrf.mxu0
      %v2447 = vadd.f32 %v2424, %v2446
      %2448 = vmatmul.f32.gmra.mxu0 %v2335
      %v2449 = vpop.f32.mrf.mxu0
      %v2450 = vadd.f32 %v2427, %v2449
      %2451 = vdwg.mxu0
      %2452 = vmatpush.msra.mxu0 %v2062
      %2453 = vmatpush.msra.mxu0 %v2058
      %2454 = vmatpush.msra.mxu0 %v2054
      %2455 = vmatpush.msra.mxu0 %v2050
      %2456 = vmatpush.msra.mxu0 %v2046
      %2457 = vmatpush.msra.mxu0 %v2042
      %2458 = vmatpush.msra.mxu0 %v2038
      %2459 = vmatpush.msra.mxu0 %v2034
      %2460 = vmatpush.msra.mxu0 %v2030
      %2461 = vmatpush.msra.mxu0 %v2026
      %2462 = vmatpush.msra.mxu0 %v2022
      %2463 = vmatpush.msra.mxu0 %v2018
      %2464 = vmatpush.msra.mxu0 %v2014
      %2465 = vmatpush.msra.mxu0 %v2010
      %2466 = vmatpush.msra.mxu0 %v2006
      %2467 = vmatpush.msra.mxu0 %v2002
      %2468 = vmatmul.f32.gmra.mxu0 %v2302
      %v2469 = vpop.f32.mrf.mxu0
      %v2470 = vadd.f32 0.0, %v2469
      %2471 = vmatmul.f32.gmra.mxu0 %v2316
      %v2472 = vpop.f32.mrf.mxu0
      %v2473 = vadd.f32 0.0, %v2472
      %2474 = vdwg.mxu0
      %2475 = vmatpush.msra.mxu0 %v2126
      %2476 = vmatpush.msra.mxu0 %v2122
      %2477 = vmatpush.msra.mxu0 %v2118
      %2478 = vmatpush.msra.mxu0 %v2114
      %2479 = vmatpush.msra.mxu0 %v2110
      %2480 = vmatpush.msra.mxu0 %v2106
      %2481 = vmatpush.msra.mxu0 %v2102
      %2482 = vmatpush.msra.mxu0 %v2098
      %2483 = vmatpush.msra.mxu0 %v2094
      %2484 = vmatpush.msra.mxu0 %v2090
      %2485 = vmatpush.msra.mxu0 %v2086
      %2486 = vmatpush.msra.mxu0 %v2082
      %2487 = vmatpush.msra.mxu0 %v2078
      %2488 = vmatpush.msra.mxu0 %v2074
      %2489 = vmatpush.msra.mxu0 %v2070
      %2490 = vmatpush.msra.mxu0 %v2066
      %2491 = vmatmul.f32.gmra.mxu0 %v2305
      %v2492 = vpop.f32.mrf.mxu0
      %v2493 = vadd.f32 %v2470, %v2492
      %2494 = vmatmul.f32.gmra.mxu0 %v2318
      %v2495 = vpop.f32.mrf.mxu0
      %v2496 = vadd.f32 %v2473, %v2495
      %2497 = vdwg.mxu0
      %2498 = vmatpush.msra.mxu0 %v2190
      %2499 = vmatpush.msra.mxu0 %v2186
      %2500 = vmatpush.msra.mxu0 %v2182
      %2501 = vmatpush.msra.mxu0 %v2178
      %2502 = vmatpush.msra.mxu0 %v2174
      %2503 = vmatpush.msra.mxu0 %v2170
      %2504 = vmatpush.msra.mxu0 %v2166
      %2505 = vmatpush.msra.mxu0 %v2162
      %2506 = vmatpush.msra.mxu0 %v2158
      %2507 = vmatpush.msra.mxu0 %v2154
      %2508 = vmatpush.msra.mxu0 %v2150
      %2509 = vmatpush.msra.mxu0 %v2146
      %2510 = vmatpush.msra.mxu0 %v2142
      %2511 = vmatpush.msra.mxu0 %v2138
      %2512 = vmatpush.msra.mxu0 %v2134
      %2513 = vmatpush.msra.mxu0 %v2130
      %2514 = vmatmul.f32.gmra.mxu0 %v2308
      %v2515 = vpop.f32.mrf.mxu0
      %v2516 = vadd.f32 %v2493, %v2515
      %2517 = vmatmul.f32.gmra.mxu0 %v2320
      %v2518 = vpop.f32.mrf.mxu0
      %v2519 = vadd.f32 %v2496, %v2518
      %2520 = vdwg.mxu0
      %2521 = vmatpush.msra.mxu0 %v2254
      %2522 = vmatpush.msra.mxu0 %v2250
      %2523 = vmatpush.msra.mxu0 %v2246
      %2524 = vmatpush.msra.mxu0 %v2242
      %2525 = vmatpush.msra.mxu0 %v2238
      %2526 = vmatpush.msra.mxu0 %v2234
      %2527 = vmatpush.msra.mxu0 %v2230
      %2528 = vmatpush.msra.mxu0 %v2226
      %2529 = vmatpush.msra.mxu0 %v2222
      %2530 = vmatpush.msra.mxu0 %v2218
      %2531 = vmatpush.msra.mxu0 %v2214
      %2532 = vmatpush.msra.mxu0 %v2210
      %2533 = vmatpush.msra.mxu0 %v2206
      %2534 = vmatpush.msra.mxu0 %v2202
      %2535 = vmatpush.msra.mxu0 %v2198
      %2536 = vmatpush.msra.mxu0 %v2194
      %2537 = vmatmul.f32.gmra.mxu0 %v2311
      %v2538 = vpop.f32.mrf.mxu0
      %v2539 = vadd.f32 %v2516, %v2538
      %2540 = vmatmul.f32.gmra.mxu0 %v2322
      %v2541 = vpop.f32.mrf.mxu0
      %v2542 = vadd.f32 %v2519, %v2541
      %2543 = vdwg.mxu0
      %2544 = vmatpush.msra.mxu0 0.0
      %2545 = vmatpush.msra.mxu0 0.0
      %2546 = vmatpush.msra.mxu0 0.0
      %2547 = vmatpush.msra.mxu0 0.0
      %2548 = vmatpush.msra.mxu0 0.0
      %2549 = vmatpush.msra.mxu0 0.0
      %2550 = vmatpush.msra.mxu0 0.0
      %2551 = vmatpush.msra.mxu0 0.0
      %2552 = vmatpush.msra.mxu0 %v2286
      %2553 = vmatpush.msra.mxu0 %v2282
      %2554 = vmatpush.msra.mxu0 %v2278
      %2555 = vmatpush.msra.mxu0 %v2274
      %2556 = vmatpush.msra.mxu0 %v2270
      %2557 = vmatpush.msra.mxu0 %v2266
      %2558 = vmatpush.msra.mxu0 %v2262
      %2559 = vmatpush.msra.mxu0 %v2258
      %2560 = vmatmul.f32.gmra.mxu0 %v2333
      %v2561 = vpop.f32.mrf.mxu0
      %v2562 = vadd.f32 %v2539, %v2561
      %2563 = vmatmul.f32.gmra.mxu0 %v2335
      %v2564 = vpop.f32.mrf.mxu0
      %v2565 = vadd.f32 %v2542, %v2564
      %2566 = vdwg.mxu0
      %2567 = vmatpush.msra.mxu0 %v2063
      %2568 = vmatpush.msra.mxu0 %v2059
      %2569 = vmatpush.msra.mxu0 %v2055
      %2570 = vmatpush.msra.mxu0 %v2051
      %2571 = vmatpush.msra.mxu0 %v2047
      %2572 = vmatpush.msra.mxu0 %v2043
      %2573 = vmatpush.msra.mxu0 %v2039
      %2574 = vmatpush.msra.mxu0 %v2035
      %2575 = vmatpush.msra.mxu0 %v2031
      %2576 = vmatpush.msra.mxu0 %v2027
      %2577 = vmatpush.msra.mxu0 %v2023
      %2578 = vmatpush.msra.mxu0 %v2019
      %2579 = vmatpush.msra.mxu0 %v2015
      %2580 = vmatpush.msra.mxu0 %v2011
      %2581 = vmatpush.msra.mxu0 %v2007
      %2582 = vmatpush.msra.mxu0 %v2003
      %2583 = vmatmul.f32.gmra.mxu0 %v2302
      %v2584 = vpop.f32.mrf.mxu0
      %v2585 = vadd.f32 0.0, %v2584
      %2586 = vmatmul.f32.gmra.mxu0 %v2316
      %v2587 = vpop.f32.mrf.mxu0
      %v2588 = vadd.f32 0.0, %v2587
      %2589 = vdwg.mxu0
      %2590 = vmatpush.msra.mxu0 %v2127
      %2591 = vmatpush.msra.mxu0 %v2123
      %2592 = vmatpush.msra.mxu0 %v2119
      %2593 = vmatpush.msra.mxu0 %v2115
      %2594 = vmatpush.msra.mxu0 %v2111
      %2595 = vmatpush.msra.mxu0 %v2107
      %2596 = vmatpush.msra.mxu0 %v2103
      %2597 = vmatpush.msra.mxu0 %v2099
      %2598 = vmatpush.msra.mxu0 %v2095
      %2599 = vmatpush.msra.mxu0 %v2091
      %2600 = vmatpush.msra.mxu0 %v2087
      %2601 = vmatpush.msra.mxu0 %v2083
      %2602 = vmatpush.msra.mxu0 %v2079
      %2603 = vmatpush.msra.mxu0 %v2075
      %2604 = vmatpush.msra.mxu0 %v2071
      %2605 = vmatpush.msra.mxu0 %v2067
      %2606 = vmatmul.f32.gmra.mxu0 %v2305
      %v2607 = vpop.f32.mrf.mxu0
      %v2608 = vadd.f32 %v2585, %v2607
      %2609 = vmatmul.f32.gmra.mxu0 %v2318
      %v2610 = vpop.f32.mrf.mxu0
      %v2611 = vadd.f32 %v2588, %v2610
      %2612 = vdwg.mxu0
      %2613 = vmatpush.msra.mxu0 %v2191
      %2614 = vmatpush.msra.mxu0 %v2187
      %2615 = vmatpush.msra.mxu0 %v2183
      %2616 = vmatpush.msra.mxu0 %v2179
      %2617 = vmatpush.msra.mxu0 %v2175
      %2618 = vmatpush.msra.mxu0 %v2171
      %2619 = vmatpush.msra.mxu0 %v2167
      %2620 = vmatpush.msra.mxu0 %v2163
      %2621 = vmatpush.msra.mxu0 %v2159
      %2622 = vmatpush.msra.mxu0 %v2155
      %2623 = vmatpush.msra.mxu0 %v2151
      %2624 = vmatpush.msra.mxu0 %v2147
      %2625 = vmatpush.msra.mxu0 %v2143
      %2626 = vmatpush.msra.mxu0 %v2139
      %2627 = vmatpush.msra.mxu0 %v2135
      %2628 = vmatpush.msra.mxu0 %v2131
      %2629 = vmatmul.f32.gmra.mxu0 %v2308
      %v2630 = vpop.f32.mrf.mxu0
      %v2631 = vadd.f32 %v2608, %v2630
      %2632 = vmatmul.f32.gmra.mxu0 %v2320
      %v2633 = vpop.f32.mrf.mxu0
      %v2634 = vadd.f32 %v2611, %v2633
      %2635 = vdwg.mxu0
      %2636 = vmatpush.msra.mxu0 %v2255
      %2637 = vmatpush.msra.mxu0 %v2251
      %2638 = vmatpush.msra.mxu0 %v2247
      %2639 = vmatpush.msra.mxu0 %v2243
      %2640 = vmatpush.msra.mxu0 %v2239
      %2641 = vmatpush.msra.mxu0 %v2235
      %2642 = vmatpush.msra.mxu0 %v2231
      %2643 = vmatpush.msra.mxu0 %v2227
      %2644 = vmatpush.msra.mxu0 %v2223
      %2645 = vmatpush.msra.mxu0 %v2219
      %2646 = vmatpush.msra.mxu0 %v2215
      %2647 = vmatpush.msra.mxu0 %v2211
      %2648 = vmatpush.msra.mxu0 %v2207
      %2649 = vmatpush.msra.mxu0 %v2203
      %2650 = vmatpush.msra.mxu0 %v2199
      %2651 = vmatpush.msra.mxu0 %v2195
      %2652 = vmatmul.f32.gmra.mxu0 %v2311
      %v2653 = vpop.f32.mrf.mxu0
      %v2654 = vadd.f32 %v2631, %v2653
      %2655 = vmatmul.f32.gmra.mxu0 %v2322
      %v2656 = vpop.f32.mrf.mxu0
      %v2657 = vadd.f32 %v2634, %v2656
      %2658 = vdwg.mxu0
      %2659 = vmatpush.msra.mxu0 0.0
      %2660 = vmatpush.msra.mxu0 0.0
      %2661 = vmatpush.msra.mxu0 0.0
      %2662 = vmatpush.msra.mxu0 0.0
      %2663 = vmatpush.msra.mxu0 0.0
      %2664 = vmatpush.msra.mxu0 0.0
      %2665 = vmatpush.msra.mxu0 0.0
      %2666 = vmatpush.msra.mxu0 0.0
      %2667 = vmatpush.msra.mxu0 %v2287
      %2668 = vmatpush.msra.mxu0 %v2283
      %2669 = vmatpush.msra.mxu0 %v2279
      %2670 = vmatpush.msra.mxu0 %v2275
      %2671 = vmatpush.msra.mxu0 %v2271
      %2672 = vmatpush.msra.mxu0 %v2267
      %2673 = vmatpush.msra.mxu0 %v2263
      %2674 = vmatpush.msra.mxu0 %v2259
      %2675 = vmatmul.f32.gmra.mxu0 %v2333
      %v2676 = vpop.f32.mrf.mxu0
      %v2677 = vadd.f32 %v2654, %v2676
      %2678 = vmatmul.f32.gmra.mxu0 %v2335
      %v2679 = vpop.f32.mrf.mxu0
      %v2680 = vadd.f32 %v2657, %v2679
      %2681 = vdwg.mxu0
      %2682 = vmatpush.msra.mxu0 %v2064
      %2683 = vmatpush.msra.mxu0 %v2060
      %2684 = vmatpush.msra.mxu0 %v2056
      %2685 = vmatpush.msra.mxu0 %v2052
      %2686 = vmatpush.msra.mxu0 %v2048
      %2687 = vmatpush.msra.mxu0 %v2044
      %2688 = vmatpush.msra.mxu0 %v2040
      %2689 = vmatpush.msra.mxu0 %v2036
      %2690 = vmatpush.msra.mxu0 %v2032
      %2691 = vmatpush.msra.mxu0 %v2028
      %2692 = vmatpush.msra.mxu0 %v2024
      %2693 = vmatpush.msra.mxu0 %v2020
      %2694 = vmatpush.msra.mxu0 %v2016
      %2695 = vmatpush.msra.mxu0 %v2012
      %2696 = vmatpush.msra.mxu0 %v2008
      %2697 = vmatpush.msra.mxu0 %v2004
      %2698 = vmatmul.f32.gmra.mxu0 %v2302
      %v2699 = vpop.f32.mrf.mxu0
      %v2700 = vadd.f32 0.0, %v2699
      %2701 = vmatmul.f32.gmra.mxu0 %v2316
      %v2702 = vpop.f32.mrf.mxu0
      %v2703 = vadd.f32 0.0, %v2702
      %2704 = vdwg.mxu0
      %2705 = vmatpush.msra.mxu0 %v2128
      %2706 = vmatpush.msra.mxu0 %v2124
      %2707 = vmatpush.msra.mxu0 %v2120
      %2708 = vmatpush.msra.mxu0 %v2116
      %2709 = vmatpush.msra.mxu0 %v2112
      %2710 = vmatpush.msra.mxu0 %v2108
      %2711 = vmatpush.msra.mxu0 %v2104
      %2712 = vmatpush.msra.mxu0 %v2100
      %2713 = vmatpush.msra.mxu0 %v2096
      %2714 = vmatpush.msra.mxu0 %v2092
      %2715 = vmatpush.msra.mxu0 %v2088
      %2716 = vmatpush.msra.mxu0 %v2084
      %2717 = vmatpush.msra.mxu0 %v2080
      %2718 = vmatpush.msra.mxu0 %v2076
      %2719 = vmatpush.msra.mxu0 %v2072
      %2720 = vmatpush.msra.mxu0 %v2068
      %2721 = vmatmul.f32.gmra.mxu0 %v2305
      %v2722 = vpop.f32.mrf.mxu0
      %v2723 = vadd.f32 %v2700, %v2722
      %2724 = vmatmul.f32.gmra.mxu0 %v2318
      %v2725 = vpop.f32.mrf.mxu0
      %v2726 = vadd.f32 %v2703, %v2725
      %2727 = vdwg.mxu0
      %2728 = vmatpush.msra.mxu0 %v2192
      %2729 = vmatpush.msra.mxu0 %v2188
      %2730 = vmatpush.msra.mxu0 %v2184
      %2731 = vmatpush.msra.mxu0 %v2180
      %2732 = vmatpush.msra.mxu0 %v2176
      %2733 = vmatpush.msra.mxu0 %v2172
      %2734 = vmatpush.msra.mxu0 %v2168
      %2735 = vmatpush.msra.mxu0 %v2164
      %2736 = vmatpush.msra.mxu0 %v2160
      %2737 = vmatpush.msra.mxu0 %v2156
      %2738 = vmatpush.msra.mxu0 %v2152
      %2739 = vmatpush.msra.mxu0 %v2148
      %2740 = vmatpush.msra.mxu0 %v2144
      %2741 = vmatpush.msra.mxu0 %v2140
      %2742 = vmatpush.msra.mxu0 %v2136
      %2743 = vmatpush.msra.mxu0 %v2132
      %2744 = vmatmul.f32.gmra.mxu0 %v2308
      %v2745 = vpop.f32.mrf.mxu0
      %v2746 = vadd.f32 %v2723, %v2745
      %2747 = vmatmul.f32.gmra.mxu0 %v2320
      %v2748 = vpop.f32.mrf.mxu0
      %v2749 = vadd.f32 %v2726, %v2748
      %2750 = vdwg.mxu0
      %2751 = vmatpush.msra.mxu0 %v2256
      %2752 = vmatpush.msra.mxu0 %v2252
      %2753 = vmatpush.msra.mxu0 %v2248
      %2754 = vmatpush.msra.mxu0 %v2244
      %2755 = vmatpush.msra.mxu0 %v2240
      %2756 = vmatpush.msra.mxu0 %v2236
      %2757 = vmatpush.msra.mxu0 %v2232
      %2758 = vmatpush.msra.mxu0 %v2228
      %2759 = vmatpush.msra.mxu0 %v2224
      %2760 = vmatpush.msra.mxu0 %v2220
      %2761 = vmatpush.msra.mxu0 %v2216
      %2762 = vmatpush.msra.mxu0 %v2212
      %2763 = vmatpush.msra.mxu0 %v2208
      %2764 = vmatpush.msra.mxu0 %v2204
      %2765 = vmatpush.msra.mxu0 %v2200
      %2766 = vmatpush.msra.mxu0 %v2196
      %2767 = vmatmul.f32.gmra.mxu0 %v2311
      %v2768 = vpop.f32.mrf.mxu0
      %v2769 = vadd.f32 %v2746, %v2768
      %2770 = vmatmul.f32.gmra.mxu0 %v2322
      %v2771 = vpop.f32.mrf.mxu0
      %v2772 = vadd.f32 %v2749, %v2771
      %2773 = vdwg.mxu0
      %2774 = vmatpush.msra.mxu0 0.0
      %2775 = vmatpush.msra.mxu0 0.0
      %2776 = vmatpush.msra.mxu0 0.0
      %2777 = vmatpush.msra.mxu0 0.0
      %2778 = vmatpush.msra.mxu0 0.0
      %2779 = vmatpush.msra.mxu0 0.0
      %2780 = vmatpush.msra.mxu0 0.0
      %2781 = vmatpush.msra.mxu0 0.0
      %2782 = vmatpush.msra.mxu0 %v2288
      %2783 = vmatpush.msra.mxu0 %v2284
      %2784 = vmatpush.msra.mxu0 %v2280
      %2785 = vmatpush.msra.mxu0 %v2276
      %2786 = vmatpush.msra.mxu0 %v2272
      %2787 = vmatpush.msra.mxu0 %v2268
      %2788 = vmatpush.msra.mxu0 %v2264
      %2789 = vmatpush.msra.mxu0 %v2260
      %2790 = vmatmul.f32.gmra.mxu0 %v2333
      %v2791 = vpop.f32.mrf.mxu0
      %v2792 = vadd.f32 %v2769, %v2791
      %2793 = vmatmul.f32.gmra.mxu0 %v2335
      %v2794 = vpop.f32.mrf.mxu0
      %v2795 = vadd.f32 %v2772, %v2794
      %2796 = vdwg.mxu0
      %v2797 = vadd.f32 %v1640, %v2447
      %v2798 = vadd.f32 %v1755, %v2562
      %v2799 = vadd.f32 %v1870, %v2677
      %v2800 = vadd.f32 %v1985, %v2792
      %v2801 = vadd.f32 %v1643, %v2450
      %v2802 = vadd.f32 %v1758, %v2565
      %v2803 = vadd.f32 %v1873, %v2680
      %v2804 = vadd.f32 %v1988, %v2795
      %v2805 = vld [vmem:[%s2] sm:$0xf]
      %v2807 = vperm.slane %v2805, 0
      %v2808 = vperm.slane %v2805, 1
      %v2809 = vperm.slane %v2805, 2
      %v2810 = vperm.slane %v2805, 3
      %v2815 = vadd.f32 %v2797, %v2807
      %v2816 = vadd.f32 %v2798, %v2808
      %v2817 = vadd.f32 %v2799, %v2809
      %v2818 = vadd.f32 %v2800, %v2810
      %v2819 = vadd.f32 %v2801, %v2807
      %v2820 = vadd.f32 %v2802, %v2808
      %v2821 = vadd.f32 %v2803, %v2809
      %v2822 = vadd.f32 %v2804, %v2810
      %v2823 = vmax.f32 %v2815, 0.0
      %v2824 = vmax.f32 %v2816, 0.0
      %v2825 = vmax.f32 %v2817, 0.0
      %v2826 = vmax.f32 %v2818, 0.0
      %v2827 = vmax.f32 %v2819, 0.0
      %v2828 = vmax.f32 %v2820, 0.0
      %v2829 = vmax.f32 %v2821, 0.0
      %v2830 = vmax.f32 %v2822, 0.0
      %v2831 = vadd.f32 %v2823, %v2827
      %v2832 = vrot.slane %v2831, 4
      %v2833 = vadd.f32 %v2831, %v2832
      %v2834 = vrot.slane %v2833, 2
      %v2835 = vadd.f32 %v2833, %v2834
      %v2836 = vrot.slane %v2835, 1
      %v2837 = vadd.f32 %v2835, %v2836
      %v2838 = vadd.f32 %v2824, %v2828
      %v2839 = vrot.slane %v2838, 4
      %v2840 = vadd.f32 %v2838, %v2839
      %v2841 = vrot.slane %v2840, 2
      %v2842 = vadd.f32 %v2840, %v2841
      %v2843 = vrot.slane %v2842, 1
      %v2844 = vadd.f32 %v2842, %v2843
      %v2845 = vadd.f32 %v2825, %v2829
      %v2846 = vrot.slane %v2845, 4
      %v2847 = vadd.f32 %v2845, %v2846
      %v2848 = vrot.slane %v2847, 2
      %v2849 = vadd.f32 %v2847, %v2848
      %v2850 = vrot.slane %v2849, 1
      %v2851 = vadd.f32 %v2849, %v2850
      %v2852 = vadd.f32 %v2826, %v2830
      %v2853 = vrot.slane %v2852, 4
      %v2854 = vadd.f32 %v2852, %v2853
      %v2855 = vrot.slane %v2854, 2
      %v2856 = vadd.f32 %v2854, %v2855
      %v2857 = vrot.slane %v2856, 1
      %v2858 = vadd.f32 %v2856, %v2857
      %v2859 = vld [vmem:[%s3] sm:$0xff]
      %v2860 = vld [vmem:[%s3 + $0x8] sm:$0xff]
      %v2861 = vld [vmem:[%s3 + $0x10] sm:$0xff]
      %v2862 = vld [vmem:[%s3 + $0x18] sm:$0xff]
      %v2863 = vld [vmem:[%s3 + $0x20] sm:$0xff]
      %v2864 = vld [vmem:[%s3 + $0x28] sm:$0xff]
      %v2865 = vld [vmem:[%s3 + $0x30] sm:$0xff]
      %v2866 = vld [vmem:[%s3 + $0x38] sm:$0xff]
      %v2867 = vld [vmem:[%s3 + $0x40] sm:$0xff]
      %v2868 = vld [vmem:[%s3 + $0x48] sm:$0xff]
      %v2869 = vld [vmem:[%s3 + $0x50] sm:$0xff]
      %v2870 = vld [vmem:[%s3 + $0x58] sm:$0xff]
      %v2871 = vld [vmem:[%s3 + $0x60] sm:$0xff]
      %v2872 = vld [vmem:[%s3 + $0x68] sm:$0xff]
      %v2873 = vld [vmem:[%s3 + $0x70] sm:$0xff]
      %v2874 = vld [vmem:[%s3 + $0x78] sm:$0xff]
      %v2875 = vld [vmem:[%s3 + $0x80] sm:$0xff]
      %v2876 = vld [vmem:[%s3 + $0x88] sm:$0xff]
      %v2877 = vld [vmem:[%s3 + $0x90] sm:$0xff]
      %v2878 = vld [vmem:[%s3 + $0x98] sm:$0xff]
      %v2879 = vld [vmem:[%s3 + $0xa0] sm:$0xff]
      %v2880 = vld [vmem:[%s3 + $0xa8] sm:$0xff]
      %v2881 = vld [vmem:[%s3 + $0xb0] sm:$0xff]
      %v2882 = vld [vmem:[%s3 + $0xb8] sm:$0xff]
      %v2883 = vld [vmem:[%s3 + $0xc0] sm:$0xff]
      %v2884 = vld [vmem:[%s3 + $0xc8] sm:$0xff]
      %v2885 = vld [vmem:[%s3 + $0xd0] sm:$0xff]
      %v2886 = vld [vmem:[%s3 + $0xd8] sm:$0xff]
      %v2887 = vld [vmem:[%s3 + $0xe0] sm:$0xff]
      %v2888 = vld [vmem:[%s3 + $0xe8] sm:$0xff]
      %v2889 = vld [vmem:[%s3 + $0xf0] sm:$0xff]
      %v2890 = vld [vmem:[%s3 + $0xf8] sm:$0xff]
      %v2891 = vld [vmem:[%s3 + $0x100] sm:$0xff]
      %v2892 = vld [vmem:[%s3 + $0x108] sm:$0xff]
      %v2893 = vld [vmem:[%s3 + $0x110] sm:$0xff]
      %v2894 = vld [vmem:[%s3 + $0x118] sm:$0xff]
      %v2895 = vld [vmem:[%s3 + $0x120] sm:$0xff]
      %v2896 = vld [vmem:[%s3 + $0x128] sm:$0xff]
      %v2897 = vld [vmem:[%s3 + $0x130] sm:$0xff]
      %v2898 = vld [vmem:[%s3 + $0x138] sm:$0xff]
      %v2899 = vld [vmem:[%s3 + $0x140] sm:$0xff]
      %v2900 = vld [vmem:[%s3 + $0x148] sm:$0xff]
      %v2901 = vld [vmem:[%s3 + $0x150] sm:$0xff]
      %v2902 = vld [vmem:[%s3 + $0x158] sm:$0xff]
      %v2903 = vld [vmem:[%s3 + $0x160] sm:$0xff]
      %v2904 = vld [vmem:[%s3 + $0x168] sm:$0xff]
      %v2905 = vld [vmem:[%s3 + $0x170] sm:$0xff]
      %v2906 = vld [vmem:[%s3 + $0x178] sm:$0xff]
      %v2907 = vld [vmem:[%s3 + $0x180] sm:$0xff]
      %v2908 = vld [vmem:[%s3 + $0x188] sm:$0xff]
      %v2909 = vld [vmem:[%s3 + $0x190] sm:$0xff]
      %v2910 = vld [vmem:[%s3 + $0x198] sm:$0xff]
      %v2911 = vld [vmem:[%s3 + $0x1a0] sm:$0xff]
      %v2912 = vld [vmem:[%s3 + $0x1a8] sm:$0xff]
      %v2913 = vld [vmem:[%s3 + $0x1b0] sm:$0xff]
      %v2914 = vld [vmem:[%s3 + $0x1b8] sm:$0xff]
      %v2915 = vld [vmem:[%s3 + $0x1c0] sm:$0xff]
      %v2916 = vld [vmem:[%s3 + $0x1c8] sm:$0xff]
      %v2917 = vld [vmem:[%s3 + $0x1d0] sm:$0xff]
      %v2918 = vld [vmem:[%s3 + $0x1d8] sm:$0xff]
      %v2919 = vld [vmem:[%s3 + $0x1e0] sm:$0xff]
      %v2920 = vld [vmem:[%s3 + $0x1e8] sm:$0xff]
      %v2921 = vld [vmem:[%s3 + $0x1f0] sm:$0xff]
      %v2922 = vld [vmem:[%s3 + $0x1f8] sm:$0xff]
      %v2923 = vld [vmem:[%s4] sm:$0x1]
      %2924 = vmatpush.msra.mxu0 %v2874
      %2925 = vmatpush.msra.mxu0 %v2873
      %2926 = vmatpush.msra.mxu0 %v2872
      %2927 = vmatpush.msra.mxu0 %v2871
      %2928 = vmatpush.msra.mxu0 %v2870
      %2929 = vmatpush.msra.mxu0 %v2869
      %2930 = vmatpush.msra.mxu0 %v2868
      %2931 = vmatpush.msra.mxu0 %v2867
      %2932 = vmatpush.msra.mxu0 %v2866
      %2933 = vmatpush.msra.mxu0 %v2865
      %2934 = vmatpush.msra.mxu0 %v2864
      %2935 = vmatpush.msra.mxu0 %v2863
      %2936 = vmatpush.msra.mxu0 %v2862
      %2937 = vmatpush.msra.mxu0 %v2861
      %2938 = vmatpush.msra.mxu0 %v2860
      %2939 = vmatpush.msra.mxu0 %v2859
      %2940 = vmatmul.f32.gmra.mxu0 %v2837
      %v2941 = vpop.f32.mrf.mxu0
      %v2942 = vadd.f32 %v2923, %v2941
      %2943 = vdwg.mxu0
      %2944 = vmatpush.msra.mxu0 %v2890
      %2945 = vmatpush.msra.mxu0 %v2889
      %2946 = vmatpush.msra.mxu0 %v2888
      %2947 = vmatpush.msra.mxu0 %v2887
      %2948 = vmatpush.msra.mxu0 %v2886
      %2949 = vmatpush.msra.mxu0 %v2885
      %2950 = vmatpush.msra.mxu0 %v2884
      %2951 = vmatpush.msra.mxu0 %v2883
      %2952 = vmatpush.msra.mxu0 %v2882
      %2953 = vmatpush.msra.mxu0 %v2881
      %2954 = vmatpush.msra.mxu0 %v2880
      %2955 = vmatpush.msra.mxu0 %v2879
      %2956 = vmatpush.msra.mxu0 %v2878
      %2957 = vmatpush.msra.mxu0 %v2877
      %2958 = vmatpush.msra.mxu0 %v2876
      %2959 = vmatpush.msra.mxu0 %v2875
      %2960 = vmatmul.f32.gmra.mxu0 %v2844
      %v2961 = vpop.f32.mrf.mxu0
      %v2962 = vadd.f32 %v2942, %v2961
      %2963 = vdwg.mxu0
      %2964 = vmatpush.msra.mxu0 %v2906
      %2965 = vmatpush.msra.mxu0 %v2905
      %2966 = vmatpush.msra.mxu0 %v2904
      %2967 = vmatpush.msra.mxu0 %v2903
      %2968 = vmatpush.msra.mxu0 %v2902
      %2969 = vmatpush.msra.mxu0 %v2901
      %2970 = vmatpush.msra.mxu0 %v2900
      %2971 = vmatpush.msra.mxu0 %v2899
      %2972 = vmatpush.msra.mxu0 %v2898
      %2973 = vmatpush.msra.mxu0 %v2897
      %2974 = vmatpush.msra.mxu0 %v2896
      %2975 = vmatpush.msra.mxu0 %v2895
      %2976 = vmatpush.msra.mxu0 %v2894
      %2977 = vmatpush.msra.mxu0 %v2893
      %2978 = vmatpush.msra.mxu0 %v2892
      %2979 = vmatpush.msra.mxu0 %v2891
      %2980 = vmatmul.f32.gmra.mxu0 %v2851
      %v2981 = vpop.f32.mrf.mxu0
      %v2982 = vadd.f32 %v2962, %v2981
      %2983 = vdwg.mxu0
      %2984 = vmatpush.msra.mxu0 %v2922
      %2985 = vmatpush.msra.mxu0 %v2921
      %2986 = vmatpush.msra.mxu0 %v2920
      %2987 = vmatpush.msra.mxu0 %v2919
      %2988 = vmatpush.msra.mxu0 %v2918
      %2989 = vmatpush.msra.mxu0 %v2917
      %2990 = vmatpush.msra.mxu0 %v2916
      %2991 = vmatpush.msra.mxu0 %v2915
      %2992 = vmatpush.msra.mxu0 %v2914
      %2993 = vmatpush.msra.mxu0 %v2913
      %2994 = vmatpush.msra.mxu0 %v2912
      %2995 = vmatpush.msra.mxu0 %v2911
      %2996 = vmatpush.msra.mxu0 %v2910
      %2997 = vmatpush.msra.mxu0 %v2909
      %2998 = vmatpush.msra.mxu0 %v2908
      %2999 = vmatpush.msra.mxu0 %v2907
      %3000 = vmatmul.f32.gmra.mxu0 %v2858
      %v3001 = vpop.f32.mrf.mxu0
      %v3002 = vadd.f32 %v2982, %v3001
      %3003 = vdwg.mxu0
      %v3004 = vmax.f32 %v3002, 0.0
      %v3005 = vld [vmem:[%s5] sm:$0xff]
      %v3006 = vld [vmem:[%s5 + $0x8] sm:$0xff]
      %v3007 = vld [vmem:[%s5 + $0x10] sm:$0xff]
      %v3008 = vld [vmem:[%s5 + $0x18] sm:$0xff]
      %v3009 = vld [vmem:[%s6] sm:$0x1]
      %vm3010 = vcmask 261120
      %v3012 = vsel %vm3010, %v3004, 0
      %3014 = vmatpush.msra.mxu0 0.0
      %3015 = vmatpush.msra.mxu0 0.0
      %3016 = vmatpush.msra.mxu0 0.0
      %3017 = vmatpush.msra.mxu0 0.0
      %3018 = vmatpush.msra.mxu0 0.0
      %3019 = vmatpush.msra.mxu0 0.0
      %3020 = vmatpush.msra.mxu0 0.0
      %3021 = vmatpush.msra.mxu0 0.0
      %3022 = vmatpush.msra.mxu0 0.0
      %3023 = vmatpush.msra.mxu0 0.0
      %3024 = vmatpush.msra.mxu0 0.0
      %3025 = vmatpush.msra.mxu0 0.0
      %3026 = vmatpush.msra.mxu0 %v3008
      %3027 = vmatpush.msra.mxu0 %v3007
      %3028 = vmatpush.msra.mxu0 %v3006
      %3029 = vmatpush.msra.mxu0 %v3005
      %3030 = vmatmul.f32.gmra.mxu0 %v3012
      %v3031 = vpop.f32.mrf.mxu0
      %v3032 = vadd.f32 %v3009, %v3031
      %3033 = vdwg.mxu0
      %v3034 = vmax.f32 %v3032, 0.0
      %v3035 = vxor.u32 %v3034, 2147483648
      %v3036 = vmul.f32 %v3035, 1.442695
      %v3037 = vpow.pop %v3036
      %v3038 = vadd.f32 %v3037, 1.0
      %v3039 = vrcp.pop %v3038
      %v3040 = vmul.f32 %v3038, %v3039
      %v3041 = vsub.f32 1.0, %v3040
      %v3042 = vmul.f32 %v3039, %v3041
      %v3043 = vadd.f32 %v3039, %v3042
      %vm3044 = vweird.f32 %v3038
      %vm3045 = vweird.f32 %v3039
      %vm3046 = vmor %vm3044, %vm3045
      %v3047 = vsel %vm3046, %v3039, %v3043
      %v3048 = vand.u32 2147483647, %v3038
      %vm3049 = vcmp.eq.f32.partialorder %v3048, 8.507059e+37
      %v3050 = vand.u32 %v3038, 2147483648
      %v3051 = vor.u32 1.1754944e-38, %v3050
      %v3052 = vsel %vm3049, %v3051, %v3047
      %v3053 = vmul.f32 1.0, %v3052
      %v3054 = vld [vmem:[%s7] sm:$0xff]
      %v3055 = vld [vmem:[%s7 + $0x8] sm:$0xff]
      %v3056 = vld [vmem:[%s7 + $0x10] sm:$0xff]
      %v3057 = vld [vmem:[%s7 + $0x18] sm:$0xff]
      %v3058 = vld [vmem:[%s7 + $0x20] sm:$0xff]
      %v3059 = vld [vmem:[%s7 + $0x28] sm:$0xff]
      %v3060 = vld [vmem:[%s7 + $0x30] sm:$0xff]
      %v3061 = vld [vmem:[%s7 + $0x38] sm:$0xff]
      %v3062 = vld [vmem:[%s7 + $0x40] sm:$0xff]
      %v3063 = vld [vmem:[%s7 + $0x48] sm:$0xff]
      %v3064 = vld [vmem:[%s7 + $0x50] sm:$0xff]
      %v3065 = vld [vmem:[%s7 + $0x58] sm:$0xff]
      %v3066 = vld [vmem:[%s7 + $0x60] sm:$0xff]
      %v3067 = vld [vmem:[%s7 + $0x68] sm:$0xff]
      %v3068 = vld [vmem:[%s7 + $0x70] sm:$0xff]
      %v3069 = vld [vmem:[%s7 + $0x78] sm:$0xff]
      %v3071 = vsel %vm3010, %v3053, 0
      %3073 = vmatpush.msra.mxu0 0.0
      %3074 = vmatpush.msra.mxu0 0.0
      %3075 = vmatpush.msra.mxu0 0.0
      %3076 = vmatpush.msra.mxu0 0.0
      %3077 = vmatpush.msra.mxu0 0.0
      %3078 = vmatpush.msra.mxu0 0.0
      %3079 = vmatpush.msra.mxu0 0.0
      %3080 = vmatpush.msra.mxu0 0.0
      %3081 = vmatpush.msra.mxu0 0.0
      %3082 = vmatpush.msra.mxu0 0.0
      %3083 = vmatpush.msra.mxu0 0.0
      %3084 = vmatpush.msra.mxu0 0.0
      %3085 = vmatpush.msra.mxu0 %v3066
      %3086 = vmatpush.msra.mxu0 %v3062
      %3087 = vmatpush.msra.mxu0 %v3058
      %3088 = vmatpush.msra.mxu0 %v3054
      %3089 = vmatmul.f32.gmra.mxu0 %v3071
      %v3090 = vpop.f32.mrf.mxu0
      %v3091 = vadd.f32 0.0, %v3090
      %3092 = vdwg.mxu0
      %3093 = vmatpush.msra.mxu0 0.0
      %3094 = vmatpush.msra.mxu0 0.0
      %3095 = vmatpush.msra.mxu0 0.0
      %3096 = vmatpush.msra.mxu0 0.0
      %3097 = vmatpush.msra.mxu0 0.0
      %3098 = vmatpush.msra.mxu0 0.0
      %3099 = vmatpush.msra.mxu0 0.0
      %3100 = vmatpush.msra.mxu0 0.0
      %3101 = vmatpush.msra.mxu0 0.0
      %3102 = vmatpush.msra.mxu0 0.0
      %3103 = vmatpush.msra.mxu0 0.0
      %3104 = vmatpush.msra.mxu0 0.0
      %3105 = vmatpush.msra.mxu0 %v3067
      %3106 = vmatpush.msra.mxu0 %v3063
      %3107 = vmatpush.msra.mxu0 %v3059
      %3108 = vmatpush.msra.mxu0 %v3055
      %3109 = vmatmul.f32.gmra.mxu0 %v3071
      %v3110 = vpop.f32.mrf.mxu0
      %v3111 = vadd.f32 0.0, %v3110
      %3112 = vdwg.mxu0
      %3113 = vmatpush.msra.mxu0 0.0
      %3114 = vmatpush.msra.mxu0 0.0
      %3115 = vmatpush.msra.mxu0 0.0
      %3116 = vmatpush.msra.mxu0 0.0
      %3117 = vmatpush.msra.mxu0 0.0
      %3118 = vmatpush.msra.mxu0 0.0
      %3119 = vmatpush.msra.mxu0 0.0
      %3120 = vmatpush.msra.mxu0 0.0
      %3121 = vmatpush.msra.mxu0 0.0
      %3122 = vmatpush.msra.mxu0 0.0
      %3123 = vmatpush.msra.mxu0 0.0
      %3124 = vmatpush.msra.mxu0 0.0
      %3125 = vmatpush.msra.mxu0 %v3068
      %3126 = vmatpush.msra.mxu0 %v3064
      %3127 = vmatpush.msra.mxu0 %v3060
      %3128 = vmatpush.msra.mxu0 %v3056
      %3129 = vmatmul.f32.gmra.mxu0 %v3071
      %v3130 = vpop.f32.mrf.mxu0
      %v3131 = vadd.f32 0.0, %v3130
      %3132 = vdwg.mxu0
      %3133 = vmatpush.msra.mxu0 0.0
      %3134 = vmatpush.msra.mxu0 0.0
      %3135 = vmatpush.msra.mxu0 0.0
      %3136 = vmatpush.msra.mxu0 0.0
      %3137 = vmatpush.msra.mxu0 0.0
      %3138 = vmatpush.msra.mxu0 0.0
      %3139 = vmatpush.msra.mxu0 0.0
      %3140 = vmatpush.msra.mxu0 0.0
      %3141 = vmatpush.msra.mxu0 0.0
      %3142 = vmatpush.msra.mxu0 0.0
      %3143 = vmatpush.msra.mxu0 0.0
      %3144 = vmatpush.msra.mxu0 0.0
      %3145 = vmatpush.msra.mxu0 %v3069
      %3146 = vmatpush.msra.mxu0 %v3065
      %3147 = vmatpush.msra.mxu0 %v3061
      %3148 = vmatpush.msra.mxu0 %v3057
      %3149 = vmatmul.f32.gmra.mxu0 %v3071
      %v3150 = vpop.f32.mrf.mxu0
      %v3151 = vadd.f32 0.0, %v3150
      %3152 = vdwg.mxu0
      %v3153 = vpack.c.bf16 %v2827, %v2823
      %v3154 = vpack.c.bf16 %v2828, %v2824
      %v3155 = vpack.c.bf16 %v2829, %v2825
      %v3156 = vpack.c.bf16 %v2830, %v2826
      %v3157 = vld [vmem:[%s8] sm:$0xff]
      %v3158 = vld [vmem:[%s8 + $0x8] sm:$0xff]
      %v3159 = vld [vmem:[%s8 + $0x10] sm:$0xff]
      %v3160 = vld [vmem:[%s8 + $0x18] sm:$0xff]
      %v3161 = vld [vmem:[%s8 + $0x20] sm:$0xff]
      %v3162 = vld [vmem:[%s8 + $0x28] sm:$0xff]
      %v3163 = vld [vmem:[%s8 + $0x30] sm:$0xff]
      %v3164 = vld [vmem:[%s8 + $0x38] sm:$0xff]
      %v3165 = vld [vmem:[%s8 + $0x40] sm:$0xff]
      %v3166 = vld [vmem:[%s8 + $0x48] sm:$0xff]
      %v3167 = vld [vmem:[%s8 + $0x50] sm:$0xff]
      %v3168 = vld [vmem:[%s8 + $0x58] sm:$0xff]
      %v3169 = vld [vmem:[%s8 + $0x60] sm:$0xff]
      %v3170 = vld [vmem:[%s8 + $0x68] sm:$0xff]
      %v3171 = vld [vmem:[%s8 + $0x70] sm:$0xff]
      %v3172 = vld [vmem:[%s8 + $0x78] sm:$0xff]
      %v3173 = vld [vmem:[%s8 + $0x80] sm:$0xff]
      %v3174 = vld [vmem:[%s8 + $0x88] sm:$0xff]
      %v3175 = vld [vmem:[%s8 + $0x90] sm:$0xff]
      %v3176 = vld [vmem:[%s8 + $0x98] sm:$0xff]
      %v3177 = vld [vmem:[%s8 + $0xa0] sm:$0xff]
      %v3178 = vld [vmem:[%s8 + $0xa8] sm:$0xff]
      %v3179 = vld [vmem:[%s8 + $0xb0] sm:$0xff]
      %v3180 = vld [vmem:[%s8 + $0xb8] sm:$0xff]
      %v3181 = vld [vmem:[%s8 + $0xc0] sm:$0xff]
      %v3182 = vld [vmem:[%s8 + $0xc8] sm:$0xff]
      %v3183 = vld [vmem:[%s8 + $0xd0] sm:$0xff]
      %v3184 = vld [vmem:[%s8 + $0xd8] sm:$0xff]
      %v3185 = vld [vmem:[%s8 + $0xe0] sm:$0xff]
      %v3186 = vld [vmem:[%s8 + $0xe8] sm:$0xff]
      %v3187 = vld [vmem:[%s8 + $0xf0] sm:$0xff]
      %v3188 = vld [vmem:[%s8 + $0xf8] sm:$0xff]
      %v3189 = vld [vmem:[%s8 + $0x100] sm:$0xff]
      %v3190 = vld [vmem:[%s8 + $0x108] sm:$0xff]
      %v3191 = vld [vmem:[%s8 + $0x110] sm:$0xff]
      %v3192 = vld [vmem:[%s8 + $0x118] sm:$0xff]
      %v3193 = vld [vmem:[%s8 + $0x120] sm:$0xff]
      %v3194 = vld [vmem:[%s8 + $0x128] sm:$0xff]
      %v3195 = vld [vmem:[%s8 + $0x130] sm:$0xff]
      %v3196 = vld [vmem:[%s8 + $0x138] sm:$0xff]
      %v3197 = vld [vmem:[%s8 + $0x140] sm:$0xff]
      %v3198 = vld [vmem:[%s8 + $0x148] sm:$0xff]
      %v3199 = vld [vmem:[%s8 + $0x150] sm:$0xff]
      %v3200 = vld [vmem:[%s8 + $0x158] sm:$0xff]
      %v3201 = vld [vmem:[%s8 + $0x160] sm:$0xff]
      %v3202 = vld [vmem:[%s8 + $0x168] sm:$0xff]
      %v3203 = vld [vmem:[%s8 + $0x170] sm:$0xff]
      %v3204 = vld [vmem:[%s8 + $0x178] sm:$0xff]
      %v3205 = vld [vmem:[%s8 + $0x180] sm:$0xff]
      %v3206 = vld [vmem:[%s8 + $0x188] sm:$0xff]
      %v3207 = vld [vmem:[%s8 + $0x190] sm:$0xff]
      %v3208 = vld [vmem:[%s8 + $0x198] sm:$0xff]
      %v3209 = vld [vmem:[%s8 + $0x1a0] sm:$0xff]
      %v3210 = vld [vmem:[%s8 + $0x1a8] sm:$0xff]
      %v3211 = vld [vmem:[%s8 + $0x1b0] sm:$0xff]
      %v3212 = vld [vmem:[%s8 + $0x1b8] sm:$0xff]
      %v3213 = vld [vmem:[%s8 + $0x1c0] sm:$0xff]
      %v3214 = vld [vmem:[%s8 + $0x1c8] sm:$0xff]
      %v3215 = vld [vmem:[%s8 + $0x1d0] sm:$0xff]
      %v3216 = vld [vmem:[%s8 + $0x1d8] sm:$0xff]
      %v3217 = vld [vmem:[%s8 + $0x1e0] sm:$0xff]
      %v3218 = vld [vmem:[%s8 + $0x1e8] sm:$0xff]
      %v3219 = vld [vmem:[%s8 + $0x1f0] sm:$0xff]
      %v3220 = vld [vmem:[%s8 + $0x1f8] sm:$0xff]
      %v3221 = vld [vmem:[%s8 + $0x200] sm:$0xff]
      %v3222 = vld [vmem:[%s8 + $0x208] sm:$0xff]
      %v3223 = vld [vmem:[%s8 + $0x210] sm:$0xff]
      %v3224 = vld [vmem:[%s8 + $0x218] sm:$0xff]
      %v3225 = vld [vmem:[%s8 + $0x220] sm:$0xff]
      %v3226 = vld [vmem:[%s8 + $0x228] sm:$0xff]
      %v3227 = vld [vmem:[%s8 + $0x230] sm:$0xff]
      %v3228 = vld [vmem:[%s8 + $0x238] sm:$0xff]
      %v3229 = vld [vmem:[%s8 + $0x240] sm:$0xff]
      %v3230 = vld [vmem:[%s8 + $0x248] sm:$0xff]
      %v3231 = vld [vmem:[%s8 + $0x250] sm:$0xff]
      %v3232 = vld [vmem:[%s8 + $0x258] sm:$0xff]
      %v3233 = vld [vmem:[%s8 + $0x260] sm:$0xff]
      %v3234 = vld [vmem:[%s8 + $0x268] sm:$0xff]
      %v3235 = vld [vmem:[%s8 + $0x270] sm:$0xff]
      %v3236 = vld [vmem:[%s8 + $0x278] sm:$0xff]
      %v3237 = vld [vmem:[%s8 + $0x280] sm:$0xff]
      %v3238 = vld [vmem:[%s8 + $0x288] sm:$0xff]
      %v3239 = vld [vmem:[%s8 + $0x290] sm:$0xff]
      %v3240 = vld [vmem:[%s8 + $0x298] sm:$0xff]
      %v3241 = vld [vmem:[%s8 + $0x2a0] sm:$0xff]
      %v3242 = vld [vmem:[%s8 + $0x2a8] sm:$0xff]
      %v3243 = vld [vmem:[%s8 + $0x2b0] sm:$0xff]
      %v3244 = vld [vmem:[%s8 + $0x2b8] sm:$0xff]
      %v3245 = vld [vmem:[%s8 + $0x2c0] sm:$0xff]
      %v3246 = vld [vmem:[%s8 + $0x2c8] sm:$0xff]
      %v3247 = vld [vmem:[%s8 + $0x2d0] sm:$0xff]
      %v3248 = vld [vmem:[%s8 + $0x2d8] sm:$0xff]
      %v3249 = vld [vmem:[%s8 + $0x2e0] sm:$0xff]
      %v3250 = vld [vmem:[%s8 + $0x2e8] sm:$0xff]
      %v3251 = vld [vmem:[%s8 + $0x2f0] sm:$0xff]
      %v3252 = vld [vmem:[%s8 + $0x2f8] sm:$0xff]
      %v3253 = vld [vmem:[%s8 + $0x300] sm:$0xff]
      %v3254 = vld [vmem:[%s8 + $0x308] sm:$0xff]
      %v3255 = vld [vmem:[%s8 + $0x310] sm:$0xff]
      %v3256 = vld [vmem:[%s8 + $0x318] sm:$0xff]
      %v3257 = vld [vmem:[%s8 + $0x320] sm:$0xff]
      %v3258 = vld [vmem:[%s8 + $0x328] sm:$0xff]
      %v3259 = vld [vmem:[%s8 + $0x330] sm:$0xff]
      %v3260 = vld [vmem:[%s8 + $0x338] sm:$0xff]
      %v3261 = vld [vmem:[%s8 + $0x340] sm:$0xff]
      %v3262 = vld [vmem:[%s8 + $0x348] sm:$0xff]
      %v3263 = vld [vmem:[%s8 + $0x350] sm:$0xff]
      %v3264 = vld [vmem:[%s8 + $0x358] sm:$0xff]
      %v3265 = vld [vmem:[%s8 + $0x360] sm:$0xff]
      %v3266 = vld [vmem:[%s8 + $0x368] sm:$0xff]
      %v3267 = vld [vmem:[%s8 + $0x370] sm:$0xff]
      %v3268 = vld [vmem:[%s8 + $0x378] sm:$0xff]
      %v3269 = vld [vmem:[%s8 + $0x380] sm:$0xff]
      %v3270 = vld [vmem:[%s8 + $0x388] sm:$0xff]
      %v3271 = vld [vmem:[%s8 + $0x390] sm:$0xff]
      %v3272 = vld [vmem:[%s8 + $0x398] sm:$0xff]
      %v3273 = vld [vmem:[%s8 + $0x3a0] sm:$0xff]
      %v3274 = vld [vmem:[%s8 + $0x3a8] sm:$0xff]
      %v3275 = vld [vmem:[%s8 + $0x3b0] sm:$0xff]
      %v3276 = vld [vmem:[%s8 + $0x3b8] sm:$0xff]
      %v3277 = vld [vmem:[%s8 + $0x3c0] sm:$0xff]
      %v3278 = vld [vmem:[%s8 + $0x3c8] sm:$0xff]
      %v3279 = vld [vmem:[%s8 + $0x3d0] sm:$0xff]
      %v3280 = vld [vmem:[%s8 + $0x3d8] sm:$0xff]
      %v3281 = vld [vmem:[%s8 + $0x3e0] sm:$0xff]
      %v3282 = vld [vmem:[%s8 + $0x3e8] sm:$0xff]
      %v3283 = vld [vmem:[%s8 + $0x3f0] sm:$0xff]
      %v3284 = vld [vmem:[%s8 + $0x3f8] sm:$0xff]
      %v3285 = vld [vmem:[%s9] sm:$0xf]
      %v3287 = vperm.slane %v3285, 0
      %v3288 = vperm.slane %v3285, 1
      %v3289 = vperm.slane %v3285, 2
      %v3290 = vperm.slane %v3285, 3
      %v3423 = vunpack.c.l.b16 %v3157
      %v3424 = vunpack.c.h.b16 %v3157
      %v3425 = vunpack.c.l.b16 %v3158
      %v3426 = vunpack.c.h.b16 %v3158
      %v3427 = vunpack.c.l.b16 %v3159
      %v3428 = vunpack.c.h.b16 %v3159
      %v3429 = vunpack.c.l.b16 %v3160
      %v3430 = vunpack.c.h.b16 %v3160
      %v3431 = vunpack.c.l.b16 %v3161
      %v3432 = vunpack.c.h.b16 %v3161
      %v3433 = vunpack.c.l.b16 %v3162
      %v3434 = vunpack.c.h.b16 %v3162
      %v3435 = vunpack.c.l.b16 %v3163
      %v3436 = vunpack.c.h.b16 %v3163
      %v3437 = vunpack.c.l.b16 %v3164
      %v3438 = vunpack.c.h.b16 %v3164
      %v3439 = vunpack.c.l.b16 %v3165
      %v3440 = vunpack.c.h.b16 %v3165
      %v3441 = vunpack.c.l.b16 %v3166
      %v3442 = vunpack.c.h.b16 %v3166
      %v3443 = vunpack.c.l.b16 %v3167
      %v3444 = vunpack.c.h.b16 %v3167
      %v3445 = vunpack.c.l.b16 %v3168
      %v3446 = vunpack.c.h.b16 %v3168
      %v3447 = vunpack.c.l.b16 %v3169
      %v3448 = vunpack.c.h.b16 %v3169
      %v3449 = vunpack.c.l.b16 %v3170
      %v3450 = vunpack.c.h.b16 %v3170
      %v3451 = vunpack.c.l.b16 %v3171
      %v3452 = vunpack.c.h.b16 %v3171
      %v3453 = vunpack.c.l.b16 %v3172
      %v3454 = vunpack.c.h.b16 %v3172
      %v3455 = vunpack.c.l.b16 %v3173
      %v3456 = vunpack.c.h.b16 %v3173
      %v3457 = vunpack.c.l.b16 %v3174
      %v3458 = vunpack.c.h.b16 %v3174
      %v3459 = vunpack.c.l.b16 %v3175
      %v3460 = vunpack.c.h.b16 %v3175
      %v3461 = vunpack.c.l.b16 %v3176
      %v3462 = vunpack.c.h.b16 %v3176
      %v3463 = vunpack.c.l.b16 %v3177
      %v3464 = vunpack.c.h.b16 %v3177
      %v3465 = vunpack.c.l.b16 %v3178
      %v3466 = vunpack.c.h.b16 %v3178
      %v3467 = vunpack.c.l.b16 %v3179
      %v3468 = vunpack.c.h.b16 %v3179
      %v3469 = vunpack.c.l.b16 %v3180
      %v3470 = vunpack.c.h.b16 %v3180
      %v3471 = vunpack.c.l.b16 %v3181
      %v3472 = vunpack.c.h.b16 %v3181
      %v3473 = vunpack.c.l.b16 %v3182
      %v3474 = vunpack.c.h.b16 %v3182
      %v3475 = vunpack.c.l.b16 %v3183
      %v3476 = vunpack.c.h.b16 %v3183
      %v3477 = vunpack.c.l.b16 %v3184
      %v3478 = vunpack.c.h.b16 %v3184
      %v3479 = vunpack.c.l.b16 %v3185
      %v3480 = vunpack.c.h.b16 %v3185
      %v3481 = vunpack.c.l.b16 %v3186
      %v3482 = vunpack.c.h.b16 %v3186
      %v3483 = vunpack.c.l.b16 %v3187
      %v3484 = vunpack.c.h.b16 %v3187
      %v3485 = vunpack.c.l.b16 %v3188
      %v3486 = vunpack.c.h.b16 %v3188
      %v3487 = vunpack.c.l.b16 %v3189
      %v3488 = vunpack.c.h.b16 %v3189
      %v3489 = vunpack.c.l.b16 %v3190
      %v3490 = vunpack.c.h.b16 %v3190
      %v3491 = vunpack.c.l.b16 %v3191
      %v3492 = vunpack.c.h.b16 %v3191
      %v3493 = vunpack.c.l.b16 %v3192
      %v3494 = vunpack.c.h.b16 %v3192
      %v3495 = vunpack.c.l.b16 %v3193
      %v3496 = vunpack.c.h.b16 %v3193
      %v3497 = vunpack.c.l.b16 %v3194
      %v3498 = vunpack.c.h.b16 %v3194
      %v3499 = vunpack.c.l.b16 %v3195
      %v3500 = vunpack.c.h.b16 %v3195
      %v3501 = vunpack.c.l.b16 %v3196
      %v3502 = vunpack.c.h.b16 %v3196
      %v3503 = vunpack.c.l.b16 %v3197
      %v3504 = vunpack.c.h.b16 %v3197
      %v3505 = vunpack.c.l.b16 %v3198
      %v3506 = vunpack.c.h.b16 %v3198
      %v3507 = vunpack.c.l.b16 %v3199
      %v3508 = vunpack.c.h.b16 %v3199
      %v3509 = vunpack.c.l.b16 %v3200
      %v3510 = vunpack.c.h.b16 %v3200
      %v3511 = vunpack.c.l.b16 %v3201
      %v3512 = vunpack.c.h.b16 %v3201
      %v3513 = vunpack.c.l.b16 %v3202
      %v3514 = vunpack.c.h.b16 %v3202
      %v3515 = vunpack.c.l.b16 %v3203
      %v3516 = vunpack.c.h.b16 %v3203
      %v3517 = vunpack.c.l.b16 %v3204
      %v3518 = vunpack.c.h.b16 %v3204
      %v3519 = vunpack.c.l.b16 %v3205
      %v3520 = vunpack.c.h.b16 %v3205
      %v3521 = vunpack.c.l.b16 %v3206
      %v3522 = vunpack.c.h.b16 %v3206
      %v3523 = vunpack.c.l.b16 %v3207
      %v3524 = vunpack.c.h.b16 %v3207
      %v3525 = vunpack.c.l.b16 %v3208
      %v3526 = vunpack.c.h.b16 %v3208
      %v3527 = vunpack.c.l.b16 %v3209
      %v3528 = vunpack.c.h.b16 %v3209
      %v3529 = vunpack.c.l.b16 %v3210
      %v3530 = vunpack.c.h.b16 %v3210
      %v3531 = vunpack.c.l.b16 %v3211
      %v3532 = vunpack.c.h.b16 %v3211
      %v3533 = vunpack.c.l.b16 %v3212
      %v3534 = vunpack.c.h.b16 %v3212
      %v3535 = vunpack.c.l.b16 %v3213
      %v3536 = vunpack.c.h.b16 %v3213
      %v3537 = vunpack.c.l.b16 %v3214
      %v3538 = vunpack.c.h.b16 %v3214
      %v3539 = vunpack.c.l.b16 %v3215
      %v3540 = vunpack.c.h.b16 %v3215
      %v3541 = vunpack.c.l.b16 %v3216
      %v3542 = vunpack.c.h.b16 %v3216
      %v3543 = vunpack.c.l.b16 %v3217
      %v3544 = vunpack.c.h.b16 %v3217
      %v3545 = vunpack.c.l.b16 %v3218
      %v3546 = vunpack.c.h.b16 %v3218
      %v3547 = vunpack.c.l.b16 %v3219
      %v3548 = vunpack.c.h.b16 %v3219
      %v3549 = vunpack.c.l.b16 %v3220
      %v3550 = vunpack.c.h.b16 %v3220
      %v3551 = vunpack.c.l.b16 %v3221
      %v3552 = vunpack.c.h.b16 %v3221
      %v3553 = vunpack.c.l.b16 %v3222
      %v3554 = vunpack.c.h.b16 %v3222
      %v3555 = vunpack.c.l.b16 %v3223
      %v3556 = vunpack.c.h.b16 %v3223
      %v3557 = vunpack.c.l.b16 %v3224
      %v3558 = vunpack.c.h.b16 %v3224
      %v3559 = vunpack.c.l.b16 %v3225
      %v3560 = vunpack.c.h.b16 %v3225
      %v3561 = vunpack.c.l.b16 %v3226
      %v3562 = vunpack.c.h.b16 %v3226
      %v3563 = vunpack.c.l.b16 %v3227
      %v3564 = vunpack.c.h.b16 %v3227
      %v3565 = vunpack.c.l.b16 %v3228
      %v3566 = vunpack.c.h.b16 %v3228
      %v3567 = vunpack.c.l.b16 %v3229
      %v3568 = vunpack.c.h.b16 %v3229
      %v3569 = vunpack.c.l.b16 %v3230
      %v3570 = vunpack.c.h.b16 %v3230
      %v3571 = vunpack.c.l.b16 %v3231
      %v3572 = vunpack.c.h.b16 %v3231
      %v3573 = vunpack.c.l.b16 %v3232
      %v3574 = vunpack.c.h.b16 %v3232
      %v3575 = vunpack.c.l.b16 %v3233
      %v3576 = vunpack.c.h.b16 %v3233
      %v3577 = vunpack.c.l.b16 %v3234
      %v3578 = vunpack.c.h.b16 %v3234
      %v3579 = vunpack.c.l.b16 %v3235
      %v3580 = vunpack.c.h.b16 %v3235
      %v3581 = vunpack.c.l.b16 %v3236
      %v3582 = vunpack.c.h.b16 %v3236
      %v3583 = vunpack.c.l.b16 %v3237
      %v3584 = vunpack.c.h.b16 %v3237
      %v3585 = vunpack.c.l.b16 %v3238
      %v3586 = vunpack.c.h.b16 %v3238
      %v3587 = vunpack.c.l.b16 %v3239
      %v3588 = vunpack.c.h.b16 %v3239
      %v3589 = vunpack.c.l.b16 %v3240
      %v3590 = vunpack.c.h.b16 %v3240
      %v3591 = vunpack.c.l.b16 %v3241
      %v3592 = vunpack.c.h.b16 %v3241
      %v3593 = vunpack.c.l.b16 %v3242
      %v3594 = vunpack.c.h.b16 %v3242
      %v3595 = vunpack.c.l.b16 %v3243
      %v3596 = vunpack.c.h.b16 %v3243
      %v3597 = vunpack.c.l.b16 %v3244
      %v3598 = vunpack.c.h.b16 %v3244
      %v3599 = vunpack.c.l.b16 %v3245
      %v3600 = vunpack.c.h.b16 %v3245
      %v3601 = vunpack.c.l.b16 %v3246
      %v3602 = vunpack.c.h.b16 %v3246
      %v3603 = vunpack.c.l.b16 %v3247
      %v3604 = vunpack.c.h.b16 %v3247
      %v3605 = vunpack.c.l.b16 %v3248
      %v3606 = vunpack.c.h.b16 %v3248
      %v3607 = vunpack.c.l.b16 %v3249
      %v3608 = vunpack.c.h.b16 %v3249
      %v3609 = vunpack.c.l.b16 %v3250
      %v3610 = vunpack.c.h.b16 %v3250
      %v3611 = vunpack.c.l.b16 %v3251
      %v3612 = vunpack.c.h.b16 %v3251
      %v3613 = vunpack.c.l.b16 %v3252
      %v3614 = vunpack.c.h.b16 %v3252
      %v3615 = vunpack.c.l.b16 %v3253
      %v3616 = vunpack.c.h.b16 %v3253
      %v3617 = vunpack.c.l.b16 %v3254
      %v3618 = vunpack.c.h.b16 %v3254
      %v3619 = vunpack.c.l.b16 %v3255
      %v3620 = vunpack.c.h.b16 %v3255
      %v3621 = vunpack.c.l.b16 %v3256
      %v3622 = vunpack.c.h.b16 %v3256
      %v3623 = vunpack.c.l.b16 %v3257
      %v3624 = vunpack.c.h.b16 %v3257
      %v3625 = vunpack.c.l.b16 %v3258
      %v3626 = vunpack.c.h.b16 %v3258
      %v3627 = vunpack.c.l.b16 %v3259
      %v3628 = vunpack.c.h.b16 %v3259
      %v3629 = vunpack.c.l.b16 %v3260
      %v3630 = vunpack.c.h.b16 %v3260
      %v3631 = vunpack.c.l.b16 %v3261
      %v3632 = vunpack.c.h.b16 %v3261
      %v3633 = vunpack.c.l.b16 %v3262
      %v3634 = vunpack.c.h.b16 %v3262
      %v3635 = vunpack.c.l.b16 %v3263
      %v3636 = vunpack.c.h.b16 %v3263
      %v3637 = vunpack.c.l.b16 %v3264
      %v3638 = vunpack.c.h.b16 %v3264
      %v3639 = vunpack.c.l.b16 %v3265
      %v3640 = vunpack.c.h.b16 %v3265
      %v3641 = vunpack.c.l.b16 %v3266
      %v3642 = vunpack.c.h.b16 %v3266
      %v3643 = vunpack.c.l.b16 %v3267
      %v3644 = vunpack.c.h.b16 %v3267
      %v3645 = vunpack.c.l.b16 %v3268
      %v3646 = vunpack.c.h.b16 %v3268
      %v3647 = vunpack.c.l.b16 %v3269
      %v3648 = vunpack.c.h.b16 %v3269
      %v3649 = vunpack.c.l.b16 %v3270
      %v3650 = vunpack.c.h.b16 %v3270
      %v3651 = vunpack.c.l.b16 %v3271
      %v3652 = vunpack.c.h.b16 %v3271
      %v3653 = vunpack.c.l.b16 %v3272
      %v3654 = vunpack.c.h.b16 %v3272
      %v3655 = vunpack.c.l.b16 %v3273
      %v3656 = vunpack.c.h.b16 %v3273
      %v3657 = vunpack.c.l.b16 %v3274
      %v3658 = vunpack.c.h.b16 %v3274
      %v3659 = vunpack.c.l.b16 %v3275
      %v3660 = vunpack.c.h.b16 %v3275
      %v3661 = vunpack.c.l.b16 %v3276
      %v3662 = vunpack.c.h.b16 %v3276
      %v3663 = vunpack.c.l.b16 %v3277
      %v3664 = vunpack.c.h.b16 %v3277
      %v3665 = vunpack.c.l.b16 %v3278
      %v3666 = vunpack.c.h.b16 %v3278
      %v3667 = vunpack.c.l.b16 %v3279
      %v3668 = vunpack.c.h.b16 %v3279
      %v3669 = vunpack.c.l.b16 %v3280
      %v3670 = vunpack.c.h.b16 %v3280
      %v3671 = vunpack.c.l.b16 %v3281
      %v3672 = vunpack.c.h.b16 %v3281
      %v3673 = vunpack.c.l.b16 %v3282
      %v3674 = vunpack.c.h.b16 %v3282
      %v3675 = vunpack.c.l.b16 %v3283
      %v3676 = vunpack.c.h.b16 %v3283
      %v3677 = vunpack.c.l.b16 %v3284
      %v3678 = vunpack.c.h.b16 %v3284
      %v3679 = vpack.c.b16 %v3427, %v3423
      %v3680 = vpack.c.b16 %v3428, %v3424
      %v3681 = vpack.c.b16 %v3429, %v3425
      %v3682 = vpack.c.b16 %v3430, %v3426
      %v3683 = vpack.c.b16 %v3435, %v3431
      %v3684 = vpack.c.b16 %v3436, %v3432
      %v3685 = vpack.c.b16 %v3437, %v3433
      %v3686 = vpack.c.b16 %v3438, %v3434
      %v3687 = vpack.c.b16 %v3443, %v3439
      %v3688 = vpack.c.b16 %v3444, %v3440
      %v3689 = vpack.c.b16 %v3445, %v3441
      %v3690 = vpack.c.b16 %v3446, %v3442
      %v3691 = vpack.c.b16 %v3451, %v3447
      %v3692 = vpack.c.b16 %v3452, %v3448
      %v3693 = vpack.c.b16 %v3453, %v3449
      %v3694 = vpack.c.b16 %v3454, %v3450
      %v3695 = vpack.c.b16 %v3459, %v3455
      %v3696 = vpack.c.b16 %v3460, %v3456
      %v3697 = vpack.c.b16 %v3461, %v3457
      %v3698 = vpack.c.b16 %v3462, %v3458
      %v3699 = vpack.c.b16 %v3467, %v3463
      %v3700 = vpack.c.b16 %v3468, %v3464
      %v3701 = vpack.c.b16 %v3469, %v3465
      %v3702 = vpack.c.b16 %v3470, %v3466
      %v3703 = vpack.c.b16 %v3475, %v3471
      %v3704 = vpack.c.b16 %v3476, %v3472
      %v3705 = vpack.c.b16 %v3477, %v3473
      %v3706 = vpack.c.b16 %v3478, %v3474
      %v3707 = vpack.c.b16 %v3483, %v3479
      %v3708 = vpack.c.b16 %v3484, %v3480
      %v3709 = vpack.c.b16 %v3485, %v3481
      %v3710 = vpack.c.b16 %v3486, %v3482
      %v3711 = vpack.c.b16 %v3491, %v3487
      %v3712 = vpack.c.b16 %v3492, %v3488
      %v3713 = vpack.c.b16 %v3493, %v3489
      %v3714 = vpack.c.b16 %v3494, %v3490
      %v3715 = vpack.c.b16 %v3499, %v3495
      %v3716 = vpack.c.b16 %v3500, %v3496
      %v3717 = vpack.c.b16 %v3501, %v3497
      %v3718 = vpack.c.b16 %v3502, %v3498
      %v3719 = vpack.c.b16 %v3507, %v3503
      %v3720 = vpack.c.b16 %v3508, %v3504
      %v3721 = vpack.c.b16 %v3509, %v3505
      %v3722 = vpack.c.b16 %v3510, %v3506
      %v3723 = vpack.c.b16 %v3515, %v3511
      %v3724 = vpack.c.b16 %v3516, %v3512
      %v3725 = vpack.c.b16 %v3517, %v3513
      %v3726 = vpack.c.b16 %v3518, %v3514
      %v3727 = vpack.c.b16 %v3523, %v3519
      %v3728 = vpack.c.b16 %v3524, %v3520
      %v3729 = vpack.c.b16 %v3525, %v3521
      %v3730 = vpack.c.b16 %v3526, %v3522
      %v3731 = vpack.c.b16 %v3531, %v3527
      %v3732 = vpack.c.b16 %v3532, %v3528
      %v3733 = vpack.c.b16 %v3533, %v3529
      %v3734 = vpack.c.b16 %v3534, %v3530
      %v3735 = vpack.c.b16 %v3539, %v3535
      %v3736 = vpack.c.b16 %v3540, %v3536
      %v3737 = vpack.c.b16 %v3541, %v3537
      %v3738 = vpack.c.b16 %v3542, %v3538
      %v3739 = vpack.c.b16 %v3547, %v3543
      %v3740 = vpack.c.b16 %v3548, %v3544
      %v3741 = vpack.c.b16 %v3549, %v3545
      %v3742 = vpack.c.b16 %v3550, %v3546
      %v3743 = vpack.c.b16 %v3555, %v3551
      %v3744 = vpack.c.b16 %v3556, %v3552
      %v3745 = vpack.c.b16 %v3557, %v3553
      %v3746 = vpack.c.b16 %v3558, %v3554
      %v3747 = vpack.c.b16 %v3563, %v3559
      %v3748 = vpack.c.b16 %v3564, %v3560
      %v3749 = vpack.c.b16 %v3565, %v3561
      %v3750 = vpack.c.b16 %v3566, %v3562
      %v3751 = vpack.c.b16 %v3571, %v3567
      %v3752 = vpack.c.b16 %v3572, %v3568
      %v3753 = vpack.c.b16 %v3573, %v3569
      %v3754 = vpack.c.b16 %v3574, %v3570
      %v3755 = vpack.c.b16 %v3579, %v3575
      %v3756 = vpack.c.b16 %v3580, %v3576
      %v3757 = vpack.c.b16 %v3581, %v3577
      %v3758 = vpack.c.b16 %v3582, %v3578
      %v3759 = vpack.c.b16 %v3587, %v3583
      %v3760 = vpack.c.b16 %v3588, %v3584
      %v3761 = vpack.c.b16 %v3589, %v3585
      %v3762 = vpack.c.b16 %v3590, %v3586
      %v3763 = vpack.c.b16 %v3595, %v3591
      %v3764 = vpack.c.b16 %v3596, %v3592
      %v3765 = vpack.c.b16 %v3597, %v3593
      %v3766 = vpack.c.b16 %v3598, %v3594
      %v3767 = vpack.c.b16 %v3603, %v3599
      %v3768 = vpack.c.b16 %v3604, %v3600
      %v3769 = vpack.c.b16 %v3605, %v3601
      %v3770 = vpack.c.b16 %v3606, %v3602
      %v3771 = vpack.c.b16 %v3611, %v3607
      %v3772 = vpack.c.b16 %v3612, %v3608
      %v3773 = vpack.c.b16 %v3613, %v3609
      %v3774 = vpack.c.b16 %v3614, %v3610
      %v3775 = vpack.c.b16 %v3619, %v3615
      %v3776 = vpack.c.b16 %v3620, %v3616
      %v3777 = vpack.c.b16 %v3621, %v3617
      %v3778 = vpack.c.b16 %v3622, %v3618
      %v3779 = vpack.c.b16 %v3627, %v3623
      %v3780 = vpack.c.b16 %v3628, %v3624
      %v3781 = vpack.c.b16 %v3629, %v3625
      %v3782 = vpack.c.b16 %v3630, %v3626
      %v3783 = vpack.c.b16 %v3635, %v3631
      %v3784 = vpack.c.b16 %v3636, %v3632
      %v3785 = vpack.c.b16 %v3637, %v3633
      %v3786 = vpack.c.b16 %v3638, %v3634
      %v3787 = vpack.c.b16 %v3643, %v3639
      %v3788 = vpack.c.b16 %v3644, %v3640
      %v3789 = vpack.c.b16 %v3645, %v3641
      %v3790 = vpack.c.b16 %v3646, %v3642
      %v3791 = vpack.c.b16 %v3651, %v3647
      %v3792 = vpack.c.b16 %v3652, %v3648
      %v3793 = vpack.c.b16 %v3653, %v3649
      %v3794 = vpack.c.b16 %v3654, %v3650
      %v3795 = vpack.c.b16 %v3659, %v3655
      %v3796 = vpack.c.b16 %v3660, %v3656
      %v3797 = vpack.c.b16 %v3661, %v3657
      %v3798 = vpack.c.b16 %v3662, %v3658
      %v3799 = vpack.c.b16 %v3667, %v3663
      %v3800 = vpack.c.b16 %v3668, %v3664
      %v3801 = vpack.c.b16 %v3669, %v3665
      %v3802 = vpack.c.b16 %v3670, %v3666
      %v3803 = vpack.c.b16 %v3675, %v3671
      %v3804 = vpack.c.b16 %v3676, %v3672
      %v3805 = vpack.c.b16 %v3677, %v3673
      %v3806 = vpack.c.b16 %v3678, %v3674
      %3935 = vmatpush.bf16.msra.mxu0 %v3707
      %3936 = vmatpush.bf16.msra.mxu0 %v3703
      %3937 = vmatpush.bf16.msra.mxu0 %v3699
      %3938 = vmatpush.bf16.msra.mxu0 %v3695
      %3939 = vmatpush.bf16.msra.mxu0 %v3691
      %3940 = vmatpush.bf16.msra.mxu0 %v3687
      %3941 = vmatpush.bf16.msra.mxu0 %v3683
      %3942 = vmatpush.bf16.msra.mxu0 %v3679
      %3943 = vmatmul.bf16.gmra.mxu0 %v3153
      %v3944 = vpop.f32.mrf.mxu0
      %v3945 = vadd.f32 %v3287, %v3944
      %v3946 = vpop.f32.mrf.mxu0
      %v3947 = vadd.f32 %v3287, %v3946
      %3948 = vdwg.mxu0
      %3949 = vmatpush.bf16.msra.mxu0 %v3739
      %3950 = vmatpush.bf16.msra.mxu0 %v3735
      %3951 = vmatpush.bf16.msra.mxu0 %v3731
      %3952 = vmatpush.bf16.msra.mxu0 %v3727
      %3953 = vmatpush.bf16.msra.mxu0 %v3723
      %3954 = vmatpush.bf16.msra.mxu0 %v3719
      %3955 = vmatpush.bf16.msra.mxu0 %v3715
      %3956 = vmatpush.bf16.msra.mxu0 %v3711
      %3957 = vmatmul.bf16.gmra.mxu0 %v3154
      %v3958 = vpop.f32.mrf.mxu0
      %v3959 = vadd.f32 %v3945, %v3958
      %v3960 = vpop.f32.mrf.mxu0
      %v3961 = vadd.f32 %v3947, %v3960
      %3962 = vdwg.mxu0
      %3963 = vmatpush.bf16.msra.mxu0 %v3771
      %3964 = vmatpush.bf16.msra.mxu0 %v3767
      %3965 = vmatpush.bf16.msra.mxu0 %v3763
      %3966 = vmatpush.bf16.msra.mxu0 %v3759
      %3967 = vmatpush.bf16.msra.mxu0 %v3755
      %3968 = vmatpush.bf16.msra.mxu0 %v3751
      %3969 = vmatpush.bf16.msra.mxu0 %v3747
      %3970 = vmatpush.bf16.msra.mxu0 %v3743
      %3971 = vmatmul.bf16.gmra.mxu0 %v3155
      %v3972 = vpop.f32.mrf.mxu0
      %v3973 = vadd.f32 %v3959, %v3972
      %v3974 = vpop.f32.mrf.mxu0
      %v3975 = vadd.f32 %v3961, %v3974
      %3976 = vdwg.mxu0
      %3977 = vmatpush.bf16.msra.mxu0 %v3803
      %3978 = vmatpush.bf16.msra.mxu0 %v3799
      %3979 = vmatpush.bf16.msra.mxu0 %v3795
      %3980 = vmatpush.bf16.msra.mxu0 %v3791
      %3981 = vmatpush.bf16.msra.mxu0 %v3787
      %3982 = vmatpush.bf16.msra.mxu0 %v3783
      %3983 = vmatpush.bf16.msra.mxu0 %v3779
      %3984 = vmatpush.bf16.msra.mxu0 %v3775
      %3985 = vmatmul.bf16.gmra.mxu0 %v3156
      %v3986 = vpop.f32.mrf.mxu0
      %v3987 = vadd.f32 %v3973, %v3986
      %v3988 = vpop.f32.mrf.mxu0
      %v3989 = vadd.f32 %v3975, %v3988
      %3990 = vdwg.mxu0
      %3991 = vmatpush.bf16.msra.mxu0 %v3708
      %3992 = vmatpush.bf16.msra.mxu0 %v3704
      %3993 = vmatpush.bf16.msra.mxu0 %v3700
      %3994 = vmatpush.bf16.msra.mxu0 %v3696
      %3995 = vmatpush.bf16.msra.mxu0 %v3692
      %3996 = vmatpush.bf16.msra.mxu0 %v3688
      %3997 = vmatpush.bf16.msra.mxu0 %v3684
      %3998 = vmatpush.bf16.msra.mxu0 %v3680
      %3999 = vmatmul.bf16.gmra.mxu0 %v3153
      %v4000 = vpop.f32.mrf.mxu0
      %v4001 = vadd.f32 %v3288, %v4000
      %v4002 = vpop.f32.mrf.mxu0
      %v4003 = vadd.f32 %v3288, %v4002
      %4004 = vdwg.mxu0
      %4005 = vmatpush.bf16.msra.mxu0 %v3740
      %4006 = vmatpush.bf16.msra.mxu0 %v3736
      %4007 = vmatpush.bf16.msra.mxu0 %v3732
      %4008 = vmatpush.bf16.msra.mxu0 %v3728
      %4009 = vmatpush.bf16.msra.mxu0 %v3724
      %4010 = vmatpush.bf16.msra.mxu0 %v3720
      %4011 = vmatpush.bf16.msra.mxu0 %v3716
      %4012 = vmatpush.bf16.msra.mxu0 %v3712
      %4013 = vmatmul.bf16.gmra.mxu0 %v3154
      %v4014 = vpop.f32.mrf.mxu0
      %v4015 = vadd.f32 %v4001, %v4014
      %v4016 = vpop.f32.mrf.mxu0
      %v4017 = vadd.f32 %v4003, %v4016
      %4018 = vdwg.mxu0
      %4019 = vmatpush.bf16.msra.mxu0 %v3772
      %4020 = vmatpush.bf16.msra.mxu0 %v3768
      %4021 = vmatpush.bf16.msra.mxu0 %v3764
      %4022 = vmatpush.bf16.msra.mxu0 %v3760
      %4023 = vmatpush.bf16.msra.mxu0 %v3756
      %4024 = vmatpush.bf16.msra.mxu0 %v3752
      %4025 = vmatpush.bf16.msra.mxu0 %v3748
      %4026 = vmatpush.bf16.msra.mxu0 %v3744
      %4027 = vmatmul.bf16.gmra.mxu0 %v3155
      %v4028 = vpop.f32.mrf.mxu0
      %v4029 = vadd.f32 %v4015, %v4028
      %v4030 = vpop.f32.mrf.mxu0
      %v4031 = vadd.f32 %v4017, %v4030
      %4032 = vdwg.mxu0
      %4033 = vmatpush.bf16.msra.mxu0 %v3804
      %4034 = vmatpush.bf16.msra.mxu0 %v3800
      %4035 = vmatpush.bf16.msra.mxu0 %v3796
      %4036 = vmatpush.bf16.msra.mxu0 %v3792
      %4037 = vmatpush.bf16.msra.mxu0 %v3788
      %4038 = vmatpush.bf16.msra.mxu0 %v3784
      %4039 = vmatpush.bf16.msra.mxu0 %v3780
      %4040 = vmatpush.bf16.msra.mxu0 %v3776
      %4041 = vmatmul.bf16.gmra.mxu0 %v3156
      %v4042 = vpop.f32.mrf.mxu0
      %v4043 = vadd.f32 %v4029, %v4042
      %v4044 = vpop.f32.mrf.mxu0
      %v4045 = vadd.f32 %v4031, %v4044
      %4046 = vdwg.mxu0
      %4047 = vmatpush.bf16.msra.mxu0 %v3709
      %4048 = vmatpush.bf16.msra.mxu0 %v3705
      %4049 = vmatpush.bf16.msra.mxu0 %v3701
      %4050 = vmatpush.bf16.msra.mxu0 %v3697
      %4051 = vmatpush.bf16.msra.mxu0 %v3693
      %4052 = vmatpush.bf16.msra.mxu0 %v3689
      %4053 = vmatpush.bf16.msra.mxu0 %v3685
      %4054 = vmatpush.bf16.msra.mxu0 %v3681
      %4055 = vmatmul.bf16.gmra.mxu0 %v3153
      %v4056 = vpop.f32.mrf.mxu0
      %v4057 = vadd.f32 %v3289, %v4056
      %v4058 = vpop.f32.mrf.mxu0
      %v4059 = vadd.f32 %v3289, %v4058
      %4060 = vdwg.mxu0
      %4061 = vmatpush.bf16.msra.mxu0 %v3741
      %4062 = vmatpush.bf16.msra.mxu0 %v3737
      %4063 = vmatpush.bf16.msra.mxu0 %v3733
      %4064 = vmatpush.bf16.msra.mxu0 %v3729
      %4065 = vmatpush.bf16.msra.mxu0 %v3725
      %4066 = vmatpush.bf16.msra.mxu0 %v3721
      %4067 = vmatpush.bf16.msra.mxu0 %v3717
      %4068 = vmatpush.bf16.msra.mxu0 %v3713
      %4069 = vmatmul.bf16.gmra.mxu0 %v3154
      %v4070 = vpop.f32.mrf.mxu0
      %v4071 = vadd.f32 %v4057, %v4070
      %v4072 = vpop.f32.mrf.mxu0
      %v4073 = vadd.f32 %v4059, %v4072
      %4074 = vdwg.mxu0
      %4075 = vmatpush.bf16.msra.mxu0 %v3773
      %4076 = vmatpush.bf16.msra.mxu0 %v3769
      %4077 = vmatpush.bf16.msra.mxu0 %v3765
      %4078 = vmatpush.bf16.msra.mxu0 %v3761
      %4079 = vmatpush.bf16.msra.mxu0 %v3757
      %4080 = vmatpush.bf16.msra.mxu0 %v3753
      %4081 = vmatpush.bf16.msra.mxu0 %v3749
      %4082 = vmatpush.bf16.msra.mxu0 %v3745
      %4083 = vmatmul.bf16.gmra.mxu0 %v3155
      %v4084 = vpop.f32.mrf.mxu0
      %v4085 = vadd.f32 %v4071, %v4084
      %v4086 = vpop.f32.mrf.mxu0
      %v4087 = vadd.f32 %v4073, %v4086
      %4088 = vdwg.mxu0
      %4089 = vmatpush.bf16.msra.mxu0 %v3805
      %4090 = vmatpush.bf16.msra.mxu0 %v3801
      %4091 = vmatpush.bf16.msra.mxu0 %v3797
      %4092 = vmatpush.bf16.msra.mxu0 %v3793
      %4093 = vmatpush.bf16.msra.mxu0 %v3789
      %4094 = vmatpush.bf16.msra.mxu0 %v3785
      %4095 = vmatpush.bf16.msra.mxu0 %v3781
      %4096 = vmatpush.bf16.msra.mxu0 %v3777
      %4097 = vmatmul.bf16.gmra.mxu0 %v3156
      %v4098 = vpop.f32.mrf.mxu0
      %v4099 = vadd.f32 %v4085, %v4098
      %v4100 = vpop.f32.mrf.mxu0
      %v4101 = vadd.f32 %v4087, %v4100
      %4102 = vdwg.mxu0
      %4103 = vmatpush.bf16.msra.mxu0 %v3710
      %4104 = vmatpush.bf16.msra.mxu0 %v3706
      %4105 = vmatpush.bf16.msra.mxu0 %v3702
      %4106 = vmatpush.bf16.msra.mxu0 %v3698
      %4107 = vmatpush.bf16.msra.mxu0 %v3694
      %4108 = vmatpush.bf16.msra.mxu0 %v3690
      %4109 = vmatpush.bf16.msra.mxu0 %v3686
      %4110 = vmatpush.bf16.msra.mxu0 %v3682
      %4111 = vmatmul.bf16.gmra.mxu0 %v3153
      %v4112 = vpop.f32.mrf.mxu0
      %v4113 = vadd.f32 %v3290, %v4112
      %v4114 = vpop.f32.mrf.mxu0
      %v4115 = vadd.f32 %v3290, %v4114
      %4116 = vdwg.mxu0
      %4117 = vmatpush.bf16.msra.mxu0 %v3742
      %4118 = vmatpush.bf16.msra.mxu0 %v3738
      %4119 = vmatpush.bf16.msra.mxu0 %v3734
      %4120 = vmatpush.bf16.msra.mxu0 %v3730
      %4121 = vmatpush.bf16.msra.mxu0 %v3726
      %4122 = vmatpush.bf16.msra.mxu0 %v3722
      %4123 = vmatpush.bf16.msra.mxu0 %v3718
      %4124 = vmatpush.bf16.msra.mxu0 %v3714
      %4125 = vmatmul.bf16.gmra.mxu0 %v3154
      %v4126 = vpop.f32.mrf.mxu0
      %v4127 = vadd.f32 %v4113, %v4126
      %v4128 = vpop.f32.mrf.mxu0
      %v4129 = vadd.f32 %v4115, %v4128
      %4130 = vdwg.mxu0
      %4131 = vmatpush.bf16.msra.mxu0 %v3774
      %4132 = vmatpush.bf16.msra.mxu0 %v3770
      %4133 = vmatpush.bf16.msra.mxu0 %v3766
      %4134 = vmatpush.bf16.msra.mxu0 %v3762
      %4135 = vmatpush.bf16.msra.mxu0 %v3758
      %4136 = vmatpush.bf16.msra.mxu0 %v3754
      %4137 = vmatpush.bf16.msra.mxu0 %v3750
      %4138 = vmatpush.bf16.msra.mxu0 %v3746
      %4139 = vmatmul.bf16.gmra.mxu0 %v3155
      %v4140 = vpop.f32.mrf.mxu0
      %v4141 = vadd.f32 %v4127, %v4140
      %v4142 = vpop.f32.mrf.mxu0
      %v4143 = vadd.f32 %v4129, %v4142
      %4144 = vdwg.mxu0
      %4145 = vmatpush.bf16.msra.mxu0 %v3806
      %4146 = vmatpush.bf16.msra.mxu0 %v3802
      %4147 = vmatpush.bf16.msra.mxu0 %v3798
      %4148 = vmatpush.bf16.msra.mxu0 %v3794
      %4149 = vmatpush.bf16.msra.mxu0 %v3790
      %4150 = vmatpush.bf16.msra.mxu0 %v3786
      %4151 = vmatpush.bf16.msra.mxu0 %v3782
      %4152 = vmatpush.bf16.msra.mxu0 %v3778
      %4153 = vmatmul.bf16.gmra.mxu0 %v3156
      %v4154 = vpop.f32.mrf.mxu0
      %v4155 = vadd.f32 %v4141, %v4154
      %v4156 = vpop.f32.mrf.mxu0
      %v4157 = vadd.f32 %v4143, %v4156
      %4158 = vdwg.mxu0
      %v4159 = vmax.f32 %v3987, 0.0
      %v4160 = vmax.f32 %v4043, 0.0
      %v4161 = vmax.f32 %v4099, 0.0
      %v4162 = vmax.f32 %v4155, 0.0
      %v4163 = vmax.f32 %v3989, 0.0
      %v4164 = vmax.f32 %v4045, 0.0
      %v4165 = vmax.f32 %v4101, 0.0
      %v4166 = vmax.f32 %v4157, 0.0
      %4167 = vst [vmem:[#allocation2] sm:$0xff] 0.0
      %4168 = vst [vmem:[#allocation2 + $0x8] sm:$0xff] 0.0
      %4169 = vst [vmem:[#allocation2 + $0x10] sm:$0xff] 0.0
      %4170 = vst [vmem:[#allocation2 + $0x18] sm:$0xff] 0.0
      %4171 = vst [vmem:[#allocation2 + $0x20] sm:$0xff] 0.0
      %4172 = vst [vmem:[#allocation2 + $0x28] sm:$0xff] 0.0
      %4173 = vst [vmem:[#allocation2 + $0x30] sm:$0xff] 0.0
      %4174 = vst [vmem:[#allocation2 + $0x38] sm:$0xff] 0.0
      %4175 = vst [vmem:[#allocation2 + $0x40] sm:$0xff] 0.0
      %4176 = vst [vmem:[#allocation2 + $0x48] sm:$0xff] 0.0
      %4177 = vst [vmem:[#allocation2 + $0x50] sm:$0xff] 0.0
      %4178 = vst [vmem:[#allocation2 + $0x58] sm:$0xff] 0.0
      %4179 = vst [vmem:[#allocation2 + $0x60] sm:$0xff] 0.0
      %4180 = vst [vmem:[#allocation2 + $0x68] sm:$0xff] 0.0
      %4181 = vst [vmem:[#allocation2 + $0x70] sm:$0xff] 0.0
      %4182 = vst [vmem:[#allocation2 + $0x78] sm:$0xff] 0.0
      %4183 = vst [vmem:[#allocation2 + $0x80] sm:$0xff] 0.0
      %4184 = vst [vmem:[#allocation2 + $0x88] sm:$0xff] 0.0
      %vm4193 = vcmask 1043456
      %v4194 = vrot.slane %v4159, 4
      %v4195 = vrot.slane %v4160, 4
      %v4196 = vrot.slane %v4161, 4
      %v4197 = vrot.slane %v4162, 4
      %v4198 = vrot.slane %v4163, 4
      %v4199 = vsel %vm4193, %v4194, %v4198
      %v4200 = vrot.slane %v4164, 4
      %v4201 = vsel %vm4193, %v4195, %v4200
      %v4202 = vrot.slane %v4165, 4
      %v4203 = vsel %vm4193, %v4196, %v4202
      %v4204 = vrot.slane %v4166, 4
      %v4205 = vsel %vm4193, %v4197, %v4204
      %4218 = vst [vmem:[#allocation2 + $0x8] sm:$0xf0] %v4194
      %4219 = vst [vmem:[#allocation2 + $0x10] sm:$0xf0] %v4195
      %4220 = vst [vmem:[#allocation2 + $0x18] sm:$0xf0] %v4196
      %4221 = vst [vmem:[#allocation2 + $0x20] sm:$0xf0] %v4197
      %4222 = vst [vmem:[#allocation2 + $0x38] sm:$0xff] %v4199
      %4223 = vst [vmem:[#allocation2 + $0x40] sm:$0xff] %v4201
      %4224 = vst [vmem:[#allocation2 + $0x48] sm:$0xff] %v4203
      %4225 = vst [vmem:[#allocation2 + $0x50] sm:$0xff] %v4205
      %4226 = vst [vmem:[#allocation2 + $0x68] sm:$0xf] %v4198
      %4227 = vst [vmem:[#allocation2 + $0x70] sm:$0xf] %v4200
      %4228 = vst [vmem:[#allocation2 + $0x78] sm:$0xf] %v4202
      %4229 = vst [vmem:[#allocation2 + $0x80] sm:$0xf] %v4204
      %v4230 = vld [vmem:[#allocation2] sm:$0xff]
      %v4231 = vld [vmem:[#allocation2 + $0x8] sm:$0xff]
      %v4232 = vld [vmem:[#allocation2 + $0x10] sm:$0xff]
      %v4233 = vld [vmem:[#allocation2 + $0x18] sm:$0xff]
      %v4234 = vld [vmem:[#allocation2 + $0x20] sm:$0xff]
      %v4235 = vld [vmem:[#allocation2 + $0x28] sm:$0xff]
      %v4236 = vld [vmem:[#allocation2 + $0x30] sm:$0xff]
      %v4237 = vld [vmem:[#allocation2 + $0x38] sm:$0xff]
      %v4238 = vld [vmem:[#allocation2 + $0x40] sm:$0xff]
      %v4239 = vld [vmem:[#allocation2 + $0x48] sm:$0xff]
      %v4240 = vld [vmem:[#allocation2 + $0x50] sm:$0xff]
      %v4241 = vld [vmem:[#allocation2 + $0x58] sm:$0xff]
      %v4242 = vld [vmem:[#allocation2 + $0x60] sm:$0xff]
      %v4243 = vld [vmem:[#allocation2 + $0x68] sm:$0xff]
      %v4244 = vld [vmem:[#allocation2 + $0x70] sm:$0xff]
      %v4245 = vld [vmem:[#allocation2 + $0x78] sm:$0xff]
      %v4246 = vld [vmem:[#allocation2 + $0x80] sm:$0xff]
      %v4247 = vld [vmem:[#allocation2 + $0x88] sm:$0xff]
      %4266 = vrot.lane.b32.xlu0 %v4230, 96
      %v4267 = vpop.permute.xlu0 %4266
      %4268 = vrot.lane.b32.xlu0 %v4231, 96
      %v4269 = vpop.permute.xlu0 %4268
      %4270 = vrot.lane.b32.xlu0 %v4232, 96
      %v4271 = vpop.permute.xlu0 %4270
      %4272 = vrot.lane.b32.xlu0 %v4233, 96
      %v4273 = vpop.permute.xlu0 %4272
      %4274 = vrot.lane.b32.xlu0 %v4234, 96
      %v4275 = vpop.permute.xlu0 %4274
      %4276 = vrot.lane.b32.xlu0 %v4235, 96
      %v4277 = vpop.permute.xlu0 %4276
      %4278 = vrot.lane.b32.xlu0 %v4236, 96
      %v4279 = vpop.permute.xlu0 %4278
      %4280 = vrot.lane.b32.xlu0 %v4237, 96
      %v4281 = vpop.permute.xlu0 %4280
      %4282 = vrot.lane.b32.xlu0 %v4238, 96
      %v4283 = vpop.permute.xlu0 %4282
      %4284 = vrot.lane.b32.xlu0 %v4239, 96
      %v4285 = vpop.permute.xlu0 %4284
      %4286 = vrot.lane.b32.xlu0 %v4240, 96
      %v4287 = vpop.permute.xlu0 %4286
      %4288 = vrot.lane.b32.xlu0 %v4241, 96
      %v4289 = vpop.permute.xlu0 %4288
      %4290 = vrot.lane.b32.xlu0 %v4242, 96
      %v4291 = vpop.permute.xlu0 %4290
      %4292 = vrot.lane.b32.xlu0 %v4243, 96
      %v4293 = vpop.permute.xlu0 %4292
      %4294 = vrot.lane.b32.xlu0 %v4244, 96
      %v4295 = vpop.permute.xlu0 %4294
      %4296 = vrot.lane.b32.xlu0 %v4245, 96
      %v4297 = vpop.permute.xlu0 %4296
      %4298 = vrot.lane.b32.xlu0 %v4246, 96
      %v4299 = vpop.permute.xlu0 %4298
      %4300 = vrot.lane.b32.xlu0 %v4247, 96
      %v4301 = vpop.permute.xlu0 %4300
      %vm4302 = vcmask 785408
      %v4303 = vsel %vm4302, %v4267, %v4269
      %v4304 = vsel %vm4302, %v4269, %v4271
      %v4305 = vsel %vm4302, %v4271, %v4273
      %v4306 = vsel %vm4302, %v4273, %v4275
      %v4307 = vsel %vm4302, %v4275, %v4277
      %v4308 = vsel %vm4302, %v4279, %v4281
      %v4309 = vsel %vm4302, %v4281, %v4283
      %v4310 = vsel %vm4302, %v4283, %v4285
      %v4311 = vsel %vm4302, %v4285, %v4287
      %v4312 = vsel %vm4302, %v4287, %v4289
      %v4313 = vsel %vm4302, %v4291, %v4293
      %v4314 = vsel %vm4302, %v4293, %v4295
      %v4315 = vsel %vm4302, %v4295, %v4297
      %v4316 = vsel %vm4302, %v4297, %v4299
      %v4317 = vsel %vm4302, %v4299, %v4301
      %s4336 = scalar_lea.vmem [#allocation2], 144
      %4337 = vst [vmem:[%s4336] sm:$0xff] %v4303
      %4338 = vst [vmem:[%s4336 + $0x8] sm:$0xff] %v4304
      %4339 = vst [vmem:[%s4336 + $0x10] sm:$0xff] %v4305
      %4340 = vst [vmem:[%s4336 + $0x18] sm:$0xff] %v4306
      %4341 = vst [vmem:[%s4336 + $0x20] sm:$0xff] %v4307
      %4342 = vst.msk [vmem:[%s4336 + $0x28] sm:$0xff] %vm4302, %v4277
      %4343 = vst [vmem:[%s4336 + $0x30] sm:$0xff] %v4308
      %4344 = vst [vmem:[%s4336 + $0x38] sm:$0xff] %v4309
      %4345 = vst [vmem:[%s4336 + $0x40] sm:$0xff] %v4310
      %4346 = vst [vmem:[%s4336 + $0x48] sm:$0xff] %v4311
      %4347 = vst [vmem:[%s4336 + $0x50] sm:$0xff] %v4312
      %4348 = vst.msk [vmem:[%s4336 + $0x58] sm:$0xff] %vm4302, %v4289
      %4349 = vst [vmem:[%s4336 + $0x60] sm:$0xff] %v4313
      %4350 = vst [vmem:[%s4336 + $0x68] sm:$0xff] %v4314
      %4351 = vst [vmem:[%s4336 + $0x70] sm:$0xff] %v4315
      %4352 = vst [vmem:[%s4336 + $0x78] sm:$0xff] %v4316
      %4353 = vst [vmem:[%s4336 + $0x80] sm:$0xff] %v4317
      %4354 = vst.msk [vmem:[%s4336 + $0x88] sm:$0xff] %vm4302, %v4301
      %v4355 = vld [vmem:[#allocation2] sm:$0xff]
      %v4356 = vld [vmem:[#allocation2 + $0x8] sm:$0xff]
      %v4357 = vld [vmem:[#allocation2 + $0x10] sm:$0xff]
      %v4358 = vld [vmem:[#allocation2 + $0x18] sm:$0xff]
      %v4359 = vld [vmem:[#allocation2 + $0x20] sm:$0xff]
      %v4360 = vld [vmem:[#allocation2 + $0x28] sm:$0xff]
      %v4361 = vld [vmem:[#allocation2 + $0x30] sm:$0xff]
      %v4362 = vld [vmem:[#allocation2 + $0x38] sm:$0xff]
      %v4363 = vld [vmem:[#allocation2 + $0x40] sm:$0xff]
      %v4364 = vld [vmem:[#allocation2 + $0x48] sm:$0xff]
      %v4365 = vld [vmem:[#allocation2 + $0x50] sm:$0xff]
      %v4366 = vld [vmem:[#allocation2 + $0x58] sm:$0xff]
      %v4367 = vld [vmem:[#allocation2 + $0x60] sm:$0xff]
      %v4368 = vld [vmem:[#allocation2 + $0x68] sm:$0xff]
      %v4369 = vld [vmem:[#allocation2 + $0x70] sm:$0xff]
      %v4370 = vld [vmem:[#allocation2 + $0x78] sm:$0xff]
      %v4371 = vld [vmem:[#allocation2 + $0x80] sm:$0xff]
      %v4372 = vld [vmem:[#allocation2 + $0x88] sm:$0xff]
      %4391 = vrot.lane.b32.xlu0 %v4355, 64
      %v4392 = vpop.permute.xlu0 %4391
      %4393 = vrot.lane.b32.xlu0 %v4356, 64
      %v4394 = vpop.permute.xlu0 %4393
      %4395 = vrot.lane.b32.xlu0 %v4357, 64
      %v4396 = vpop.permute.xlu0 %4395
      %4397 = vrot.lane.b32.xlu0 %v4358, 64
      %v4398 = vpop.permute.xlu0 %4397
      %4399 = vrot.lane.b32.xlu0 %v4359, 64
      %v4400 = vpop.permute.xlu0 %4399
      %4401 = vrot.lane.b32.xlu0 %v4360, 64
      %v4402 = vpop.permute.xlu0 %4401
      %4403 = vrot.lane.b32.xlu0 %v4361, 64
      %v4404 = vpop.permute.xlu0 %4403
      %4405 = vrot.lane.b32.xlu0 %v4362, 64
      %v4406 = vpop.permute.xlu0 %4405
      %4407 = vrot.lane.b32.xlu0 %v4363, 64
      %v4408 = vpop.permute.xlu0 %4407
      %4409 = vrot.lane.b32.xlu0 %v4364, 64
      %v4410 = vpop.permute.xlu0 %4409
      %4411 = vrot.lane.b32.xlu0 %v4365, 64
      %v4412 = vpop.permute.xlu0 %4411
      %4413 = vrot.lane.b32.xlu0 %v4366, 64
      %v4414 = vpop.permute.xlu0 %4413
      %4415 = vrot.lane.b32.xlu0 %v4367, 64
      %v4416 = vpop.permute.xlu0 %4415
      %4417 = vrot.lane.b32.xlu0 %v4368, 64
      %v4418 = vpop.permute.xlu0 %4417
      %4419 = vrot.lane.b32.xlu0 %v4369, 64
      %v4420 = vpop.permute.xlu0 %4419
      %4421 = vrot.lane.b32.xlu0 %v4370, 64
      %v4422 = vpop.permute.xlu0 %4421
      %4423 = vrot.lane.b32.xlu0 %v4371, 64
      %v4424 = vpop.permute.xlu0 %4423
      %4425 = vrot.lane.b32.xlu0 %v4372, 64
      %v4426 = vpop.permute.xlu0 %4425
      %v4427 = vsel %vm1060, %v4392, %v4394
      %v4428 = vsel %vm1060, %v4394, %v4396
      %v4429 = vsel %vm1060, %v4396, %v4398
      %v4430 = vsel %vm1060, %v4398, %v4400
      %v4431 = vsel %vm1060, %v4400, %v4402
      %v4432 = vsel %vm1060, %v4404, %v4406
      %v4433 = vsel %vm1060, %v4406, %v4408
      %v4434 = vsel %vm1060, %v4408, %v4410
      %v4435 = vsel %vm1060, %v4410, %v4412
      %v4436 = vsel %vm1060, %v4412, %v4414
      %v4437 = vsel %vm1060, %v4416, %v4418
      %v4438 = vsel %vm1060, %v4418, %v4420
      %v4439 = vsel %vm1060, %v4420, %v4422
      %v4440 = vsel %vm1060, %v4422, %v4424
      %v4441 = vsel %vm1060, %v4424, %v4426
      %s4460 = scalar_lea.vmem [#allocation2], 288
      %4461 = vst [vmem:[%s4460] sm:$0xff] %v4427
      %4462 = vst [vmem:[%s4460 + $0x8] sm:$0xff] %v4428
      %4463 = vst [vmem:[%s4460 + $0x10] sm:$0xff] %v4429
      %4464 = vst [vmem:[%s4460 + $0x18] sm:$0xff] %v4430
      %4465 = vst [vmem:[%s4460 + $0x20] sm:$0xff] %v4431
      %4466 = vst.msk [vmem:[%s4460 + $0x28] sm:$0xff] %vm1060, %v4402
      %4467 = vst [vmem:[%s4460 + $0x30] sm:$0xff] %v4432
      %4468 = vst [vmem:[%s4460 + $0x38] sm:$0xff] %v4433
      %4469 = vst [vmem:[%s4460 + $0x40] sm:$0xff] %v4434
      %4470 = vst [vmem:[%s4460 + $0x48] sm:$0xff] %v4435
      %4471 = vst [vmem:[%s4460 + $0x50] sm:$0xff] %v4436
      %4472 = vst.msk [vmem:[%s4460 + $0x58] sm:$0xff] %vm1060, %v4414
      %4473 = vst [vmem:[%s4460 + $0x60] sm:$0xff] %v4437
      %4474 = vst [vmem:[%s4460 + $0x68] sm:$0xff] %v4438
      %4475 = vst [vmem:[%s4460 + $0x70] sm:$0xff] %v4439
      %4476 = vst [vmem:[%s4460 + $0x78] sm:$0xff] %v4440
      %4477 = vst [vmem:[%s4460 + $0x80] sm:$0xff] %v4441
      %4478 = vst.msk [vmem:[%s4460 + $0x88] sm:$0xff] %vm1060, %v4426
      %v4479 = vld [vmem:[#allocation2] sm:$0xff]
      %v4480 = vld [vmem:[#allocation2 + $0x8] sm:$0xff]
      %v4481 = vld [vmem:[#allocation2 + $0x10] sm:$0xff]
      %v4482 = vld [vmem:[#allocation2 + $0x18] sm:$0xff]
      %v4483 = vld [vmem:[#allocation2 + $0x20] sm:$0xff]
      %v4484 = vld [vmem:[#allocation2 + $0x28] sm:$0xff]
      %v4485 = vld [vmem:[#allocation2 + $0x30] sm:$0xff]
      %v4486 = vld [vmem:[#allocation2 + $0x38] sm:$0xff]
      %v4487 = vld [vmem:[#allocation2 + $0x40] sm:$0xff]
      %v4488 = vld [vmem:[#allocation2 + $0x48] sm:$0xff]
      %v4489 = vld [vmem:[#allocation2 + $0x50] sm:$0xff]
      %v4490 = vld [vmem:[#allocation2 + $0x58] sm:$0xff]
      %v4491 = vld [vmem:[#allocation2 + $0x60] sm:$0xff]
      %v4492 = vld [vmem:[#allocation2 + $0x68] sm:$0xff]
      %v4493 = vld [vmem:[#allocation2 + $0x70] sm:$0xff]
      %v4494 = vld [vmem:[#allocation2 + $0x78] sm:$0xff]
      %v4495 = vld [vmem:[#allocation2 + $0x80] sm:$0xff]
      %v4496 = vld [vmem:[#allocation2 + $0x88] sm:$0xff]
      %4515 = vrot.lane.b32.xlu0 %v4479, 32
      %v4516 = vpop.permute.xlu0 %4515
      %4517 = vrot.lane.b32.xlu0 %v4480, 32
      %v4518 = vpop.permute.xlu0 %4517
      %4519 = vrot.lane.b32.xlu0 %v4481, 32
      %v4520 = vpop.permute.xlu0 %4519
      %4521 = vrot.lane.b32.xlu0 %v4482, 32
      %v4522 = vpop.permute.xlu0 %4521
      %4523 = vrot.lane.b32.xlu0 %v4483, 32
      %v4524 = vpop.permute.xlu0 %4523
      %4525 = vrot.lane.b32.xlu0 %v4484, 32
      %v4526 = vpop.permute.xlu0 %4525
      %4527 = vrot.lane.b32.xlu0 %v4485, 32
      %v4528 = vpop.permute.xlu0 %4527
      %4529 = vrot.lane.b32.xlu0 %v4486, 32
      %v4530 = vpop.permute.xlu0 %4529
      %4531 = vrot.lane.b32.xlu0 %v4487, 32
      %v4532 = vpop.permute.xlu0 %4531
      %4533 = vrot.lane.b32.xlu0 %v4488, 32
      %v4534 = vpop.permute.xlu0 %4533
      %4535 = vrot.lane.b32.xlu0 %v4489, 32
      %v4536 = vpop.permute.xlu0 %4535
      %4537 = vrot.lane.b32.xlu0 %v4490, 32
      %v4538 = vpop.permute.xlu0 %4537
      %4539 = vrot.lane.b32.xlu0 %v4491, 32
      %v4540 = vpop.permute.xlu0 %4539
      %4541 = vrot.lane.b32.xlu0 %v4492, 32
      %v4542 = vpop.permute.xlu0 %4541
      %4543 = vrot.lane.b32.xlu0 %v4493, 32
      %v4544 = vpop.permute.xlu0 %4543
      %4545 = vrot.lane.b32.xlu0 %v4494, 32
      %v4546 = vpop.permute.xlu0 %4545
      %4547 = vrot.lane.b32.xlu0 %v4495, 32
      %v4548 = vpop.permute.xlu0 %4547
      %4549 = vrot.lane.b32.xlu0 %v4496, 32
      %v4550 = vpop.permute.xlu0 %4549
      %v4551 = vsel %vm3010, %v4516, %v4518
      %v4552 = vsel %vm3010, %v4518, %v4520
      %v4553 = vsel %vm3010, %v4520, %v4522
      %v4554 = vsel %vm3010, %v4522, %v4524
      %v4555 = vsel %vm3010, %v4524, %v4526
      %v4556 = vsel %vm3010, %v4528, %v4530
      %v4557 = vsel %vm3010, %v4530, %v4532
      %v4558 = vsel %vm3010, %v4532, %v4534
      %v4559 = vsel %vm3010, %v4534, %v4536
      %v4560 = vsel %vm3010, %v4536, %v4538
      %v4561 = vsel %vm3010, %v4540, %v4542
      %v4562 = vsel %vm3010, %v4542, %v4544
      %v4563 = vsel %vm3010, %v4544, %v4546
      %v4564 = vsel %vm3010, %v4546, %v4548
      %v4565 = vsel %vm3010, %v4548, %v4550
      %s4584 = scalar_lea.vmem [#allocation2], 432
      %4585 = vst [vmem:[%s4584] sm:$0xff] %v4551
      %4586 = vst [vmem:[%s4584 + $0x8] sm:$0xff] %v4552
      %4587 = vst [vmem:[%s4584 + $0x10] sm:$0xff] %v4553
      %4588 = vst [vmem:[%s4584 + $0x18] sm:$0xff] %v4554
      %4589 = vst [vmem:[%s4584 + $0x20] sm:$0xff] %v4555
      %4590 = vst.msk [vmem:[%s4584 + $0x28] sm:$0xff] %vm3010, %v4526
      %4591 = vst [vmem:[%s4584 + $0x30] sm:$0xff] %v4556
      %4592 = vst [vmem:[%s4584 + $0x38] sm:$0xff] %v4557
      %4593 = vst [vmem:[%s4584 + $0x40] sm:$0xff] %v4558
      %4594 = vst [vmem:[%s4584 + $0x48] sm:$0xff] %v4559
      %4595 = vst [vmem:[%s4584 + $0x50] sm:$0xff] %v4560
      %4596 = vst.msk [vmem:[%s4584 + $0x58] sm:$0xff] %vm3010, %v4538
      %4597 = vst [vmem:[%s4584 + $0x60] sm:$0xff] %v4561
      %4598 = vst [vmem:[%s4584 + $0x68] sm:$0xff] %v4562
      %4599 = vst [vmem:[%s4584 + $0x70] sm:$0xff] %v4563
      %4600 = vst [vmem:[%s4584 + $0x78] sm:$0xff] %v4564
      %4601 = vst [vmem:[%s4584 + $0x80] sm:$0xff] %v4565
      %4602 = vst.msk [vmem:[%s4584 + $0x88] sm:$0xff] %vm3010, %v4550
      %v4603 = vld [vmem:[#allocation2] sm:$0xff]
      %v4604 = vld [vmem:[#allocation2 + $0x8] sm:$0xff]
      %v4605 = vld [vmem:[#allocation2 + $0x10] sm:$0xff]
      %v4606 = vld [vmem:[#allocation2 + $0x18] sm:$0xff]
      %v4607 = vld [vmem:[#allocation2 + $0x30] sm:$0xff]
      %v4608 = vld [vmem:[#allocation2 + $0x38] sm:$0xff]
      %v4609 = vld [vmem:[#allocation2 + $0x40] sm:$0xff]
      %v4610 = vld [vmem:[#allocation2 + $0x48] sm:$0xff]
      %v4611 = vld [vmem:[%s10] sm:$0xf]
      %v4613 = vperm.slane %v4611, 0
      %v4614 = vperm.slane %v4611, 1
      %v4615 = vperm.slane %v4611, 2
      %v4616 = vperm.slane %v4611, 3
      %v4621 = vmul.f32 %v4603, %v4613
      %v4622 = vmul.f32 %v4604, %v4614
      %v4623 = vmul.f32 %v4605, %v4615
      %v4624 = vmul.f32 %v4606, %v4616
      %v4625 = vmul.f32 %v4607, %v4613
      %v4626 = vmul.f32 %v4608, %v4614
      %v4627 = vmul.f32 %v4609, %v4615
      %v4628 = vmul.f32 %v4610, %v4616
      %v4629 = vadd.f32 %v4621, 0.0
      %v4630 = vadd.f32 %v4622, 0.0
      %v4631 = vadd.f32 %v4623, 0.0
      %v4632 = vadd.f32 %v4624, 0.0
      %v4633 = vadd.f32 %v4625, 0.0
      %v4634 = vadd.f32 %v4626, 0.0
      %v4635 = vadd.f32 %v4627, 0.0
      %v4636 = vadd.f32 %v4628, 0.0
      %v4637 = vld [vmem:[%s4336] sm:$0xff]
      %v4638 = vld [vmem:[%s4336 + $0x8] sm:$0xff]
      %v4639 = vld [vmem:[%s4336 + $0x10] sm:$0xff]
      %v4640 = vld [vmem:[%s4336 + $0x18] sm:$0xff]
      %v4641 = vld [vmem:[%s4336 + $0x30] sm:$0xff]
      %v4642 = vld [vmem:[%s4336 + $0x38] sm:$0xff]
      %v4643 = vld [vmem:[%s4336 + $0x40] sm:$0xff]
      %v4644 = vld [vmem:[%s4336 + $0x48] sm:$0xff]
      %s4645 = scalar_lea.vmem %s10, 4
      %v4646 = vld [vmem:[%s4645] sm:$0xf]
      %v4648 = vperm.slane %v4646, 0
      %v4649 = vperm.slane %v4646, 1
      %v4650 = vperm.slane %v4646, 2
      %v4651 = vperm.slane %v4646, 3
      %v4656 = vmul.f32 %v4637, %v4648
      %v4657 = vmul.f32 %v4638, %v4649
      %v4658 = vmul.f32 %v4639, %v4650
      %v4659 = vmul.f32 %v4640, %v4651
      %v4660 = vmul.f32 %v4641, %v4648
      %v4661 = vmul.f32 %v4642, %v4649
      %v4662 = vmul.f32 %v4643, %v4650
      %v4663 = vmul.f32 %v4644, %v4651
      %v4664 = vadd.f32 %v4629, %v4656
      %v4665 = vadd.f32 %v4630, %v4657
      %v4666 = vadd.f32 %v4631, %v4658
      %v4667 = vadd.f32 %v4632, %v4659
      %v4668 = vadd.f32 %v4633, %v4660
      %v4669 = vadd.f32 %v4634, %v4661
      %v4670 = vadd.f32 %v4635, %v4662
      %v4671 = vadd.f32 %v4636, %v4663
      %v4672 = vld [vmem:[%s4460] sm:$0xff]
      %v4673 = vld [vmem:[%s4460 + $0x8] sm:$0xff]
      %v4674 = vld [vmem:[%s4460 + $0x10] sm:$0xff]
      %v4675 = vld [vmem:[%s4460 + $0x18] sm:$0xff]
      %v4676 = vld [vmem:[%s4460 + $0x30] sm:$0xff]
      %v4677 = vld [vmem:[%s4460 + $0x38] sm:$0xff]
      %v4678 = vld [vmem:[%s4460 + $0x40] sm:$0xff]
      %v4679 = vld [vmem:[%s4460 + $0x48] sm:$0xff]
      %s4680 = scalar_lea.vmem %s10, 8
      %v4681 = vld [vmem:[%s4680] sm:$0xf]
      %v4683 = vperm.slane %v4681, 0
      %v4684 = vperm.slane %v4681, 1
      %v4685 = vperm.slane %v4681, 2
      %v4686 = vperm.slane %v4681, 3
      %v4691 = vmul.f32 %v4672, %v4683
      %v4692 = vmul.f32 %v4673, %v4684
      %v4693 = vmul.f32 %v4674, %v4685
      %v4694 = vmul.f32 %v4675, %v4686
      %v4695 = vmul.f32 %v4676, %v4683
      %v4696 = vmul.f32 %v4677, %v4684
      %v4697 = vmul.f32 %v4678, %v4685
      %v4698 = vmul.f32 %v4679, %v4686
      %v4699 = vadd.f32 %v4664, %v4691
      %v4700 = vadd.f32 %v4665, %v4692
      %v4701 = vadd.f32 %v4666, %v4693
      %v4702 = vadd.f32 %v4667, %v4694
      %v4703 = vadd.f32 %v4668, %v4695
      %v4704 = vadd.f32 %v4669, %v4696
      %v4705 = vadd.f32 %v4670, %v4697
      %v4706 = vadd.f32 %v4671, %v4698
      %v4707 = vld [vmem:[%s4584] sm:$0xff]
      %v4708 = vld [vmem:[%s4584 + $0x8] sm:$0xff]
      %v4709 = vld [vmem:[%s4584 + $0x10] sm:$0xff]
      %v4710 = vld [vmem:[%s4584 + $0x18] sm:$0xff]
      %v4711 = vld [vmem:[%s4584 + $0x30] sm:$0xff]
      %v4712 = vld [vmem:[%s4584 + $0x38] sm:$0xff]
      %v4713 = vld [vmem:[%s4584 + $0x40] sm:$0xff]
      %v4714 = vld [vmem:[%s4584 + $0x48] sm:$0xff]
      %s4715 = scalar_lea.vmem %s10, 12
      %v4716 = vld [vmem:[%s4715] sm:$0xf]
      %v4718 = vperm.slane %v4716, 0
      %v4719 = vperm.slane %v4716, 1
      %v4720 = vperm.slane %v4716, 2
      %v4721 = vperm.slane %v4716, 3
      %v4726 = vmul.f32 %v4707, %v4718
      %v4727 = vmul.f32 %v4708, %v4719
      %v4728 = vmul.f32 %v4709, %v4720
      %v4729 = vmul.f32 %v4710, %v4721
      %v4730 = vmul.f32 %v4711, %v4718
      %v4731 = vmul.f32 %v4712, %v4719
      %v4732 = vmul.f32 %v4713, %v4720
      %v4733 = vmul.f32 %v4714, %v4721
      %v4734 = vadd.f32 %v4699, %v4726
      %v4735 = vadd.f32 %v4700, %v4727
      %v4736 = vadd.f32 %v4701, %v4728
      %v4737 = vadd.f32 %v4702, %v4729
      %v4738 = vadd.f32 %v4703, %v4730
      %v4739 = vadd.f32 %v4704, %v4731
      %v4740 = vadd.f32 %v4705, %v4732
      %v4741 = vadd.f32 %v4706, %v4733
      %v4742 = vld [vmem:[#allocation2 + $0x20] sm:$0xff]
      %v4743 = vld [vmem:[#allocation2 + $0x50] sm:$0xff]
      %s4744 = scalar_lea.vmem %s10, 16
      %v4745 = vld [vmem:[%s4744] sm:$0xf]
      %v4747 = vperm.slane %v4745, 0
      %v4748 = vperm.slane %v4745, 1
      %v4749 = vperm.slane %v4745, 2
      %v4750 = vperm.slane %v4745, 3
      %v4755 = vmul.f32 %v4604, %v4747
      %v4756 = vmul.f32 %v4605, %v4748
      %v4757 = vmul.f32 %v4606, %v4749
      %v4758 = vmul.f32 %v4742, %v4750
      %v4759 = vmul.f32 %v4608, %v4747
      %v4760 = vmul.f32 %v4609, %v4748
      %v4761 = vmul.f32 %v4610, %v4749
      %v4762 = vmul.f32 %v4743, %v4750
      %v4763 = vadd.f32 %v4734, %v4755
      %v4764 = vadd.f32 %v4735, %v4756
      %v4765 = vadd.f32 %v4736, %v4757
      %v4766 = vadd.f32 %v4737, %v4758
      %v4767 = vadd.f32 %v4738, %v4759
      %v4768 = vadd.f32 %v4739, %v4760
      %v4769 = vadd.f32 %v4740, %v4761
      %v4770 = vadd.f32 %v4741, %v4762
      %v4771 = vld [vmem:[%s4336 + $0x20] sm:$0xff]
      %v4772 = vld [vmem:[%s4336 + $0x50] sm:$0xff]
      %s4773 = scalar_lea.vmem %s10, 20
      %v4774 = vld [vmem:[%s4773] sm:$0xf]
      %v4776 = vperm.slane %v4774, 0
      %v4777 = vperm.slane %v4774, 1
      %v4778 = vperm.slane %v4774, 2
      %v4779 = vperm.slane %v4774, 3
      %v4784 = vmul.f32 %v4638, %v4776
      %v4785 = vmul.f32 %v4639, %v4777
      %v4786 = vmul.f32 %v4640, %v4778
      %v4787 = vmul.f32 %v4771, %v4779
      %v4788 = vmul.f32 %v4642, %v4776
      %v4789 = vmul.f32 %v4643, %v4777
      %v4790 = vmul.f32 %v4644, %v4778
      %v4791 = vmul.f32 %v4772, %v4779
      %v4792 = vadd.f32 %v4763, %v4784
      %v4793 = vadd.f32 %v4764, %v4785
      %v4794 = vadd.f32 %v4765, %v4786
      %v4795 = vadd.f32 %v4766, %v4787
      %v4796 = vadd.f32 %v4767, %v4788
      %v4797 = vadd.f32 %v4768, %v4789
      %v4798 = vadd.f32 %v4769, %v4790
      %v4799 = vadd.f32 %v4770, %v4791
      %v4800 = vld [vmem:[%s4460 + $0x20] sm:$0xff]
      %v4801 = vld [vmem:[%s4460 + $0x50] sm:$0xff]
      %s4802 = scalar_lea.vmem %s10, 24
      %v4803 = vld [vmem:[%s4802] sm:$0xf]
      %v4805 = vperm.slane %v4803, 0
      %v4806 = vperm.slane %v4803, 1
      %v4807 = vperm.slane %v4803, 2
      %v4808 = vperm.slane %v4803, 3
      %v4813 = vmul.f32 %v4673, %v4805
      %v4814 = vmul.f32 %v4674, %v4806
      %v4815 = vmul.f32 %v4675, %v4807
      %v4816 = vmul.f32 %v4800, %v4808
      %v4817 = vmul.f32 %v4677, %v4805
      %v4818 = vmul.f32 %v4678, %v4806
      %v4819 = vmul.f32 %v4679, %v4807
      %v4820 = vmul.f32 %v4801, %v4808
      %v4821 = vadd.f32 %v4792, %v4813
      %v4822 = vadd.f32 %v4793, %v4814
      %v4823 = vadd.f32 %v4794, %v4815
      %v4824 = vadd.f32 %v4795, %v4816
      %v4825 = vadd.f32 %v4796, %v4817
      %v4826 = vadd.f32 %v4797, %v4818
      %v4827 = vadd.f32 %v4798, %v4819
      %v4828 = vadd.f32 %v4799, %v4820
      %v4829 = vld [vmem:[%s4584 + $0x20] sm:$0xff]
      %v4830 = vld [vmem:[%s4584 + $0x50] sm:$0xff]
      %s4831 = scalar_lea.vmem %s10, 28
      %v4832 = vld [vmem:[%s4831] sm:$0xf]
      %v4834 = vperm.slane %v4832, 0
      %v4835 = vperm.slane %v4832, 1
      %v4836 = vperm.slane %v4832, 2
      %v4837 = vperm.slane %v4832, 3
      %v4842 = vmul.f32 %v4708, %v4834
      %v4843 = vmul.f32 %v4709, %v4835
      %v4844 = vmul.f32 %v4710, %v4836
      %v4845 = vmul.f32 %v4829, %v4837
      %v4846 = vmul.f32 %v4712, %v4834
      %v4847 = vmul.f32 %v4713, %v4835
      %v4848 = vmul.f32 %v4714, %v4836
      %v4849 = vmul.f32 %v4830, %v4837
      %v4850 = vadd.f32 %v4821, %v4842
      %v4851 = vadd.f32 %v4822, %v4843
      %v4852 = vadd.f32 %v4823, %v4844
      %v4853 = vadd.f32 %v4824, %v4845
      %v4854 = vadd.f32 %v4825, %v4846
      %v4855 = vadd.f32 %v4826, %v4847
      %v4856 = vadd.f32 %v4827, %v4848
      %v4857 = vadd.f32 %v4828, %v4849
      %v4858 = vld [vmem:[#allocation2 + $0x28] sm:$0xff]
      %v4859 = vld [vmem:[#allocation2 + $0x58] sm:$0xff]
      %s4860 = scalar_lea.vmem %s10, 32
      %v4861 = vld [vmem:[%s4860] sm:$0xf]
      %v4863 = vperm.slane %v4861, 0
      %v4864 = vperm.slane %v4861, 1
      %v4865 = vperm.slane %v4861, 2
      %v4866 = vperm.slane %v4861, 3
      %v4871 = vmul.f32 %v4605, %v4863
      %v4872 = vmul.f32 %v4606, %v4864
      %v4873 = vmul.f32 %v4742, %v4865
      %v4874 = vmul.f32 %v4858, %v4866
      %v4875 = vmul.f32 %v4609, %v4863
      %v4876 = vmul.f32 %v4610, %v4864
      %v4877 = vmul.f32 %v4743, %v4865
      %v4878 = vmul.f32 %v4859, %v4866
      %v4879 = vadd.f32 %v4850, %v4871
      %v4880 = vadd.f32 %v4851, %v4872
      %v4881 = vadd.f32 %v4852, %v4873
      %v4882 = vadd.f32 %v4853, %v4874
      %v4883 = vadd.f32 %v4854, %v4875
      %v4884 = vadd.f32 %v4855, %v4876
      %v4885 = vadd.f32 %v4856, %v4877
      %v4886 = vadd.f32 %v4857, %v4878
      %v4887 = vld [vmem:[#allocation2] sm:$0xfe]
      %v4888 = vld [vmem:[#allocation2 + $0x8] sm:$0xfe]
      %v4889 = vld [vmem:[#allocation2 + $0x10] sm:$0xfe]
      %v4890 = vld [vmem:[#allocation2 + $0x18] sm:$0xfe]
      %v4891 = vld [vmem:[#allocation2 + $0x60] sm:$0x1]
      %v4892 = vld [vmem:[#allocation2 + $0x68] sm:$0x1]
      %v4893 = vld [vmem:[#allocation2 + $0x70] sm:$0x1]
      %v4894 = vld [vmem:[#allocation2 + $0x78] sm:$0x1]
      %s4895 = scalar_lea.vmem %s10, 36
      %v4896 = vld [vmem:[%s4895] sm:$0xf]
      %v4898 = vperm.slane %v4896, 0
      %v4899 = vperm.slane %v4896, 1
      %v4900 = vperm.slane %v4896, 2
      %v4901 = vperm.slane %v4896, 3
      %v4906 = vmul.f32 %v4887, %v4898
      %v4907 = vmul.f32 %v4888, %v4899
      %v4908 = vmul.f32 %v4889, %v4900
      %v4909 = vmul.f32 %v4890, %v4901
      %v4910 = vmul.f32 %v4607, %v4898
      %v4911 = vmul.f32 %v4608, %v4899
      %v4912 = vmul.f32 %v4609, %v4900
      %v4913 = vmul.f32 %v4610, %v4901
      %v4914 = vmul.f32 %v4891, %v4898
      %v4915 = vmul.f32 %v4892, %v4899
      %v4916 = vmul.f32 %v4893, %v4900
      %v4917 = vmul.f32 %v4894, %v4901
      %v4930 = vrot.slane %v4906, 1
      %v4931 = vrot.slane %v4910, 1
      %v4932 = vsel %vm1026, %v4930, %v4931
      %v4933 = vrot.slane %v4907, 1
      %v4934 = vrot.slane %v4911, 1
      %v4935 = vsel %vm1026, %v4933, %v4934
      %v4936 = vrot.slane %v4908, 1
      %v4937 = vrot.slane %v4912, 1
      %v4938 = vsel %vm1026, %v4936, %v4937
      %v4939 = vrot.slane %v4909, 1
      %v4940 = vrot.slane %v4913, 1
      %v4941 = vsel %vm1026, %v4939, %v4940
      %v4942 = vrot.slane %v4914, 1
      %v4943 = vsel %vm1026, %v4931, %v4942
      %v4944 = vrot.slane %v4915, 1
      %v4945 = vsel %vm1026, %v4934, %v4944
      %v4946 = vrot.slane %v4916, 1
      %v4947 = vsel %vm1026, %v4937, %v4946
      %v4948 = vrot.slane %v4917, 1
      %v4949 = vsel %vm1026, %v4940, %v4948
      %v4958 = vadd.f32 %v4879, %v4932
      %v4959 = vadd.f32 %v4880, %v4935
      %v4960 = vadd.f32 %v4881, %v4938
      %v4961 = vadd.f32 %v4882, %v4941
      %v4962 = vadd.f32 %v4883, %v4943
      %v4963 = vadd.f32 %v4884, %v4945
      %v4964 = vadd.f32 %v4885, %v4947
      %v4965 = vadd.f32 %v4886, %v4949
      %v4966 = vld [vmem:[%s4336] sm:$0xfe]
      %v4967 = vld [vmem:[%s4336 + $0x8] sm:$0xfe]
      %v4968 = vld [vmem:[%s4336 + $0x10] sm:$0xfe]
      %v4969 = vld [vmem:[%s4336 + $0x18] sm:$0xfe]
      %v4970 = vld [vmem:[%s4336 + $0x60] sm:$0x1]
      %v4971 = vld [vmem:[%s4336 + $0x68] sm:$0x1]
      %v4972 = vld [vmem:[%s4336 + $0x70] sm:$0x1]
      %v4973 = vld [vmem:[%s4336 + $0x78] sm:$0x1]
      %s4974 = scalar_lea.vmem %s10, 40
      %v4975 = vld [vmem:[%s4974] sm:$0xf]
      %v4977 = vperm.slane %v4975, 0
      %v4978 = vperm.slane %v4975, 1
      %v4979 = vperm.slane %v4975, 2
      %v4980 = vperm.slane %v4975, 3
      %v4985 = vmul.f32 %v4966, %v4977
      %v4986 = vmul.f32 %v4967, %v4978
      %v4987 = vmul.f32 %v4968, %v4979
      %v4988 = vmul.f32 %v4969, %v4980
      %v4989 = vmul.f32 %v4641, %v4977
      %v4990 = vmul.f32 %v4642, %v4978
      %v4991 = vmul.f32 %v4643, %v4979
      %v4992 = vmul.f32 %v4644, %v4980
      %v4993 = vmul.f32 %v4970, %v4977
      %v4994 = vmul.f32 %v4971, %v4978
      %v4995 = vmul.f32 %v4972, %v4979
      %v4996 = vmul.f32 %v4973, %v4980
      %v5009 = vrot.slane %v4985, 1
      %v5010 = vrot.slane %v4989, 1
      %v5011 = vsel %vm1026, %v5009, %v5010
      %v5012 = vrot.slane %v4986, 1
      %v5013 = vrot.slane %v4990, 1
      %v5014 = vsel %vm1026, %v5012, %v5013
      %v5015 = vrot.slane %v4987, 1
      %v5016 = vrot.slane %v4991, 1
      %v5017 = vsel %vm1026, %v5015, %v5016
      %v5018 = vrot.slane %v4988, 1
      %v5019 = vrot.slane %v4992, 1
      %v5020 = vsel %vm1026, %v5018, %v5019
      %v5021 = vrot.slane %v4993, 1
      %v5022 = vsel %vm1026, %v5010, %v5021
      %v5023 = vrot.slane %v4994, 1
      %v5024 = vsel %vm1026, %v5013, %v5023
      %v5025 = vrot.slane %v4995, 1
      %v5026 = vsel %vm1026, %v5016, %v5025
      %v5027 = vrot.slane %v4996, 1
      %v5028 = vsel %vm1026, %v5019, %v5027
      %v5037 = vadd.f32 %v4958, %v5011
      %v5038 = vadd.f32 %v4959, %v5014
      %v5039 = vadd.f32 %v4960, %v5017
      %v5040 = vadd.f32 %v4961, %v5020
      %v5041 = vadd.f32 %v4962, %v5022
      %v5042 = vadd.f32 %v4963, %v5024
      %v5043 = vadd.f32 %v4964, %v5026
      %v5044 = vadd.f32 %v4965, %v5028
      %v5045 = vld [vmem:[%s4460] sm:$0xfe]
      %v5046 = vld [vmem:[%s4460 + $0x8] sm:$0xfe]
      %v5047 = vld [vmem:[%s4460 + $0x10] sm:$0xfe]
      %v5048 = vld [vmem:[%s4460 + $0x18] sm:$0xfe]
      %v5049 = vld [vmem:[%s4460 + $0x60] sm:$0x1]
      %v5050 = vld [vmem:[%s4460 + $0x68] sm:$0x1]
      %v5051 = vld [vmem:[%s4460 + $0x70] sm:$0x1]
      %v5052 = vld [vmem:[%s4460 + $0x78] sm:$0x1]
      %s5053 = scalar_lea.vmem %s10, 44
      %v5054 = vld [vmem:[%s5053] sm:$0xf]
      %v5056 = vperm.slane %v5054, 0
      %v5057 = vperm.slane %v5054, 1
      %v5058 = vperm.slane %v5054, 2
      %v5059 = vperm.slane %v5054, 3
      %v5064 = vmul.f32 %v5045, %v5056
      %v5065 = vmul.f32 %v5046, %v5057
      %v5066 = vmul.f32 %v5047, %v5058
      %v5067 = vmul.f32 %v5048, %v5059
      %v5068 = vmul.f32 %v4676, %v5056
      %v5069 = vmul.f32 %v4677, %v5057
      %v5070 = vmul.f32 %v4678, %v5058
      %v5071 = vmul.f32 %v4679, %v5059
      %v5072 = vmul.f32 %v5049, %v5056
      %v5073 = vmul.f32 %v5050, %v5057
      %v5074 = vmul.f32 %v5051, %v5058
      %v5075 = vmul.f32 %v5052, %v5059
      %v5088 = vrot.slane %v5064, 1
      %v5089 = vrot.slane %v5068, 1
      %v5090 = vsel %vm1026, %v5088, %v5089
      %v5091 = vrot.slane %v5065, 1
      %v5092 = vrot.slane %v5069, 1
      %v5093 = vsel %vm1026, %v5091, %v5092
      %v5094 = vrot.slane %v5066, 1
      %v5095 = vrot.slane %v5070, 1
      %v5096 = vsel %vm1026, %v5094, %v5095
      %v5097 = vrot.slane %v5067, 1
      %v5098 = vrot.slane %v5071, 1
      %v5099 = vsel %vm1026, %v5097, %v5098
      %v5100 = vrot.slane %v5072, 1
      %v5101 = vsel %vm1026, %v5089, %v5100
      %v5102 = vrot.slane %v5073, 1
      %v5103 = vsel %vm1026, %v5092, %v5102
      %v5104 = vrot.slane %v5074, 1
      %v5105 = vsel %vm1026, %v5095, %v5104
      %v5106 = vrot.slane %v5075, 1
      %v5107 = vsel %vm1026, %v5098, %v5106
      %v5116 = vadd.f32 %v5037, %v5090
      %v5117 = vadd.f32 %v5038, %v5093
      %v5118 = vadd.f32 %v5039, %v5096
      %v5119 = vadd.f32 %v5040, %v5099
      %v5120 = vadd.f32 %v5041, %v5101
      %v5121 = vadd.f32 %v5042, %v5103
      %v5122 = vadd.f32 %v5043, %v5105
      %v5123 = vadd.f32 %v5044, %v5107
      %v5124 = vld [vmem:[%s4584] sm:$0xfe]
      %v5125 = vld [vmem:[%s4584 + $0x8] sm:$0xfe]
      %v5126 = vld [vmem:[%s4584 + $0x10] sm:$0xfe]
      %v5127 = vld [vmem:[%s4584 + $0x18] sm:$0xfe]
      %v5128 = vld [vmem:[%s4584 + $0x60] sm:$0x1]
      %v5129 = vld [vmem:[%s4584 + $0x68] sm:$0x1]
      %v5130 = vld [vmem:[%s4584 + $0x70] sm:$0x1]
      %v5131 = vld [vmem:[%s4584 + $0x78] sm:$0x1]
      %s5132 = scalar_lea.vmem %s10, 48
      %v5133 = vld [vmem:[%s5132] sm:$0xf]
      %v5135 = vperm.slane %v5133, 0
      %v5136 = vperm.slane %v5133, 1
      %v5137 = vperm.slane %v5133, 2
      %v5138 = vperm.slane %v5133, 3
      %v5143 = vmul.f32 %v5124, %v5135
      %v5144 = vmul.f32 %v5125, %v5136
      %v5145 = vmul.f32 %v5126, %v5137
      %v5146 = vmul.f32 %v5127, %v5138
      %v5147 = vmul.f32 %v4711, %v5135
      %v5148 = vmul.f32 %v4712, %v5136
      %v5149 = vmul.f32 %v4713, %v5137
      %v5150 = vmul.f32 %v4714, %v5138
      %v5151 = vmul.f32 %v5128, %v5135
      %v5152 = vmul.f32 %v5129, %v5136
      %v5153 = vmul.f32 %v5130, %v5137
      %v5154 = vmul.f32 %v5131, %v5138
      %v5167 = vrot.slane %v5143, 1
      %v5168 = vrot.slane %v5147, 1
      %v5169 = vsel %vm1026, %v5167, %v5168
      %v5170 = vrot.slane %v5144, 1
      %v5171 = vrot.slane %v5148, 1
      %v5172 = vsel %vm1026, %v5170, %v5171
      %v5173 = vrot.slane %v5145, 1
      %v5174 = vrot.slane %v5149, 1
      %v5175 = vsel %vm1026, %v5173, %v5174
      %v5176 = vrot.slane %v5146, 1
      %v5177 = vrot.slane %v5150, 1
      %v5178 = vsel %vm1026, %v5176, %v5177
      %v5179 = vrot.slane %v5151, 1
      %v5180 = vsel %vm1026, %v5168, %v5179
      %v5181 = vrot.slane %v5152, 1
      %v5182 = vsel %vm1026, %v5171, %v5181
      %v5183 = vrot.slane %v5153, 1
      %v5184 = vsel %vm1026, %v5174, %v5183
      %v5185 = vrot.slane %v5154, 1
      %v5186 = vsel %vm1026, %v5177, %v5185
      %v5195 = vadd.f32 %v5116, %v5169
      %v5196 = vadd.f32 %v5117, %v5172
      %v5197 = vadd.f32 %v5118, %v5175
      %v5198 = vadd.f32 %v5119, %v5178
      %v5199 = vadd.f32 %v5120, %v5180
      %v5200 = vadd.f32 %v5121, %v5182
      %v5201 = vadd.f32 %v5122, %v5184
      %v5202 = vadd.f32 %v5123, %v5186
      %v5203 = vld [vmem:[#allocation2 + $0x20] sm:$0xfe]
      %v5204 = vld [vmem:[#allocation2 + $0x80] sm:$0x1]
      %s5205 = scalar_lea.vmem %s10, 52
      %v5206 = vld [vmem:[%s5205] sm:$0xf]
      %v5208 = vperm.slane %v5206, 0
      %v5209 = vperm.slane %v5206, 1
      %v5210 = vperm.slane %v5206, 2
      %v5211 = vperm.slane %v5206, 3
      %v5216 = vmul.f32 %v4888, %v5208
      %v5217 = vmul.f32 %v4889, %v5209
      %v5218 = vmul.f32 %v4890, %v5210
      %v5219 = vmul.f32 %v5203, %v5211
      %v5220 = vmul.f32 %v4608, %v5208
      %v5221 = vmul.f32 %v4609, %v5209
      %v5222 = vmul.f32 %v4610, %v5210
      %v5223 = vmul.f32 %v4743, %v5211
      %v5224 = vmul.f32 %v4892, %v5208
      %v5225 = vmul.f32 %v4893, %v5209
      %v5226 = vmul.f32 %v4894, %v5210
      %v5227 = vmul.f32 %v5204, %v5211
      %v5240 = vrot.slane %v5216, 1
      %v5241 = vrot.slane %v5220, 1
      %v5242 = vsel %vm1026, %v5240, %v5241
      %v5243 = vrot.slane %v5217, 1
      %v5244 = vrot.slane %v5221, 1
      %v5245 = vsel %vm1026, %v5243, %v5244
      %v5246 = vrot.slane %v5218, 1
      %v5247 = vrot.slane %v5222, 1
      %v5248 = vsel %vm1026, %v5246, %v5247
      %v5249 = vrot.slane %v5219, 1
      %v5250 = vrot.slane %v5223, 1
      %v5251 = vsel %vm1026, %v5249, %v5250
      %v5252 = vrot.slane %v5224, 1
      %v5253 = vsel %vm1026, %v5241, %v5252
      %v5254 = vrot.slane %v5225, 1
      %v5255 = vsel %vm1026, %v5244, %v5254
      %v5256 = vrot.slane %v5226, 1
      %v5257 = vsel %vm1026, %v5247, %v5256
      %v5258 = vrot.slane %v5227, 1
      %v5259 = vsel %vm1026, %v5250, %v5258
      %v5268 = vadd.f32 %v5195, %v5242
      %v5269 = vadd.f32 %v5196, %v5245
      %v5270 = vadd.f32 %v5197, %v5248
      %v5271 = vadd.f32 %v5198, %v5251
      %v5272 = vadd.f32 %v5199, %v5253
      %v5273 = vadd.f32 %v5200, %v5255
      %v5274 = vadd.f32 %v5201, %v5257
      %v5275 = vadd.f32 %v5202, %v5259
      %v5276 = vld [vmem:[%s4336 + $0x20] sm:$0xfe]
      %v5277 = vld [vmem:[%s4336 + $0x80] sm:$0x1]
      %s5278 = scalar_lea.vmem %s10, 56
      %v5279 = vld [vmem:[%s5278] sm:$0xf]
      %v5281 = vperm.slane %v5279, 0
      %v5282 = vperm.slane %v5279, 1
      %v5283 = vperm.slane %v5279, 2
      %v5284 = vperm.slane %v5279, 3
      %v5289 = vmul.f32 %v4967, %v5281
      %v5290 = vmul.f32 %v4968, %v5282
      %v5291 = vmul.f32 %v4969, %v5283
      %v5292 = vmul.f32 %v5276, %v5284
      %v5293 = vmul.f32 %v4642, %v5281
      %v5294 = vmul.f32 %v4643, %v5282
      %v5295 = vmul.f32 %v4644, %v5283
      %v5296 = vmul.f32 %v4772, %v5284
      %v5297 = vmul.f32 %v4971, %v5281
      %v5298 = vmul.f32 %v4972, %v5282
      %v5299 = vmul.f32 %v4973, %v5283
      %v5300 = vmul.f32 %v5277, %v5284
      %v5313 = vrot.slane %v5289, 1
      %v5314 = vrot.slane %v5293, 1
      %v5315 = vsel %vm1026, %v5313, %v5314
      %v5316 = vrot.slane %v5290, 1
      %v5317 = vrot.slane %v5294, 1
      %v5318 = vsel %vm1026, %v5316, %v5317
      %v5319 = vrot.slane %v5291, 1
      %v5320 = vrot.slane %v5295, 1
      %v5321 = vsel %vm1026, %v5319, %v5320
      %v5322 = vrot.slane %v5292, 1
      %v5323 = vrot.slane %v5296, 1
      %v5324 = vsel %vm1026, %v5322, %v5323
      %v5325 = vrot.slane %v5297, 1
      %v5326 = vsel %vm1026, %v5314, %v5325
      %v5327 = vrot.slane %v5298, 1
      %v5328 = vsel %vm1026, %v5317, %v5327
      %v5329 = vrot.slane %v5299, 1
      %v5330 = vsel %vm1026, %v5320, %v5329
      %v5331 = vrot.slane %v5300, 1
      %v5332 = vsel %vm1026, %v5323, %v5331
      %v5341 = vadd.f32 %v5268, %v5315
      %v5342 = vadd.f32 %v5269, %v5318
      %v5343 = vadd.f32 %v5270, %v5321
      %v5344 = vadd.f32 %v5271, %v5324
      %v5345 = vadd.f32 %v5272, %v5326
      %v5346 = vadd.f32 %v5273, %v5328
      %v5347 = vadd.f32 %v5274, %v5330
      %v5348 = vadd.f32 %v5275, %v5332
      %v5349 = vld [vmem:[%s4460 + $0x20] sm:$0xfe]
      %v5350 = vld [vmem:[%s4460 + $0x80] sm:$0x1]
      %s5351 = scalar_lea.vmem %s10, 60
      %v5352 = vld [vmem:[%s5351] sm:$0xf]
      %v5354 = vperm.slane %v5352, 0
      %v5355 = vperm.slane %v5352, 1
      %v5356 = vperm.slane %v5352, 2
      %v5357 = vperm.slane %v5352, 3
      %v5362 = vmul.f32 %v5046, %v5354
      %v5363 = vmul.f32 %v5047, %v5355
      %v5364 = vmul.f32 %v5048, %v5356
      %v5365 = vmul.f32 %v5349, %v5357
      %v5366 = vmul.f32 %v4677, %v5354
      %v5367 = vmul.f32 %v4678, %v5355
      %v5368 = vmul.f32 %v4679, %v5356
      %v5369 = vmul.f32 %v4801, %v5357
      %v5370 = vmul.f32 %v5050, %v5354
      %v5371 = vmul.f32 %v5051, %v5355
      %v5372 = vmul.f32 %v5052, %v5356
      %v5373 = vmul.f32 %v5350, %v5357
      %v5386 = vrot.slane %v5362, 1
      %v5387 = vrot.slane %v5366, 1
      %v5388 = vsel %vm1026, %v5386, %v5387
      %v5389 = vrot.slane %v5363, 1
      %v5390 = vrot.slane %v5367, 1
      %v5391 = vsel %vm1026, %v5389, %v5390
      %v5392 = vrot.slane %v5364, 1
      %v5393 = vrot.slane %v5368, 1
      %v5394 = vsel %vm1026, %v5392, %v5393
      %v5395 = vrot.slane %v5365, 1
      %v5396 = vrot.slane %v5369, 1
      %v5397 = vsel %vm1026, %v5395, %v5396
      %v5398 = vrot.slane %v5370, 1
      %v5399 = vsel %vm1026, %v5387, %v5398
      %v5400 = vrot.slane %v5371, 1
      %v5401 = vsel %vm1026, %v5390, %v5400
      %v5402 = vrot.slane %v5372, 1
      %v5403 = vsel %vm1026, %v5393, %v5402
      %v5404 = vrot.slane %v5373, 1
      %v5405 = vsel %vm1026, %v5396, %v5404
      %v5414 = vadd.f32 %v5341, %v5388
      %v5415 = vadd.f32 %v5342, %v5391
      %v5416 = vadd.f32 %v5343, %v5394
      %v5417 = vadd.f32 %v5344, %v5397
      %v5418 = vadd.f32 %v5345, %v5399
      %v5419 = vadd.f32 %v5346, %v5401
      %v5420 = vadd.f32 %v5347, %v5403
      %v5421 = vadd.f32 %v5348, %v5405
      %v5422 = vld [vmem:[%s4584 + $0x20] sm:$0xfe]
      %v5423 = vld [vmem:[%s4584 + $0x80] sm:$0x1]
      %s5424 = scalar_lea.vmem %s10, 64
      %v5425 = vld [vmem:[%s5424] sm:$0xf]
      %v5427 = vperm.slane %v5425, 0
      %v5428 = vperm.slane %v5425, 1
      %v5429 = vperm.slane %v5425, 2
      %v5430 = vperm.slane %v5425, 3
      %v5435 = vmul.f32 %v5125, %v5427
      %v5436 = vmul.f32 %v5126, %v5428
      %v5437 = vmul.f32 %v5127, %v5429
      %v5438 = vmul.f32 %v5422, %v5430
      %v5439 = vmul.f32 %v4712, %v5427
      %v5440 = vmul.f32 %v4713, %v5428
      %v5441 = vmul.f32 %v4714, %v5429
      %v5442 = vmul.f32 %v4830, %v5430
      %v5443 = vmul.f32 %v5129, %v5427
      %v5444 = vmul.f32 %v5130, %v5428
      %v5445 = vmul.f32 %v5131, %v5429
      %v5446 = vmul.f32 %v5423, %v5430
      %v5459 = vrot.slane %v5435, 1
      %v5460 = vrot.slane %v5439, 1
      %v5461 = vsel %vm1026, %v5459, %v5460
      %v5462 = vrot.slane %v5436, 1
      %v5463 = vrot.slane %v5440, 1
      %v5464 = vsel %vm1026, %v5462, %v5463
      %v5465 = vrot.slane %v5437, 1
      %v5466 = vrot.slane %v5441, 1
      %v5467 = vsel %vm1026, %v5465, %v5466
      %v5468 = vrot.slane %v5438, 1
      %v5469 = vrot.slane %v5442, 1
      %v5470 = vsel %vm1026, %v5468, %v5469
      %v5471 = vrot.slane %v5443, 1
      %v5472 = vsel %vm1026, %v5460, %v5471
      %v5473 = vrot.slane %v5444, 1
      %v5474 = vsel %vm1026, %v5463, %v5473
      %v5475 = vrot.slane %v5445, 1
      %v5476 = vsel %vm1026, %v5466, %v5475
      %v5477 = vrot.slane %v5446, 1
      %v5478 = vsel %vm1026, %v5469, %v5477
      %v5487 = vadd.f32 %v5414, %v5461
      %v5488 = vadd.f32 %v5415, %v5464
      %v5489 = vadd.f32 %v5416, %v5467
      %v5490 = vadd.f32 %v5417, %v5470
      %v5491 = vadd.f32 %v5418, %v5472
      %v5492 = vadd.f32 %v5419, %v5474
      %v5493 = vadd.f32 %v5420, %v5476
      %v5494 = vadd.f32 %v5421, %v5478
      %v5495 = vld [vmem:[#allocation2 + $0x28] sm:$0xfe]
      %v5496 = vld [vmem:[#allocation2 + $0x88] sm:$0x1]
      %s5497 = scalar_lea.vmem %s10, 68
      %v5498 = vld [vmem:[%s5497] sm:$0xf]
      %v5500 = vperm.slane %v5498, 0
      %v5501 = vperm.slane %v5498, 1
      %v5502 = vperm.slane %v5498, 2
      %v5503 = vperm.slane %v5498, 3
      %v5508 = vmul.f32 %v4889, %v5500
      %v5509 = vmul.f32 %v4890, %v5501
      %v5510 = vmul.f32 %v5203, %v5502
      %v5511 = vmul.f32 %v5495, %v5503
      %v5512 = vmul.f32 %v4609, %v5500
      %v5513 = vmul.f32 %v4610, %v5501
      %v5514 = vmul.f32 %v4743, %v5502
      %v5515 = vmul.f32 %v4859, %v5503
      %v5516 = vmul.f32 %v4893, %v5500
      %v5517 = vmul.f32 %v4894, %v5501
      %v5518 = vmul.f32 %v5204, %v5502
      %v5519 = vmul.f32 %v5496, %v5503
      %v5532 = vrot.slane %v5508, 1
      %v5533 = vrot.slane %v5512, 1
      %v5534 = vsel %vm1026, %v5532, %v5533
      %v5535 = vrot.slane %v5509, 1
      %v5536 = vrot.slane %v5513, 1
      %v5537 = vsel %vm1026, %v5535, %v5536
      %v5538 = vrot.slane %v5510, 1
      %v5539 = vrot.slane %v5514, 1
      %v5540 = vsel %vm1026, %v5538, %v5539
      %v5541 = vrot.slane %v5511, 1
      %v5542 = vrot.slane %v5515, 1
      %v5543 = vsel %vm1026, %v5541, %v5542
      %v5544 = vrot.slane %v5516, 1
      %v5545 = vsel %vm1026, %v5533, %v5544
      %v5546 = vrot.slane %v5517, 1
      %v5547 = vsel %vm1026, %v5536, %v5546
      %v5548 = vrot.slane %v5518, 1
      %v5549 = vsel %vm1026, %v5539, %v5548
      %v5550 = vrot.slane %v5519, 1
      %v5551 = vsel %vm1026, %v5542, %v5550
      %v5560 = vadd.f32 %v5487, %v5534
      %v5561 = vadd.f32 %v5488, %v5537
      %v5562 = vadd.f32 %v5489, %v5540
      %v5563 = vadd.f32 %v5490, %v5543
      %v5564 = vadd.f32 %v5491, %v5545
      %v5565 = vadd.f32 %v5492, %v5547
      %v5566 = vadd.f32 %v5493, %v5549
      %v5567 = vadd.f32 %v5494, %v5551
      %v5568 = vld [vmem:[#allocation2] sm:$0xfc]
      %v5569 = vld [vmem:[#allocation2 + $0x8] sm:$0xfc]
      %v5570 = vld [vmem:[#allocation2 + $0x10] sm:$0xfc]
      %v5571 = vld [vmem:[#allocation2 + $0x18] sm:$0xfc]
      %v5572 = vld [vmem:[#allocation2 + $0x60] sm:$0x3]
      %v5573 = vld [vmem:[#allocation2 + $0x68] sm:$0x3]
      %v5574 = vld [vmem:[#allocation2 + $0x70] sm:$0x3]
      %v5575 = vld [vmem:[#allocation2 + $0x78] sm:$0x3]
      %s5576 = scalar_lea.vmem %s10, 72
      %v5577 = vld [vmem:[%s5576] sm:$0xf]
      %v5579 = vperm.slane %v5577, 0
      %v5580 = vperm.slane %v5577, 1
      %v5581 = vperm.slane %v5577, 2
      %v5582 = vperm.slane %v5577, 3
      %v5587 = vmul.f32 %v5568, %v5579
      %v5588 = vmul.f32 %v5569, %v5580
      %v5589 = vmul.f32 %v5570, %v5581
      %v5590 = vmul.f32 %v5571, %v5582
      %v5591 = vmul.f32 %v4607, %v5579
      %v5592 = vmul.f32 %v4608, %v5580
      %v5593 = vmul.f32 %v4609, %v5581
      %v5594 = vmul.f32 %v4610, %v5582
      %v5595 = vmul.f32 %v5572, %v5579
      %v5596 = vmul.f32 %v5573, %v5580
      %v5597 = vmul.f32 %v5574, %v5581
      %v5598 = vmul.f32 %v5575, %v5582
      %v5611 = vrot.slane %v5587, 2
      %v5612 = vrot.slane %v5591, 2
      %v5613 = vsel %vm2299, %v5611, %v5612
      %v5614 = vrot.slane %v5588, 2
      %v5615 = vrot.slane %v5592, 2
      %v5616 = vsel %vm2299, %v5614, %v5615
      %v5617 = vrot.slane %v5589, 2
      %v5618 = vrot.slane %v5593, 2
      %v5619 = vsel %vm2299, %v5617, %v5618
      %v5620 = vrot.slane %v5590, 2
      %v5621 = vrot.slane %v5594, 2
      %v5622 = vsel %vm2299, %v5620, %v5621
      %v5623 = vrot.slane %v5595, 2
      %v5624 = vsel %vm2299, %v5612, %v5623
      %v5625 = vrot.slane %v5596, 2
      %v5626 = vsel %vm2299, %v5615, %v5625
      %v5627 = vrot.slane %v5597, 2
      %v5628 = vsel %vm2299, %v5618, %v5627
      %v5629 = vrot.slane %v5598, 2
      %v5630 = vsel %vm2299, %v5621, %v5629
      %v5639 = vadd.f32 %v5560, %v5613
      %v5640 = vadd.f32 %v5561, %v5616
      %v5641 = vadd.f32 %v5562, %v5619
      %v5642 = vadd.f32 %v5563, %v5622
      %v5643 = vadd.f32 %v5564, %v5624
      %v5644 = vadd.f32 %v5565, %v5626
      %v5645 = vadd.f32 %v5566, %v5628
      %v5646 = vadd.f32 %v5567, %v5630
      %v5647 = vld [vmem:[%s4336] sm:$0xfc]
      %v5648 = vld [vmem:[%s4336 + $0x8] sm:$0xfc]
      %v5649 = vld [vmem:[%s4336 + $0x10] sm:$0xfc]
      %v5650 = vld [vmem:[%s4336 + $0x18] sm:$0xfc]
      %v5651 = vld [vmem:[%s4336 + $0x60] sm:$0x3]
      %v5652 = vld [vmem:[%s4336 + $0x68] sm:$0x3]
      %v5653 = vld [vmem:[%s4336 + $0x70] sm:$0x3]
      %v5654 = vld [vmem:[%s4336 + $0x78] sm:$0x3]
      %s5655 = scalar_lea.vmem %s10, 76
      %v5656 = vld [vmem:[%s5655] sm:$0xf]
      %v5658 = vperm.slane %v5656, 0
      %v5659 = vperm.slane %v5656, 1
      %v5660 = vperm.slane %v5656, 2
      %v5661 = vperm.slane %v5656, 3
      %v5666 = vmul.f32 %v5647, %v5658
      %v5667 = vmul.f32 %v5648, %v5659
      %v5668 = vmul.f32 %v5649, %v5660
      %v5669 = vmul.f32 %v5650, %v5661
      %v5670 = vmul.f32 %v4641, %v5658
      %v5671 = vmul.f32 %v4642, %v5659
      %v5672 = vmul.f32 %v4643, %v5660
      %v5673 = vmul.f32 %v4644, %v5661
      %v5674 = vmul.f32 %v5651, %v5658
      %v5675 = vmul.f32 %v5652, %v5659
      %v5676 = vmul.f32 %v5653, %v5660
      %v5677 = vmul.f32 %v5654, %v5661
      %v5690 = vrot.slane %v5666, 2
      %v5691 = vrot.slane %v5670, 2
      %v5692 = vsel %vm2299, %v5690, %v5691
      %v5693 = vrot.slane %v5667, 2
      %v5694 = vrot.slane %v5671, 2
      %v5695 = vsel %vm2299, %v5693, %v5694
      %v5696 = vrot.slane %v5668, 2
      %v5697 = vrot.slane %v5672, 2
      %v5698 = vsel %vm2299, %v5696, %v5697
      %v5699 = vrot.slane %v5669, 2
      %v5700 = vrot.slane %v5673, 2
      %v5701 = vsel %vm2299, %v5699, %v5700
      %v5702 = vrot.slane %v5674, 2
      %v5703 = vsel %vm2299, %v5691, %v5702
      %v5704 = vrot.slane %v5675, 2
      %v5705 = vsel %vm2299, %v5694, %v5704
      %v5706 = vrot.slane %v5676, 2
      %v5707 = vsel %vm2299, %v5697, %v5706
      %v5708 = vrot.slane %v5677, 2
      %v5709 = vsel %vm2299, %v5700, %v5708
      %v5718 = vadd.f32 %v5639, %v5692
      %v5719 = vadd.f32 %v5640, %v5695
      %v5720 = vadd.f32 %v5641, %v5698
      %v5721 = vadd.f32 %v5642, %v5701
      %v5722 = vadd.f32 %v5643, %v5703
      %v5723 = vadd.f32 %v5644, %v5705
      %v5724 = vadd.f32 %v5645, %v5707
      %v5725 = vadd.f32 %v5646, %v5709
      %v5726 = vld [vmem:[%s4460] sm:$0xfc]
      %v5727 = vld [vmem:[%s4460 + $0x8] sm:$0xfc]
      %v5728 = vld [vmem:[%s4460 + $0x10] sm:$0xfc]
      %v5729 = vld [vmem:[%s4460 + $0x18] sm:$0xfc]
      %v5730 = vld [vmem:[%s4460 + $0x60] sm:$0x3]
      %v5731 = vld [vmem:[%s4460 + $0x68] sm:$0x3]
      %v5732 = vld [vmem:[%s4460 + $0x70] sm:$0x3]
      %v5733 = vld [vmem:[%s4460 + $0x78] sm:$0x3]
      %s5734 = scalar_lea.vmem %s10, 80
      %v5735 = vld [vmem:[%s5734] sm:$0xf]
      %v5737 = vperm.slane %v5735, 0
      %v5738 = vperm.slane %v5735, 1
      %v5739 = vperm.slane %v5735, 2
      %v5740 = vperm.slane %v5735, 3
      %v5745 = vmul.f32 %v5726, %v5737
      %v5746 = vmul.f32 %v5727, %v5738
      %v5747 = vmul.f32 %v5728, %v5739
      %v5748 = vmul.f32 %v5729, %v5740
      %v5749 = vmul.f32 %v4676, %v5737
      %v5750 = vmul.f32 %v4677, %v5738
      %v5751 = vmul.f32 %v4678, %v5739
      %v5752 = vmul.f32 %v4679, %v5740
      %v5753 = vmul.f32 %v5730, %v5737
      %v5754 = vmul.f32 %v5731, %v5738
      %v5755 = vmul.f32 %v5732, %v5739
      %v5756 = vmul.f32 %v5733, %v5740
      %v5769 = vrot.slane %v5745, 2
      %v5770 = vrot.slane %v5749, 2
      %v5771 = vsel %vm2299, %v5769, %v5770
      %v5772 = vrot.slane %v5746, 2
      %v5773 = vrot.slane %v5750, 2
      %v5774 = vsel %vm2299, %v5772, %v5773
      %v5775 = vrot.slane %v5747, 2
      %v5776 = vrot.slane %v5751, 2
      %v5777 = vsel %vm2299, %v5775, %v5776
      %v5778 = vrot.slane %v5748, 2
      %v5779 = vrot.slane %v5752, 2
      %v5780 = vsel %vm2299, %v5778, %v5779
      %v5781 = vrot.slane %v5753, 2
      %v5782 = vsel %vm2299, %v5770, %v5781
      %v5783 = vrot.slane %v5754, 2
      %v5784 = vsel %vm2299, %v5773, %v5783
      %v5785 = vrot.slane %v5755, 2
      %v5786 = vsel %vm2299, %v5776, %v5785
      %v5787 = vrot.slane %v5756, 2
      %v5788 = vsel %vm2299, %v5779, %v5787
      %v5797 = vadd.f32 %v5718, %v5771
      %v5798 = vadd.f32 %v5719, %v5774
      %v5799 = vadd.f32 %v5720, %v5777
      %v5800 = vadd.f32 %v5721, %v5780
      %v5801 = vadd.f32 %v5722, %v5782
      %v5802 = vadd.f32 %v5723, %v5784
      %v5803 = vadd.f32 %v5724, %v5786
      %v5804 = vadd.f32 %v5725, %v5788
      %v5805 = vld [vmem:[%s4584] sm:$0xfc]
      %v5806 = vld [vmem:[%s4584 + $0x8] sm:$0xfc]
      %v5807 = vld [vmem:[%s4584 + $0x10] sm:$0xfc]
      %v5808 = vld [vmem:[%s4584 + $0x18] sm:$0xfc]
      %v5809 = vld [vmem:[%s4584 + $0x60] sm:$0x3]
      %v5810 = vld [vmem:[%s4584 + $0x68] sm:$0x3]
      %v5811 = vld [vmem:[%s4584 + $0x70] sm:$0x3]
      %v5812 = vld [vmem:[%s4584 + $0x78] sm:$0x3]
      %s5813 = scalar_lea.vmem %s10, 84
      %v5814 = vld [vmem:[%s5813] sm:$0xf]
      %v5816 = vperm.slane %v5814, 0
      %v5817 = vperm.slane %v5814, 1
      %v5818 = vperm.slane %v5814, 2
      %v5819 = vperm.slane %v5814, 3
      %v5824 = vmul.f32 %v5805, %v5816
      %v5825 = vmul.f32 %v5806, %v5817
      %v5826 = vmul.f32 %v5807, %v5818
      %v5827 = vmul.f32 %v5808, %v5819
      %v5828 = vmul.f32 %v4711, %v5816
      %v5829 = vmul.f32 %v4712, %v5817
      %v5830 = vmul.f32 %v4713, %v5818
      %v5831 = vmul.f32 %v4714, %v5819
      %v5832 = vmul.f32 %v5809, %v5816
      %v5833 = vmul.f32 %v5810, %v5817
      %v5834 = vmul.f32 %v5811, %v5818
      %v5835 = vmul.f32 %v5812, %v5819
      %v5848 = vrot.slane %v5824, 2
      %v5849 = vrot.slane %v5828, 2
      %v5850 = vsel %vm2299, %v5848, %v5849
      %v5851 = vrot.slane %v5825, 2
      %v5852 = vrot.slane %v5829, 2
      %v5853 = vsel %vm2299, %v5851, %v5852
      %v5854 = vrot.slane %v5826, 2
      %v5855 = vrot.slane %v5830, 2
      %v5856 = vsel %vm2299, %v5854, %v5855
      %v5857 = vrot.slane %v5827, 2
      %v5858 = vrot.slane %v5831, 2
      %v5859 = vsel %vm2299, %v5857, %v5858
      %v5860 = vrot.slane %v5832, 2
      %v5861 = vsel %vm2299, %v5849, %v5860
      %v5862 = vrot.slane %v5833, 2
      %v5863 = vsel %vm2299, %v5852, %v5862
      %v5864 = vrot.slane %v5834, 2
      %v5865 = vsel %vm2299, %v5855, %v5864
      %v5866 = vrot.slane %v5835, 2
      %v5867 = vsel %vm2299, %v5858, %v5866
      %v5876 = vadd.f32 %v5797, %v5850
      %v5877 = vadd.f32 %v5798, %v5853
      %v5878 = vadd.f32 %v5799, %v5856
      %v5879 = vadd.f32 %v5800, %v5859
      %v5880 = vadd.f32 %v5801, %v5861
      %v5881 = vadd.f32 %v5802, %v5863
      %v5882 = vadd.f32 %v5803, %v5865
      %v5883 = vadd.f32 %v5804, %v5867
      %v5884 = vld [vmem:[#allocation2 + $0x20] sm:$0xfc]
      %v5885 = vld [vmem:[#allocation2 + $0x80] sm:$0x3]
      %s5886 = scalar_lea.vmem %s10, 88
      %v5887 = vld [vmem:[%s5886] sm:$0xf]
      %v5889 = vperm.slane %v5887, 0
      %v5890 = vperm.slane %v5887, 1
      %v5891 = vperm.slane %v5887, 2
      %v5892 = vperm.slane %v5887, 3
      %v5897 = vmul.f32 %v5569, %v5889
      %v5898 = vmul.f32 %v5570, %v5890
      %v5899 = vmul.f32 %v5571, %v5891
      %v5900 = vmul.f32 %v5884, %v5892
      %v5901 = vmul.f32 %v4608, %v5889
      %v5902 = vmul.f32 %v4609, %v5890
      %v5903 = vmul.f32 %v4610, %v5891
      %v5904 = vmul.f32 %v4743, %v5892
      %v5905 = vmul.f32 %v5573, %v5889
      %v5906 = vmul.f32 %v5574, %v5890
      %v5907 = vmul.f32 %v5575, %v5891
      %v5908 = vmul.f32 %v5885, %v5892
      %v5921 = vrot.slane %v5897, 2
      %v5922 = vrot.slane %v5901, 2
      %v5923 = vsel %vm2299, %v5921, %v5922
      %v5924 = vrot.slane %v5898, 2
      %v5925 = vrot.slane %v5902, 2
      %v5926 = vsel %vm2299, %v5924, %v5925
      %v5927 = vrot.slane %v5899, 2
      %v5928 = vrot.slane %v5903, 2
      %v5929 = vsel %vm2299, %v5927, %v5928
      %v5930 = vrot.slane %v5900, 2
      %v5931 = vrot.slane %v5904, 2
      %v5932 = vsel %vm2299, %v5930, %v5931
      %v5933 = vrot.slane %v5905, 2
      %v5934 = vsel %vm2299, %v5922, %v5933
      %v5935 = vrot.slane %v5906, 2
      %v5936 = vsel %vm2299, %v5925, %v5935
      %v5937 = vrot.slane %v5907, 2
      %v5938 = vsel %vm2299, %v5928, %v5937
      %v5939 = vrot.slane %v5908, 2
      %v5940 = vsel %vm2299, %v5931, %v5939
      %v5949 = vadd.f32 %v5876, %v5923
      %v5950 = vadd.f32 %v5877, %v5926
      %v5951 = vadd.f32 %v5878, %v5929
      %v5952 = vadd.f32 %v5879, %v5932
      %v5953 = vadd.f32 %v5880, %v5934
      %v5954 = vadd.f32 %v5881, %v5936
      %v5955 = vadd.f32 %v5882, %v5938
      %v5956 = vadd.f32 %v5883, %v5940
      %v5957 = vld [vmem:[%s4336 + $0x20] sm:$0xfc]
      %v5958 = vld [vmem:[%s4336 + $0x80] sm:$0x3]
      %s5959 = scalar_lea.vmem %s10, 92
      %v5960 = vld [vmem:[%s5959] sm:$0xf]
      %v5962 = vperm.slane %v5960, 0
      %v5963 = vperm.slane %v5960, 1
      %v5964 = vperm.slane %v5960, 2
      %v5965 = vperm.slane %v5960, 3
      %v5970 = vmul.f32 %v5648, %v5962
      %v5971 = vmul.f32 %v5649, %v5963
      %v5972 = vmul.f32 %v5650, %v5964
      %v5973 = vmul.f32 %v5957, %v5965
      %v5974 = vmul.f32 %v4642, %v5962
      %v5975 = vmul.f32 %v4643, %v5963
      %v5976 = vmul.f32 %v4644, %v5964
      %v5977 = vmul.f32 %v4772, %v5965
      %v5978 = vmul.f32 %v5652, %v5962
      %v5979 = vmul.f32 %v5653, %v5963
      %v5980 = vmul.f32 %v5654, %v5964
      %v5981 = vmul.f32 %v5958, %v5965
      %v5994 = vrot.slane %v5970, 2
      %v5995 = vrot.slane %v5974, 2
      %v5996 = vsel %vm2299, %v5994, %v5995
      %v5997 = vrot.slane %v5971, 2
      %v5998 = vrot.slane %v5975, 2
      %v5999 = vsel %vm2299, %v5997, %v5998
      %v6000 = vrot.slane %v5972, 2
      %v6001 = vrot.slane %v5976, 2
      %v6002 = vsel %vm2299, %v6000, %v6001
      %v6003 = vrot.slane %v5973, 2
      %v6004 = vrot.slane %v5977, 2
      %v6005 = vsel %vm2299, %v6003, %v6004
      %v6006 = vrot.slane %v5978, 2
      %v6007 = vsel %vm2299, %v5995, %v6006
      %v6008 = vrot.slane %v5979, 2
      %v6009 = vsel %vm2299, %v5998, %v6008
      %v6010 = vrot.slane %v5980, 2
      %v6011 = vsel %vm2299, %v6001, %v6010
      %v6012 = vrot.slane %v5981, 2
      %v6013 = vsel %vm2299, %v6004, %v6012
      %v6022 = vadd.f32 %v5949, %v5996
      %v6023 = vadd.f32 %v5950, %v5999
      %v6024 = vadd.f32 %v5951, %v6002
      %v6025 = vadd.f32 %v5952, %v6005
      %v6026 = vadd.f32 %v5953, %v6007
      %v6027 = vadd.f32 %v5954, %v6009
      %v6028 = vadd.f32 %v5955, %v6011
      %v6029 = vadd.f32 %v5956, %v6013
      %v6030 = vld [vmem:[%s4460 + $0x20] sm:$0xfc]
      %v6031 = vld [vmem:[%s4460 + $0x80] sm:$0x3]
      %s6032 = scalar_lea.vmem %s10, 96
      %v6033 = vld [vmem:[%s6032] sm:$0xf]
      %v6035 = vperm.slane %v6033, 0
      %v6036 = vperm.slane %v6033, 1
      %v6037 = vperm.slane %v6033, 2
      %v6038 = vperm.slane %v6033, 3
      %v6043 = vmul.f32 %v5727, %v6035
      %v6044 = vmul.f32 %v5728, %v6036
      %v6045 = vmul.f32 %v5729, %v6037
      %v6046 = vmul.f32 %v6030, %v6038
      %v6047 = vmul.f32 %v4677, %v6035
      %v6048 = vmul.f32 %v4678, %v6036
      %v6049 = vmul.f32 %v4679, %v6037
      %v6050 = vmul.f32 %v4801, %v6038
      %v6051 = vmul.f32 %v5731, %v6035
      %v6052 = vmul.f32 %v5732, %v6036
      %v6053 = vmul.f32 %v5733, %v6037
      %v6054 = vmul.f32 %v6031, %v6038
      %v6067 = vrot.slane %v6043, 2
      %v6068 = vrot.slane %v6047, 2
      %v6069 = vsel %vm2299, %v6067, %v6068
      %v6070 = vrot.slane %v6044, 2
      %v6071 = vrot.slane %v6048, 2
      %v6072 = vsel %vm2299, %v6070, %v6071
      %v6073 = vrot.slane %v6045, 2
      %v6074 = vrot.slane %v6049, 2
      %v6075 = vsel %vm2299, %v6073, %v6074
      %v6076 = vrot.slane %v6046, 2
      %v6077 = vrot.slane %v6050, 2
      %v6078 = vsel %vm2299, %v6076, %v6077
      %v6079 = vrot.slane %v6051, 2
      %v6080 = vsel %vm2299, %v6068, %v6079
      %v6081 = vrot.slane %v6052, 2
      %v6082 = vsel %vm2299, %v6071, %v6081
      %v6083 = vrot.slane %v6053, 2
      %v6084 = vsel %vm2299, %v6074, %v6083
      %v6085 = vrot.slane %v6054, 2
      %v6086 = vsel %vm2299, %v6077, %v6085
      %v6095 = vadd.f32 %v6022, %v6069
      %v6096 = vadd.f32 %v6023, %v6072
      %v6097 = vadd.f32 %v6024, %v6075
      %v6098 = vadd.f32 %v6025, %v6078
      %v6099 = vadd.f32 %v6026, %v6080
      %v6100 = vadd.f32 %v6027, %v6082
      %v6101 = vadd.f32 %v6028, %v6084
      %v6102 = vadd.f32 %v6029, %v6086
      %v6103 = vld [vmem:[%s4584 + $0x20] sm:$0xfc]
      %v6104 = vld [vmem:[%s4584 + $0x80] sm:$0x3]
      %s6105 = scalar_lea.vmem %s10, 100
      %v6106 = vld [vmem:[%s6105] sm:$0xf]
      %v6108 = vperm.slane %v6106, 0
      %v6109 = vperm.slane %v6106, 1
      %v6110 = vperm.slane %v6106, 2
      %v6111 = vperm.slane %v6106, 3
      %v6116 = vmul.f32 %v5806, %v6108
      %v6117 = vmul.f32 %v5807, %v6109
      %v6118 = vmul.f32 %v5808, %v6110
      %v6119 = vmul.f32 %v6103, %v6111
      %v6120 = vmul.f32 %v4712, %v6108
      %v6121 = vmul.f32 %v4713, %v6109
      %v6122 = vmul.f32 %v4714, %v6110
      %v6123 = vmul.f32 %v4830, %v6111
      %v6124 = vmul.f32 %v5810, %v6108
      %v6125 = vmul.f32 %v5811, %v6109
      %v6126 = vmul.f32 %v5812, %v6110
      %v6127 = vmul.f32 %v6104, %v6111
      %v6140 = vrot.slane %v6116, 2
      %v6141 = vrot.slane %v6120, 2
      %v6142 = vsel %vm2299, %v6140, %v6141
      %v6143 = vrot.slane %v6117, 2
      %v6144 = vrot.slane %v6121, 2
      %v6145 = vsel %vm2299, %v6143, %v6144
      %v6146 = vrot.slane %v6118, 2
      %v6147 = vrot.slane %v6122, 2
      %v6148 = vsel %vm2299, %v6146, %v6147
      %v6149 = vrot.slane %v6119, 2
      %v6150 = vrot.slane %v6123, 2
      %v6151 = vsel %vm2299, %v6149, %v6150
      %v6152 = vrot.slane %v6124, 2
      %v6153 = vsel %vm2299, %v6141, %v6152
      %v6154 = vrot.slane %v6125, 2
      %v6155 = vsel %vm2299, %v6144, %v6154
      %v6156 = vrot.slane %v6126, 2
      %v6157 = vsel %vm2299, %v6147, %v6156
      %v6158 = vrot.slane %v6127, 2
      %v6159 = vsel %vm2299, %v6150, %v6158
      %v6168 = vadd.f32 %v6095, %v6142
      %v6169 = vadd.f32 %v6096, %v6145
      %v6170 = vadd.f32 %v6097, %v6148
      %v6171 = vadd.f32 %v6098, %v6151
      %v6172 = vadd.f32 %v6099, %v6153
      %v6173 = vadd.f32 %v6100, %v6155
      %v6174 = vadd.f32 %v6101, %v6157
      %v6175 = vadd.f32 %v6102, %v6159
      %v6176 = vld [vmem:[#allocation2 + $0x28] sm:$0xfc]
      %v6177 = vld [vmem:[#allocation2 + $0x88] sm:$0x3]
      %s6178 = scalar_lea.vmem %s10, 104
      %v6179 = vld [vmem:[%s6178] sm:$0xf]
      %v6181 = vperm.slane %v6179, 0
      %v6182 = vperm.slane %v6179, 1
      %v6183 = vperm.slane %v6179, 2
      %v6184 = vperm.slane %v6179, 3
      %v6189 = vmul.f32 %v5570, %v6181
      %v6190 = vmul.f32 %v5571, %v6182
      %v6191 = vmul.f32 %v5884, %v6183
      %v6192 = vmul.f32 %v6176, %v6184
      %v6193 = vmul.f32 %v4609, %v6181
      %v6194 = vmul.f32 %v4610, %v6182
      %v6195 = vmul.f32 %v4743, %v6183
      %v6196 = vmul.f32 %v4859, %v6184
      %v6197 = vmul.f32 %v5574, %v6181
      %v6198 = vmul.f32 %v5575, %v6182
      %v6199 = vmul.f32 %v5885, %v6183
      %v6200 = vmul.f32 %v6177, %v6184
      %v6213 = vrot.slane %v6189, 2
      %v6214 = vrot.slane %v6193, 2
      %v6215 = vsel %vm2299, %v6213, %v6214
      %v6216 = vrot.slane %v6190, 2
      %v6217 = vrot.slane %v6194, 2
      %v6218 = vsel %vm2299, %v6216, %v6217
      %v6219 = vrot.slane %v6191, 2
      %v6220 = vrot.slane %v6195, 2
      %v6221 = vsel %vm2299, %v6219, %v6220
      %v6222 = vrot.slane %v6192, 2
      %v6223 = vrot.slane %v6196, 2
      %v6224 = vsel %vm2299, %v6222, %v6223
      %v6225 = vrot.slane %v6197, 2
      %v6226 = vsel %vm2299, %v6214, %v6225
      %v6227 = vrot.slane %v6198, 2
      %v6228 = vsel %vm2299, %v6217, %v6227
      %v6229 = vrot.slane %v6199, 2
      %v6230 = vsel %vm2299, %v6220, %v6229
      %v6231 = vrot.slane %v6200, 2
      %v6232 = vsel %vm2299, %v6223, %v6231
      %v6241 = vadd.f32 %v6168, %v6215
      %v6242 = vadd.f32 %v6169, %v6218
      %v6243 = vadd.f32 %v6170, %v6221
      %v6244 = vadd.f32 %v6171, %v6224
      %v6245 = vadd.f32 %v6172, %v6226
      %v6246 = vadd.f32 %v6173, %v6228
      %v6247 = vadd.f32 %v6174, %v6230
      %v6248 = vadd.f32 %v6175, %v6232
      %v6249 = vld [vmem:[#allocation2] sm:$0xf8]
      %v6250 = vld [vmem:[#allocation2 + $0x8] sm:$0xf8]
      %v6251 = vld [vmem:[#allocation2 + $0x10] sm:$0xf8]
      %v6252 = vld [vmem:[#allocation2 + $0x18] sm:$0xf8]
      %v6253 = vld [vmem:[#allocation2 + $0x60] sm:$0x7]
      %v6254 = vld [vmem:[#allocation2 + $0x68] sm:$0x7]
      %v6255 = vld [vmem:[#allocation2 + $0x70] sm:$0x7]
      %v6256 = vld [vmem:[#allocation2 + $0x78] sm:$0x7]
      %s6257 = scalar_lea.vmem %s10, 108
      %v6258 = vld [vmem:[%s6257] sm:$0xf]
      %v6260 = vperm.slane %v6258, 0
      %v6261 = vperm.slane %v6258, 1
      %v6262 = vperm.slane %v6258, 2
      %v6263 = vperm.slane %v6258, 3
      %v6268 = vmul.f32 %v6249, %v6260
      %v6269 = vmul.f32 %v6250, %v6261
      %v6270 = vmul.f32 %v6251, %v6262
      %v6271 = vmul.f32 %v6252, %v6263
      %v6272 = vmul.f32 %v4607, %v6260
      %v6273 = vmul.f32 %v4608, %v6261
      %v6274 = vmul.f32 %v4609, %v6262
      %v6275 = vmul.f32 %v4610, %v6263
      %v6276 = vmul.f32 %v6253, %v6260
      %v6277 = vmul.f32 %v6254, %v6261
      %v6278 = vmul.f32 %v6255, %v6262
      %v6279 = vmul.f32 %v6256, %v6263
      %vm6292 = vcmask 1044480
      %v6293 = vrot.slane %v6268, 3
      %v6294 = vrot.slane %v6272, 3
      %v6295 = vsel %vm6292, %v6293, %v6294
      %v6296 = vrot.slane %v6269, 3
      %v6297 = vrot.slane %v6273, 3
      %v6298 = vsel %vm6292, %v6296, %v6297
      %v6299 = vrot.slane %v6270, 3
      %v6300 = vrot.slane %v6274, 3
      %v6301 = vsel %vm6292, %v6299, %v6300
      %v6302 = vrot.slane %v6271, 3
      %v6303 = vrot.slane %v6275, 3
      %v6304 = vsel %vm6292, %v6302, %v6303
      %v6305 = vrot.slane %v6276, 3
      %v6306 = vsel %vm6292, %v6294, %v6305
      %v6307 = vrot.slane %v6277, 3
      %v6308 = vsel %vm6292, %v6297, %v6307
      %v6309 = vrot.slane %v6278, 3
      %v6310 = vsel %vm6292, %v6300, %v6309
      %v6311 = vrot.slane %v6279, 3
      %v6312 = vsel %vm6292, %v6303, %v6311
      %v6321 = vadd.f32 %v6241, %v6295
      %v6322 = vadd.f32 %v6242, %v6298
      %v6323 = vadd.f32 %v6243, %v6301
      %v6324 = vadd.f32 %v6244, %v6304
      %v6325 = vadd.f32 %v6245, %v6306
      %v6326 = vadd.f32 %v6246, %v6308
      %v6327 = vadd.f32 %v6247, %v6310
      %v6328 = vadd.f32 %v6248, %v6312
      %v6329 = vld [vmem:[%s4336] sm:$0xf8]
      %v6330 = vld [vmem:[%s4336 + $0x8] sm:$0xf8]
      %v6331 = vld [vmem:[%s4336 + $0x10] sm:$0xf8]
      %v6332 = vld [vmem:[%s4336 + $0x18] sm:$0xf8]
      %v6333 = vld [vmem:[%s4336 + $0x60] sm:$0x7]
      %v6334 = vld [vmem:[%s4336 + $0x68] sm:$0x7]
      %v6335 = vld [vmem:[%s4336 + $0x70] sm:$0x7]
      %v6336 = vld [vmem:[%s4336 + $0x78] sm:$0x7]
      %s6337 = scalar_lea.vmem %s10, 112
      %v6338 = vld [vmem:[%s6337] sm:$0xf]
      %v6340 = vperm.slane %v6338, 0
      %v6341 = vperm.slane %v6338, 1
      %v6342 = vperm.slane %v6338, 2
      %v6343 = vperm.slane %v6338, 3
      %v6348 = vmul.f32 %v6329, %v6340
      %v6349 = vmul.f32 %v6330, %v6341
      %v6350 = vmul.f32 %v6331, %v6342
      %v6351 = vmul.f32 %v6332, %v6343
      %v6352 = vmul.f32 %v4641, %v6340
      %v6353 = vmul.f32 %v4642, %v6341
      %v6354 = vmul.f32 %v4643, %v6342
      %v6355 = vmul.f32 %v4644, %v6343
      %v6356 = vmul.f32 %v6333, %v6340
      %v6357 = vmul.f32 %v6334, %v6341
      %v6358 = vmul.f32 %v6335, %v6342
      %v6359 = vmul.f32 %v6336, %v6343
      %v6372 = vrot.slane %v6348, 3
      %v6373 = vrot.slane %v6352, 3
      %v6374 = vsel %vm6292, %v6372, %v6373
      %v6375 = vrot.slane %v6349, 3
      %v6376 = vrot.slane %v6353, 3
      %v6377 = vsel %vm6292, %v6375, %v6376
      %v6378 = vrot.slane %v6350, 3
      %v6379 = vrot.slane %v6354, 3
      %v6380 = vsel %vm6292, %v6378, %v6379
      %v6381 = vrot.slane %v6351, 3
      %v6382 = vrot.slane %v6355, 3
      %v6383 = vsel %vm6292, %v6381, %v6382
      %v6384 = vrot.slane %v6356, 3
      %v6385 = vsel %vm6292, %v6373, %v6384
      %v6386 = vrot.slane %v6357, 3
      %v6387 = vsel %vm6292, %v6376, %v6386
      %v6388 = vrot.slane %v6358, 3
      %v6389 = vsel %vm6292, %v6379, %v6388
      %v6390 = vrot.slane %v6359, 3
      %v6391 = vsel %vm6292, %v6382, %v6390
      %v6400 = vadd.f32 %v6321, %v6374
      %v6401 = vadd.f32 %v6322, %v6377
      %v6402 = vadd.f32 %v6323, %v6380
      %v6403 = vadd.f32 %v6324, %v6383
      %v6404 = vadd.f32 %v6325, %v6385
      %v6405 = vadd.f32 %v6326, %v6387
      %v6406 = vadd.f32 %v6327, %v6389
      %v6407 = vadd.f32 %v6328, %v6391
      %v6408 = vld [vmem:[%s4460] sm:$0xf8]
      %v6409 = vld [vmem:[%s4460 + $0x8] sm:$0xf8]
      %v6410 = vld [vmem:[%s4460 + $0x10] sm:$0xf8]
      %v6411 = vld [vmem:[%s4460 + $0x18] sm:$0xf8]
      %v6412 = vld [vmem:[%s4460 + $0x60] sm:$0x7]
      %v6413 = vld [vmem:[%s4460 + $0x68] sm:$0x7]
      %v6414 = vld [vmem:[%s4460 + $0x70] sm:$0x7]
      %v6415 = vld [vmem:[%s4460 + $0x78] sm:$0x7]
      %s6416 = scalar_lea.vmem %s10, 116
      %v6417 = vld [vmem:[%s6416] sm:$0xf]
      %v6419 = vperm.slane %v6417, 0
      %v6420 = vperm.slane %v6417, 1
      %v6421 = vperm.slane %v6417, 2
      %v6422 = vperm.slane %v6417, 3
      %v6427 = vmul.f32 %v6408, %v6419
      %v6428 = vmul.f32 %v6409, %v6420
      %v6429 = vmul.f32 %v6410, %v6421
      %v6430 = vmul.f32 %v6411, %v6422
      %v6431 = vmul.f32 %v4676, %v6419
      %v6432 = vmul.f32 %v4677, %v6420
      %v6433 = vmul.f32 %v4678, %v6421
      %v6434 = vmul.f32 %v4679, %v6422
      %v6435 = vmul.f32 %v6412, %v6419
      %v6436 = vmul.f32 %v6413, %v6420
      %v6437 = vmul.f32 %v6414, %v6421
      %v6438 = vmul.f32 %v6415, %v6422
      %v6451 = vrot.slane %v6427, 3
      %v6452 = vrot.slane %v6431, 3
      %v6453 = vsel %vm6292, %v6451, %v6452
      %v6454 = vrot.slane %v6428, 3
      %v6455 = vrot.slane %v6432, 3
      %v6456 = vsel %vm6292, %v6454, %v6455
      %v6457 = vrot.slane %v6429, 3
      %v6458 = vrot.slane %v6433, 3
      %v6459 = vsel %vm6292, %v6457, %v6458
      %v6460 = vrot.slane %v6430, 3
      %v6461 = vrot.slane %v6434, 3
      %v6462 = vsel %vm6292, %v6460, %v6461
      %v6463 = vrot.slane %v6435, 3
      %v6464 = vsel %vm6292, %v6452, %v6463
      %v6465 = vrot.slane %v6436, 3
      %v6466 = vsel %vm6292, %v6455, %v6465
      %v6467 = vrot.slane %v6437, 3
      %v6468 = vsel %vm6292, %v6458, %v6467
      %v6469 = vrot.slane %v6438, 3
      %v6470 = vsel %vm6292, %v6461, %v6469
      %v6479 = vadd.f32 %v6400, %v6453
      %v6480 = vadd.f32 %v6401, %v6456
      %v6481 = vadd.f32 %v6402, %v6459
      %v6482 = vadd.f32 %v6403, %v6462
      %v6483 = vadd.f32 %v6404, %v6464
      %v6484 = vadd.f32 %v6405, %v6466
      %v6485 = vadd.f32 %v6406, %v6468
      %v6486 = vadd.f32 %v6407, %v6470
      %v6487 = vld [vmem:[%s4584] sm:$0xf8]
      %v6488 = vld [vmem:[%s4584 + $0x8] sm:$0xf8]
      %v6489 = vld [vmem:[%s4584 + $0x10] sm:$0xf8]
      %v6490 = vld [vmem:[%s4584 + $0x18] sm:$0xf8]
      %v6491 = vld [vmem:[%s4584 + $0x60] sm:$0x7]
      %v6492 = vld [vmem:[%s4584 + $0x68] sm:$0x7]
      %v6493 = vld [vmem:[%s4584 + $0x70] sm:$0x7]
      %v6494 = vld [vmem:[%s4584 + $0x78] sm:$0x7]
      %s6495 = scalar_lea.vmem %s10, 120
      %v6496 = vld [vmem:[%s6495] sm:$0xf]
      %v6498 = vperm.slane %v6496, 0
      %v6499 = vperm.slane %v6496, 1
      %v6500 = vperm.slane %v6496, 2
      %v6501 = vperm.slane %v6496, 3
      %v6506 = vmul.f32 %v6487, %v6498
      %v6507 = vmul.f32 %v6488, %v6499
      %v6508 = vmul.f32 %v6489, %v6500
      %v6509 = vmul.f32 %v6490, %v6501
      %v6510 = vmul.f32 %v4711, %v6498
      %v6511 = vmul.f32 %v4712, %v6499
      %v6512 = vmul.f32 %v4713, %v6500
      %v6513 = vmul.f32 %v4714, %v6501
      %v6514 = vmul.f32 %v6491, %v6498
      %v6515 = vmul.f32 %v6492, %v6499
      %v6516 = vmul.f32 %v6493, %v6500
      %v6517 = vmul.f32 %v6494, %v6501
      %v6530 = vrot.slane %v6506, 3
      %v6531 = vrot.slane %v6510, 3
      %v6532 = vsel %vm6292, %v6530, %v6531
      %v6533 = vrot.slane %v6507, 3
      %v6534 = vrot.slane %v6511, 3
      %v6535 = vsel %vm6292, %v6533, %v6534
      %v6536 = vrot.slane %v6508, 3
      %v6537 = vrot.slane %v6512, 3
      %v6538 = vsel %vm6292, %v6536, %v6537
      %v6539 = vrot.slane %v6509, 3
      %v6540 = vrot.slane %v6513, 3
      %v6541 = vsel %vm6292, %v6539, %v6540
      %v6542 = vrot.slane %v6514, 3
      %v6543 = vsel %vm6292, %v6531, %v6542
      %v6544 = vrot.slane %v6515, 3
      %v6545 = vsel %vm6292, %v6534, %v6544
      %v6546 = vrot.slane %v6516, 3
      %v6547 = vsel %vm6292, %v6537, %v6546
      %v6548 = vrot.slane %v6517, 3
      %v6549 = vsel %vm6292, %v6540, %v6548
      %v6558 = vadd.f32 %v6479, %v6532
      %v6559 = vadd.f32 %v6480, %v6535
      %v6560 = vadd.f32 %v6481, %v6538
      %v6561 = vadd.f32 %v6482, %v6541
      %v6562 = vadd.f32 %v6483, %v6543
      %v6563 = vadd.f32 %v6484, %v6545
      %v6564 = vadd.f32 %v6485, %v6547
      %v6565 = vadd.f32 %v6486, %v6549
      %v6566 = vld [vmem:[#allocation2 + $0x20] sm:$0xf8]
      %v6567 = vld [vmem:[#allocation2 + $0x80] sm:$0x7]
      %s6568 = scalar_lea.vmem %s10, 124
      %v6569 = vld [vmem:[%s6568] sm:$0xf]
      %v6571 = vperm.slane %v6569, 0
      %v6572 = vperm.slane %v6569, 1
      %v6573 = vperm.slane %v6569, 2
      %v6574 = vperm.slane %v6569, 3
      %v6579 = vmul.f32 %v6250, %v6571
      %v6580 = vmul.f32 %v6251, %v6572
      %v6581 = vmul.f32 %v6252, %v6573
      %v6582 = vmul.f32 %v6566, %v6574
      %v6583 = vmul.f32 %v4608, %v6571
      %v6584 = vmul.f32 %v4609, %v6572
      %v6585 = vmul.f32 %v4610, %v6573
      %v6586 = vmul.f32 %v4743, %v6574
      %v6587 = vmul.f32 %v6254, %v6571
      %v6588 = vmul.f32 %v6255, %v6572
      %v6589 = vmul.f32 %v6256, %v6573
      %v6590 = vmul.f32 %v6567, %v6574
      %v6603 = vrot.slane %v6579, 3
      %v6604 = vrot.slane %v6583, 3
      %v6605 = vsel %vm6292, %v6603, %v6604
      %v6606 = vrot.slane %v6580, 3
      %v6607 = vrot.slane %v6584, 3
      %v6608 = vsel %vm6292, %v6606, %v6607
      %v6609 = vrot.slane %v6581, 3
      %v6610 = vrot.slane %v6585, 3
      %v6611 = vsel %vm6292, %v6609, %v6610
      %v6612 = vrot.slane %v6582, 3
      %v6613 = vrot.slane %v6586, 3
      %v6614 = vsel %vm6292, %v6612, %v6613
      %v6615 = vrot.slane %v6587, 3
      %v6616 = vsel %vm6292, %v6604, %v6615
      %v6617 = vrot.slane %v6588, 3
      %v6618 = vsel %vm6292, %v6607, %v6617
      %v6619 = vrot.slane %v6589, 3
      %v6620 = vsel %vm6292, %v6610, %v6619
      %v6621 = vrot.slane %v6590, 3
      %v6622 = vsel %vm6292, %v6613, %v6621
      %v6631 = vadd.f32 %v6558, %v6605
      %v6632 = vadd.f32 %v6559, %v6608
      %v6633 = vadd.f32 %v6560, %v6611
      %v6634 = vadd.f32 %v6561, %v6614
      %v6635 = vadd.f32 %v6562, %v6616
      %v6636 = vadd.f32 %v6563, %v6618
      %v6637 = vadd.f32 %v6564, %v6620
      %v6638 = vadd.f32 %v6565, %v6622
      %v6639 = vld [vmem:[%s4336 + $0x20] sm:$0xf8]
      %v6640 = vld [vmem:[%s4336 + $0x80] sm:$0x7]
      %s6641 = scalar_lea.vmem %s10, 128
      %v6642 = vld [vmem:[%s6641] sm:$0xf]
      %v6644 = vperm.slane %v6642, 0
      %v6645 = vperm.slane %v6642, 1
      %v6646 = vperm.slane %v6642, 2
      %v6647 = vperm.slane %v6642, 3
      %v6652 = vmul.f32 %v6330, %v6644
      %v6653 = vmul.f32 %v6331, %v6645
      %v6654 = vmul.f32 %v6332, %v6646
      %v6655 = vmul.f32 %v6639, %v6647
      %v6656 = vmul.f32 %v4642, %v6644
      %v6657 = vmul.f32 %v4643, %v6645
      %v6658 = vmul.f32 %v4644, %v6646
      %v6659 = vmul.f32 %v4772, %v6647
      %v6660 = vmul.f32 %v6334, %v6644
      %v6661 = vmul.f32 %v6335, %v6645
      %v6662 = vmul.f32 %v6336, %v6646
      %v6663 = vmul.f32 %v6640, %v6647
      %v6676 = vrot.slane %v6652, 3
      %v6677 = vrot.slane %v6656, 3
      %v6678 = vsel %vm6292, %v6676, %v6677
      %v6679 = vrot.slane %v6653, 3
      %v6680 = vrot.slane %v6657, 3
      %v6681 = vsel %vm6292, %v6679, %v6680
      %v6682 = vrot.slane %v6654, 3
      %v6683 = vrot.slane %v6658, 3
      %v6684 = vsel %vm6292, %v6682, %v6683
      %v6685 = vrot.slane %v6655, 3
      %v6686 = vrot.slane %v6659, 3
      %v6687 = vsel %vm6292, %v6685, %v6686
      %v6688 = vrot.slane %v6660, 3
      %v6689 = vsel %vm6292, %v6677, %v6688
      %v6690 = vrot.slane %v6661, 3
      %v6691 = vsel %vm6292, %v6680, %v6690
      %v6692 = vrot.slane %v6662, 3
      %v6693 = vsel %vm6292, %v6683, %v6692
      %v6694 = vrot.slane %v6663, 3
      %v6695 = vsel %vm6292, %v6686, %v6694
      %v6704 = vadd.f32 %v6631, %v6678
      %v6705 = vadd.f32 %v6632, %v6681
      %v6706 = vadd.f32 %v6633, %v6684
      %v6707 = vadd.f32 %v6634, %v6687
      %v6708 = vadd.f32 %v6635, %v6689
      %v6709 = vadd.f32 %v6636, %v6691
      %v6710 = vadd.f32 %v6637, %v6693
      %v6711 = vadd.f32 %v6638, %v6695
      %v6712 = vld [vmem:[%s4460 + $0x20] sm:$0xf8]
      %v6713 = vld [vmem:[%s4460 + $0x80] sm:$0x7]
      %s6714 = scalar_lea.vmem %s10, 132
      %v6715 = vld [vmem:[%s6714] sm:$0xf]
      %v6717 = vperm.slane %v6715, 0
      %v6718 = vperm.slane %v6715, 1
      %v6719 = vperm.slane %v6715, 2
      %v6720 = vperm.slane %v6715, 3
      %v6725 = vmul.f32 %v6409, %v6717
      %v6726 = vmul.f32 %v6410, %v6718
      %v6727 = vmul.f32 %v6411, %v6719
      %v6728 = vmul.f32 %v6712, %v6720
      %v6729 = vmul.f32 %v4677, %v6717
      %v6730 = vmul.f32 %v4678, %v6718
      %v6731 = vmul.f32 %v4679, %v6719
      %v6732 = vmul.f32 %v4801, %v6720
      %v6733 = vmul.f32 %v6413, %v6717
      %v6734 = vmul.f32 %v6414, %v6718
      %v6735 = vmul.f32 %v6415, %v6719
      %v6736 = vmul.f32 %v6713, %v6720
      %v6749 = vrot.slane %v6725, 3
      %v6750 = vrot.slane %v6729, 3
      %v6751 = vsel %vm6292, %v6749, %v6750
      %v6752 = vrot.slane %v6726, 3
      %v6753 = vrot.slane %v6730, 3
      %v6754 = vsel %vm6292, %v6752, %v6753
      %v6755 = vrot.slane %v6727, 3
      %v6756 = vrot.slane %v6731, 3
      %v6757 = vsel %vm6292, %v6755, %v6756
      %v6758 = vrot.slane %v6728, 3
      %v6759 = vrot.slane %v6732, 3
      %v6760 = vsel %vm6292, %v6758, %v6759
      %v6761 = vrot.slane %v6733, 3
      %v6762 = vsel %vm6292, %v6750, %v6761
      %v6763 = vrot.slane %v6734, 3
      %v6764 = vsel %vm6292, %v6753, %v6763
      %v6765 = vrot.slane %v6735, 3
      %v6766 = vsel %vm6292, %v6756, %v6765
      %v6767 = vrot.slane %v6736, 3
      %v6768 = vsel %vm6292, %v6759, %v6767
      %v6777 = vadd.f32 %v6704, %v6751
      %v6778 = vadd.f32 %v6705, %v6754
      %v6779 = vadd.f32 %v6706, %v6757
      %v6780 = vadd.f32 %v6707, %v6760
      %v6781 = vadd.f32 %v6708, %v6762
      %v6782 = vadd.f32 %v6709, %v6764
      %v6783 = vadd.f32 %v6710, %v6766
      %v6784 = vadd.f32 %v6711, %v6768
      %v6785 = vld [vmem:[%s4584 + $0x20] sm:$0xf8]
      %v6786 = vld [vmem:[%s4584 + $0x80] sm:$0x7]
      %s6787 = scalar_lea.vmem %s10, 136
      %v6788 = vld [vmem:[%s6787] sm:$0xf]
      %v6790 = vperm.slane %v6788, 0
      %v6791 = vperm.slane %v6788, 1
      %v6792 = vperm.slane %v6788, 2
      %v6793 = vperm.slane %v6788, 3
      %v6798 = vmul.f32 %v6488, %v6790
      %v6799 = vmul.f32 %v6489, %v6791
      %v6800 = vmul.f32 %v6490, %v6792
      %v6801 = vmul.f32 %v6785, %v6793
      %v6802 = vmul.f32 %v4712, %v6790
      %v6803 = vmul.f32 %v4713, %v6791
      %v6804 = vmul.f32 %v4714, %v6792
      %v6805 = vmul.f32 %v4830, %v6793
      %v6806 = vmul.f32 %v6492, %v6790
      %v6807 = vmul.f32 %v6493, %v6791
      %v6808 = vmul.f32 %v6494, %v6792
      %v6809 = vmul.f32 %v6786, %v6793
      %v6822 = vrot.slane %v6798, 3
      %v6823 = vrot.slane %v6802, 3
      %v6824 = vsel %vm6292, %v6822, %v6823
      %v6825 = vrot.slane %v6799, 3
      %v6826 = vrot.slane %v6803, 3
      %v6827 = vsel %vm6292, %v6825, %v6826
      %v6828 = vrot.slane %v6800, 3
      %v6829 = vrot.slane %v6804, 3
      %v6830 = vsel %vm6292, %v6828, %v6829
      %v6831 = vrot.slane %v6801, 3
      %v6832 = vrot.slane %v6805, 3
      %v6833 = vsel %vm6292, %v6831, %v6832
      %v6834 = vrot.slane %v6806, 3
      %v6835 = vsel %vm6292, %v6823, %v6834
      %v6836 = vrot.slane %v6807, 3
      %v6837 = vsel %vm6292, %v6826, %v6836
      %v6838 = vrot.slane %v6808, 3
      %v6839 = vsel %vm6292, %v6829, %v6838
      %v6840 = vrot.slane %v6809, 3
      %v6841 = vsel %vm6292, %v6832, %v6840
      %v6850 = vadd.f32 %v6777, %v6824
      %v6851 = vadd.f32 %v6778, %v6827
      %v6852 = vadd.f32 %v6779, %v6830
      %v6853 = vadd.f32 %v6780, %v6833
      %v6854 = vadd.f32 %v6781, %v6835
      %v6855 = vadd.f32 %v6782, %v6837
      %v6856 = vadd.f32 %v6783, %v6839
      %v6857 = vadd.f32 %v6784, %v6841
      %v6858 = vld [vmem:[#allocation2 + $0x28] sm:$0xf8]
      %v6859 = vld [vmem:[#allocation2 + $0x88] sm:$0x7]
      %s6860 = scalar_lea.vmem %s10, 140
      %v6861 = vld [vmem:[%s6860] sm:$0xf]
      %v6863 = vperm.slane %v6861, 0
      %v6864 = vperm.slane %v6861, 1
      %v6865 = vperm.slane %v6861, 2
      %v6866 = vperm.slane %v6861, 3
      %v6871 = vmul.f32 %v6251, %v6863
      %v6872 = vmul.f32 %v6252, %v6864
      %v6873 = vmul.f32 %v6566, %v6865
      %v6874 = vmul.f32 %v6858, %v6866
      %v6875 = vmul.f32 %v4609, %v6863
      %v6876 = vmul.f32 %v4610, %v6864
      %v6877 = vmul.f32 %v4743, %v6865
      %v6878 = vmul.f32 %v4859, %v6866
      %v6879 = vmul.f32 %v6255, %v6863
      %v6880 = vmul.f32 %v6256, %v6864
      %v6881 = vmul.f32 %v6567, %v6865
      %v6882 = vmul.f32 %v6859, %v6866
      %v6895 = vrot.slane %v6871, 3
      %v6896 = vrot.slane %v6875, 3
      %v6897 = vsel %vm6292, %v6895, %v6896
      %v6898 = vrot.slane %v6872, 3
      %v6899 = vrot.slane %v6876, 3
      %v6900 = vsel %vm6292, %v6898, %v6899
      %v6901 = vrot.slane %v6873, 3
      %v6902 = vrot.slane %v6877, 3
      %v6903 = vsel %vm6292, %v6901, %v6902
      %v6904 = vrot.slane %v6874, 3
      %v6905 = vrot.slane %v6878, 3
      %v6906 = vsel %vm6292, %v6904, %v6905
      %v6907 = vrot.slane %v6879, 3
      %v6908 = vsel %vm6292, %v6896, %v6907
      %v6909 = vrot.slane %v6880, 3
      %v6910 = vsel %vm6292, %v6899, %v6909
      %v6911 = vrot.slane %v6881, 3
      %v6912 = vsel %vm6292, %v6902, %v6911
      %v6913 = vrot.slane %v6882, 3
      %v6914 = vsel %vm6292, %v6905, %v6913
      %v6923 = vadd.f32 %v6850, %v6897
      %v6924 = vadd.f32 %v6851, %v6900
      %v6925 = vadd.f32 %v6852, %v6903
      %v6926 = vadd.f32 %v6853, %v6906
      %v6927 = vadd.f32 %v6854, %v6908
      %v6928 = vadd.f32 %v6855, %v6910
      %v6929 = vadd.f32 %v6856, %v6912
      %v6930 = vadd.f32 %v6857, %v6914
      %v6931 = vld [vmem:[#allocation2] sm:$0xf0]
      %v6932 = vld [vmem:[#allocation2 + $0x8] sm:$0xf0]
      %v6933 = vld [vmem:[#allocation2 + $0x10] sm:$0xf0]
      %v6934 = vld [vmem:[#allocation2 + $0x18] sm:$0xf0]
      %v6935 = vld [vmem:[#allocation2 + $0x60] sm:$0xf]
      %v6936 = vld [vmem:[#allocation2 + $0x68] sm:$0xf]
      %v6937 = vld [vmem:[#allocation2 + $0x70] sm:$0xf]
      %v6938 = vld [vmem:[#allocation2 + $0x78] sm:$0xf]
      %s6939 = scalar_lea.vmem %s10, 144
      %v6940 = vld [vmem:[%s6939] sm:$0xf]
      %v6942 = vperm.slane %v6940, 0
      %v6943 = vperm.slane %v6940, 1
      %v6944 = vperm.slane %v6940, 2
      %v6945 = vperm.slane %v6940, 3
      %v6950 = vmul.f32 %v6931, %v6942
      %v6951 = vmul.f32 %v6932, %v6943
      %v6952 = vmul.f32 %v6933, %v6944
      %v6953 = vmul.f32 %v6934, %v6945
      %v6954 = vmul.f32 %v4607, %v6942
      %v6955 = vmul.f32 %v4608, %v6943
      %v6956 = vmul.f32 %v4609, %v6944
      %v6957 = vmul.f32 %v4610, %v6945
      %v6958 = vmul.f32 %v6935, %v6942
      %v6959 = vmul.f32 %v6936, %v6943
      %v6960 = vmul.f32 %v6937, %v6944
      %v6961 = vmul.f32 %v6938, %v6945
      %v6974 = vrot.slane %v6950, 4
      %v6975 = vrot.slane %v6954, 4
      %v6976 = vsel %vm4193, %v6974, %v6975
      %v6977 = vrot.slane %v6951, 4
      %v6978 = vrot.slane %v6955, 4
      %v6979 = vsel %vm4193, %v6977, %v6978
      %v6980 = vrot.slane %v6952, 4
      %v6981 = vrot.slane %v6956, 4
      %v6982 = vsel %vm4193, %v6980, %v6981
      %v6983 = vrot.slane %v6953, 4
      %v6984 = vrot.slane %v6957, 4
      %v6985 = vsel %vm4193, %v6983, %v6984
      %v6986 = vrot.slane %v6958, 4
      %v6987 = vsel %vm4193, %v6975, %v6986
      %v6988 = vrot.slane %v6959, 4
      %v6989 = vsel %vm4193, %v6978, %v6988
      %v6990 = vrot.slane %v6960, 4
      %v6991 = vsel %vm4193, %v6981, %v6990
      %v6992 = vrot.slane %v6961, 4
      %v6993 = vsel %vm4193, %v6984, %v6992
      %v7002 = vadd.f32 %v6923, %v6976
      %v7003 = vadd.f32 %v6924, %v6979
      %v7004 = vadd.f32 %v6925, %v6982
      %v7005 = vadd.f32 %v6926, %v6985
      %v7006 = vadd.f32 %v6927, %v6987
      %v7007 = vadd.f32 %v6928, %v6989
      %v7008 = vadd.f32 %v6929, %v6991
      %v7009 = vadd.f32 %v6930, %v6993
      %v7010 = vld [vmem:[%s4336] sm:$0xf0]
      %v7011 = vld [vmem:[%s4336 + $0x8] sm:$0xf0]
      %v7012 = vld [vmem:[%s4336 + $0x10] sm:$0xf0]
      %v7013 = vld [vmem:[%s4336 + $0x18] sm:$0xf0]
      %v7014 = vld [vmem:[%s4336 + $0x60] sm:$0xf]
      %v7015 = vld [vmem:[%s4336 + $0x68] sm:$0xf]
      %v7016 = vld [vmem:[%s4336 + $0x70] sm:$0xf]
      %v7017 = vld [vmem:[%s4336 + $0x78] sm:$0xf]
      %s7018 = scalar_lea.vmem %s10, 148
      %v7019 = vld [vmem:[%s7018] sm:$0xf]
      %v7021 = vperm.slane %v7019, 0
      %v7022 = vperm.slane %v7019, 1
      %v7023 = vperm.slane %v7019, 2
      %v7024 = vperm.slane %v7019, 3
      %v7029 = vmul.f32 %v7010, %v7021
      %v7030 = vmul.f32 %v7011, %v7022
      %v7031 = vmul.f32 %v7012, %v7023
      %v7032 = vmul.f32 %v7013, %v7024
      %v7033 = vmul.f32 %v4641, %v7021
      %v7034 = vmul.f32 %v4642, %v7022
      %v7035 = vmul.f32 %v4643, %v7023
      %v7036 = vmul.f32 %v4644, %v7024
      %v7037 = vmul.f32 %v7014, %v7021
      %v7038 = vmul.f32 %v7015, %v7022
      %v7039 = vmul.f32 %v7016, %v7023
      %v7040 = vmul.f32 %v7017, %v7024
      %v7053 = vrot.slane %v7029, 4
      %v7054 = vrot.slane %v7033, 4
      %v7055 = vsel %vm4193, %v7053, %v7054
      %v7056 = vrot.slane %v7030, 4
      %v7057 = vrot.slane %v7034, 4
      %v7058 = vsel %vm4193, %v7056, %v7057
      %v7059 = vrot.slane %v7031, 4
      %v7060 = vrot.slane %v7035, 4
      %v7061 = vsel %vm4193, %v7059, %v7060
      %v7062 = vrot.slane %v7032, 4
      %v7063 = vrot.slane %v7036, 4
      %v7064 = vsel %vm4193, %v7062, %v7063
      %v7065 = vrot.slane %v7037, 4
      %v7066 = vsel %vm4193, %v7054, %v7065
      %v7067 = vrot.slane %v7038, 4
      %v7068 = vsel %vm4193, %v7057, %v7067
      %v7069 = vrot.slane %v7039, 4
      %v7070 = vsel %vm4193, %v7060, %v7069
      %v7071 = vrot.slane %v7040, 4
      %v7072 = vsel %vm4193, %v7063, %v7071
      %v7081 = vadd.f32 %v7002, %v7055
      %v7082 = vadd.f32 %v7003, %v7058
      %v7083 = vadd.f32 %v7004, %v7061
      %v7084 = vadd.f32 %v7005, %v7064
      %v7085 = vadd.f32 %v7006, %v7066
      %v7086 = vadd.f32 %v7007, %v7068
      %v7087 = vadd.f32 %v7008, %v7070
      %v7088 = vadd.f32 %v7009, %v7072
      %v7089 = vld [vmem:[%s4460] sm:$0xf0]
      %v7090 = vld [vmem:[%s4460 + $0x8] sm:$0xf0]
      %v7091 = vld [vmem:[%s4460 + $0x10] sm:$0xf0]
      %v7092 = vld [vmem:[%s4460 + $0x18] sm:$0xf0]
      %v7093 = vld [vmem:[%s4460 + $0x60] sm:$0xf]
      %v7094 = vld [vmem:[%s4460 + $0x68] sm:$0xf]
      %v7095 = vld [vmem:[%s4460 + $0x70] sm:$0xf]
      %v7096 = vld [vmem:[%s4460 + $0x78] sm:$0xf]
      %s7097 = scalar_lea.vmem %s10, 152
      %v7098 = vld [vmem:[%s7097] sm:$0xf]
      %v7100 = vperm.slane %v7098, 0
      %v7101 = vperm.slane %v7098, 1
      %v7102 = vperm.slane %v7098, 2
      %v7103 = vperm.slane %v7098, 3
      %v7108 = vmul.f32 %v7089, %v7100
      %v7109 = vmul.f32 %v7090, %v7101
      %v7110 = vmul.f32 %v7091, %v7102
      %v7111 = vmul.f32 %v7092, %v7103
      %v7112 = vmul.f32 %v4676, %v7100
      %v7113 = vmul.f32 %v4677, %v7101
      %v7114 = vmul.f32 %v4678, %v7102
      %v7115 = vmul.f32 %v4679, %v7103
      %v7116 = vmul.f32 %v7093, %v7100
      %v7117 = vmul.f32 %v7094, %v7101
      %v7118 = vmul.f32 %v7095, %v7102
      %v7119 = vmul.f32 %v7096, %v7103
      %v7132 = vrot.slane %v7108, 4
      %v7133 = vrot.slane %v7112, 4
      %v7134 = vsel %vm4193, %v7132, %v7133
      %v7135 = vrot.slane %v7109, 4
      %v7136 = vrot.slane %v7113, 4
      %v7137 = vsel %vm4193, %v7135, %v7136
      %v7138 = vrot.slane %v7110, 4
      %v7139 = vrot.slane %v7114, 4
      %v7140 = vsel %vm4193, %v7138, %v7139
      %v7141 = vrot.slane %v7111, 4
      %v7142 = vrot.slane %v7115, 4
      %v7143 = vsel %vm4193, %v7141, %v7142
      %v7144 = vrot.slane %v7116, 4
      %v7145 = vsel %vm4193, %v7133, %v7144
      %v7146 = vrot.slane %v7117, 4
      %v7147 = vsel %vm4193, %v7136, %v7146
      %v7148 = vrot.slane %v7118, 4
      %v7149 = vsel %vm4193, %v7139, %v7148
      %v7150 = vrot.slane %v7119, 4
      %v7151 = vsel %vm4193, %v7142, %v7150
      %v7160 = vadd.f32 %v7081, %v7134
      %v7161 = vadd.f32 %v7082, %v7137
      %v7162 = vadd.f32 %v7083, %v7140
      %v7163 = vadd.f32 %v7084, %v7143
      %v7164 = vadd.f32 %v7085, %v7145
      %v7165 = vadd.f32 %v7086, %v7147
      %v7166 = vadd.f32 %v7087, %v7149
      %v7167 = vadd.f32 %v7088, %v7151
      %v7168 = vld [vmem:[%s4584] sm:$0xf0]
      %v7169 = vld [vmem:[%s4584 + $0x8] sm:$0xf0]
      %v7170 = vld [vmem:[%s4584 + $0x10] sm:$0xf0]
      %v7171 = vld [vmem:[%s4584 + $0x18] sm:$0xf0]
      %v7172 = vld [vmem:[%s4584 + $0x60] sm:$0xf]
      %v7173 = vld [vmem:[%s4584 + $0x68] sm:$0xf]
      %v7174 = vld [vmem:[%s4584 + $0x70] sm:$0xf]
      %v7175 = vld [vmem:[%s4584 + $0x78] sm:$0xf]
      %s7176 = scalar_lea.vmem %s10, 156
      %v7177 = vld [vmem:[%s7176] sm:$0xf]
      %v7179 = vperm.slane %v7177, 0
      %v7180 = vperm.slane %v7177, 1
      %v7181 = vperm.slane %v7177, 2
      %v7182 = vperm.slane %v7177, 3
      %v7187 = vmul.f32 %v7168, %v7179
      %v7188 = vmul.f32 %v7169, %v7180
      %v7189 = vmul.f32 %v7170, %v7181
      %v7190 = vmul.f32 %v7171, %v7182
      %v7191 = vmul.f32 %v4711, %v7179
      %v7192 = vmul.f32 %v4712, %v7180
      %v7193 = vmul.f32 %v4713, %v7181
      %v7194 = vmul.f32 %v4714, %v7182
      %v7195 = vmul.f32 %v7172, %v7179
      %v7196 = vmul.f32 %v7173, %v7180
      %v7197 = vmul.f32 %v7174, %v7181
      %v7198 = vmul.f32 %v7175, %v7182
      %v7211 = vrot.slane %v7187, 4
      %v7212 = vrot.slane %v7191, 4
      %v7213 = vsel %vm4193, %v7211, %v7212
      %v7214 = vrot.slane %v7188, 4
      %v7215 = vrot.slane %v7192, 4
      %v7216 = vsel %vm4193, %v7214, %v7215
      %v7217 = vrot.slane %v7189, 4
      %v7218 = vrot.slane %v7193, 4
      %v7219 = vsel %vm4193, %v7217, %v7218
      %v7220 = vrot.slane %v7190, 4
      %v7221 = vrot.slane %v7194, 4
      %v7222 = vsel %vm4193, %v7220, %v7221
      %v7223 = vrot.slane %v7195, 4
      %v7224 = vsel %vm4193, %v7212, %v7223
      %v7225 = vrot.slane %v7196, 4
      %v7226 = vsel %vm4193, %v7215, %v7225
      %v7227 = vrot.slane %v7197, 4
      %v7228 = vsel %vm4193, %v7218, %v7227
      %v7229 = vrot.slane %v7198, 4
      %v7230 = vsel %vm4193, %v7221, %v7229
      %v7239 = vadd.f32 %v7160, %v7213
      %v7240 = vadd.f32 %v7161, %v7216
      %v7241 = vadd.f32 %v7162, %v7219
      %v7242 = vadd.f32 %v7163, %v7222
      %v7243 = vadd.f32 %v7164, %v7224
      %v7244 = vadd.f32 %v7165, %v7226
      %v7245 = vadd.f32 %v7166, %v7228
      %v7246 = vadd.f32 %v7167, %v7230
      %v7247 = vld [vmem:[#allocation2 + $0x20] sm:$0xf0]
      %v7248 = vld [vmem:[#allocation2 + $0x80] sm:$0xf]
      %s7249 = scalar_lea.vmem %s10, 160
      %v7250 = vld [vmem:[%s7249] sm:$0xf]
      %v7252 = vperm.slane %v7250, 0
      %v7253 = vperm.slane %v7250, 1
      %v7254 = vperm.slane %v7250, 2
      %v7255 = vperm.slane %v7250, 3
      %v7260 = vmul.f32 %v6932, %v7252
      %v7261 = vmul.f32 %v6933, %v7253
      %v7262 = vmul.f32 %v6934, %v7254
      %v7263 = vmul.f32 %v7247, %v7255
      %v7264 = vmul.f32 %v4608, %v7252
      %v7265 = vmul.f32 %v4609, %v7253
      %v7266 = vmul.f32 %v4610, %v7254
      %v7267 = vmul.f32 %v4743, %v7255
      %v7268 = vmul.f32 %v6936, %v7252
      %v7269 = vmul.f32 %v6937, %v7253
      %v7270 = vmul.f32 %v6938, %v7254
      %v7271 = vmul.f32 %v7248, %v7255
      %v7284 = vrot.slane %v7260, 4
      %v7285 = vrot.slane %v7264, 4
      %v7286 = vsel %vm4193, %v7284, %v7285
      %v7287 = vrot.slane %v7261, 4
      %v7288 = vrot.slane %v7265, 4
      %v7289 = vsel %vm4193, %v7287, %v7288
      %v7290 = vrot.slane %v7262, 4
      %v7291 = vrot.slane %v7266, 4
      %v7292 = vsel %vm4193, %v7290, %v7291
      %v7293 = vrot.slane %v7263, 4
      %v7294 = vrot.slane %v7267, 4
      %v7295 = vsel %vm4193, %v7293, %v7294
      %v7296 = vrot.slane %v7268, 4
      %v7297 = vsel %vm4193, %v7285, %v7296
      %v7298 = vrot.slane %v7269, 4
      %v7299 = vsel %vm4193, %v7288, %v7298
      %v7300 = vrot.slane %v7270, 4
      %v7301 = vsel %vm4193, %v7291, %v7300
      %v7302 = vrot.slane %v7271, 4
      %v7303 = vsel %vm4193, %v7294, %v7302
      %v7312 = vadd.f32 %v7239, %v7286
      %v7313 = vadd.f32 %v7240, %v7289
      %v7314 = vadd.f32 %v7241, %v7292
      %v7315 = vadd.f32 %v7242, %v7295
      %v7316 = vadd.f32 %v7243, %v7297
      %v7317 = vadd.f32 %v7244, %v7299
      %v7318 = vadd.f32 %v7245, %v7301
      %v7319 = vadd.f32 %v7246, %v7303
      %v7320 = vld [vmem:[%s4336 + $0x20] sm:$0xf0]
      %v7321 = vld [vmem:[%s4336 + $0x80] sm:$0xf]
      %s7322 = scalar_lea.vmem %s10, 164
      %v7323 = vld [vmem:[%s7322] sm:$0xf]
      %v7325 = vperm.slane %v7323, 0
      %v7326 = vperm.slane %v7323, 1
      %v7327 = vperm.slane %v7323, 2
      %v7328 = vperm.slane %v7323, 3
      %v7333 = vmul.f32 %v7011, %v7325
      %v7334 = vmul.f32 %v7012, %v7326
      %v7335 = vmul.f32 %v7013, %v7327
      %v7336 = vmul.f32 %v7320, %v7328
      %v7337 = vmul.f32 %v4642, %v7325
      %v7338 = vmul.f32 %v4643, %v7326
      %v7339 = vmul.f32 %v4644, %v7327
      %v7340 = vmul.f32 %v4772, %v7328
      %v7341 = vmul.f32 %v7015, %v7325
      %v7342 = vmul.f32 %v7016, %v7326
      %v7343 = vmul.f32 %v7017, %v7327
      %v7344 = vmul.f32 %v7321, %v7328
      %v7357 = vrot.slane %v7333, 4
      %v7358 = vrot.slane %v7337, 4
      %v7359 = vsel %vm4193, %v7357, %v7358
      %v7360 = vrot.slane %v7334, 4
      %v7361 = vrot.slane %v7338, 4
      %v7362 = vsel %vm4193, %v7360, %v7361
      %v7363 = vrot.slane %v7335, 4
      %v7364 = vrot.slane %v7339, 4
      %v7365 = vsel %vm4193, %v7363, %v7364
      %v7366 = vrot.slane %v7336, 4
      %v7367 = vrot.slane %v7340, 4
      %v7368 = vsel %vm4193, %v7366, %v7367
      %v7369 = vrot.slane %v7341, 4
      %v7370 = vsel %vm4193, %v7358, %v7369
      %v7371 = vrot.slane %v7342, 4
      %v7372 = vsel %vm4193, %v7361, %v7371
      %v7373 = vrot.slane %v7343, 4
      %v7374 = vsel %vm4193, %v7364, %v7373
      %v7375 = vrot.slane %v7344, 4
      %v7376 = vsel %vm4193, %v7367, %v7375
      %v7385 = vadd.f32 %v7312, %v7359
      %v7386 = vadd.f32 %v7313, %v7362
      %v7387 = vadd.f32 %v7314, %v7365
      %v7388 = vadd.f32 %v7315, %v7368
      %v7389 = vadd.f32 %v7316, %v7370
      %v7390 = vadd.f32 %v7317, %v7372
      %v7391 = vadd.f32 %v7318, %v7374
      %v7392 = vadd.f32 %v7319, %v7376
      %v7393 = vld [vmem:[%s4460 + $0x20] sm:$0xf0]
      %v7394 = vld [vmem:[%s4460 + $0x80] sm:$0xf]
      %s7395 = scalar_lea.vmem %s10, 168
      %v7396 = vld [vmem:[%s7395] sm:$0xf]
      %v7398 = vperm.slane %v7396, 0
      %v7399 = vperm.slane %v7396, 1
      %v7400 = vperm.slane %v7396, 2
      %v7401 = vperm.slane %v7396, 3
      %v7406 = vmul.f32 %v7090, %v7398
      %v7407 = vmul.f32 %v7091, %v7399
      %v7408 = vmul.f32 %v7092, %v7400
      %v7409 = vmul.f32 %v7393, %v7401
      %v7410 = vmul.f32 %v4677, %v7398
      %v7411 = vmul.f32 %v4678, %v7399
      %v7412 = vmul.f32 %v4679, %v7400
      %v7413 = vmul.f32 %v4801, %v7401
      %v7414 = vmul.f32 %v7094, %v7398
      %v7415 = vmul.f32 %v7095, %v7399
      %v7416 = vmul.f32 %v7096, %v7400
      %v7417 = vmul.f32 %v7394, %v7401
      %v7430 = vrot.slane %v7406, 4
      %v7431 = vrot.slane %v7410, 4
      %v7432 = vsel %vm4193, %v7430, %v7431
      %v7433 = vrot.slane %v7407, 4
      %v7434 = vrot.slane %v7411, 4
      %v7435 = vsel %vm4193, %v7433, %v7434
      %v7436 = vrot.slane %v7408, 4
      %v7437 = vrot.slane %v7412, 4
      %v7438 = vsel %vm4193, %v7436, %v7437
      %v7439 = vrot.slane %v7409, 4
      %v7440 = vrot.slane %v7413, 4
      %v7441 = vsel %vm4193, %v7439, %v7440
      %v7442 = vrot.slane %v7414, 4
      %v7443 = vsel %vm4193, %v7431, %v7442
      %v7444 = vrot.slane %v7415, 4
      %v7445 = vsel %vm4193, %v7434, %v7444
      %v7446 = vrot.slane %v7416, 4
      %v7447 = vsel %vm4193, %v7437, %v7446
      %v7448 = vrot.slane %v7417, 4
      %v7449 = vsel %vm4193, %v7440, %v7448
      %v7458 = vadd.f32 %v7385, %v7432
      %v7459 = vadd.f32 %v7386, %v7435
      %v7460 = vadd.f32 %v7387, %v7438
      %v7461 = vadd.f32 %v7388, %v7441
      %v7462 = vadd.f32 %v7389, %v7443
      %v7463 = vadd.f32 %v7390, %v7445
      %v7464 = vadd.f32 %v7391, %v7447
      %v7465 = vadd.f32 %v7392, %v7449
      %v7466 = vld [vmem:[%s4584 + $0x20] sm:$0xf0]
      %v7467 = vld [vmem:[%s4584 + $0x80] sm:$0xf]
      %s7468 = scalar_lea.vmem %s10, 172
      %v7469 = vld [vmem:[%s7468] sm:$0xf]
      %v7471 = vperm.slane %v7469, 0
      %v7472 = vperm.slane %v7469, 1
      %v7473 = vperm.slane %v7469, 2
      %v7474 = vperm.slane %v7469, 3
      %v7479 = vmul.f32 %v7169, %v7471
      %v7480 = vmul.f32 %v7170, %v7472
      %v7481 = vmul.f32 %v7171, %v7473
      %v7482 = vmul.f32 %v7466, %v7474
      %v7483 = vmul.f32 %v4712, %v7471
      %v7484 = vmul.f32 %v4713, %v7472
      %v7485 = vmul.f32 %v4714, %v7473
      %v7486 = vmul.f32 %v4830, %v7474
      %v7487 = vmul.f32 %v7173, %v7471
      %v7488 = vmul.f32 %v7174, %v7472
      %v7489 = vmul.f32 %v7175, %v7473
      %v7490 = vmul.f32 %v7467, %v7474
      %v7503 = vrot.slane %v7479, 4
      %v7504 = vrot.slane %v7483, 4
      %v7505 = vsel %vm4193, %v7503, %v7504
      %v7506 = vrot.slane %v7480, 4
      %v7507 = vrot.slane %v7484, 4
      %v7508 = vsel %vm4193, %v7506, %v7507
      %v7509 = vrot.slane %v7481, 4
      %v7510 = vrot.slane %v7485, 4
      %v7511 = vsel %vm4193, %v7509, %v7510
      %v7512 = vrot.slane %v7482, 4
      %v7513 = vrot.slane %v7486, 4
      %v7514 = vsel %vm4193, %v7512, %v7513
      %v7515 = vrot.slane %v7487, 4
      %v7516 = vsel %vm4193, %v7504, %v7515
      %v7517 = vrot.slane %v7488, 4
      %v7518 = vsel %vm4193, %v7507, %v7517
      %v7519 = vrot.slane %v7489, 4
      %v7520 = vsel %vm4193, %v7510, %v7519
      %v7521 = vrot.slane %v7490, 4
      %v7522 = vsel %vm4193, %v7513, %v7521
      %v7531 = vadd.f32 %v7458, %v7505
      %v7532 = vadd.f32 %v7459, %v7508
      %v7533 = vadd.f32 %v7460, %v7511
      %v7534 = vadd.f32 %v7461, %v7514
      %v7535 = vadd.f32 %v7462, %v7516
      %v7536 = vadd.f32 %v7463, %v7518
      %v7537 = vadd.f32 %v7464, %v7520
      %v7538 = vadd.f32 %v7465, %v7522
      %v7539 = vld [vmem:[#allocation2 + $0x28] sm:$0xf0]
      %v7540 = vld [vmem:[#allocation2 + $0x88] sm:$0xf]
      %s7541 = scalar_lea.vmem %s10, 176
      %v7542 = vld [vmem:[%s7541] sm:$0xf]
      %v7544 = vperm.slane %v7542, 0
      %v7545 = vperm.slane %v7542, 1
      %v7546 = vperm.slane %v7542, 2
      %v7547 = vperm.slane %v7542, 3
      %v7552 = vmul.f32 %v6933, %v7544
      %v7553 = vmul.f32 %v6934, %v7545
      %v7554 = vmul.f32 %v7247, %v7546
      %v7555 = vmul.f32 %v7539, %v7547
      %v7556 = vmul.f32 %v4609, %v7544
      %v7557 = vmul.f32 %v4610, %v7545
      %v7558 = vmul.f32 %v4743, %v7546
      %v7559 = vmul.f32 %v4859, %v7547
      %v7560 = vmul.f32 %v6937, %v7544
      %v7561 = vmul.f32 %v6938, %v7545
      %v7562 = vmul.f32 %v7248, %v7546
      %v7563 = vmul.f32 %v7540, %v7547
      %v7576 = vrot.slane %v7552, 4
      %v7577 = vrot.slane %v7556, 4
      %v7578 = vsel %vm4193, %v7576, %v7577
      %v7579 = vrot.slane %v7553, 4
      %v7580 = vrot.slane %v7557, 4
      %v7581 = vsel %vm4193, %v7579, %v7580
      %v7582 = vrot.slane %v7554, 4
      %v7583 = vrot.slane %v7558, 4
      %v7584 = vsel %vm4193, %v7582, %v7583
      %v7585 = vrot.slane %v7555, 4
      %v7586 = vrot.slane %v7559, 4
      %v7587 = vsel %vm4193, %v7585, %v7586
      %v7588 = vrot.slane %v7560, 4
      %v7589 = vsel %vm4193, %v7577, %v7588
      %v7590 = vrot.slane %v7561, 4
      %v7591 = vsel %vm4193, %v7580, %v7590
      %v7592 = vrot.slane %v7562, 4
      %v7593 = vsel %vm4193, %v7583, %v7592
      %v7594 = vrot.slane %v7563, 4
      %v7595 = vsel %vm4193, %v7586, %v7594
      %v7604 = vadd.f32 %v7531, %v7578
      %v7605 = vadd.f32 %v7532, %v7581
      %v7606 = vadd.f32 %v7533, %v7584
      %v7607 = vadd.f32 %v7534, %v7587
      %v7608 = vadd.f32 %v7535, %v7589
      %v7609 = vadd.f32 %v7536, %v7591
      %v7610 = vadd.f32 %v7537, %v7593
      %v7611 = vadd.f32 %v7538, %v7595
      %v7612 = vld [vmem:[#allocation2] sm:$0xe0]
      %v7613 = vld [vmem:[#allocation2 + $0x8] sm:$0xe0]
      %v7614 = vld [vmem:[#allocation2 + $0x10] sm:$0xe0]
      %v7615 = vld [vmem:[#allocation2 + $0x18] sm:$0xe0]
      %v7616 = vld [vmem:[#allocation2 + $0x60] sm:$0x1f]
      %v7617 = vld [vmem:[#allocation2 + $0x68] sm:$0x1f]
      %v7618 = vld [vmem:[#allocation2 + $0x70] sm:$0x1f]
      %v7619 = vld [vmem:[#allocation2 + $0x78] sm:$0x1f]
      %s7620 = scalar_lea.vmem %s10, 180
      %v7621 = vld [vmem:[%s7620] sm:$0xf]
      %v7623 = vperm.slane %v7621, 0
      %v7624 = vperm.slane %v7621, 1
      %v7625 = vperm.slane %v7621, 2
      %v7626 = vperm.slane %v7621, 3
      %v7631 = vmul.f32 %v7612, %v7623
      %v7632 = vmul.f32 %v7613, %v7624
      %v7633 = vmul.f32 %v7614, %v7625
      %v7634 = vmul.f32 %v7615, %v7626
      %v7635 = vmul.f32 %v4607, %v7623
      %v7636 = vmul.f32 %v4608, %v7624
      %v7637 = vmul.f32 %v4609, %v7625
      %v7638 = vmul.f32 %v4610, %v7626
      %v7639 = vmul.f32 %v7616, %v7623
      %v7640 = vmul.f32 %v7617, %v7624
      %v7641 = vmul.f32 %v7618, %v7625
      %v7642 = vmul.f32 %v7619, %v7626
      %vm7655 = vcmask 1042432
      %v7656 = vrot.slane %v7631, 5
      %v7657 = vrot.slane %v7635, 5
      %v7658 = vsel %vm7655, %v7656, %v7657
      %v7659 = vrot.slane %v7632, 5
      %v7660 = vrot.slane %v7636, 5
      %v7661 = vsel %vm7655, %v7659, %v7660
      %v7662 = vrot.slane %v7633, 5
      %v7663 = vrot.slane %v7637, 5
      %v7664 = vsel %vm7655, %v7662, %v7663
      %v7665 = vrot.slane %v7634, 5
      %v7666 = vrot.slane %v7638, 5
      %v7667 = vsel %vm7655, %v7665, %v7666
      %v7668 = vrot.slane %v7639, 5
      %v7669 = vsel %vm7655, %v7657, %v7668
      %v7670 = vrot.slane %v7640, 5
      %v7671 = vsel %vm7655, %v7660, %v7670
      %v7672 = vrot.slane %v7641, 5
      %v7673 = vsel %vm7655, %v7663, %v7672
      %v7674 = vrot.slane %v7642, 5
      %v7675 = vsel %vm7655, %v7666, %v7674
      %v7684 = vadd.f32 %v7604, %v7658
      %v7685 = vadd.f32 %v7605, %v7661
      %v7686 = vadd.f32 %v7606, %v7664
      %v7687 = vadd.f32 %v7607, %v7667
      %v7688 = vadd.f32 %v7608, %v7669
      %v7689 = vadd.f32 %v7609, %v7671
      %v7690 = vadd.f32 %v7610, %v7673
      %v7691 = vadd.f32 %v7611, %v7675
      %v7692 = vld [vmem:[%s4336] sm:$0xe0]
      %v7693 = vld [vmem:[%s4336 + $0x8] sm:$0xe0]
      %v7694 = vld [vmem:[%s4336 + $0x10] sm:$0xe0]
      %v7695 = vld [vmem:[%s4336 + $0x18] sm:$0xe0]
      %v7696 = vld [vmem:[%s4336 + $0x60] sm:$0x1f]
      %v7697 = vld [vmem:[%s4336 + $0x68] sm:$0x1f]
      %v7698 = vld [vmem:[%s4336 + $0x70] sm:$0x1f]
      %v7699 = vld [vmem:[%s4336 + $0x78] sm:$0x1f]
      %s7700 = scalar_lea.vmem %s10, 184
      %v7701 = vld [vmem:[%s7700] sm:$0xf]
      %v7703 = vperm.slane %v7701, 0
      %v7704 = vperm.slane %v7701, 1
      %v7705 = vperm.slane %v7701, 2
      %v7706 = vperm.slane %v7701, 3
      %v7711 = vmul.f32 %v7692, %v7703
      %v7712 = vmul.f32 %v7693, %v7704
      %v7713 = vmul.f32 %v7694, %v7705
      %v7714 = vmul.f32 %v7695, %v7706
      %v7715 = vmul.f32 %v4641, %v7703
      %v7716 = vmul.f32 %v4642, %v7704
      %v7717 = vmul.f32 %v4643, %v7705
      %v7718 = vmul.f32 %v4644, %v7706
      %v7719 = vmul.f32 %v7696, %v7703
      %v7720 = vmul.f32 %v7697, %v7704
      %v7721 = vmul.f32 %v7698, %v7705
      %v7722 = vmul.f32 %v7699, %v7706
      %v7735 = vrot.slane %v7711, 5
      %v7736 = vrot.slane %v7715, 5
      %v7737 = vsel %vm7655, %v7735, %v7736
      %v7738 = vrot.slane %v7712, 5
      %v7739 = vrot.slane %v7716, 5
      %v7740 = vsel %vm7655, %v7738, %v7739
      %v7741 = vrot.slane %v7713, 5
      %v7742 = vrot.slane %v7717, 5
      %v7743 = vsel %vm7655, %v7741, %v7742
      %v7744 = vrot.slane %v7714, 5
      %v7745 = vrot.slane %v7718, 5
      %v7746 = vsel %vm7655, %v7744, %v7745
      %v7747 = vrot.slane %v7719, 5
      %v7748 = vsel %vm7655, %v7736, %v7747
      %v7749 = vrot.slane %v7720, 5
      %v7750 = vsel %vm7655, %v7739, %v7749
      %v7751 = vrot.slane %v7721, 5
      %v7752 = vsel %vm7655, %v7742, %v7751
      %v7753 = vrot.slane %v7722, 5
      %v7754 = vsel %vm7655, %v7745, %v7753
      %v7763 = vadd.f32 %v7684, %v7737
      %v7764 = vadd.f32 %v7685, %v7740
      %v7765 = vadd.f32 %v7686, %v7743
      %v7766 = vadd.f32 %v7687, %v7746
      %v7767 = vadd.f32 %v7688, %v7748
      %v7768 = vadd.f32 %v7689, %v7750
      %v7769 = vadd.f32 %v7690, %v7752
      %v7770 = vadd.f32 %v7691, %v7754
      %v7771 = vld [vmem:[%s4460] sm:$0xe0]
      %v7772 = vld [vmem:[%s4460 + $0x8] sm:$0xe0]
      %v7773 = vld [vmem:[%s4460 + $0x10] sm:$0xe0]
      %v7774 = vld [vmem:[%s4460 + $0x18] sm:$0xe0]
      %v7775 = vld [vmem:[%s4460 + $0x60] sm:$0x1f]
      %v7776 = vld [vmem:[%s4460 + $0x68] sm:$0x1f]
      %v7777 = vld [vmem:[%s4460 + $0x70] sm:$0x1f]
      %v7778 = vld [vmem:[%s4460 + $0x78] sm:$0x1f]
      %s7779 = scalar_lea.vmem %s10, 188
      %v7780 = vld [vmem:[%s7779] sm:$0xf]
      %v7782 = vperm.slane %v7780, 0
      %v7783 = vperm.slane %v7780, 1
      %v7784 = vperm.slane %v7780, 2
      %v7785 = vperm.slane %v7780, 3
      %v7790 = vmul.f32 %v7771, %v7782
      %v7791 = vmul.f32 %v7772, %v7783
      %v7792 = vmul.f32 %v7773, %v7784
      %v7793 = vmul.f32 %v7774, %v7785
      %v7794 = vmul.f32 %v4676, %v7782
      %v7795 = vmul.f32 %v4677, %v7783
      %v7796 = vmul.f32 %v4678, %v7784
      %v7797 = vmul.f32 %v4679, %v7785
      %v7798 = vmul.f32 %v7775, %v7782
      %v7799 = vmul.f32 %v7776, %v7783
      %v7800 = vmul.f32 %v7777, %v7784
      %v7801 = vmul.f32 %v7778, %v7785
      %v7814 = vrot.slane %v7790, 5
      %v7815 = vrot.slane %v7794, 5
      %v7816 = vsel %vm7655, %v7814, %v7815
      %v7817 = vrot.slane %v7791, 5
      %v7818 = vrot.slane %v7795, 5
      %v7819 = vsel %vm7655, %v7817, %v7818
      %v7820 = vrot.slane %v7792, 5
      %v7821 = vrot.slane %v7796, 5
      %v7822 = vsel %vm7655, %v7820, %v7821
      %v7823 = vrot.slane %v7793, 5
      %v7824 = vrot.slane %v7797, 5
      %v7825 = vsel %vm7655, %v7823, %v7824
      %v7826 = vrot.slane %v7798, 5
      %v7827 = vsel %vm7655, %v7815, %v7826
      %v7828 = vrot.slane %v7799, 5
      %v7829 = vsel %vm7655, %v7818, %v7828
      %v7830 = vrot.slane %v7800, 5
      %v7831 = vsel %vm7655, %v7821, %v7830
      %v7832 = vrot.slane %v7801, 5
      %v7833 = vsel %vm7655, %v7824, %v7832
      %v7842 = vadd.f32 %v7763, %v7816
      %v7843 = vadd.f32 %v7764, %v7819
      %v7844 = vadd.f32 %v7765, %v7822
      %v7845 = vadd.f32 %v7766, %v7825
      %v7846 = vadd.f32 %v7767, %v7827
      %v7847 = vadd.f32 %v7768, %v7829
      %v7848 = vadd.f32 %v7769, %v7831
      %v7849 = vadd.f32 %v7770, %v7833
      %v7850 = vld [vmem:[%s4584] sm:$0xe0]
      %v7851 = vld [vmem:[%s4584 + $0x8] sm:$0xe0]
      %v7852 = vld [vmem:[%s4584 + $0x10] sm:$0xe0]
      %v7853 = vld [vmem:[%s4584 + $0x18] sm:$0xe0]
      %v7854 = vld [vmem:[%s4584 + $0x60] sm:$0x1f]
      %v7855 = vld [vmem:[%s4584 + $0x68] sm:$0x1f]
      %v7856 = vld [vmem:[%s4584 + $0x70] sm:$0x1f]
      %v7857 = vld [vmem:[%s4584 + $0x78] sm:$0x1f]
      %s7858 = scalar_lea.vmem %s10, 192
      %v7859 = vld [vmem:[%s7858] sm:$0xf]
      %v7861 = vperm.slane %v7859, 0
      %v7862 = vperm.slane %v7859, 1
      %v7863 = vperm.slane %v7859, 2
      %v7864 = vperm.slane %v7859, 3
      %v7869 = vmul.f32 %v7850, %v7861
      %v7870 = vmul.f32 %v7851, %v7862
      %v7871 = vmul.f32 %v7852, %v7863
      %v7872 = vmul.f32 %v7853, %v7864
      %v7873 = vmul.f32 %v4711, %v7861
      %v7874 = vmul.f32 %v4712, %v7862
      %v7875 = vmul.f32 %v4713, %v7863
      %v7876 = vmul.f32 %v4714, %v7864
      %v7877 = vmul.f32 %v7854, %v7861
      %v7878 = vmul.f32 %v7855, %v7862
      %v7879 = vmul.f32 %v7856, %v7863
      %v7880 = vmul.f32 %v7857, %v7864
      %v7893 = vrot.slane %v7869, 5
      %v7894 = vrot.slane %v7873, 5
      %v7895 = vsel %vm7655, %v7893, %v7894
      %v7896 = vrot.slane %v7870, 5
      %v7897 = vrot.slane %v7874, 5
      %v7898 = vsel %vm7655, %v7896, %v7897
      %v7899 = vrot.slane %v7871, 5
      %v7900 = vrot.slane %v7875, 5
      %v7901 = vsel %vm7655, %v7899, %v7900
      %v7902 = vrot.slane %v7872, 5
      %v7903 = vrot.slane %v7876, 5
      %v7904 = vsel %vm7655, %v7902, %v7903
      %v7905 = vrot.slane %v7877, 5
      %v7906 = vsel %vm7655, %v7894, %v7905
      %v7907 = vrot.slane %v7878, 5
      %v7908 = vsel %vm7655, %v7897, %v7907
      %v7909 = vrot.slane %v7879, 5
      %v7910 = vsel %vm7655, %v7900, %v7909
      %v7911 = vrot.slane %v7880, 5
      %v7912 = vsel %vm7655, %v7903, %v7911
      %v7921 = vadd.f32 %v7842, %v7895
      %v7922 = vadd.f32 %v7843, %v7898
      %v7923 = vadd.f32 %v7844, %v7901
      %v7924 = vadd.f32 %v7845, %v7904
      %v7925 = vadd.f32 %v7846, %v7906
      %v7926 = vadd.f32 %v7847, %v7908
      %v7927 = vadd.f32 %v7848, %v7910
      %v7928 = vadd.f32 %v7849, %v7912
      %v7929 = vld [vmem:[#allocation2 + $0x20] sm:$0xe0]
      %v7930 = vld [vmem:[#allocation2 + $0x80] sm:$0x1f]
      %s7931 = scalar_lea.vmem %s10, 196
      %v7932 = vld [vmem:[%s7931] sm:$0xf]
      %v7934 = vperm.slane %v7932, 0
      %v7935 = vperm.slane %v7932, 1
      %v7936 = vperm.slane %v7932, 2
      %v7937 = vperm.slane %v7932, 3
      %v7942 = vmul.f32 %v7613, %v7934
      %v7943 = vmul.f32 %v7614, %v7935
      %v7944 = vmul.f32 %v7615, %v7936
      %v7945 = vmul.f32 %v7929, %v7937
      %v7946 = vmul.f32 %v4608, %v7934
      %v7947 = vmul.f32 %v4609, %v7935
      %v7948 = vmul.f32 %v4610, %v7936
      %v7949 = vmul.f32 %v4743, %v7937
      %v7950 = vmul.f32 %v7617, %v7934
      %v7951 = vmul.f32 %v7618, %v7935
      %v7952 = vmul.f32 %v7619, %v7936
      %v7953 = vmul.f32 %v7930, %v7937
      %v7966 = vrot.slane %v7942, 5
      %v7967 = vrot.slane %v7946, 5
      %v7968 = vsel %vm7655, %v7966, %v7967
      %v7969 = vrot.slane %v7943, 5
      %v7970 = vrot.slane %v7947, 5
      %v7971 = vsel %vm7655, %v7969, %v7970
      %v7972 = vrot.slane %v7944, 5
      %v7973 = vrot.slane %v7948, 5
      %v7974 = vsel %vm7655, %v7972, %v7973
      %v7975 = vrot.slane %v7945, 5
      %v7976 = vrot.slane %v7949, 5
      %v7977 = vsel %vm7655, %v7975, %v7976
      %v7978 = vrot.slane %v7950, 5
      %v7979 = vsel %vm7655, %v7967, %v7978
      %v7980 = vrot.slane %v7951, 5
      %v7981 = vsel %vm7655, %v7970, %v7980
      %v7982 = vrot.slane %v7952, 5
      %v7983 = vsel %vm7655, %v7973, %v7982
      %v7984 = vrot.slane %v7953, 5
      %v7985 = vsel %vm7655, %v7976, %v7984
      %v7994 = vadd.f32 %v7921, %v7968
      %v7995 = vadd.f32 %v7922, %v7971
      %v7996 = vadd.f32 %v7923, %v7974
      %v7997 = vadd.f32 %v7924, %v7977
      %v7998 = vadd.f32 %v7925, %v7979
      %v7999 = vadd.f32 %v7926, %v7981
      %v8000 = vadd.f32 %v7927, %v7983
      %v8001 = vadd.f32 %v7928, %v7985
      %v8002 = vld [vmem:[%s4336 + $0x20] sm:$0xe0]
      %v8003 = vld [vmem:[%s4336 + $0x80] sm:$0x1f]
      %s8004 = scalar_lea.vmem %s10, 200
      %v8005 = vld [vmem:[%s8004] sm:$0xf]
      %v8007 = vperm.slane %v8005, 0
      %v8008 = vperm.slane %v8005, 1
      %v8009 = vperm.slane %v8005, 2
      %v8010 = vperm.slane %v8005, 3
      %v8015 = vmul.f32 %v7693, %v8007
      %v8016 = vmul.f32 %v7694, %v8008
      %v8017 = vmul.f32 %v7695, %v8009
      %v8018 = vmul.f32 %v8002, %v8010
      %v8019 = vmul.f32 %v4642, %v8007
      %v8020 = vmul.f32 %v4643, %v8008
      %v8021 = vmul.f32 %v4644, %v8009
      %v8022 = vmul.f32 %v4772, %v8010
      %v8023 = vmul.f32 %v7697, %v8007
      %v8024 = vmul.f32 %v7698, %v8008
      %v8025 = vmul.f32 %v7699, %v8009
      %v8026 = vmul.f32 %v8003, %v8010
      %v8039 = vrot.slane %v8015, 5
      %v8040 = vrot.slane %v8019, 5
      %v8041 = vsel %vm7655, %v8039, %v8040
      %v8042 = vrot.slane %v8016, 5
      %v8043 = vrot.slane %v8020, 5
      %v8044 = vsel %vm7655, %v8042, %v8043
      %v8045 = vrot.slane %v8017, 5
      %v8046 = vrot.slane %v8021, 5
      %v8047 = vsel %vm7655, %v8045, %v8046
      %v8048 = vrot.slane %v8018, 5
      %v8049 = vrot.slane %v8022, 5
      %v8050 = vsel %vm7655, %v8048, %v8049
      %v8051 = vrot.slane %v8023, 5
      %v8052 = vsel %vm7655, %v8040, %v8051
      %v8053 = vrot.slane %v8024, 5
      %v8054 = vsel %vm7655, %v8043, %v8053
      %v8055 = vrot.slane %v8025, 5
      %v8056 = vsel %vm7655, %v8046, %v8055
      %v8057 = vrot.slane %v8026, 5
      %v8058 = vsel %vm7655, %v8049, %v8057
      %v8067 = vadd.f32 %v7994, %v8041
      %v8068 = vadd.f32 %v7995, %v8044
      %v8069 = vadd.f32 %v7996, %v8047
      %v8070 = vadd.f32 %v7997, %v8050
      %v8071 = vadd.f32 %v7998, %v8052
      %v8072 = vadd.f32 %v7999, %v8054
      %v8073 = vadd.f32 %v8000, %v8056
      %v8074 = vadd.f32 %v8001, %v8058
      %v8075 = vld [vmem:[%s4460 + $0x20] sm:$0xe0]
      %v8076 = vld [vmem:[%s4460 + $0x80] sm:$0x1f]
      %s8077 = scalar_lea.vmem %s10, 204
      %v8078 = vld [vmem:[%s8077] sm:$0xf]
      %v8080 = vperm.slane %v8078, 0
      %v8081 = vperm.slane %v8078, 1
      %v8082 = vperm.slane %v8078, 2
      %v8083 = vperm.slane %v8078, 3
      %v8088 = vmul.f32 %v7772, %v8080
      %v8089 = vmul.f32 %v7773, %v8081
      %v8090 = vmul.f32 %v7774, %v8082
      %v8091 = vmul.f32 %v8075, %v8083
      %v8092 = vmul.f32 %v4677, %v8080
      %v8093 = vmul.f32 %v4678, %v8081
      %v8094 = vmul.f32 %v4679, %v8082
      %v8095 = vmul.f32 %v4801, %v8083
      %v8096 = vmul.f32 %v7776, %v8080
      %v8097 = vmul.f32 %v7777, %v8081
      %v8098 = vmul.f32 %v7778, %v8082
      %v8099 = vmul.f32 %v8076, %v8083
      %v8112 = vrot.slane %v8088, 5
      %v8113 = vrot.slane %v8092, 5
      %v8114 = vsel %vm7655, %v8112, %v8113
      %v8115 = vrot.slane %v8089, 5
      %v8116 = vrot.slane %v8093, 5
      %v8117 = vsel %vm7655, %v8115, %v8116
      %v8118 = vrot.slane %v8090, 5
      %v8119 = vrot.slane %v8094, 5
      %v8120 = vsel %vm7655, %v8118, %v8119
      %v8121 = vrot.slane %v8091, 5
      %v8122 = vrot.slane %v8095, 5
      %v8123 = vsel %vm7655, %v8121, %v8122
      %v8124 = vrot.slane %v8096, 5
      %v8125 = vsel %vm7655, %v8113, %v8124
      %v8126 = vrot.slane %v8097, 5
      %v8127 = vsel %vm7655, %v8116, %v8126
      %v8128 = vrot.slane %v8098, 5
      %v8129 = vsel %vm7655, %v8119, %v8128
      %v8130 = vrot.slane %v8099, 5
      %v8131 = vsel %vm7655, %v8122, %v8130
      %v8140 = vadd.f32 %v8067, %v8114
      %v8141 = vadd.f32 %v8068, %v8117
      %v8142 = vadd.f32 %v8069, %v8120
      %v8143 = vadd.f32 %v8070, %v8123
      %v8144 = vadd.f32 %v8071, %v8125
      %v8145 = vadd.f32 %v8072, %v8127
      %v8146 = vadd.f32 %v8073, %v8129
      %v8147 = vadd.f32 %v8074, %v8131
      %v8148 = vld [vmem:[%s4584 + $0x20] sm:$0xe0]
      %v8149 = vld [vmem:[%s4584 + $0x80] sm:$0x1f]
      %s8150 = scalar_lea.vmem %s10, 208
      %v8151 = vld [vmem:[%s8150] sm:$0xf]
      %v8153 = vperm.slane %v8151, 0
      %v8154 = vperm.slane %v8151, 1
      %v8155 = vperm.slane %v8151, 2
      %v8156 = vperm.slane %v8151, 3
      %v8161 = vmul.f32 %v7851, %v8153
      %v8162 = vmul.f32 %v7852, %v8154
      %v8163 = vmul.f32 %v7853, %v8155
      %v8164 = vmul.f32 %v8148, %v8156
      %v8165 = vmul.f32 %v4712, %v8153
      %v8166 = vmul.f32 %v4713, %v8154
      %v8167 = vmul.f32 %v4714, %v8155
      %v8168 = vmul.f32 %v4830, %v8156
      %v8169 = vmul.f32 %v7855, %v8153
      %v8170 = vmul.f32 %v7856, %v8154
      %v8171 = vmul.f32 %v7857, %v8155
      %v8172 = vmul.f32 %v8149, %v8156
      %v8185 = vrot.slane %v8161, 5
      %v8186 = vrot.slane %v8165, 5
      %v8187 = vsel %vm7655, %v8185, %v8186
      %v8188 = vrot.slane %v8162, 5
      %v8189 = vrot.slane %v8166, 5
      %v8190 = vsel %vm7655, %v8188, %v8189
      %v8191 = vrot.slane %v8163, 5
      %v8192 = vrot.slane %v8167, 5
      %v8193 = vsel %vm7655, %v8191, %v8192
      %v8194 = vrot.slane %v8164, 5
      %v8195 = vrot.slane %v8168, 5
      %v8196 = vsel %vm7655, %v8194, %v8195
      %v8197 = vrot.slane %v8169, 5
      %v8198 = vsel %vm7655, %v8186, %v8197
      %v8199 = vrot.slane %v8170, 5
      %v8200 = vsel %vm7655, %v8189, %v8199
      %v8201 = vrot.slane %v8171, 5
      %v8202 = vsel %vm7655, %v8192, %v8201
      %v8203 = vrot.slane %v8172, 5
      %v8204 = vsel %vm7655, %v8195, %v8203
      %v8213 = vadd.f32 %v8140, %v8187
      %v8214 = vadd.f32 %v8141, %v8190
      %v8215 = vadd.f32 %v8142, %v8193
      %v8216 = vadd.f32 %v8143, %v8196
      %v8217 = vadd.f32 %v8144, %v8198
      %v8218 = vadd.f32 %v8145, %v8200
      %v8219 = vadd.f32 %v8146, %v8202
      %v8220 = vadd.f32 %v8147, %v8204
      %v8221 = vld [vmem:[#allocation2 + $0x28] sm:$0xe0]
      %v8222 = vld [vmem:[#allocation2 + $0x88] sm:$0x1f]
      %s8223 = scalar_lea.vmem %s10, 212
      %v8224 = vld [vmem:[%s8223] sm:$0xf]
      %v8226 = vperm.slane %v8224, 0
      %v8227 = vperm.slane %v8224, 1
      %v8228 = vperm.slane %v8224, 2
      %v8229 = vperm.slane %v8224, 3
      %v8234 = vmul.f32 %v7614, %v8226
      %v8235 = vmul.f32 %v7615, %v8227
      %v8236 = vmul.f32 %v7929, %v8228
      %v8237 = vmul.f32 %v8221, %v8229
      %v8238 = vmul.f32 %v4609, %v8226
      %v8239 = vmul.f32 %v4610, %v8227
      %v8240 = vmul.f32 %v4743, %v8228
      %v8241 = vmul.f32 %v4859, %v8229
      %v8242 = vmul.f32 %v7618, %v8226
      %v8243 = vmul.f32 %v7619, %v8227
      %v8244 = vmul.f32 %v7930, %v8228
      %v8245 = vmul.f32 %v8222, %v8229
      %v8258 = vrot.slane %v8234, 5
      %v8259 = vrot.slane %v8238, 5
      %v8260 = vsel %vm7655, %v8258, %v8259
      %v8261 = vrot.slane %v8235, 5
      %v8262 = vrot.slane %v8239, 5
      %v8263 = vsel %vm7655, %v8261, %v8262
      %v8264 = vrot.slane %v8236, 5
      %v8265 = vrot.slane %v8240, 5
      %v8266 = vsel %vm7655, %v8264, %v8265
      %v8267 = vrot.slane %v8237, 5
      %v8268 = vrot.slane %v8241, 5
      %v8269 = vsel %vm7655, %v8267, %v8268
      %v8270 = vrot.slane %v8242, 5
      %v8271 = vsel %vm7655, %v8259, %v8270
      %v8272 = vrot.slane %v8243, 5
      %v8273 = vsel %vm7655, %v8262, %v8272
      %v8274 = vrot.slane %v8244, 5
      %v8275 = vsel %vm7655, %v8265, %v8274
      %v8276 = vrot.slane %v8245, 5
      %v8277 = vsel %vm7655, %v8268, %v8276
      %v8286 = vadd.f32 %v8213, %v8260
      %v8287 = vadd.f32 %v8214, %v8263
      %v8288 = vadd.f32 %v8215, %v8266
      %v8289 = vadd.f32 %v8216, %v8269
      %v8290 = vadd.f32 %v8217, %v8271
      %v8291 = vadd.f32 %v8218, %v8273
      %v8292 = vadd.f32 %v8219, %v8275
      %v8293 = vadd.f32 %v8220, %v8277
      %v8294 = vld [vmem:[#allocation2] sm:$0xc0]
      %v8295 = vld [vmem:[#allocation2 + $0x8] sm:$0xc0]
      %v8296 = vld [vmem:[#allocation2 + $0x10] sm:$0xc0]
      %v8297 = vld [vmem:[#allocation2 + $0x18] sm:$0xc0]
      %v8298 = vld [vmem:[#allocation2 + $0x60] sm:$0x3f]
      %v8299 = vld [vmem:[#allocation2 + $0x68] sm:$0x3f]
      %v8300 = vld [vmem:[#allocation2 + $0x70] sm:$0x3f]
      %v8301 = vld [vmem:[#allocation2 + $0x78] sm:$0x3f]
      %s8302 = scalar_lea.vmem %s10, 216
      %v8303 = vld [vmem:[%s8302] sm:$0xf]
      %v8305 = vperm.slane %v8303, 0
      %v8306 = vperm.slane %v8303, 1
      %v8307 = vperm.slane %v8303, 2
      %v8308 = vperm.slane %v8303, 3
      %v8313 = vmul.f32 %v8294, %v8305
      %v8314 = vmul.f32 %v8295, %v8306
      %v8315 = vmul.f32 %v8296, %v8307
      %v8316 = vmul.f32 %v8297, %v8308
      %v8317 = vmul.f32 %v4607, %v8305
      %v8318 = vmul.f32 %v4608, %v8306
      %v8319 = vmul.f32 %v4609, %v8307
      %v8320 = vmul.f32 %v4610, %v8308
      %v8321 = vmul.f32 %v8298, %v8305
      %v8322 = vmul.f32 %v8299, %v8306
      %v8323 = vmul.f32 %v8300, %v8307
      %v8324 = vmul.f32 %v8301, %v8308
      %vm8337 = vcmask 1041408
      %v8338 = vrot.slane %v8313, 6
      %v8339 = vrot.slane %v8317, 6
      %v8340 = vsel %vm8337, %v8338, %v8339
      %v8341 = vrot.slane %v8314, 6
      %v8342 = vrot.slane %v8318, 6
      %v8343 = vsel %vm8337, %v8341, %v8342
      %v8344 = vrot.slane %v8315, 6
      %v8345 = vrot.slane %v8319, 6
      %v8346 = vsel %vm8337, %v8344, %v8345
      %v8347 = vrot.slane %v8316, 6
      %v8348 = vrot.slane %v8320, 6
      %v8349 = vsel %vm8337, %v8347, %v8348
      %v8350 = vrot.slane %v8321, 6
      %v8351 = vsel %vm8337, %v8339, %v8350
      %v8352 = vrot.slane %v8322, 6
      %v8353 = vsel %vm8337, %v8342, %v8352
      %v8354 = vrot.slane %v8323, 6
      %v8355 = vsel %vm8337, %v8345, %v8354
      %v8356 = vrot.slane %v8324, 6
      %v8357 = vsel %vm8337, %v8348, %v8356
      %v8366 = vadd.f32 %v8286, %v8340
      %v8367 = vadd.f32 %v8287, %v8343
      %v8368 = vadd.f32 %v8288, %v8346
      %v8369 = vadd.f32 %v8289, %v8349
      %v8370 = vadd.f32 %v8290, %v8351
      %v8371 = vadd.f32 %v8291, %v8353
      %v8372 = vadd.f32 %v8292, %v8355
      %v8373 = vadd.f32 %v8293, %v8357
      %v8374 = vld [vmem:[%s4336] sm:$0xc0]
      %v8375 = vld [vmem:[%s4336 + $0x8] sm:$0xc0]
      %v8376 = vld [vmem:[%s4336 + $0x10] sm:$0xc0]
      %v8377 = vld [vmem:[%s4336 + $0x18] sm:$0xc0]
      %v8378 = vld [vmem:[%s4336 + $0x60] sm:$0x3f]
      %v8379 = vld [vmem:[%s4336 + $0x68] sm:$0x3f]
      %v8380 = vld [vmem:[%s4336 + $0x70] sm:$0x3f]
      %v8381 = vld [vmem:[%s4336 + $0x78] sm:$0x3f]
      %s8382 = scalar_lea.vmem %s10, 220
      %v8383 = vld [vmem:[%s8382] sm:$0xf]
      %v8385 = vperm.slane %v8383, 0
      %v8386 = vperm.slane %v8383, 1
      %v8387 = vperm.slane %v8383, 2
      %v8388 = vperm.slane %v8383, 3
      %v8393 = vmul.f32 %v8374, %v8385
      %v8394 = vmul.f32 %v8375, %v8386
      %v8395 = vmul.f32 %v8376, %v8387
      %v8396 = vmul.f32 %v8377, %v8388
      %v8397 = vmul.f32 %v4641, %v8385
      %v8398 = vmul.f32 %v4642, %v8386
      %v8399 = vmul.f32 %v4643, %v8387
      %v8400 = vmul.f32 %v4644, %v8388
      %v8401 = vmul.f32 %v8378, %v8385
      %v8402 = vmul.f32 %v8379, %v8386
      %v8403 = vmul.f32 %v8380, %v8387
      %v8404 = vmul.f32 %v8381, %v8388
      %v8417 = vrot.slane %v8393, 6
      %v8418 = vrot.slane %v8397, 6
      %v8419 = vsel %vm8337, %v8417, %v8418
      %v8420 = vrot.slane %v8394, 6
      %v8421 = vrot.slane %v8398, 6
      %v8422 = vsel %vm8337, %v8420, %v8421
      %v8423 = vrot.slane %v8395, 6
      %v8424 = vrot.slane %v8399, 6
      %v8425 = vsel %vm8337, %v8423, %v8424
      %v8426 = vrot.slane %v8396, 6
      %v8427 = vrot.slane %v8400, 6
      %v8428 = vsel %vm8337, %v8426, %v8427
      %v8429 = vrot.slane %v8401, 6
      %v8430 = vsel %vm8337, %v8418, %v8429
      %v8431 = vrot.slane %v8402, 6
      %v8432 = vsel %vm8337, %v8421, %v8431
      %v8433 = vrot.slane %v8403, 6
      %v8434 = vsel %vm8337, %v8424, %v8433
      %v8435 = vrot.slane %v8404, 6
      %v8436 = vsel %vm8337, %v8427, %v8435
      %v8445 = vadd.f32 %v8366, %v8419
      %v8446 = vadd.f32 %v8367, %v8422
      %v8447 = vadd.f32 %v8368, %v8425
      %v8448 = vadd.f32 %v8369, %v8428
      %v8449 = vadd.f32 %v8370, %v8430
      %v8450 = vadd.f32 %v8371, %v8432
      %v8451 = vadd.f32 %v8372, %v8434
      %v8452 = vadd.f32 %v8373, %v8436
      %v8453 = vld [vmem:[%s4460] sm:$0xc0]
      %v8454 = vld [vmem:[%s4460 + $0x8] sm:$0xc0]
      %v8455 = vld [vmem:[%s4460 + $0x10] sm:$0xc0]
      %v8456 = vld [vmem:[%s4460 + $0x18] sm:$0xc0]
      %v8457 = vld [vmem:[%s4460 + $0x60] sm:$0x3f]
      %v8458 = vld [vmem:[%s4460 + $0x68] sm:$0x3f]
      %v8459 = vld [vmem:[%s4460 + $0x70] sm:$0x3f]
      %v8460 = vld [vmem:[%s4460 + $0x78] sm:$0x3f]
      %s8461 = scalar_lea.vmem %s10, 224
      %v8462 = vld [vmem:[%s8461] sm:$0xf]
      %v8464 = vperm.slane %v8462, 0
      %v8465 = vperm.slane %v8462, 1
      %v8466 = vperm.slane %v8462, 2
      %v8467 = vperm.slane %v8462, 3
      %v8472 = vmul.f32 %v8453, %v8464
      %v8473 = vmul.f32 %v8454, %v8465
      %v8474 = vmul.f32 %v8455, %v8466
      %v8475 = vmul.f32 %v8456, %v8467
      %v8476 = vmul.f32 %v4676, %v8464
      %v8477 = vmul.f32 %v4677, %v8465
      %v8478 = vmul.f32 %v4678, %v8466
      %v8479 = vmul.f32 %v4679, %v8467
      %v8480 = vmul.f32 %v8457, %v8464
      %v8481 = vmul.f32 %v8458, %v8465
      %v8482 = vmul.f32 %v8459, %v8466
      %v8483 = vmul.f32 %v8460, %v8467
      %v8496 = vrot.slane %v8472, 6
      %v8497 = vrot.slane %v8476, 6
      %v8498 = vsel %vm8337, %v8496, %v8497
      %v8499 = vrot.slane %v8473, 6
      %v8500 = vrot.slane %v8477, 6
      %v8501 = vsel %vm8337, %v8499, %v8500
      %v8502 = vrot.slane %v8474, 6
      %v8503 = vrot.slane %v8478, 6
      %v8504 = vsel %vm8337, %v8502, %v8503
      %v8505 = vrot.slane %v8475, 6
      %v8506 = vrot.slane %v8479, 6
      %v8507 = vsel %vm8337, %v8505, %v8506
      %v8508 = vrot.slane %v8480, 6
      %v8509 = vsel %vm8337, %v8497, %v8508
      %v8510 = vrot.slane %v8481, 6
      %v8511 = vsel %vm8337, %v8500, %v8510
      %v8512 = vrot.slane %v8482, 6
      %v8513 = vsel %vm8337, %v8503, %v8512
      %v8514 = vrot.slane %v8483, 6
      %v8515 = vsel %vm8337, %v8506, %v8514
      %v8524 = vadd.f32 %v8445, %v8498
      %v8525 = vadd.f32 %v8446, %v8501
      %v8526 = vadd.f32 %v8447, %v8504
      %v8527 = vadd.f32 %v8448, %v8507
      %v8528 = vadd.f32 %v8449, %v8509
      %v8529 = vadd.f32 %v8450, %v8511
      %v8530 = vadd.f32 %v8451, %v8513
      %v8531 = vadd.f32 %v8452, %v8515
      %v8532 = vld [vmem:[%s4584] sm:$0xc0]
      %v8533 = vld [vmem:[%s4584 + $0x8] sm:$0xc0]
      %v8534 = vld [vmem:[%s4584 + $0x10] sm:$0xc0]
      %v8535 = vld [vmem:[%s4584 + $0x18] sm:$0xc0]
      %v8536 = vld [vmem:[%s4584 + $0x60] sm:$0x3f]
      %v8537 = vld [vmem:[%s4584 + $0x68] sm:$0x3f]
      %v8538 = vld [vmem:[%s4584 + $0x70] sm:$0x3f]
      %v8539 = vld [vmem:[%s4584 + $0x78] sm:$0x3f]
      %s8540 = scalar_lea.vmem %s10, 228
      %v8541 = vld [vmem:[%s8540] sm:$0xf]
      %v8543 = vperm.slane %v8541, 0
      %v8544 = vperm.slane %v8541, 1
      %v8545 = vperm.slane %v8541, 2
      %v8546 = vperm.slane %v8541, 3
      %v8551 = vmul.f32 %v8532, %v8543
      %v8552 = vmul.f32 %v8533, %v8544
      %v8553 = vmul.f32 %v8534, %v8545
      %v8554 = vmul.f32 %v8535, %v8546
      %v8555 = vmul.f32 %v4711, %v8543
      %v8556 = vmul.f32 %v4712, %v8544
      %v8557 = vmul.f32 %v4713, %v8545
      %v8558 = vmul.f32 %v4714, %v8546
      %v8559 = vmul.f32 %v8536, %v8543
      %v8560 = vmul.f32 %v8537, %v8544
      %v8561 = vmul.f32 %v8538, %v8545
      %v8562 = vmul.f32 %v8539, %v8546
      %v8575 = vrot.slane %v8551, 6
      %v8576 = vrot.slane %v8555, 6
      %v8577 = vsel %vm8337, %v8575, %v8576
      %v8578 = vrot.slane %v8552, 6
      %v8579 = vrot.slane %v8556, 6
      %v8580 = vsel %vm8337, %v8578, %v8579
      %v8581 = vrot.slane %v8553, 6
      %v8582 = vrot.slane %v8557, 6
      %v8583 = vsel %vm8337, %v8581, %v8582
      %v8584 = vrot.slane %v8554, 6
      %v8585 = vrot.slane %v8558, 6
      %v8586 = vsel %vm8337, %v8584, %v8585
      %v8587 = vrot.slane %v8559, 6
      %v8588 = vsel %vm8337, %v8576, %v8587
      %v8589 = vrot.slane %v8560, 6
      %v8590 = vsel %vm8337, %v8579, %v8589
      %v8591 = vrot.slane %v8561, 6
      %v8592 = vsel %vm8337, %v8582, %v8591
      %v8593 = vrot.slane %v8562, 6
      %v8594 = vsel %vm8337, %v8585, %v8593
      %v8603 = vadd.f32 %v8524, %v8577
      %v8604 = vadd.f32 %v8525, %v8580
      %v8605 = vadd.f32 %v8526, %v8583
      %v8606 = vadd.f32 %v8527, %v8586
      %v8607 = vadd.f32 %v8528, %v8588
      %v8608 = vadd.f32 %v8529, %v8590
      %v8609 = vadd.f32 %v8530, %v8592
      %v8610 = vadd.f32 %v8531, %v8594
      %v8611 = vld [vmem:[#allocation2 + $0x20] sm:$0xc0]
      %v8612 = vld [vmem:[#allocation2 + $0x80] sm:$0x3f]
      %s8613 = scalar_lea.vmem %s10, 232
      %v8614 = vld [vmem:[%s8613] sm:$0xf]
      %v8616 = vperm.slane %v8614, 0
      %v8617 = vperm.slane %v8614, 1
      %v8618 = vperm.slane %v8614, 2
      %v8619 = vperm.slane %v8614, 3
      %v8624 = vmul.f32 %v8295, %v8616
      %v8625 = vmul.f32 %v8296, %v8617
      %v8626 = vmul.f32 %v8297, %v8618
      %v8627 = vmul.f32 %v8611, %v8619
      %v8628 = vmul.f32 %v4608, %v8616
      %v8629 = vmul.f32 %v4609, %v8617
      %v8630 = vmul.f32 %v4610, %v8618
      %v8631 = vmul.f32 %v4743, %v8619
      %v8632 = vmul.f32 %v8299, %v8616
      %v8633 = vmul.f32 %v8300, %v8617
      %v8634 = vmul.f32 %v8301, %v8618
      %v8635 = vmul.f32 %v8612, %v8619
      %v8648 = vrot.slane %v8624, 6
      %v8649 = vrot.slane %v8628, 6
      %v8650 = vsel %vm8337, %v8648, %v8649
      %v8651 = vrot.slane %v8625, 6
      %v8652 = vrot.slane %v8629, 6
      %v8653 = vsel %vm8337, %v8651, %v8652
      %v8654 = vrot.slane %v8626, 6
      %v8655 = vrot.slane %v8630, 6
      %v8656 = vsel %vm8337, %v8654, %v8655
      %v8657 = vrot.slane %v8627, 6
      %v8658 = vrot.slane %v8631, 6
      %v8659 = vsel %vm8337, %v8657, %v8658
      %v8660 = vrot.slane %v8632, 6
      %v8661 = vsel %vm8337, %v8649, %v8660
      %v8662 = vrot.slane %v8633, 6
      %v8663 = vsel %vm8337, %v8652, %v8662
      %v8664 = vrot.slane %v8634, 6
      %v8665 = vsel %vm8337, %v8655, %v8664
      %v8666 = vrot.slane %v8635, 6
      %v8667 = vsel %vm8337, %v8658, %v8666
      %v8676 = vadd.f32 %v8603, %v8650
      %v8677 = vadd.f32 %v8604, %v8653
      %v8678 = vadd.f32 %v8605, %v8656
      %v8679 = vadd.f32 %v8606, %v8659
      %v8680 = vadd.f32 %v8607, %v8661
      %v8681 = vadd.f32 %v8608, %v8663
      %v8682 = vadd.f32 %v8609, %v8665
      %v8683 = vadd.f32 %v8610, %v8667
      %v8684 = vld [vmem:[%s4336 + $0x20] sm:$0xc0]
      %v8685 = vld [vmem:[%s4336 + $0x80] sm:$0x3f]
      %s8686 = scalar_lea.vmem %s10, 236
      %v8687 = vld [vmem:[%s8686] sm:$0xf]
      %v8689 = vperm.slane %v8687, 0
      %v8690 = vperm.slane %v8687, 1
      %v8691 = vperm.slane %v8687, 2
      %v8692 = vperm.slane %v8687, 3
      %v8697 = vmul.f32 %v8375, %v8689
      %v8698 = vmul.f32 %v8376, %v8690
      %v8699 = vmul.f32 %v8377, %v8691
      %v8700 = vmul.f32 %v8684, %v8692
      %v8701 = vmul.f32 %v4642, %v8689
      %v8702 = vmul.f32 %v4643, %v8690
      %v8703 = vmul.f32 %v4644, %v8691
      %v8704 = vmul.f32 %v4772, %v8692
      %v8705 = vmul.f32 %v8379, %v8689
      %v8706 = vmul.f32 %v8380, %v8690
      %v8707 = vmul.f32 %v8381, %v8691
      %v8708 = vmul.f32 %v8685, %v8692
      %v8721 = vrot.slane %v8697, 6
      %v8722 = vrot.slane %v8701, 6
      %v8723 = vsel %vm8337, %v8721, %v8722
      %v8724 = vrot.slane %v8698, 6
      %v8725 = vrot.slane %v8702, 6
      %v8726 = vsel %vm8337, %v8724, %v8725
      %v8727 = vrot.slane %v8699, 6
      %v8728 = vrot.slane %v8703, 6
      %v8729 = vsel %vm8337, %v8727, %v8728
      %v8730 = vrot.slane %v8700, 6
      %v8731 = vrot.slane %v8704, 6
      %v8732 = vsel %vm8337, %v8730, %v8731
      %v8733 = vrot.slane %v8705, 6
      %v8734 = vsel %vm8337, %v8722, %v8733
      %v8735 = vrot.slane %v8706, 6
      %v8736 = vsel %vm8337, %v8725, %v8735
      %v8737 = vrot.slane %v8707, 6
      %v8738 = vsel %vm8337, %v8728, %v8737
      %v8739 = vrot.slane %v8708, 6
      %v8740 = vsel %vm8337, %v8731, %v8739
      %v8749 = vadd.f32 %v8676, %v8723
      %v8750 = vadd.f32 %v8677, %v8726
      %v8751 = vadd.f32 %v8678, %v8729
      %v8752 = vadd.f32 %v8679, %v8732
      %v8753 = vadd.f32 %v8680, %v8734
      %v8754 = vadd.f32 %v8681, %v8736
      %v8755 = vadd.f32 %v8682, %v8738
      %v8756 = vadd.f32 %v8683, %v8740
      %v8757 = vld [vmem:[%s4460 + $0x20] sm:$0xc0]
      %v8758 = vld [vmem:[%s4460 + $0x80] sm:$0x3f]
      %s8759 = scalar_lea.vmem %s10, 240
      %v8760 = vld [vmem:[%s8759] sm:$0xf]
      %v8762 = vperm.slane %v8760, 0
      %v8763 = vperm.slane %v8760, 1
      %v8764 = vperm.slane %v8760, 2
      %v8765 = vperm.slane %v8760, 3
      %v8770 = vmul.f32 %v8454, %v8762
      %v8771 = vmul.f32 %v8455, %v8763
      %v8772 = vmul.f32 %v8456, %v8764
      %v8773 = vmul.f32 %v8757, %v8765
      %v8774 = vmul.f32 %v4677, %v8762
      %v8775 = vmul.f32 %v4678, %v8763
      %v8776 = vmul.f32 %v4679, %v8764
      %v8777 = vmul.f32 %v4801, %v8765
      %v8778 = vmul.f32 %v8458, %v8762
      %v8779 = vmul.f32 %v8459, %v8763
      %v8780 = vmul.f32 %v8460, %v8764
      %v8781 = vmul.f32 %v8758, %v8765
      %v8794 = vrot.slane %v8770, 6
      %v8795 = vrot.slane %v8774, 6
      %v8796 = vsel %vm8337, %v8794, %v8795
      %v8797 = vrot.slane %v8771, 6
      %v8798 = vrot.slane %v8775, 6
      %v8799 = vsel %vm8337, %v8797, %v8798
      %v8800 = vrot.slane %v8772, 6
      %v8801 = vrot.slane %v8776, 6
      %v8802 = vsel %vm8337, %v8800, %v8801
      %v8803 = vrot.slane %v8773, 6
      %v8804 = vrot.slane %v8777, 6
      %v8805 = vsel %vm8337, %v8803, %v8804
      %v8806 = vrot.slane %v8778, 6
      %v8807 = vsel %vm8337, %v8795, %v8806
      %v8808 = vrot.slane %v8779, 6
      %v8809 = vsel %vm8337, %v8798, %v8808
      %v8810 = vrot.slane %v8780, 6
      %v8811 = vsel %vm8337, %v8801, %v8810
      %v8812 = vrot.slane %v8781, 6
      %v8813 = vsel %vm8337, %v8804, %v8812
      %v8822 = vadd.f32 %v8749, %v8796
      %v8823 = vadd.f32 %v8750, %v8799
      %v8824 = vadd.f32 %v8751, %v8802
      %v8825 = vadd.f32 %v8752, %v8805
      %v8826 = vadd.f32 %v8753, %v8807
      %v8827 = vadd.f32 %v8754, %v8809
      %v8828 = vadd.f32 %v8755, %v8811
      %v8829 = vadd.f32 %v8756, %v8813
      %v8830 = vld [vmem:[%s4584 + $0x20] sm:$0xc0]
      %v8831 = vld [vmem:[%s4584 + $0x80] sm:$0x3f]
      %s8832 = scalar_lea.vmem %s10, 244
      %v8833 = vld [vmem:[%s8832] sm:$0xf]
      %v8835 = vperm.slane %v8833, 0
      %v8836 = vperm.slane %v8833, 1
      %v8837 = vperm.slane %v8833, 2
      %v8838 = vperm.slane %v8833, 3
      %v8843 = vmul.f32 %v8533, %v8835
      %v8844 = vmul.f32 %v8534, %v8836
      %v8845 = vmul.f32 %v8535, %v8837
      %v8846 = vmul.f32 %v8830, %v8838
      %v8847 = vmul.f32 %v4712, %v8835
      %v8848 = vmul.f32 %v4713, %v8836
      %v8849 = vmul.f32 %v4714, %v8837
      %v8850 = vmul.f32 %v4830, %v8838
      %v8851 = vmul.f32 %v8537, %v8835
      %v8852 = vmul.f32 %v8538, %v8836
      %v8853 = vmul.f32 %v8539, %v8837
      %v8854 = vmul.f32 %v8831, %v8838
      %v8867 = vrot.slane %v8843, 6
      %v8868 = vrot.slane %v8847, 6
      %v8869 = vsel %vm8337, %v8867, %v8868
      %v8870 = vrot.slane %v8844, 6
      %v8871 = vrot.slane %v8848, 6
      %v8872 = vsel %vm8337, %v8870, %v8871
      %v8873 = vrot.slane %v8845, 6
      %v8874 = vrot.slane %v8849, 6
      %v8875 = vsel %vm8337, %v8873, %v8874
      %v8876 = vrot.slane %v8846, 6
      %v8877 = vrot.slane %v8850, 6
      %v8878 = vsel %vm8337, %v8876, %v8877
      %v8879 = vrot.slane %v8851, 6
      %v8880 = vsel %vm8337, %v8868, %v8879
      %v8881 = vrot.slane %v8852, 6
      %v8882 = vsel %vm8337, %v8871, %v8881
      %v8883 = vrot.slane %v8853, 6
      %v8884 = vsel %vm8337, %v8874, %v8883
      %v8885 = vrot.slane %v8854, 6
      %v8886 = vsel %vm8337, %v8877, %v8885
      %v8895 = vadd.f32 %v8822, %v8869
      %v8896 = vadd.f32 %v8823, %v8872
      %v8897 = vadd.f32 %v8824, %v8875
      %v8898 = vadd.f32 %v8825, %v8878
      %v8899 = vadd.f32 %v8826, %v8880
      %v8900 = vadd.f32 %v8827, %v8882
      %v8901 = vadd.f32 %v8828, %v8884
      %v8902 = vadd.f32 %v8829, %v8886
      %v8903 = vld [vmem:[#allocation2 + $0x28] sm:$0xc0]
      %v8904 = vld [vmem:[#allocation2 + $0x88] sm:$0x3f]
      %s8905 = scalar_lea.vmem %s10, 248
      %v8906 = vld [vmem:[%s8905] sm:$0xf]
      %v8908 = vperm.slane %v8906, 0
      %v8909 = vperm.slane %v8906, 1
      %v8910 = vperm.slane %v8906, 2
      %v8911 = vperm.slane %v8906, 3
      %v8916 = vmul.f32 %v8296, %v8908
      %v8917 = vmul.f32 %v8297, %v8909
      %v8918 = vmul.f32 %v8611, %v8910
      %v8919 = vmul.f32 %v8903, %v8911
      %v8920 = vmul.f32 %v4609, %v8908
      %v8921 = vmul.f32 %v4610, %v8909
      %v8922 = vmul.f32 %v4743, %v8910
      %v8923 = vmul.f32 %v4859, %v8911
      %v8924 = vmul.f32 %v8300, %v8908
      %v8925 = vmul.f32 %v8301, %v8909
      %v8926 = vmul.f32 %v8612, %v8910
      %v8927 = vmul.f32 %v8904, %v8911
      %v8940 = vrot.slane %v8916, 6
      %v8941 = vrot.slane %v8920, 6
      %v8942 = vsel %vm8337, %v8940, %v8941
      %v8943 = vrot.slane %v8917, 6
      %v8944 = vrot.slane %v8921, 6
      %v8945 = vsel %vm8337, %v8943, %v8944
      %v8946 = vrot.slane %v8918, 6
      %v8947 = vrot.slane %v8922, 6
      %v8948 = vsel %vm8337, %v8946, %v8947
      %v8949 = vrot.slane %v8919, 6
      %v8950 = vrot.slane %v8923, 6
      %v8951 = vsel %vm8337, %v8949, %v8950
      %v8952 = vrot.slane %v8924, 6
      %v8953 = vsel %vm8337, %v8941, %v8952
      %v8954 = vrot.slane %v8925, 6
      %v8955 = vsel %vm8337, %v8944, %v8954
      %v8956 = vrot.slane %v8926, 6
      %v8957 = vsel %vm8337, %v8947, %v8956
      %v8958 = vrot.slane %v8927, 6
      %v8959 = vsel %vm8337, %v8950, %v8958
      %v8968 = vadd.f32 %v8895, %v8942
      %v8969 = vadd.f32 %v8896, %v8945
      %v8970 = vadd.f32 %v8897, %v8948
      %v8971 = vadd.f32 %v8898, %v8951
      %v8972 = vadd.f32 %v8899, %v8953
      %v8973 = vadd.f32 %v8900, %v8955
      %v8974 = vadd.f32 %v8901, %v8957
      %v8975 = vadd.f32 %v8902, %v8959
      %v8976 = vld [vmem:[#allocation2] sm:$0x80]
      %v8977 = vld [vmem:[#allocation2 + $0x8] sm:$0x80]
      %v8978 = vld [vmem:[#allocation2 + $0x10] sm:$0x80]
      %v8979 = vld [vmem:[#allocation2 + $0x18] sm:$0x80]
      %v8980 = vld [vmem:[#allocation2 + $0x60] sm:$0x7f]
      %v8981 = vld [vmem:[#allocation2 + $0x68] sm:$0x7f]
      %v8982 = vld [vmem:[#allocation2 + $0x70] sm:$0x7f]
      %v8983 = vld [vmem:[#allocation2 + $0x78] sm:$0x7f]
      %s8984 = scalar_lea.vmem %s10, 252
      %v8985 = vld [vmem:[%s8984] sm:$0xf]
      %v8987 = vperm.slane %v8985, 0
      %v8988 = vperm.slane %v8985, 1
      %v8989 = vperm.slane %v8985, 2
      %v8990 = vperm.slane %v8985, 3
      %v8995 = vmul.f32 %v8976, %v8987
      %v8996 = vmul.f32 %v8977, %v8988
      %v8997 = vmul.f32 %v8978, %v8989
      %v8998 = vmul.f32 %v8979, %v8990
      %v8999 = vmul.f32 %v4607, %v8987
      %v9000 = vmul.f32 %v4608, %v8988
      %v9001 = vmul.f32 %v4609, %v8989
      %v9002 = vmul.f32 %v4610, %v8990
      %v9003 = vmul.f32 %v8980, %v8987
      %v9004 = vmul.f32 %v8981, %v8988
      %v9005 = vmul.f32 %v8982, %v8989
      %v9006 = vmul.f32 %v8983, %v8990
      %vm9019 = vcmask 1040384
      %v9020 = vrot.slane %v8995, 7
      %v9021 = vrot.slane %v8999, 7
      %v9022 = vsel %vm9019, %v9020, %v9021
      %v9023 = vrot.slane %v8996, 7
      %v9024 = vrot.slane %v9000, 7
      %v9025 = vsel %vm9019, %v9023, %v9024
      %v9026 = vrot.slane %v8997, 7
      %v9027 = vrot.slane %v9001, 7
      %v9028 = vsel %vm9019, %v9026, %v9027
      %v9029 = vrot.slane %v8998, 7
      %v9030 = vrot.slane %v9002, 7
      %v9031 = vsel %vm9019, %v9029, %v9030
      %v9032 = vrot.slane %v9003, 7
      %v9033 = vsel %vm9019, %v9021, %v9032
      %v9034 = vrot.slane %v9004, 7
      %v9035 = vsel %vm9019, %v9024, %v9034
      %v9036 = vrot.slane %v9005, 7
      %v9037 = vsel %vm9019, %v9027, %v9036
      %v9038 = vrot.slane %v9006, 7
      %v9039 = vsel %vm9019, %v9030, %v9038
      %v9048 = vadd.f32 %v8968, %v9022
      %v9049 = vadd.f32 %v8969, %v9025
      %v9050 = vadd.f32 %v8970, %v9028
      %v9051 = vadd.f32 %v8971, %v9031
      %v9052 = vadd.f32 %v8972, %v9033
      %v9053 = vadd.f32 %v8973, %v9035
      %v9054 = vadd.f32 %v8974, %v9037
      %v9055 = vadd.f32 %v8975, %v9039
      %v9056 = vld [vmem:[%s4336] sm:$0x80]
      %v9057 = vld [vmem:[%s4336 + $0x8] sm:$0x80]
      %v9058 = vld [vmem:[%s4336 + $0x10] sm:$0x80]
      %v9059 = vld [vmem:[%s4336 + $0x18] sm:$0x80]
      %v9060 = vld [vmem:[%s4336 + $0x60] sm:$0x7f]
      %v9061 = vld [vmem:[%s4336 + $0x68] sm:$0x7f]
      %v9062 = vld [vmem:[%s4336 + $0x70] sm:$0x7f]
      %v9063 = vld [vmem:[%s4336 + $0x78] sm:$0x7f]
      %s9064 = scalar_lea.vmem %s10, 256
      %v9065 = vld [vmem:[%s9064] sm:$0xf]
      %v9067 = vperm.slane %v9065, 0
      %v9068 = vperm.slane %v9065, 1
      %v9069 = vperm.slane %v9065, 2
      %v9070 = vperm.slane %v9065, 3
      %v9075 = vmul.f32 %v9056, %v9067
      %v9076 = vmul.f32 %v9057, %v9068
      %v9077 = vmul.f32 %v9058, %v9069
      %v9078 = vmul.f32 %v9059, %v9070
      %v9079 = vmul.f32 %v4641, %v9067
      %v9080 = vmul.f32 %v4642, %v9068
      %v9081 = vmul.f32 %v4643, %v9069
      %v9082 = vmul.f32 %v4644, %v9070
      %v9083 = vmul.f32 %v9060, %v9067
      %v9084 = vmul.f32 %v9061, %v9068
      %v9085 = vmul.f32 %v9062, %v9069
      %v9086 = vmul.f32 %v9063, %v9070
      %v9099 = vrot.slane %v9075, 7
      %v9100 = vrot.slane %v9079, 7
      %v9101 = vsel %vm9019, %v9099, %v9100
      %v9102 = vrot.slane %v9076, 7
      %v9103 = vrot.slane %v9080, 7
      %v9104 = vsel %vm9019, %v9102, %v9103
      %v9105 = vrot.slane %v9077, 7
      %v9106 = vrot.slane %v9081, 7
      %v9107 = vsel %vm9019, %v9105, %v9106
      %v9108 = vrot.slane %v9078, 7
      %v9109 = vrot.slane %v9082, 7
      %v9110 = vsel %vm9019, %v9108, %v9109
      %v9111 = vrot.slane %v9083, 7
      %v9112 = vsel %vm9019, %v9100, %v9111
      %v9113 = vrot.slane %v9084, 7
      %v9114 = vsel %vm9019, %v9103, %v9113
      %v9115 = vrot.slane %v9085, 7
      %v9116 = vsel %vm9019, %v9106, %v9115
      %v9117 = vrot.slane %v9086, 7
      %v9118 = vsel %vm9019, %v9109, %v9117
      %v9127 = vadd.f32 %v9048, %v9101
      %v9128 = vadd.f32 %v9049, %v9104
      %v9129 = vadd.f32 %v9050, %v9107
      %v9130 = vadd.f32 %v9051, %v9110
      %v9131 = vadd.f32 %v9052, %v9112
      %v9132 = vadd.f32 %v9053, %v9114
      %v9133 = vadd.f32 %v9054, %v9116
      %v9134 = vadd.f32 %v9055, %v9118
      %v9135 = vld [vmem:[%s4460] sm:$0x80]
      %v9136 = vld [vmem:[%s4460 + $0x8] sm:$0x80]
      %v9137 = vld [vmem:[%s4460 + $0x10] sm:$0x80]
      %v9138 = vld [vmem:[%s4460 + $0x18] sm:$0x80]
      %v9139 = vld [vmem:[%s4460 + $0x60] sm:$0x7f]
      %v9140 = vld [vmem:[%s4460 + $0x68] sm:$0x7f]
      %v9141 = vld [vmem:[%s4460 + $0x70] sm:$0x7f]
      %v9142 = vld [vmem:[%s4460 + $0x78] sm:$0x7f]
      %s9143 = scalar_lea.vmem %s10, 260
      %v9144 = vld [vmem:[%s9143] sm:$0xf]
      %v9146 = vperm.slane %v9144, 0
      %v9147 = vperm.slane %v9144, 1
      %v9148 = vperm.slane %v9144, 2
      %v9149 = vperm.slane %v9144, 3
      %v9154 = vmul.f32 %v9135, %v9146
      %v9155 = vmul.f32 %v9136, %v9147
      %v9156 = vmul.f32 %v9137, %v9148
      %v9157 = vmul.f32 %v9138, %v9149
      %v9158 = vmul.f32 %v4676, %v9146
      %v9159 = vmul.f32 %v4677, %v9147
      %v9160 = vmul.f32 %v4678, %v9148
      %v9161 = vmul.f32 %v4679, %v9149
      %v9162 = vmul.f32 %v9139, %v9146
      %v9163 = vmul.f32 %v9140, %v9147
      %v9164 = vmul.f32 %v9141, %v9148
      %v9165 = vmul.f32 %v9142, %v9149
      %v9178 = vrot.slane %v9154, 7
      %v9179 = vrot.slane %v9158, 7
      %v9180 = vsel %vm9019, %v9178, %v9179
      %v9181 = vrot.slane %v9155, 7
      %v9182 = vrot.slane %v9159, 7
      %v9183 = vsel %vm9019, %v9181, %v9182
      %v9184 = vrot.slane %v9156, 7
      %v9185 = vrot.slane %v9160, 7
      %v9186 = vsel %vm9019, %v9184, %v9185
      %v9187 = vrot.slane %v9157, 7
      %v9188 = vrot.slane %v9161, 7
      %v9189 = vsel %vm9019, %v9187, %v9188
      %v9190 = vrot.slane %v9162, 7
      %v9191 = vsel %vm9019, %v9179, %v9190
      %v9192 = vrot.slane %v9163, 7
      %v9193 = vsel %vm9019, %v9182, %v9192
      %v9194 = vrot.slane %v9164, 7
      %v9195 = vsel %vm9019, %v9185, %v9194
      %v9196 = vrot.slane %v9165, 7
      %v9197 = vsel %vm9019, %v9188, %v9196
      %v9206 = vadd.f32 %v9127, %v9180
      %v9207 = vadd.f32 %v9128, %v9183
      %v9208 = vadd.f32 %v9129, %v9186
      %v9209 = vadd.f32 %v9130, %v9189
      %v9210 = vadd.f32 %v9131, %v9191
      %v9211 = vadd.f32 %v9132, %v9193
      %v9212 = vadd.f32 %v9133, %v9195
      %v9213 = vadd.f32 %v9134, %v9197
      %v9214 = vld [vmem:[%s4584] sm:$0x80]
      %v9215 = vld [vmem:[%s4584 + $0x8] sm:$0x80]
      %v9216 = vld [vmem:[%s4584 + $0x10] sm:$0x80]
      %v9217 = vld [vmem:[%s4584 + $0x18] sm:$0x80]
      %v9218 = vld [vmem:[%s4584 + $0x60] sm:$0x7f]
      %v9219 = vld [vmem:[%s4584 + $0x68] sm:$0x7f]
      %v9220 = vld [vmem:[%s4584 + $0x70] sm:$0x7f]
      %v9221 = vld [vmem:[%s4584 + $0x78] sm:$0x7f]
      %s9222 = scalar_lea.vmem %s10, 264
      %v9223 = vld [vmem:[%s9222] sm:$0xf]
      %v9225 = vperm.slane %v9223, 0
      %v9226 = vperm.slane %v9223, 1
      %v9227 = vperm.slane %v9223, 2
      %v9228 = vperm.slane %v9223, 3
      %v9233 = vmul.f32 %v9214, %v9225
      %v9234 = vmul.f32 %v9215, %v9226
      %v9235 = vmul.f32 %v9216, %v9227
      %v9236 = vmul.f32 %v9217, %v9228
      %v9237 = vmul.f32 %v4711, %v9225
      %v9238 = vmul.f32 %v4712, %v9226
      %v9239 = vmul.f32 %v4713, %v9227
      %v9240 = vmul.f32 %v4714, %v9228
      %v9241 = vmul.f32 %v9218, %v9225
      %v9242 = vmul.f32 %v9219, %v9226
      %v9243 = vmul.f32 %v9220, %v9227
      %v9244 = vmul.f32 %v9221, %v9228
      %v9257 = vrot.slane %v9233, 7
      %v9258 = vrot.slane %v9237, 7
      %v9259 = vsel %vm9019, %v9257, %v9258
      %v9260 = vrot.slane %v9234, 7
      %v9261 = vrot.slane %v9238, 7
      %v9262 = vsel %vm9019, %v9260, %v9261
      %v9263 = vrot.slane %v9235, 7
      %v9264 = vrot.slane %v9239, 7
      %v9265 = vsel %vm9019, %v9263, %v9264
      %v9266 = vrot.slane %v9236, 7
      %v9267 = vrot.slane %v9240, 7
      %v9268 = vsel %vm9019, %v9266, %v9267
      %v9269 = vrot.slane %v9241, 7
      %v9270 = vsel %vm9019, %v9258, %v9269
      %v9271 = vrot.slane %v9242, 7
      %v9272 = vsel %vm9019, %v9261, %v9271
      %v9273 = vrot.slane %v9243, 7
      %v9274 = vsel %vm9019, %v9264, %v9273
      %v9275 = vrot.slane %v9244, 7
      %v9276 = vsel %vm9019, %v9267, %v9275
      %v9285 = vadd.f32 %v9206, %v9259
      %v9286 = vadd.f32 %v9207, %v9262
      %v9287 = vadd.f32 %v9208, %v9265
      %v9288 = vadd.f32 %v9209, %v9268
      %v9289 = vadd.f32 %v9210, %v9270
      %v9290 = vadd.f32 %v9211, %v9272
      %v9291 = vadd.f32 %v9212, %v9274
      %v9292 = vadd.f32 %v9213, %v9276
      %v9293 = vld [vmem:[#allocation2 + $0x20] sm:$0x80]
      %v9294 = vld [vmem:[#allocation2 + $0x80] sm:$0x7f]
      %s9295 = scalar_lea.vmem %s10, 268
      %v9296 = vld [vmem:[%s9295] sm:$0xf]
      %v9298 = vperm.slane %v9296, 0
      %v9299 = vperm.slane %v9296, 1
      %v9300 = vperm.slane %v9296, 2
      %v9301 = vperm.slane %v9296, 3
      %v9306 = vmul.f32 %v8977, %v9298
      %v9307 = vmul.f32 %v8978, %v9299
      %v9308 = vmul.f32 %v8979, %v9300
      %v9309 = vmul.f32 %v9293, %v9301
      %v9310 = vmul.f32 %v4608, %v9298
      %v9311 = vmul.f32 %v4609, %v9299
      %v9312 = vmul.f32 %v4610, %v9300
      %v9313 = vmul.f32 %v4743, %v9301
      %v9314 = vmul.f32 %v8981, %v9298
      %v9315 = vmul.f32 %v8982, %v9299
      %v9316 = vmul.f32 %v8983, %v9300
      %v9317 = vmul.f32 %v9294, %v9301
      %v9330 = vrot.slane %v9306, 7
      %v9331 = vrot.slane %v9310, 7
      %v9332 = vsel %vm9019, %v9330, %v9331
      %v9333 = vrot.slane %v9307, 7
      %v9334 = vrot.slane %v9311, 7
      %v9335 = vsel %vm9019, %v9333, %v9334
      %v9336 = vrot.slane %v9308, 7
      %v9337 = vrot.slane %v9312, 7
      %v9338 = vsel %vm9019, %v9336, %v9337
      %v9339 = vrot.slane %v9309, 7
      %v9340 = vrot.slane %v9313, 7
      %v9341 = vsel %vm9019, %v9339, %v9340
      %v9342 = vrot.slane %v9314, 7
      %v9343 = vsel %vm9019, %v9331, %v9342
      %v9344 = vrot.slane %v9315, 7
      %v9345 = vsel %vm9019, %v9334, %v9344
      %v9346 = vrot.slane %v9316, 7
      %v9347 = vsel %vm9019, %v9337, %v9346
      %v9348 = vrot.slane %v9317, 7
      %v9349 = vsel %vm9019, %v9340, %v9348
      %v9358 = vadd.f32 %v9285, %v9332
      %v9359 = vadd.f32 %v9286, %v9335
      %v9360 = vadd.f32 %v9287, %v9338
      %v9361 = vadd.f32 %v9288, %v9341
      %v9362 = vadd.f32 %v9289, %v9343
      %v9363 = vadd.f32 %v9290, %v9345
      %v9364 = vadd.f32 %v9291, %v9347
      %v9365 = vadd.f32 %v9292, %v9349
      %v9366 = vld [vmem:[%s4336 + $0x20] sm:$0x80]
      %v9367 = vld [vmem:[%s4336 + $0x80] sm:$0x7f]
      %s9368 = scalar_lea.vmem %s10, 272
      %v9369 = vld [vmem:[%s9368] sm:$0xf]
      %v9371 = vperm.slane %v9369, 0
      %v9372 = vperm.slane %v9369, 1
      %v9373 = vperm.slane %v9369, 2
      %v9374 = vperm.slane %v9369, 3
      %v9379 = vmul.f32 %v9057, %v9371
      %v9380 = vmul.f32 %v9058, %v9372
      %v9381 = vmul.f32 %v9059, %v9373
      %v9382 = vmul.f32 %v9366, %v9374
      %v9383 = vmul.f32 %v4642, %v9371
      %v9384 = vmul.f32 %v4643, %v9372
      %v9385 = vmul.f32 %v4644, %v9373
      %v9386 = vmul.f32 %v4772, %v9374
      %v9387 = vmul.f32 %v9061, %v9371
      %v9388 = vmul.f32 %v9062, %v9372
      %v9389 = vmul.f32 %v9063, %v9373
      %v9390 = vmul.f32 %v9367, %v9374
      %v9403 = vrot.slane %v9379, 7
      %v9404 = vrot.slane %v9383, 7
      %v9405 = vsel %vm9019, %v9403, %v9404
      %v9406 = vrot.slane %v9380, 7
      %v9407 = vrot.slane %v9384, 7
      %v9408 = vsel %vm9019, %v9406, %v9407
      %v9409 = vrot.slane %v9381, 7
      %v9410 = vrot.slane %v9385, 7
      %v9411 = vsel %vm9019, %v9409, %v9410
      %v9412 = vrot.slane %v9382, 7
      %v9413 = vrot.slane %v9386, 7
      %v9414 = vsel %vm9019, %v9412, %v9413
      %v9415 = vrot.slane %v9387, 7
      %v9416 = vsel %vm9019, %v9404, %v9415
      %v9417 = vrot.slane %v9388, 7
      %v9418 = vsel %vm9019, %v9407, %v9417
      %v9419 = vrot.slane %v9389, 7
      %v9420 = vsel %vm9019, %v9410, %v9419
      %v9421 = vrot.slane %v9390, 7
      %v9422 = vsel %vm9019, %v9413, %v9421
      %v9431 = vadd.f32 %v9358, %v9405
      %v9432 = vadd.f32 %v9359, %v9408
      %v9433 = vadd.f32 %v9360, %v9411
      %v9434 = vadd.f32 %v9361, %v9414
      %v9435 = vadd.f32 %v9362, %v9416
      %v9436 = vadd.f32 %v9363, %v9418
      %v9437 = vadd.f32 %v9364, %v9420
      %v9438 = vadd.f32 %v9365, %v9422
      %v9439 = vld [vmem:[%s4460 + $0x20] sm:$0x80]
      %v9440 = vld [vmem:[%s4460 + $0x80] sm:$0x7f]
      %s9441 = scalar_lea.vmem %s10, 276
      %v9442 = vld [vmem:[%s9441] sm:$0xf]
      %v9444 = vperm.slane %v9442, 0
      %v9445 = vperm.slane %v9442, 1
      %v9446 = vperm.slane %v9442, 2
      %v9447 = vperm.slane %v9442, 3
      %v9452 = vmul.f32 %v9136, %v9444
      %v9453 = vmul.f32 %v9137, %v9445
      %v9454 = vmul.f32 %v9138, %v9446
      %v9455 = vmul.f32 %v9439, %v9447
      %v9456 = vmul.f32 %v4677, %v9444
      %v9457 = vmul.f32 %v4678, %v9445
      %v9458 = vmul.f32 %v4679, %v9446
      %v9459 = vmul.f32 %v4801, %v9447
      %v9460 = vmul.f32 %v9140, %v9444
      %v9461 = vmul.f32 %v9141, %v9445
      %v9462 = vmul.f32 %v9142, %v9446
      %v9463 = vmul.f32 %v9440, %v9447
      %v9476 = vrot.slane %v9452, 7
      %v9477 = vrot.slane %v9456, 7
      %v9478 = vsel %vm9019, %v9476, %v9477
      %v9479 = vrot.slane %v9453, 7
      %v9480 = vrot.slane %v9457, 7
      %v9481 = vsel %vm9019, %v9479, %v9480
      %v9482 = vrot.slane %v9454, 7
      %v9483 = vrot.slane %v9458, 7
      %v9484 = vsel %vm9019, %v9482, %v9483
      %v9485 = vrot.slane %v9455, 7
      %v9486 = vrot.slane %v9459, 7
      %v9487 = vsel %vm9019, %v9485, %v9486
      %v9488 = vrot.slane %v9460, 7
      %v9489 = vsel %vm9019, %v9477, %v9488
      %v9490 = vrot.slane %v9461, 7
      %v9491 = vsel %vm9019, %v9480, %v9490
      %v9492 = vrot.slane %v9462, 7
      %v9493 = vsel %vm9019, %v9483, %v9492
      %v9494 = vrot.slane %v9463, 7
      %v9495 = vsel %vm9019, %v9486, %v9494
      %v9504 = vadd.f32 %v9431, %v9478
      %v9505 = vadd.f32 %v9432, %v9481
      %v9506 = vadd.f32 %v9433, %v9484
      %v9507 = vadd.f32 %v9434, %v9487
      %v9508 = vadd.f32 %v9435, %v9489
      %v9509 = vadd.f32 %v9436, %v9491
      %v9510 = vadd.f32 %v9437, %v9493
      %v9511 = vadd.f32 %v9438, %v9495
      %v9512 = vld [vmem:[%s4584 + $0x20] sm:$0x80]
      %v9513 = vld [vmem:[%s4584 + $0x80] sm:$0x7f]
      %s9514 = scalar_lea.vmem %s10, 280
      %v9515 = vld [vmem:[%s9514] sm:$0xf]
      %v9517 = vperm.slane %v9515, 0
      %v9518 = vperm.slane %v9515, 1
      %v9519 = vperm.slane %v9515, 2
      %v9520 = vperm.slane %v9515, 3
      %v9525 = vmul.f32 %v9215, %v9517
      %v9526 = vmul.f32 %v9216, %v9518
      %v9527 = vmul.f32 %v9217, %v9519
      %v9528 = vmul.f32 %v9512, %v9520
      %v9529 = vmul.f32 %v4712, %v9517
      %v9530 = vmul.f32 %v4713, %v9518
      %v9531 = vmul.f32 %v4714, %v9519
      %v9532 = vmul.f32 %v4830, %v9520
      %v9533 = vmul.f32 %v9219, %v9517
      %v9534 = vmul.f32 %v9220, %v9518
      %v9535 = vmul.f32 %v9221, %v9519
      %v9536 = vmul.f32 %v9513, %v9520
      %v9549 = vrot.slane %v9525, 7
      %v9550 = vrot.slane %v9529, 7
      %v9551 = vsel %vm9019, %v9549, %v9550
      %v9552 = vrot.slane %v9526, 7
      %v9553 = vrot.slane %v9530, 7
      %v9554 = vsel %vm9019, %v9552, %v9553
      %v9555 = vrot.slane %v9527, 7
      %v9556 = vrot.slane %v9531, 7
      %v9557 = vsel %vm9019, %v9555, %v9556
      %v9558 = vrot.slane %v9528, 7
      %v9559 = vrot.slane %v9532, 7
      %v9560 = vsel %vm9019, %v9558, %v9559
      %v9561 = vrot.slane %v9533, 7
      %v9562 = vsel %vm9019, %v9550, %v9561
      %v9563 = vrot.slane %v9534, 7
      %v9564 = vsel %vm9019, %v9553, %v9563
      %v9565 = vrot.slane %v9535, 7
      %v9566 = vsel %vm9019, %v9556, %v9565
      %v9567 = vrot.slane %v9536, 7
      %v9568 = vsel %vm9019, %v9559, %v9567
      %v9577 = vadd.f32 %v9504, %v9551
      %v9578 = vadd.f32 %v9505, %v9554
      %v9579 = vadd.f32 %v9506, %v9557
      %v9580 = vadd.f32 %v9507, %v9560
      %v9581 = vadd.f32 %v9508, %v9562
      %v9582 = vadd.f32 %v9509, %v9564
      %v9583 = vadd.f32 %v9510, %v9566
      %v9584 = vadd.f32 %v9511, %v9568
      %v9585 = vld [vmem:[#allocation2 + $0x28] sm:$0x80]
      %v9586 = vld [vmem:[#allocation2 + $0x88] sm:$0x7f]
      %s9587 = scalar_lea.vmem %s10, 284
      %v9588 = vld [vmem:[%s9587] sm:$0xf]
      %v9590 = vperm.slane %v9588, 0
      %v9591 = vperm.slane %v9588, 1
      %v9592 = vperm.slane %v9588, 2
      %v9593 = vperm.slane %v9588, 3
      %v9598 = vmul.f32 %v8978, %v9590
      %v9599 = vmul.f32 %v8979, %v9591
      %v9600 = vmul.f32 %v9293, %v9592
      %v9601 = vmul.f32 %v9585, %v9593
      %v9602 = vmul.f32 %v4609, %v9590
      %v9603 = vmul.f32 %v4610, %v9591
      %v9604 = vmul.f32 %v4743, %v9592
      %v9605 = vmul.f32 %v4859, %v9593
      %v9606 = vmul.f32 %v8982, %v9590
      %v9607 = vmul.f32 %v8983, %v9591
      %v9608 = vmul.f32 %v9294, %v9592
      %v9609 = vmul.f32 %v9586, %v9593
      %v9622 = vrot.slane %v9598, 7
      %v9623 = vrot.slane %v9602, 7
      %v9624 = vsel %vm9019, %v9622, %v9623
      %v9625 = vrot.slane %v9599, 7
      %v9626 = vrot.slane %v9603, 7
      %v9627 = vsel %vm9019, %v9625, %v9626
      %v9628 = vrot.slane %v9600, 7
      %v9629 = vrot.slane %v9604, 7
      %v9630 = vsel %vm9019, %v9628, %v9629
      %v9631 = vrot.slane %v9601, 7
      %v9632 = vrot.slane %v9605, 7
      %v9633 = vsel %vm9019, %v9631, %v9632
      %v9634 = vrot.slane %v9606, 7
      %v9635 = vsel %vm9019, %v9623, %v9634
      %v9636 = vrot.slane %v9607, 7
      %v9637 = vsel %vm9019, %v9626, %v9636
      %v9638 = vrot.slane %v9608, 7
      %v9639 = vsel %vm9019, %v9629, %v9638
      %v9640 = vrot.slane %v9609, 7
      %v9641 = vsel %vm9019, %v9632, %v9640
      %v9650 = vadd.f32 %v9577, %v9624
      %v9651 = vadd.f32 %v9578, %v9627
      %v9652 = vadd.f32 %v9579, %v9630
      %v9653 = vadd.f32 %v9580, %v9633
      %v9654 = vadd.f32 %v9581, %v9635
      %v9655 = vadd.f32 %v9582, %v9637
      %v9656 = vadd.f32 %v9583, %v9639
      %v9657 = vadd.f32 %v9584, %v9641
      %v9658 = vld [vmem:[#allocation2 + $0x60] sm:$0xff]
      %v9659 = vld [vmem:[#allocation2 + $0x68] sm:$0xff]
      %v9660 = vld [vmem:[#allocation2 + $0x70] sm:$0xff]
      %v9661 = vld [vmem:[#allocation2 + $0x78] sm:$0xff]
      %s9662 = scalar_lea.vmem %s10, 288
      %v9663 = vld [vmem:[%s9662] sm:$0xf]
      %v9665 = vperm.slane %v9663, 0
      %v9666 = vperm.slane %v9663, 1
      %v9667 = vperm.slane %v9663, 2
      %v9668 = vperm.slane %v9663, 3
      %v9673 = vmul.f32 %v4607, %v9665
      %v9674 = vmul.f32 %v4608, %v9666
      %v9675 = vmul.f32 %v4609, %v9667
      %v9676 = vmul.f32 %v4610, %v9668
      %v9677 = vmul.f32 %v9658, %v9665
      %v9678 = vmul.f32 %v9659, %v9666
      %v9679 = vmul.f32 %v9660, %v9667
      %v9680 = vmul.f32 %v9661, %v9668
      %v9681 = vadd.f32 %v9650, %v9673
      %v9682 = vadd.f32 %v9651, %v9674
      %v9683 = vadd.f32 %v9652, %v9675
      %v9684 = vadd.f32 %v9653, %v9676
      %v9685 = vadd.f32 %v9654, %v9677
      %v9686 = vadd.f32 %v9655, %v9678
      %v9687 = vadd.f32 %v9656, %v9679
      %v9688 = vadd.f32 %v9657, %v9680
      %v9689 = vld [vmem:[%s4336 + $0x60] sm:$0xff]
      %v9690 = vld [vmem:[%s4336 + $0x68] sm:$0xff]
      %v9691 = vld [vmem:[%s4336 + $0x70] sm:$0xff]
      %v9692 = vld [vmem:[%s4336 + $0x78] sm:$0xff]
      %s9693 = scalar_lea.vmem %s10, 292
      %v9694 = vld [vmem:[%s9693] sm:$0xf]
      %v9696 = vperm.slane %v9694, 0
      %v9697 = vperm.slane %v9694, 1
      %v9698 = vperm.slane %v9694, 2
      %v9699 = vperm.slane %v9694, 3
      %v9704 = vmul.f32 %v4641, %v9696
      %v9705 = vmul.f32 %v4642, %v9697
      %v9706 = vmul.f32 %v4643, %v9698
      %v9707 = vmul.f32 %v4644, %v9699
      %v9708 = vmul.f32 %v9689, %v9696
      %v9709 = vmul.f32 %v9690, %v9697
      %v9710 = vmul.f32 %v9691, %v9698
      %v9711 = vmul.f32 %v9692, %v9699
      %v9712 = vadd.f32 %v9681, %v9704
      %v9713 = vadd.f32 %v9682, %v9705
      %v9714 = vadd.f32 %v9683, %v9706
      %v9715 = vadd.f32 %v9684, %v9707
      %v9716 = vadd.f32 %v9685, %v9708
      %v9717 = vadd.f32 %v9686, %v9709
      %v9718 = vadd.f32 %v9687, %v9710
      %v9719 = vadd.f32 %v9688, %v9711
      %v9720 = vld [vmem:[%s4460 + $0x60] sm:$0xff]
      %v9721 = vld [vmem:[%s4460 + $0x68] sm:$0xff]
      %v9722 = vld [vmem:[%s4460 + $0x70] sm:$0xff]
      %v9723 = vld [vmem:[%s4460 + $0x78] sm:$0xff]
      %s9724 = scalar_lea.vmem %s10, 296
      %v9725 = vld [vmem:[%s9724] sm:$0xf]
      %v9727 = vperm.slane %v9725, 0
      %v9728 = vperm.slane %v9725, 1
      %v9729 = vperm.slane %v9725, 2
      %v9730 = vperm.slane %v9725, 3
      %v9735 = vmul.f32 %v4676, %v9727
      %v9736 = vmul.f32 %v4677, %v9728
      %v9737 = vmul.f32 %v4678, %v9729
      %v9738 = vmul.f32 %v4679, %v9730
      %v9739 = vmul.f32 %v9720, %v9727
      %v9740 = vmul.f32 %v9721, %v9728
      %v9741 = vmul.f32 %v9722, %v9729
      %v9742 = vmul.f32 %v9723, %v9730
      %v9743 = vadd.f32 %v9712, %v9735
      %v9744 = vadd.f32 %v9713, %v9736
      %v9745 = vadd.f32 %v9714, %v9737
      %v9746 = vadd.f32 %v9715, %v9738
      %v9747 = vadd.f32 %v9716, %v9739
      %v9748 = vadd.f32 %v9717, %v9740
      %v9749 = vadd.f32 %v9718, %v9741
      %v9750 = vadd.f32 %v9719, %v9742
      %v9751 = vld [vmem:[%s4584 + $0x60] sm:$0xff]
      %v9752 = vld [vmem:[%s4584 + $0x68] sm:$0xff]
      %v9753 = vld [vmem:[%s4584 + $0x70] sm:$0xff]
      %v9754 = vld [vmem:[%s4584 + $0x78] sm:$0xff]
      %s9755 = scalar_lea.vmem %s10, 300
      %v9756 = vld [vmem:[%s9755] sm:$0xf]
      %v9758 = vperm.slane %v9756, 0
      %v9759 = vperm.slane %v9756, 1
      %v9760 = vperm.slane %v9756, 2
      %v9761 = vperm.slane %v9756, 3
      %v9766 = vmul.f32 %v4711, %v9758
      %v9767 = vmul.f32 %v4712, %v9759
      %v9768 = vmul.f32 %v4713, %v9760
      %v9769 = vmul.f32 %v4714, %v9761
      %v9770 = vmul.f32 %v9751, %v9758
      %v9771 = vmul.f32 %v9752, %v9759
      %v9772 = vmul.f32 %v9753, %v9760
      %v9773 = vmul.f32 %v9754, %v9761
      %v9774 = vadd.f32 %v9743, %v9766
      %v9775 = vadd.f32 %v9744, %v9767
      %v9776 = vadd.f32 %v9745, %v9768
      %v9777 = vadd.f32 %v9746, %v9769
      %v9778 = vadd.f32 %v9747, %v9770
      %v9779 = vadd.f32 %v9748, %v9771
      %v9780 = vadd.f32 %v9749, %v9772
      %v9781 = vadd.f32 %v9750, %v9773
      %v9782 = vld [vmem:[#allocation2 + $0x80] sm:$0xff]
      %s9783 = scalar_lea.vmem %s10, 304
      %v9784 = vld [vmem:[%s9783] sm:$0xf]
      %v9786 = vperm.slane %v9784, 0
      %v9787 = vperm.slane %v9784, 1
      %v9788 = vperm.slane %v9784, 2
      %v9789 = vperm.slane %v9784, 3
      %v9794 = vmul.f32 %v4608, %v9786
      %v9795 = vmul.f32 %v4609, %v9787
      %v9796 = vmul.f32 %v4610, %v9788
      %v9797 = vmul.f32 %v4743, %v9789
      %v9798 = vmul.f32 %v9659, %v9786
      %v9799 = vmul.f32 %v9660, %v9787
      %v9800 = vmul.f32 %v9661, %v9788
      %v9801 = vmul.f32 %v9782, %v9789
      %v9802 = vadd.f32 %v9774, %v9794
      %v9803 = vadd.f32 %v9775, %v9795
      %v9804 = vadd.f32 %v9776, %v9796
      %v9805 = vadd.f32 %v9777, %v9797
      %v9806 = vadd.f32 %v9778, %v9798
      %v9807 = vadd.f32 %v9779, %v9799
      %v9808 = vadd.f32 %v9780, %v9800
      %v9809 = vadd.f32 %v9781, %v9801
      %v9810 = vld [vmem:[%s4336 + $0x80] sm:$0xff]
      %s9811 = scalar_lea.vmem %s10, 308
      %v9812 = vld [vmem:[%s9811] sm:$0xf]
      %v9814 = vperm.slane %v9812, 0
      %v9815 = vperm.slane %v9812, 1
      %v9816 = vperm.slane %v9812, 2
      %v9817 = vperm.slane %v9812, 3
      %v9822 = vmul.f32 %v4642, %v9814
      %v9823 = vmul.f32 %v4643, %v9815
      %v9824 = vmul.f32 %v4644, %v9816
      %v9825 = vmul.f32 %v4772, %v9817
      %v9826 = vmul.f32 %v9690, %v9814
      %v9827 = vmul.f32 %v9691, %v9815
      %v9828 = vmul.f32 %v9692, %v9816
      %v9829 = vmul.f32 %v9810, %v9817
      %v9830 = vadd.f32 %v9802, %v9822
      %v9831 = vadd.f32 %v9803, %v9823
      %v9832 = vadd.f32 %v9804, %v9824
      %v9833 = vadd.f32 %v9805, %v9825
      %v9834 = vadd.f32 %v9806, %v9826
      %v9835 = vadd.f32 %v9807, %v9827
      %v9836 = vadd.f32 %v9808, %v9828
      %v9837 = vadd.f32 %v9809, %v9829
      %v9838 = vld [vmem:[%s4460 + $0x80] sm:$0xff]
      %s9839 = scalar_lea.vmem %s10, 312
      %v9840 = vld [vmem:[%s9839] sm:$0xf]
      %v9842 = vperm.slane %v9840, 0
      %v9843 = vperm.slane %v9840, 1
      %v9844 = vperm.slane %v9840, 2
      %v9845 = vperm.slane %v9840, 3
      %v9850 = vmul.f32 %v4677, %v9842
      %v9851 = vmul.f32 %v4678, %v9843
      %v9852 = vmul.f32 %v4679, %v9844
      %v9853 = vmul.f32 %v4801, %v9845
      %v9854 = vmul.f32 %v9721, %v9842
      %v9855 = vmul.f32 %v9722, %v9843
      %v9856 = vmul.f32 %v9723, %v9844
      %v9857 = vmul.f32 %v9838, %v9845
      %v9858 = vadd.f32 %v9830, %v9850
      %v9859 = vadd.f32 %v9831, %v9851
      %v9860 = vadd.f32 %v9832, %v9852
      %v9861 = vadd.f32 %v9833, %v9853
      %v9862 = vadd.f32 %v9834, %v9854
      %v9863 = vadd.f32 %v9835, %v9855
      %v9864 = vadd.f32 %v9836, %v9856
      %v9865 = vadd.f32 %v9837, %v9857
      %v9866 = vld [vmem:[%s4584 + $0x80] sm:$0xff]
      %s9867 = scalar_lea.vmem %s10, 316
      %v9868 = vld [vmem:[%s9867] sm:$0xf]
      %v9870 = vperm.slane %v9868, 0
      %v9871 = vperm.slane %v9868, 1
      %v9872 = vperm.slane %v9868, 2
      %v9873 = vperm.slane %v9868, 3
      %v9878 = vmul.f32 %v4712, %v9870
      %v9879 = vmul.f32 %v4713, %v9871
      %v9880 = vmul.f32 %v4714, %v9872
      %v9881 = vmul.f32 %v4830, %v9873
      %v9882 = vmul.f32 %v9752, %v9870
      %v9883 = vmul.f32 %v9753, %v9871
      %v9884 = vmul.f32 %v9754, %v9872
      %v9885 = vmul.f32 %v9866, %v9873
      %v9886 = vadd.f32 %v9858, %v9878
      %v9887 = vadd.f32 %v9859, %v9879
      %v9888 = vadd.f32 %v9860, %v9880
      %v9889 = vadd.f32 %v9861, %v9881
      %v9890 = vadd.f32 %v9862, %v9882
      %v9891 = vadd.f32 %v9863, %v9883
      %v9892 = vadd.f32 %v9864, %v9884
      %v9893 = vadd.f32 %v9865, %v9885
      %v9894 = vld [vmem:[#allocation2 + $0x88] sm:$0xff]
      %s9895 = scalar_lea.vmem %s10, 320
      %v9896 = vld [vmem:[%s9895] sm:$0xf]
      %v9898 = vperm.slane %v9896, 0
      %v9899 = vperm.slane %v9896, 1
      %v9900 = vperm.slane %v9896, 2
      %v9901 = vperm.slane %v9896, 3
      %v9906 = vmul.f32 %v4609, %v9898
      %v9907 = vmul.f32 %v4610, %v9899
      %v9908 = vmul.f32 %v4743, %v9900
      %v9909 = vmul.f32 %v4859, %v9901
      %v9910 = vmul.f32 %v9660, %v9898
      %v9911 = vmul.f32 %v9661, %v9899
      %v9912 = vmul.f32 %v9782, %v9900
      %v9913 = vmul.f32 %v9894, %v9901
      %v9914 = vadd.f32 %v9886, %v9906
      %v9915 = vadd.f32 %v9887, %v9907
      %v9916 = vadd.f32 %v9888, %v9908
      %v9917 = vadd.f32 %v9889, %v9909
      %v9918 = vadd.f32 %v9890, %v9910
      %v9919 = vadd.f32 %v9891, %v9911
      %v9920 = vadd.f32 %v9892, %v9912
      %v9921 = vadd.f32 %v9893, %v9913
      %v9922 = vld [vmem:[%s11] sm:$0xf]
      %v9924 = vperm.slane %v9922, 0
      %v9925 = vperm.slane %v9922, 1
      %v9926 = vperm.slane %v9922, 2
      %v9927 = vperm.slane %v9922, 3
      %v9932 = vadd.f32 %v9914, %v9924
      %v9933 = vadd.f32 %v9915, %v9925
      %v9934 = vadd.f32 %v9916, %v9926
      %v9935 = vadd.f32 %v9917, %v9927
      %v9936 = vadd.f32 %v9918, %v9924
      %v9937 = vadd.f32 %v9919, %v9925
      %v9938 = vadd.f32 %v9920, %v9926
      %v9939 = vadd.f32 %v9921, %v9927
      %v9940 = vmax.f32 %v9932, 0.0
      %v9941 = vmax.f32 %v9933, 0.0
      %v9942 = vmax.f32 %v9934, 0.0
      %v9943 = vmax.f32 %v9935, 0.0
      %v9944 = vmax.f32 %v9936, 0.0
      %v9945 = vmax.f32 %v9937, 0.0
      %v9946 = vmax.f32 %v9938, 0.0
      %v9947 = vmax.f32 %v9939, 0.0
      %v9948 = vxor.u32 %v9940, 2147483648
      %v9949 = vxor.u32 %v9941, 2147483648
      %v9950 = vxor.u32 %v9942, 2147483648
      %v9951 = vxor.u32 %v9943, 2147483648
      %v9952 = vxor.u32 %v9944, 2147483648
      %v9953 = vxor.u32 %v9945, 2147483648
      %v9954 = vxor.u32 %v9946, 2147483648
      %v9955 = vxor.u32 %v9947, 2147483648
      %v9956 = vmul.f32 %v9948, 1.442695
      %v9957 = vpow.pop %v9956
      %v9958 = vmul.f32 %v9949, 1.442695
      %v9959 = vpow.pop %v9958
      %v9960 = vmul.f32 %v9950, 1.442695
      %v9961 = vpow.pop %v9960
      %v9962 = vmul.f32 %v9951, 1.442695
      %v9963 = vpow.pop %v9962
      %v9964 = vmul.f32 %v9952, 1.442695
      %v9965 = vpow.pop %v9964
      %v9966 = vmul.f32 %v9953, 1.442695
      %v9967 = vpow.pop %v9966
      %v9968 = vmul.f32 %v9954, 1.442695
      %v9969 = vpow.pop %v9968
      %v9970 = vmul.f32 %v9955, 1.442695
      %v9971 = vpow.pop %v9970
      %v9972 = vadd.f32 %v9957, 1.0
      %v9973 = vadd.f32 %v9959, 1.0
      %v9974 = vadd.f32 %v9961, 1.0
      %v9975 = vadd.f32 %v9963, 1.0
      %v9976 = vadd.f32 %v9965, 1.0
      %v9977 = vadd.f32 %v9967, 1.0
      %v9978 = vadd.f32 %v9969, 1.0
      %v9979 = vadd.f32 %v9971, 1.0
      %v9980 = vrcp.pop %v9972
      %v9981 = vmul.f32 %v9972, %v9980
      %v9982 = vsub.f32 1.0, %v9981
      %v9983 = vmul.f32 %v9980, %v9982
      %v9984 = vadd.f32 %v9980, %v9983
      %vm9985 = vweird.f32 %v9972
      %vm9986 = vweird.f32 %v9980
      %vm9987 = vmor %vm9985, %vm9986
      %v9988 = vsel %vm9987, %v9980, %v9984
      %v9989 = vand.u32 2147483647, %v9972
      %vm9990 = vcmp.eq.f32.partialorder %v9989, 8.507059e+37
      %v9991 = vand.u32 %v9972, 2147483648
      %v9992 = vor.u32 1.1754944e-38, %v9991
      %v9993 = vsel %vm9990, %v9992, %v9988
      %v9994 = vmul.f32 1.0, %v9993
      %v9995 = vrcp.pop %v9973
      %v9996 = vmul.f32 %v9973, %v9995
      %v9997 = vsub.f32 1.0, %v9996
      %v9998 = vmul.f32 %v9995, %v9997
      %v9999 = vadd.f32 %v9995, %v9998
      %vm10000 = vweird.f32 %v9973
      %vm10001 = vweird.f32 %v9995
      %vm10002 = vmor %vm10000, %vm10001
      %v10003 = vsel %vm10002, %v9995, %v9999
      %v10004 = vand.u32 2147483647, %v9973
      %vm10005 = vcmp.eq.f32.partialorder %v10004, 8.507059e+37
      %v10006 = vand.u32 %v9973, 2147483648
      %v10007 = vor.u32 1.1754944e-38, %v10006
      %v10008 = vsel %vm10005, %v10007, %v10003
      %v10009 = vmul.f32 1.0, %v10008
      %v10010 = vrcp.pop %v9974
      %v10011 = vmul.f32 %v9974, %v10010
      %v10012 = vsub.f32 1.0, %v10011
      %v10013 = vmul.f32 %v10010, %v10012
      %v10014 = vadd.f32 %v10010, %v10013
      %vm10015 = vweird.f32 %v9974
      %vm10016 = vweird.f32 %v10010
      %vm10017 = vmor %vm10015, %vm10016
      %v10018 = vsel %vm10017, %v10010, %v10014
      %v10019 = vand.u32 2147483647, %v9974
      %vm10020 = vcmp.eq.f32.partialorder %v10019, 8.507059e+37
      %v10021 = vand.u32 %v9974, 2147483648
      %v10022 = vor.u32 1.1754944e-38, %v10021
      %v10023 = vsel %vm10020, %v10022, %v10018
      %v10024 = vmul.f32 1.0, %v10023
      %v10025 = vrcp.pop %v9975
      %v10026 = vmul.f32 %v9975, %v10025
      %v10027 = vsub.f32 1.0, %v10026
      %v10028 = vmul.f32 %v10025, %v10027
      %v10029 = vadd.f32 %v10025, %v10028
      %vm10030 = vweird.f32 %v9975
      %vm10031 = vweird.f32 %v10025
      %vm10032 = vmor %vm10030, %vm10031
      %v10033 = vsel %vm10032, %v10025, %v10029
      %v10034 = vand.u32 2147483647, %v9975
      %vm10035 = vcmp.eq.f32.partialorder %v10034, 8.507059e+37
      %v10036 = vand.u32 %v9975, 2147483648
      %v10037 = vor.u32 1.1754944e-38, %v10036
      %v10038 = vsel %vm10035, %v10037, %v10033
      %v10039 = vmul.f32 1.0, %v10038
      %v10040 = vrcp.pop %v9976
      %v10041 = vmul.f32 %v9976, %v10040
      %v10042 = vsub.f32 1.0, %v10041
      %v10043 = vmul.f32 %v10040, %v10042
      %v10044 = vadd.f32 %v10040, %v10043
      %vm10045 = vweird.f32 %v9976
      %vm10046 = vweird.f32 %v10040
      %vm10047 = vmor %vm10045, %vm10046
      %v10048 = vsel %vm10047, %v10040, %v10044
      %v10049 = vand.u32 2147483647, %v9976
      %vm10050 = vcmp.eq.f32.partialorder %v10049, 8.507059e+37
      %v10051 = vand.u32 %v9976, 2147483648
      %v10052 = vor.u32 1.1754944e-38, %v10051
      %v10053 = vsel %vm10050, %v10052, %v10048
      %v10054 = vmul.f32 1.0, %v10053
      %v10055 = vrcp.pop %v9977
      %v10056 = vmul.f32 %v9977, %v10055
      %v10057 = vsub.f32 1.0, %v10056
      %v10058 = vmul.f32 %v10055, %v10057
      %v10059 = vadd.f32 %v10055, %v10058
      %vm10060 = vweird.f32 %v9977
      %vm10061 = vweird.f32 %v10055
      %vm10062 = vmor %vm10060, %vm10061
      %v10063 = vsel %vm10062, %v10055, %v10059
      %v10064 = vand.u32 2147483647, %v9977
      %vm10065 = vcmp.eq.f32.partialorder %v10064, 8.507059e+37
      %v10066 = vand.u32 %v9977, 2147483648
      %v10067 = vor.u32 1.1754944e-38, %v10066
      %v10068 = vsel %vm10065, %v10067, %v10063
      %v10069 = vmul.f32 1.0, %v10068
      %v10070 = vrcp.pop %v9978
      %v10071 = vmul.f32 %v9978, %v10070
      %v10072 = vsub.f32 1.0, %v10071
      %v10073 = vmul.f32 %v10070, %v10072
      %v10074 = vadd.f32 %v10070, %v10073
      %vm10075 = vweird.f32 %v9978
      %vm10076 = vweird.f32 %v10070
      %vm10077 = vmor %vm10075, %vm10076
      %v10078 = vsel %vm10077, %v10070, %v10074
      %v10079 = vand.u32 2147483647, %v9978
      %vm10080 = vcmp.eq.f32.partialorder %v10079, 8.507059e+37
      %v10081 = vand.u32 %v9978, 2147483648
      %v10082 = vor.u32 1.1754944e-38, %v10081
      %v10083 = vsel %vm10080, %v10082, %v10078
      %v10084 = vmul.f32 1.0, %v10083
      %v10085 = vrcp.pop %v9979
      %v10086 = vmul.f32 %v9979, %v10085
      %v10087 = vsub.f32 1.0, %v10086
      %v10088 = vmul.f32 %v10085, %v10087
      %v10089 = vadd.f32 %v10085, %v10088
      %vm10090 = vweird.f32 %v9979
      %vm10091 = vweird.f32 %v10085
      %vm10092 = vmor %vm10090, %vm10091
      %v10093 = vsel %vm10092, %v10085, %v10089
      %v10094 = vand.u32 2147483647, %v9979
      %vm10095 = vcmp.eq.f32.partialorder %v10094, 8.507059e+37
      %v10096 = vand.u32 %v9979, 2147483648
      %v10097 = vor.u32 1.1754944e-38, %v10096
      %v10098 = vsel %vm10095, %v10097, %v10093
      %v10099 = vmul.f32 1.0, %v10098
      %v10100 = vperm.slane %v3091, 0
      %v10101 = vperm.slane %v3111, 0
      %v10102 = vperm.slane %v3131, 0
      %v10103 = vperm.slane %v3151, 0
      %v10104 = vmul.f32 %v10100, %v9994
      %v10105 = vmul.f32 %v10101, %v10009
      %v10106 = vmul.f32 %v10102, %v10024
      %v10107 = vmul.f32 %v10103, %v10039
      %v10108 = vmul.f32 %v10100, %v10054
      %v10109 = vmul.f32 %v10101, %v10069
      %v10110 = vmul.f32 %v10102, %v10084
      %v10111 = vmul.f32 %v10103, %v10099
      %v10112 = vadd.f32 %v10104, 1.0
      %v10113 = vadd.f32 %v10105, 1.0
      %v10114 = vadd.f32 %v10106, 1.0
      %v10115 = vadd.f32 %v10107, 1.0
      %v10116 = vadd.f32 %v10108, 1.0
      %v10117 = vadd.f32 %v10109, 1.0
      %v10118 = vadd.f32 %v10110, 1.0
      %v10119 = vadd.f32 %v10111, 1.0
      %v10120 = vmul.f32 %v2823, %v10112
      %v10121 = vmul.f32 %v2824, %v10113
      %v10122 = vmul.f32 %v2825, %v10114
      %v10123 = vmul.f32 %v2826, %v10115
      %v10124 = vmul.f32 %v2827, %v10116
      %v10125 = vmul.f32 %v2828, %v10117
      %v10126 = vmul.f32 %v2829, %v10118
      %v10127 = vmul.f32 %v2830, %v10119
      %10128 = vst [vmem:[%s413] sm:$0xff] %v10120
      %10129 = vst [vmem:[%s413 + $0x8] sm:$0xff] %v10121
      %10130 = vst [vmem:[%s413 + $0x10] sm:$0xff] %v10122
      %10131 = vst [vmem:[%s413 + $0x18] sm:$0xff] %v10123
      %10132 = vst [vmem:[%s413 + $0x20] sm:$0xff] %v10124
      %10133 = vst [vmem:[%s413 + $0x28] sm:$0xff] %v10125
      %10134 = vst [vmem:[%s413 + $0x30] sm:$0xff] %v10126
      %10135 = vst [vmem:[%s413 + $0x38] sm:$0xff] %v10127
      %p10136 = scmp.lt.s32.totalorder %s23, 1
      %s10137 = scalar_select %p10136, %s23, 1
      %s10138 = smul.addr %s10137, 8
      %s10139 = smul.addr %s10138, 8
      %s10140 = scalar_lea.vmem %s12, %s10139
      // Predicated region
      $region69: #{prm_forward.1} parent=67 // pred_check
        %p10141 = pneg %p298
      $region70: #{prm_forward.1} parent=67 // pred_check_branch
        %10143 = sbr.rel (%p10141) target = $region72
      $region71: #{prm_forward.1} parent=67 // pred_region
        _
      $region72: #{prm_forward.1} parent=67 // pred_fallthru
        _
    $region68: #{prm_forward.1} parent=5 // pred_fallthru
      _
    %p10144 = scmp.le.s32.totalorder 2, %s18
    // Predicated region
    $region73: #{prm_forward.1} parent=5 // pred_check
      %p10145 = pneg %p10144
    $region74: #{prm_forward.1} parent=5 // pred_check_branch
      %10147 = sbr.rel (%p10145) target = $region76
    $region75: #{prm_forward.1} parent=5 // pred_region
      %s10148 = ssub.s32 %s18, 2
      // Predicated region
      $region77: #{prm_forward.1} parent=75 // pred_check
        %p10149 = pneg %p304
      $region78: #{prm_forward.1} parent=75 // pred_check_branch
        %10151 = sbr.rel (%p10149) target = $region80
      $region79: #{prm_forward.1} parent=75 // pred_region
        %p10152 = scmp.lt.s32.totalorder %s24, 1
        %s10153 = scalar_select %p10152, %s24, 1
        %s10154 = smul.addr %s10153, 8
        %s10155 = smul.addr %s10154, 8
        %s10156 = scalar_lea.vmem %s12, %s10155
      $region80: #{prm_forward.1} parent=75 // pred_fallthru
        _
    $region76: #{prm_forward.1} parent=5 // pred_fallthru
      _
  $region6: #{prm_forward.1} parent=0 // loop_footer
    %s22 = sadd.s32 1, %s18
  $region7: #{prm_forward.1} parent=0 // loop_footer_branch
    %17 = sbr.rel target = $region3
  $region8: #{prm_forward.1} parent=0 // loop_exit
    _

</llo_original>
